<compile_context>
chip_gen: v7x
topology: tpu7x:2x2x1
jax: 0.10.0
libtpu: 0.0.40
codegen_flags: <defaults>
</compile_context>

<pallas_src>
import functools

import jax
import jax.numpy as jnp
from jax.experimental import pallas as pl
from jax.experimental.pallas import tpu as pltpu


# ----------------------------- Pallas kernel --------------------------------
def _window_attention_kernel(x_ref, bias_ref, wqkv_ref, bqkv_ref,
                             wproj_ref, bproj_ref, o_ref, *,
                             wb, n, num_heads, head_dim, scale, nw_bias,
                             compute_dtype):
    """One grid step == WB windows."""
    C = num_heads * head_dim
    groups = wb // nw_bias                       # how many 'batch images' this block spans

    x = x_ref[...].reshape(wb * n, C)            # (rows, C)  (leading-dim collapse only)
    w_qkv = wqkv_ref[...]
    w_proj = wproj_ref[...]
    if compute_dtype is not None:                # bf16 MXU operands (v6e/v7x), f32 accumulate
        x = x.astype(compute_dtype)
        w_qkv = w_qkv.astype(compute_dtype)
        w_proj = w_proj.astype(compute_dtype)

    # Single qkv projection for all WB windows (hot MXU matmul).
    qkv = jnp.dot(x, w_qkv, preferred_element_type=jnp.float32) + bqkv_ref[0]   # (rows, 3C) f32

    bias = bias_ref[...]                         # (nw_bias, nh, n, n) f32, resident across steps
    mm_dtype = compute_dtype if compute_dtype is not None else jnp.float32

    head_ctx = []
    for h in range(num_heads):                   # static unroll; each iter batched over WB windows
        q = (qkv[:, h * head_dim:(h + 1) * head_dim] * scale).reshape(wb, n, head_dim)
        k = qkv[:, C + h * head_dim:C + (h + 1) * head_dim].reshape(wb, n, head_dim)
        v = qkv[:, 2 * C + h * head_dim:2 * C + (h + 1) * head_dim].reshape(wb, n, head_dim)

        # Batched QK^T over windows: (wb, n, n); dot_general contracts d directly (no k.T).
        attn = jnp.einsum("wid,wjd->wij",
                          q.astype(mm_dtype), k.astype(mm_dtype),
                          preferred_element_type=jnp.float32)

        # relative-position bias (+ shifted-window mask); window-in-group == global_idx % nW.
        attn = attn.reshape(groups, nw_bias, n, n) + bias[:, h][None]
        attn = attn.reshape(wb, n, n)

        # Numerically stable softmax in f32; divide -> EUP approx reciprocal.
        m = jnp.max(attn, axis=-1, keepdims=True)
        e = jnp.exp(attn - m)
        p = e * pl.reciprocal(jnp.sum(e, axis=-1, keepdims=True), approx=True)

        head_ctx.append(jnp.einsum("wij,wjd->wid",
                                   p.astype(mm_dtype), v.astype(mm_dtype),
                                   preferred_element_type=jnp.float32))          # (wb, n, hd)

    ctx = jnp.concatenate(head_ctx, axis=-1).reshape(wb * n, C)                  # (rows, C)
    if compute_dtype is not None:
        ctx = ctx.astype(compute_dtype)

    # Single output projection for all WB windows.
    y = jnp.dot(ctx, w_proj, preferred_element_type=jnp.float32) + bproj_ref[0]
    o_ref[...] = y.reshape(wb, n, C).astype(o_ref.dtype)


# ------------------------------ JAX wrapper ----------------------------------
def make_relative_position_index(window_size):
    Wh, Ww = window_size
    coords = jnp.stack(jnp.meshgrid(jnp.arange(Wh), jnp.arange(Ww), indexing="ij"))  # (2,Wh,Ww)
    coords_flatten = coords.reshape(2, -1)                                           # (2, N)
    rel = coords_flatten[:, :, None] - coords_flatten[:, None, :]                    # (2, N, N)
    rel = rel.transpose(1, 2, 0)                                                     # (N, N, 2)
    rc0 = (rel[..., 0] + Wh - 1) * (2 * Ww - 1)
    rc1 = rel[..., 1] + Ww - 1
    return rc0 + rc1                                                                 # (N, N) int


def _choose_window_block(B_, N, C, nw_eff, target_rows=1024, vmem_budget=6 << 20):
    """Largest WB that (a) is a multiple of nw_eff, (b) divides B_, (c) keeps the per-block
    f32 working set small enough to double-buffer under the default scoped VMEM limit
    (also fine on v7x's 64 MiB VMEM)."""
    groups = B_ // nw_eff
    best_m = 1
    for m in range(1, groups + 1):
        if groups % m != 0:
            continue
        wb = m * nw_eff
        rows = wb * N
        est = 4 * (rows * C * 7 + 2 * wb * N * N)   # x + qkv(3C) + ctx + out + attn/probs (f32)
        if rows <= target_rows and est <= vmem_budget:
            best_m = m
    return best_m * nw_eff


def window_attention(x, params, window_size, num_heads, mask=None, qk_scale=None,
                     compute_dtype=None):
    """x: (B_, N, C); mask: (nW, N, N) of 0/-100-style values or None.
    compute_dtype: optionally cast MXU operands (e.g. jnp.bfloat16 on v6e/v7x)."""
    B_, N, C = x.shape
    head_dim = C // num_heads
    scale = qk_scale if qk_scale is not None else head_dim ** (-0.5)

    # Build the small shared bias once (NOT per-window): (nw_eff, nh, N, N).
    rel_index = make_relative_position_index(window_size).reshape(-1)          # (N*N,)
    rel_bias = params["rel_pos_table"][rel_index].reshape(N, N, num_heads)
    rel_bias = rel_bias.transpose(2, 0, 1)                                     # (nh, N, N)

    if mask is not None:
        nw_eff = mask.shape[0]
        assert B_ % nw_eff == 0, "B_ must be a multiple of the number of windows"
        bias = rel_bias[None, :, :, :] + mask[:, None, :, :].astype(rel_bias.dtype)
    else:
        nw_eff = 1
        bias = rel_bias[None]
    bias = bias.astype(jnp.float32)

    WB = _choose_window_block(B_, N, C, nw_eff)
    grid = (B_ // WB,)

    kernel = functools.partial(
        _window_attention_kernel,
        wb=WB, n=N, num_heads=num_heads, head_dim=head_dim,
        scale=scale, nw_bias=nw_eff, compute_dtype=compute_dtype)

    return pl.pallas_call(
        kernel,
        out_shape=jax.ShapeDtypeStruct((B_, N, C), x.dtype),
        grid_spec=pltpu.PrefetchScalarGridSpec(
            num_scalar_prefetch=0,
            grid=grid,
            in_specs=[
                pl.BlockSpec((WB, N, C), lambda i: (i, 0, 0)),                      # x
                pl.BlockSpec((nw_eff, num_heads, N, N), lambda i: (0, 0, 0, 0)),    # bias(+mask)
                pl.BlockSpec((C, 3 * C), lambda i: (0, 0)),                         # W_qkv
                pl.BlockSpec((1, 3 * C), lambda i: (0, 0)),                         # b_qkv
                pl.BlockSpec((C, C), lambda i: (0, 0)),                             # W_proj
                pl.BlockSpec((1, C), lambda i: (0, 0)),                             # b_proj
            ],
            out_specs=pl.BlockSpec((WB, N, C), lambda i: (i, 0, 0)),
        ),
        compiler_params=pltpu.CompilerParams(dimension_semantics=("parallel",)),
    )(x, bias, params["w_qkv"], params["b_qkv"], params["w_proj"], params["b_proj"])


# ----------------------------- pure-JAX reference -----------------------------
def window_attention_ref(x, params, window_size, num_heads, mask=None, qk_scale=None):
    B_, N, C = x.shape
    hd = C // num_heads
    scale = qk_scale if qk_scale is not None else hd ** (-0.5)
    qkv = x @ params["w_qkv"] + params["b_qkv"][0]
    qkv = qkv.reshape(B_, N, 3, num_heads, hd).transpose(2, 0, 3, 1, 4)
    q, k, v = qkv[0] * scale, qkv[1], qkv[2]
    attn = jnp.einsum("bhnd,bhmd->bhnm", q, k)
    rel_index = make_relative_position_index(window_size).reshape(-1)
    rb = params["rel_pos_table"][rel_index].reshape(N, N, num_heads).transpose(2, 0, 1)
    attn = attn + rb[None]
    if mask is not None:
        nW = mask.shape[0]
        attn = attn.reshape(B_ // nW, nW, num_heads, N, N) + mask[None, :, None]
        attn = attn.reshape(B_, num_heads, N, N)
    attn = jax.nn.softmax(attn, axis=-1)
    out = jnp.einsum("bhnm,bhmd->bhnd", attn, v).transpose(0, 2, 1, 3).reshape(B_, N, C)
    return out @ params["w_proj"] + params["b_proj"][0]


# ---------------------------------- main --------------------------------------
if __name__ == "__main__":
    dim = 32
    window_size = (4, 4)
    num_heads = 4
    N = window_size[0] * window_size[1]      # 16
    batch, nW = 2, 4
    B_ = batch * nW                          # 8

    key = jax.random.PRNGKey(0)
    k_x, k_rpb, k_wqkv, k_bqkv, k_wproj, k_bproj, k_mask = jax.random.split(key, 7)

    # deterministic parameter init (trunc_normal(std=0.02) ~ small normal here)
    params = {
        "rel_pos_table": 0.02 * jax.random.normal(
            k_rpb, ((2 * window_size[0] - 1) * (2 * window_size[1] - 1), num_heads),
            dtype=jnp.float32),
        "w_qkv": 0.05 * jax.random.normal(k_wqkv, (dim, 3 * dim), dtype=jnp.float32),
        "b_qkv": 0.05 * jax.random.normal(k_bqkv, (1, 3 * dim), dtype=jnp.float32),
        "w_proj": 0.05 * jax.random.normal(k_wproj, (dim, dim), dtype=jnp.float32),
        "b_proj": 0.05 * jax.random.normal(k_bproj, (1, dim), dtype=jnp.float32),
    }
    # attn_drop / proj_drop have rate 0.0 -> identity at inference; omitted.

    x = jax.random.normal(k_x, (B_, N, dim), dtype=jnp.float32)

    # shifted-window style 0 / -100 mask
    mask = jnp.where(jax.random.bernoulli(k_mask, 0.2, (nW, N, N)), -100.0, 0.0)
    mask = mask.astype(jnp.float32)

    # mask=None path (f32 compute)
    out0 = window_attention(x, params, window_size, num_heads, mask=None)
    jax.block_until_ready(out0)
    ref0 = window_attention_ref(x, params, window_size, num_heads, mask=None)
    assert jnp.allclose(out0, ref0, atol=1e-3, rtol=1e-3), "mask=None mismatch"

    # masked path (f32 compute)
    out1 = window_attention(x, params, window_size, num_heads, mask=mask)
    jax.block_until_ready(out1)
    ref1 = window_attention_ref(x, params, window_size, num_heads, mask=mask)
    assert jnp.allclose(out1, ref1, atol=1e-3, rtol=1e-3), "masked mismatch"

    # masked path with bf16 MXU operands (v6e/v7x fast path); looser tolerance
    out2 = window_attention(x, params, window_size, num_heads, mask=mask,
                            compute_dtype=jnp.bfloat16)
    jax.block_until_ready(out2)
    assert jnp.allclose(out2, ref1, atol=5e-2, rtol=5e-2), "bf16 masked mismatch"

    print("KERNEL_OK")
</pallas_src>

<mosaic_0001>
module attributes {stable_mosaic.version = 11 : i64} {
  func.func @_window_attention_kernel(%arg0: i32, %arg1: memref<8x16x32xf32, #tpu.memory_space<vmem>>, %arg2: memref<1x4x16x16xf32, #tpu.memory_space<vmem>>, %arg3: memref<32x96xf32, #tpu.memory_space<vmem>>, %arg4: memref<1x96xf32, #tpu.memory_space<vmem>>, %arg5: memref<32x32xf32, #tpu.memory_space<vmem>>, %arg6: memref<1x32xf32, #tpu.memory_space<vmem>>, %arg7: memref<8x16x32xf32, #tpu.memory_space<vmem>>) attributes {dimension_semantics = [#tpu.dimension_semantics<parallel>], iteration_bounds = array<i64: 1>, scalar_prefetch = 0 : i64, scratch_operands = 0 : i64, tpu.core_type = #tpu.core_type<tc>, window_params = [{transform_indices = @transform_0, window_bounds = array<i64: 8, 16, 32>}, {pipeline_mode = #tpu.pipeline_mode<synchronous>, transform_indices = @transform_1, window_bounds = array<i64: 1, 4, 16, 16>}, {pipeline_mode = #tpu.pipeline_mode<synchronous>, transform_indices = @transform_2, window_bounds = array<i64: 32, 96>}, {pipeline_mode = #tpu.pipeline_mode<synchronous>, transform_indices = @transform_3, window_bounds = array<i64: 1, 96>}, {pipeline_mode = #tpu.pipeline_mode<synchronous>, transform_indices = @transform_4, window_bounds = array<i64: 32, 32>}, {pipeline_mode = #tpu.pipeline_mode<synchronous>, transform_indices = @transform_5, window_bounds = array<i64: 1, 32>}, {transform_indices = @transform_6, window_bounds = array<i64: 8, 16, 32>}]} {
    %c0 = arith.constant 0 : index
    %c0_0 = arith.constant 0 : index
    %c0_1 = arith.constant 0 : index
    %0 = vector.load %arg1[%c0, %c0_0, %c0_1] : memref<8x16x32xf32, #tpu.memory_space<vmem>>, vector<8x16x32xf32>
    %1 = vector.shape_cast %0 : vector<8x16x32xf32> to vector<128x32xf32>
    %c0_2 = arith.constant 0 : index
    %c0_3 = arith.constant 0 : index
    %2 = vector.load %arg3[%c0_2, %c0_3] : memref<32x96xf32, #tpu.memory_space<vmem>>, vector<32x96xf32>
    %c0_4 = arith.constant 0 : index
    %c0_5 = arith.constant 0 : index
    %3 = vector.load %arg5[%c0_4, %c0_5] : memref<32x32xf32, #tpu.memory_space<vmem>>, vector<32x32xf32>
    %cst = arith.constant dense<0.000000e+00> : vector<128x96xf32>
    %4 = tpu.matmul %1, %2, %cst {dimension_numbers = #tpu.dot_dimension_numbers<[1], [0], [0], [1], [0, 0, 1, 1], [], []>} : vector<128x32xf32>, vector<32x96xf32>, vector<128x96xf32> -> vector<128x96xf32>
    %c0_6 = arith.constant 0 : index
    %c0_7 = arith.constant 0 : index
    %5 = vector.load %arg4[%c0_6, %c0_7] : memref<1x96xf32, #tpu.memory_space<vmem>>, vector<1x96xf32>
    %6 = vector.shape_cast %5 : vector<1x96xf32> to vector<96xf32>
    %7 = vector.shape_cast %6 : vector<96xf32> to vector<1x96xf32>
    %8 = vector.broadcast %7 : vector<1x96xf32> to vector<128x96xf32>
    %9 = arith.addf %4, %8 : vector<128x96xf32>
    %c0_8 = arith.constant 0 : index
    %c0_9 = arith.constant 0 : index
    %c0_10 = arith.constant 0 : index
    %c0_11 = arith.constant 0 : index
    %10 = vector.load %arg2[%c0_8, %c0_9, %c0_10, %c0_11] : memref<1x4x16x16xf32, #tpu.memory_space<vmem>>, vector<1x4x16x16xf32>
    %11 = vector.extract_strided_slice %9 {offsets = [0, 0], sizes = [128, 8], strides = [1, 1]} : vector<128x96xf32> to vector<128x8xf32>
    %cst_12 = arith.constant 0.353553385 : f32
    %12 = vector.broadcast %cst_12 : f32 to vector<128x8xf32>
    %13 = arith.mulf %11, %12 : vector<128x8xf32>
    %14 = vector.shape_cast %13 : vector<128x8xf32> to vector<8x16x8xf32>
    %15 = vector.extract_strided_slice %9 {offsets = [0, 32], sizes = [128, 8], strides = [1, 1]} : vector<128x96xf32> to vector<128x8xf32>
    %16 = vector.shape_cast %15 : vector<128x8xf32> to vector<8x16x8xf32>
    %17 = vector.extract_strided_slice %9 {offsets = [0, 64], sizes = [128, 8], strides = [1, 1]} : vector<128x96xf32> to vector<128x8xf32>
    %18 = vector.shape_cast %17 : vector<128x8xf32> to vector<8x16x8xf32>
    "tpu.trace_start"() <{level = 10 : i32, message = "wid,wjd->wij"}> : () -> ()
    %cst_13 = arith.constant dense<0.000000e+00> : vector<8x16x16xf32>
    %19 = tpu.matmul %14, %16, %cst_13 {dimension_numbers = #tpu.dot_dimension_numbers<[2], [2], [1], [1], [0, 0, 0, 1, 1, 1], [0], [0]>} : vector<8x16x8xf32>, vector<8x16x8xf32>, vector<8x16x16xf32> -> vector<8x16x16xf32>
    "tpu.trace_stop"() : () -> ()
    %20 = vector.shape_cast %19 : vector<8x16x16xf32> to vector<8x1x16x16xf32>
    %21 = vector.extract_strided_slice %10 {offsets = [0, 0, 0, 0], sizes = [1, 1, 16, 16], strides = [1, 1, 1, 1]} : vector<1x4x16x16xf32> to vector<1x1x16x16xf32>
    %22 = vector.shape_cast %21 : vector<1x1x16x16xf32> to vector<1x16x16xf32>
    %23 = vector.shape_cast %22 : vector<1x16x16xf32> to vector<1x1x16x16xf32>
    %24 = vector.broadcast %23 : vector<1x1x16x16xf32> to vector<8x1x16x16xf32>
    %25 = arith.addf %20, %24 : vector<8x1x16x16xf32>
    %26 = vector.shape_cast %25 : vector<8x1x16x16xf32> to vector<8x16x16xf32>
    %cst_14 = arith.constant dense<0xFF800000> : vector<8x16xf32>
    %27 = vector.multi_reduction <maximumf>, %26, %cst_14 [2] : vector<8x16x16xf32> to vector<8x16xf32>
    %28 = vector.shape_cast %27 : vector<8x16xf32> to vector<8x16x1xf32>
    %29 = vector.broadcast %28 : vector<8x16x1xf32> to vector<8x16x16xf32>
    %30 = arith.subf %26, %29 : vector<8x16x16xf32>
    %31 = math.exp %30 : vector<8x16x16xf32>
    %cst_15 = arith.constant dense<0.000000e+00> : vector<8x16xf32>
    %32 = vector.multi_reduction <add>, %31, %cst_15 [2] : vector<8x16x16xf32> to vector<8x16xf32>
    %33 = vector.shape_cast %32 : vector<8x16xf32> to vector<8x16x1xf32>
    %34 = tpu.reciprocal %33 {approx = true} : vector<8x16x1xf32> -> vector<8x16x1xf32>
    %35 = vector.broadcast %34 : vector<8x16x1xf32> to vector<8x16x16xf32>
    %36 = arith.mulf %31, %35 : vector<8x16x16xf32>
    "tpu.trace_start"() <{level = 10 : i32, message = "wij,wjd->wid"}> : () -> ()
    %cst_16 = arith.constant dense<0.000000e+00> : vector<8x16x8xf32>
    %37 = tpu.matmul %36, %18, %cst_16 {dimension_numbers = #tpu.dot_dimension_numbers<[2], [1], [1], [2], [0, 0, 0, 1, 1, 2], [0], [0]>} : vector<8x16x16xf32>, vector<8x16x8xf32>, vector<8x16x8xf32> -> vector<8x16x8xf32>
    "tpu.trace_stop"() : () -> ()
    %38 = vector.extract_strided_slice %9 {offsets = [0, 8], sizes = [128, 8], strides = [1, 1]} : vector<128x96xf32> to vector<128x8xf32>
    %cst_17 = arith.constant 0.353553385 : f32
    %39 = vector.broadcast %cst_17 : f32 to vector<128x8xf32>
    %40 = arith.mulf %38, %39 : vector<128x8xf32>
    %41 = vector.shape_cast %40 : vector<128x8xf32> to vector<8x16x8xf32>
    %42 = vector.extract_strided_slice %9 {offsets = [0, 40], sizes = [128, 8], strides = [1, 1]} : vector<128x96xf32> to vector<128x8xf32>
    %43 = vector.shape_cast %42 : vector<128x8xf32> to vector<8x16x8xf32>
    %44 = vector.extract_strided_slice %9 {offsets = [0, 72], sizes = [128, 8], strides = [1, 1]} : vector<128x96xf32> to vector<128x8xf32>
    %45 = vector.shape_cast %44 : vector<128x8xf32> to vector<8x16x8xf32>
    "tpu.trace_start"() <{level = 10 : i32, message = "wid,wjd->wij"}> : () -> ()
    %cst_18 = arith.constant dense<0.000000e+00> : vector<8x16x16xf32>
    %46 = tpu.matmul %41, %43, %cst_18 {dimension_numbers = #tpu.dot_dimension_numbers<[2], [2], [1], [1], [0, 0, 0, 1, 1, 1], [0], [0]>} : vector<8x16x8xf32>, vector<8x16x8xf32>, vector<8x16x16xf32> -> vector<8x16x16xf32>
    "tpu.trace_stop"() : () -> ()
    %47 = vector.shape_cast %46 : vector<8x16x16xf32> to vector<8x1x16x16xf32>
    %48 = vector.extract_strided_slice %10 {offsets = [0, 1, 0, 0], sizes = [1, 1, 16, 16], strides = [1, 1, 1, 1]} : vector<1x4x16x16xf32> to vector<1x1x16x16xf32>
    %49 = vector.shape_cast %48 : vector<1x1x16x16xf32> to vector<1x16x16xf32>
    %50 = vector.shape_cast %49 : vector<1x16x16xf32> to vector<1x1x16x16xf32>
    %51 = vector.broadcast %50 : vector<1x1x16x16xf32> to vector<8x1x16x16xf32>
    %52 = arith.addf %47, %51 : vector<8x1x16x16xf32>
    %53 = vector.shape_cast %52 : vector<8x1x16x16xf32> to vector<8x16x16xf32>
    %cst_19 = arith.constant dense<0xFF800000> : vector<8x16xf32>
    %54 = vector.multi_reduction <maximumf>, %53, %cst_19 [2] : vector<8x16x16xf32> to vector<8x16xf32>
    %55 = vector.shape_cast %54 : vector<8x16xf32> to vector<8x16x1xf32>
    %56 = vector.broadcast %55 : vector<8x16x1xf32> to vector<8x16x16xf32>
    %57 = arith.subf %53, %56 : vector<8x16x16xf32>
    %58 = math.exp %57 : vector<8x16x16xf32>
    %cst_20 = arith.constant dense<0.000000e+00> : vector<8x16xf32>
    %59 = vector.multi_reduction <add>, %58, %cst_20 [2] : vector<8x16x16xf32> to vector<8x16xf32>
    %60 = vector.shape_cast %59 : vector<8x16xf32> to vector<8x16x1xf32>
    %61 = tpu.reciprocal %60 {approx = true} : vector<8x16x1xf32> -> vector<8x16x1xf32>
    %62 = vector.broadcast %61 : vector<8x16x1xf32> to vector<8x16x16xf32>
    %63 = arith.mulf %58, %62 : vector<8x16x16xf32>
    "tpu.trace_start"() <{level = 10 : i32, message = "wij,wjd->wid"}> : () -> ()
    %cst_21 = arith.constant dense<0.000000e+00> : vector<8x16x8xf32>
    %64 = tpu.matmul %63, %45, %cst_21 {dimension_numbers = #tpu.dot_dimension_numbers<[2], [1], [1], [2], [0, 0, 0, 1, 1, 2], [0], [0]>} : vector<8x16x16xf32>, vector<8x16x8xf32>, vector<8x16x8xf32> -> vector<8x16x8xf32>
    "tpu.trace_stop"() : () -> ()
    %65 = vector.extract_strided_slice %9 {offsets = [0, 16], sizes = [128, 8], strides = [1, 1]} : vector<128x96xf32> to vector<128x8xf32>
    %cst_22 = arith.constant 0.353553385 : f32
    %66 = vector.broadcast %cst_22 : f32 to vector<128x8xf32>
    %67 = arith.mulf %65, %66 : vector<128x8xf32>
    %68 = vector.shape_cast %67 : vector<128x8xf32> to vector<8x16x8xf32>
    %69 = vector.extract_strided_slice %9 {offsets = [0, 48], sizes = [128, 8], strides = [1, 1]} : vector<128x96xf32> to vector<128x8xf32>
    %70 = vector.shape_cast %69 : vector<128x8xf32> to vector<8x16x8xf32>
    %71 = vector.extract_strided_slice %9 {offsets = [0, 80], sizes = [128, 8], strides = [1, 1]} : vector<128x96xf32> to vector<128x8xf32>
    %72 = vector.shape_cast %71 : vector<128x8xf32> to vector<8x16x8xf32>
    "tpu.trace_start"() <{level = 10 : i32, message = "wid,wjd->wij"}> : () -> ()
    %cst_23 = arith.constant dense<0.000000e+00> : vector<8x16x16xf32>
    %73 = tpu.matmul %68, %70, %cst_23 {dimension_numbers = #tpu.dot_dimension_numbers<[2], [2], [1], [1], [0, 0, 0, 1, 1, 1], [0], [0]>} : vector<8x16x8xf32>, vector<8x16x8xf32>, vector<8x16x16xf32> -> vector<8x16x16xf32>
    "tpu.trace_stop"() : () -> ()
    %74 = vector.shape_cast %73 : vector<8x16x16xf32> to vector<8x1x16x16xf32>
    %75 = vector.extract_strided_slice %10 {offsets = [0, 2, 0, 0], sizes = [1, 1, 16, 16], strides = [1, 1, 1, 1]} : vector<1x4x16x16xf32> to vector<1x1x16x16xf32>
    %76 = vector.shape_cast %75 : vector<1x1x16x16xf32> to vector<1x16x16xf32>
    %77 = vector.shape_cast %76 : vector<1x16x16xf32> to vector<1x1x16x16xf32>
    %78 = vector.broadcast %77 : vector<1x1x16x16xf32> to vector<8x1x16x16xf32>
    %79 = arith.addf %74, %78 : vector<8x1x16x16xf32>
    %80 = vector.shape_cast %79 : vector<8x1x16x16xf32> to vector<8x16x16xf32>
    %cst_24 = arith.constant dense<0xFF800000> : vector<8x16xf32>
    %81 = vector.multi_reduction <maximumf>, %80, %cst_24 [2] : vector<8x16x16xf32> to vector<8x16xf32>
    %82 = vector.shape_cast %81 : vector<8x16xf32> to vector<8x16x1xf32>
    %83 = vector.broadcast %82 : vector<8x16x1xf32> to vector<8x16x16xf32>
    %84 = arith.subf %80, %83 : vector<8x16x16xf32>
    %85 = math.exp %84 : vector<8x16x16xf32>
    %cst_25 = arith.constant dense<0.000000e+00> : vector<8x16xf32>
    %86 = vector.multi_reduction <add>, %85, %cst_25 [2] : vector<8x16x16xf32> to vector<8x16xf32>
    %87 = vector.shape_cast %86 : vector<8x16xf32> to vector<8x16x1xf32>
    %88 = tpu.reciprocal %87 {approx = true} : vector<8x16x1xf32> -> vector<8x16x1xf32>
    %89 = vector.broadcast %88 : vector<8x16x1xf32> to vector<8x16x16xf32>
    %90 = arith.mulf %85, %89 : vector<8x16x16xf32>
    "tpu.trace_start"() <{level = 10 : i32, message = "wij,wjd->wid"}> : () -> ()
    %cst_26 = arith.constant dense<0.000000e+00> : vector<8x16x8xf32>
    %91 = tpu.matmul %90, %72, %cst_26 {dimension_numbers = #tpu.dot_dimension_numbers<[2], [1], [1], [2], [0, 0, 0, 1, 1, 2], [0], [0]>} : vector<8x16x16xf32>, vector<8x16x8xf32>, vector<8x16x8xf32> -> vector<8x16x8xf32>
    "tpu.trace_stop"() : () -> ()
    %92 = vector.extract_strided_slice %9 {offsets = [0, 24], sizes = [128, 8], strides = [1, 1]} : vector<128x96xf32> to vector<128x8xf32>
    %cst_27 = arith.constant 0.353553385 : f32
    %93 = vector.broadcast %cst_27 : f32 to vector<128x8xf32>
    %94 = arith.mulf %92, %93 : vector<128x8xf32>
    %95 = vector.shape_cast %94 : vector<128x8xf32> to vector<8x16x8xf32>
    %96 = vector.extract_strided_slice %9 {offsets = [0, 56], sizes = [128, 8], strides = [1, 1]} : vector<128x96xf32> to vector<128x8xf32>
    %97 = vector.shape_cast %96 : vector<128x8xf32> to vector<8x16x8xf32>
    %98 = vector.extract_strided_slice %9 {offsets = [0, 88], sizes = [128, 8], strides = [1, 1]} : vector<128x96xf32> to vector<128x8xf32>
    %99 = vector.shape_cast %98 : vector<128x8xf32> to vector<8x16x8xf32>
    "tpu.trace_start"() <{level = 10 : i32, message = "wid,wjd->wij"}> : () -> ()
    %cst_28 = arith.constant dense<0.000000e+00> : vector<8x16x16xf32>
    %100 = tpu.matmul %95, %97, %cst_28 {dimension_numbers = #tpu.dot_dimension_numbers<[2], [2], [1], [1], [0, 0, 0, 1, 1, 1], [0], [0]>} : vector<8x16x8xf32>, vector<8x16x8xf32>, vector<8x16x16xf32> -> vector<8x16x16xf32>
    "tpu.trace_stop"() : () -> ()
    %101 = vector.shape_cast %100 : vector<8x16x16xf32> to vector<8x1x16x16xf32>
    %102 = vector.extract_strided_slice %10 {offsets = [0, 3, 0, 0], sizes = [1, 1, 16, 16], strides = [1, 1, 1, 1]} : vector<1x4x16x16xf32> to vector<1x1x16x16xf32>
    %103 = vector.shape_cast %102 : vector<1x1x16x16xf32> to vector<1x16x16xf32>
    %104 = vector.shape_cast %103 : vector<1x16x16xf32> to vector<1x1x16x16xf32>
    %105 = vector.broadcast %104 : vector<1x1x16x16xf32> to vector<8x1x16x16xf32>
    %106 = arith.addf %101, %105 : vector<8x1x16x16xf32>
    %107 = vector.shape_cast %106 : vector<8x1x16x16xf32> to vector<8x16x16xf32>
    %cst_29 = arith.constant dense<0xFF800000> : vector<8x16xf32>
    %108 = vector.multi_reduction <maximumf>, %107, %cst_29 [2] : vector<8x16x16xf32> to vector<8x16xf32>
    %109 = vector.shape_cast %108 : vector<8x16xf32> to vector<8x16x1xf32>
    %110 = vector.broadcast %109 : vector<8x16x1xf32> to vector<8x16x16xf32>
    %111 = arith.subf %107, %110 : vector<8x16x16xf32>
    %112 = math.exp %111 : vector<8x16x16xf32>
    %cst_30 = arith.constant dense<0.000000e+00> : vector<8x16xf32>
    %113 = vector.multi_reduction <add>, %112, %cst_30 [2] : vector<8x16x16xf32> to vector<8x16xf32>
    %114 = vector.shape_cast %113 : vector<8x16xf32> to vector<8x16x1xf32>
    %115 = tpu.reciprocal %114 {approx = true} : vector<8x16x1xf32> -> vector<8x16x1xf32>
    %116 = vector.broadcast %115 : vector<8x16x1xf32> to vector<8x16x16xf32>
    %117 = arith.mulf %112, %116 : vector<8x16x16xf32>
    "tpu.trace_start"() <{level = 10 : i32, message = "wij,wjd->wid"}> : () -> ()
    %cst_31 = arith.constant dense<0.000000e+00> : vector<8x16x8xf32>
    %118 = tpu.matmul %117, %99, %cst_31 {dimension_numbers = #tpu.dot_dimension_numbers<[2], [1], [1], [2], [0, 0, 0, 1, 1, 2], [0], [0]>} : vector<8x16x16xf32>, vector<8x16x8xf32>, vector<8x16x8xf32> -> vector<8x16x8xf32>
    "tpu.trace_stop"() : () -> ()
    %119 = tpu.concatenate %37, %64, %91, %118 in 2 : vector<8x16x8xf32>, vector<8x16x8xf32>, vector<8x16x8xf32>, vector<8x16x8xf32> -> vector<8x16x32xf32>
    %120 = vector.shape_cast %119 : vector<8x16x32xf32> to vector<128x32xf32>
    %cst_32 = arith.constant dense<0.000000e+00> : vector<128x32xf32>
    %121 = tpu.matmul %120, %3, %cst_32 {dimension_numbers = #tpu.dot_dimension_numbers<[1], [0], [0], [1], [0, 0, 1, 1], [], []>} : vector<128x32xf32>, vector<32x32xf32>, vector<128x32xf32> -> vector<128x32xf32>
    %c0_33 = arith.constant 0 : index
    %c0_34 = arith.constant 0 : index
    %122 = vector.load %arg6[%c0_33, %c0_34] : memref<1x32xf32, #tpu.memory_space<vmem>>, vector<1x32xf32>
    %123 = vector.shape_cast %122 : vector<1x32xf32> to vector<32xf32>
    %124 = vector.shape_cast %123 : vector<32xf32> to vector<1x32xf32>
    %125 = vector.broadcast %124 : vector<1x32xf32> to vector<128x32xf32>
    %126 = arith.addf %121, %125 : vector<128x32xf32>
    %127 = vector.shape_cast %126 : vector<128x32xf32> to vector<8x16x32xf32>
    %c0_35 = arith.constant 0 : index
    %c0_36 = arith.constant 0 : index
    %c0_37 = arith.constant 0 : index
    %128 = vector.load %arg7[%c0_35, %c0_36, %c0_37] : memref<8x16x32xf32, #tpu.memory_space<vmem>>, vector<8x16x32xf32>
    tpu.vector_store %arg7[%c0_35, %c0_36, %c0_37], %127 {strides = array<i32>} : memref<8x16x32xf32, #tpu.memory_space<vmem>>, vector<8x16x32xf32>,
    return
  }
  func.func @transform_0(%arg0: i32) -> (i32, i32, i32) {
    %c0_i32 = arith.constant 0 : i32
    %c0_i32_0 = arith.constant 0 : i32
    %c0_i32_1 = arith.constant 0 : i32
    return %arg0, %c0_i32, %c0_i32_0 : i32, i32, i32
  }
  func.func @transform_1(%arg0: i32) -> (i32, i32, i32, i32) {
    %c0_i32 = arith.constant 0 : i32
    %c0_i32_0 = arith.constant 0 : i32
    %c0_i32_1 = arith.constant 0 : i32
    %c0_i32_2 = arith.constant 0 : i32
    %c0_i32_3 = arith.constant 0 : i32
    return %c0_i32, %c0_i32_0, %c0_i32_1, %c0_i32_2 : i32, i32, i32, i32
  }
  func.func @transform_2(%arg0: i32) -> (i32, i32) {
    %c0_i32 = arith.constant 0 : i32
    %c0_i32_0 = arith.constant 0 : i32
    %c0_i32_1 = arith.constant 0 : i32
    return %c0_i32, %c0_i32_0 : i32, i32
  }
  func.func @transform_3(%arg0: i32) -> (i32, i32) {
    %c0_i32 = arith.constant 0 : i32
    %c0_i32_0 = arith.constant 0 : i32
    %c0_i32_1 = arith.constant 0 : i32
    return %c0_i32, %c0_i32_0 : i32, i32
  }
  func.func @transform_4(%arg0: i32) -> (i32, i32) {
    %c0_i32 = arith.constant 0 : i32
    %c0_i32_0 = arith.constant 0 : i32
    %c0_i32_1 = arith.constant 0 : i32
    return %c0_i32, %c0_i32_0 : i32, i32
  }
  func.func @transform_5(%arg0: i32) -> (i32, i32) {
    %c0_i32 = arith.constant 0 : i32
    %c0_i32_0 = arith.constant 0 : i32
    %c0_i32_1 = arith.constant 0 : i32
    return %c0_i32, %c0_i32_0 : i32, i32
  }
  func.func @transform_6(%arg0: i32) -> (i32, i32, i32) {
    %c0_i32 = arith.constant 0 : i32
    %c0_i32_0 = arith.constant 0 : i32
    %c0_i32_1 = arith.constant 0 : i32
    return %arg0, %c0_i32, %c0_i32_0 : i32, i32, i32
  }
}

</mosaic_0001>

<llo_original>
// kernel: tpu_custom_call.1
$region0: #{tpu_custom_call.1}
  #allocation0 [shape = 'u32[]', space=smem, size = 0x4, offset = 0x4, fixed_abs, tag = 'smem constant byte address 0x4 - core index']
  #allocation1 [shape = 'u32[144,128]{1,0:T(1,128)}', space=vmem, size = 0x12000, scoped, tag = 'internal scratch']
  %s0 = inlined_call_operand.hbm [shape: f32[8,16,32], index: 0, kind: input, shape index: {}]
  %s1 = inlined_call_operand.hbm [shape: f32[1,4,16,16], index: 1, kind: input, shape index: {}]
  %s2 = inlined_call_operand.hbm [shape: f32[32,96], index: 2, kind: input, shape index: {}]
  %s3 = inlined_call_operand.vmem [shape: f32[1,96], index: 3, kind: input, shape index: {}]
  %s4 = inlined_call_operand.hbm [shape: f32[32,32], index: 4, kind: input, shape index: {}]
  %s5 = inlined_call_operand.vmem [shape: f32[1,32], index: 5, kind: input, shape index: {}]
  %s6 = inlined_call_operand.hbm [shape: f32[8,16,32], index: 6, kind: output, shape index: {}]
  %s7 = sld [smem:[#allocation0]]
  $region50: #{tpu_custom_call.1} parent=0
    _
  %s9 = ssub.s32 1, %s7
  %s10 = scalar_select 0, %s9, %s7
  $region1: #{tpu_custom_call.1} parent=0
    #allocation2 [shape = 'u8[65536]{0}', space=vmem, size = 0x10000, scoped, tag = 'input window, operand 0, single buffered']
    #allocation3 [shape = 's32[1]{0}', space=sflag, size = 0x4, scoped, tag = 'scoped memory for tpu_custom_call.1']
    #allocation4 [shape = 's32[1]{0}', space=sflag, size = 0x4, scoped, tag = 'scoped memory for tpu_custom_call.1']
    #allocation5 [shape = 'u8[32768]{0}', space=vmem, size = 0x8000, scoped, tag = 'input window, operand 1, single buffered']
    #allocation6 [shape = 's32[1]{0}', space=sflag, size = 0x4, scoped, tag = 'scoped memory for tpu_custom_call.1']
    #allocation7 [shape = 'u8[16384]{0}', space=vmem, size = 0x4000, scoped, tag = 'input window, operand 2, single buffered']
    #allocation8 [shape = 'u8[16384]{0}', space=vmem, size = 0x4000, scoped, tag = 'input window, operand 4, single buffered']
    #allocation9 [shape = 's32[1]{0}', space=sflag, size = 0x4, scoped, tag = 'scoped memory for tpu_custom_call.1']
    #allocation10 [shape = 'u8[65536]{0}', space=vmem, size = 0x10000, scoped, tag = 'output window, operand 0, single buffered']
    %11 = vsyncpa [#allocation3], 0
    %12 = vsyncpa [#allocation6], 0
    %13 = vsyncpa [#allocation9], 0
    %14 = vsyncpa [#allocation4], 0
    // Predicated region
    $region2: #{tpu_custom_call.1} parent=1 // pred_check
      _
    $region3: #{tpu_custom_call.1} parent=1 // pred_check_branch
      %16 = sbr.rel (0) target = $region5
    $region4: #{tpu_custom_call.1} parent=1 // pred_region
      %s18 = ssub.s32 2048, 2048
      %19 = vsyncadd [#allocation3], %s18
      %s20 = sshll.u32 [#allocation2], 4
      %s21 = int_to_ptr.vmem [resolvable:$true] %s20
      %26 = dma.hbm_to_vmem [thread:$0]  %s0, 2048, %s21, [#allocation3], 128, 128, 8
    $region5: #{tpu_custom_call.1} parent=1 // pred_fallthru
      _
    // Predicated region
    $region6: #{tpu_custom_call.1} parent=1 // pred_check
      _
    $region7: #{tpu_custom_call.1} parent=1 // pred_check_branch
      %28 = sbr.rel (0) target = $region9
    $region8: #{tpu_custom_call.1} parent=1 // pred_region
      %s30 = ssub.s32 1024, 1024
      %31 = vsyncadd [#allocation6], %s30
      %s32 = sshll.u32 [#allocation5], 4
      %s33 = int_to_ptr.vmem [resolvable:$true] %s32
      %38 = dma.hbm_to_vmem [thread:$0]  %s1, 1024, %s33, [#allocation6], 128, 128, 8
    $region9: #{tpu_custom_call.1} parent=1 // pred_fallthru
      _
    // Predicated region
    $region10: #{tpu_custom_call.1} parent=1 // pred_check
      _
    $region11: #{tpu_custom_call.1} parent=1 // pred_check_branch
      %40 = sbr.rel (0) target = $region13
    $region12: #{tpu_custom_call.1} parent=1 // pred_region
      %s42 = ssub.s32 512, 512
      %43 = vsyncadd [#allocation6], %s42
      %s44 = sshll.u32 [#allocation7], 4
      %s45 = int_to_ptr.vmem [resolvable:$true] %s44
      %50 = dma.hbm_to_vmem [thread:$0]  %s2, 512, %s45, [#allocation6], 128, 128, 8
    $region13: #{tpu_custom_call.1} parent=1 // pred_fallthru
      _
    // Predicated region
    $region14: #{tpu_custom_call.1} parent=1 // pred_check
      _
    $region15: #{tpu_custom_call.1} parent=1 // pred_check_branch
      %52 = sbr.rel (0) target = $region17
    $region16: #{tpu_custom_call.1} parent=1 // pred_region
      _
    $region17: #{tpu_custom_call.1} parent=1 // pred_fallthru
      _
    // Predicated region
    $region18: #{tpu_custom_call.1} parent=1 // pred_check
      _
    $region19: #{tpu_custom_call.1} parent=1 // pred_check_branch
      %54 = sbr.rel (0) target = $region21
    $region20: #{tpu_custom_call.1} parent=1 // pred_region
      %s56 = ssub.s32 512, 512
      %57 = vsyncadd [#allocation9], %s56
      %s58 = sshll.u32 [#allocation8], 4
      %s59 = int_to_ptr.vmem [resolvable:$true] %s58
      %64 = dma.hbm_to_vmem [thread:$0]  %s4, 512, %s59, [#allocation9], 128, 128, 8
    $region21: #{tpu_custom_call.1} parent=1 // pred_fallthru
      _
    // Predicated region
    $region22: #{tpu_custom_call.1} parent=1 // pred_check
      _
    $region23: #{tpu_custom_call.1} parent=1 // pred_check_branch
      %66 = sbr.rel (0) target = $region25
    $region24: #{tpu_custom_call.1} parent=1 // pred_region
      _
    $region25: #{tpu_custom_call.1} parent=1 // pred_fallthru
      _
    // Predicated region
    $region26: #{tpu_custom_call.1} parent=1 // pred_check
      _
    $region27: #{tpu_custom_call.1} parent=1 // pred_check_branch
      %68 = sbr.rel (0) target = $region29
    $region28: #{tpu_custom_call.1} parent=1 // pred_region
      %69 = dma.done [#allocation3], 2048
    $region29: #{tpu_custom_call.1} parent=1 // pred_fallthru
      _
    // Predicated region
    $region30: #{tpu_custom_call.1} parent=1 // pred_check
      _
    $region31: #{tpu_custom_call.1} parent=1 // pred_check_branch
      %71 = sbr.rel (0) target = $region33
    $region32: #{tpu_custom_call.1} parent=1 // pred_region
      %72 = dma.done [#allocation6], 1024
    $region33: #{tpu_custom_call.1} parent=1 // pred_fallthru
      _
    // Predicated region
    $region34: #{tpu_custom_call.1} parent=1 // pred_check
      _
    $region35: #{tpu_custom_call.1} parent=1 // pred_check_branch
      %74 = sbr.rel (0) target = $region37
    $region36: #{tpu_custom_call.1} parent=1 // pred_region
      %75 = dma.done [#allocation6], 512
    $region37: #{tpu_custom_call.1} parent=1 // pred_fallthru
      _
    // Predicated region
    $region38: #{tpu_custom_call.1} parent=1 // pred_check
      _
    $region39: #{tpu_custom_call.1} parent=1 // pred_check_branch
      %77 = sbr.rel (0) target = $region41
    $region40: #{tpu_custom_call.1} parent=1 // pred_region
      %78 = dma.done [#allocation9], 512
    $region41: #{tpu_custom_call.1} parent=1 // pred_fallthru
      _
    %v79 = vld [vmem:[#allocation2] sm:$0xff]
    %v80 = vld [vmem:[#allocation2 + $0x8] sm:$0xff]
    %v81 = vld [vmem:[#allocation2 + $0x10] sm:$0xff]
    %v82 = vld [vmem:[#allocation2 + $0x18] sm:$0xff]
    %v83 = vld [vmem:[#allocation2 + $0x20] sm:$0xff]
    %v84 = vld [vmem:[#allocation2 + $0x28] sm:$0xff]
    %v85 = vld [vmem:[#allocation2 + $0x30] sm:$0xff]
    %v86 = vld [vmem:[#allocation2 + $0x38] sm:$0xff]
    %v87 = vld [vmem:[#allocation2 + $0x40] sm:$0xff]
    %v88 = vld [vmem:[#allocation2 + $0x48] sm:$0xff]
    %v89 = vld [vmem:[#allocation2 + $0x50] sm:$0xff]
    %v90 = vld [vmem:[#allocation2 + $0x58] sm:$0xff]
    %v91 = vld [vmem:[#allocation2 + $0x60] sm:$0xff]
    %v92 = vld [vmem:[#allocation2 + $0x68] sm:$0xff]
    %v93 = vld [vmem:[#allocation2 + $0x70] sm:$0xff]
    %v94 = vld [vmem:[#allocation2 + $0x78] sm:$0xff]
    %v95 = vld [vmem:[#allocation7] sm:$0xff]
    %v96 = vld [vmem:[#allocation7 + $0x8] sm:$0xff]
    %v97 = vld [vmem:[#allocation7 + $0x10] sm:$0xff]
    %v98 = vld [vmem:[#allocation7 + $0x18] sm:$0xff]
    %v99 = vld [vmem:[#allocation8] sm:$0xff]
    %v100 = vld [vmem:[#allocation8 + $0x8] sm:$0xff]
    %v101 = vld [vmem:[#allocation8 + $0x10] sm:$0xff]
    %v102 = vld [vmem:[#allocation8 + $0x18] sm:$0xff]
    %v103 = vld [vmem:[%s3] sm:$0x1]
    %v105 = vlaneseq
    %v106 = vshrl.u32 %v105, 7
    %v107 = vsub.s32 0, %v106
    %v108 = vrot.slane %v103, %v107
    %vm110 = vcmask 261120
    %v112 = vsel %vm110, %v79, 0
    %v115 = vsel %vm110, %v80, 0
    %v118 = vsel %vm110, %v81, 0
    %v121 = vsel %vm110, %v82, 0
    %v124 = vsel %vm110, %v83, 0
    %v127 = vsel %vm110, %v84, 0
    %v130 = vsel %vm110, %v85, 0
    %v133 = vsel %vm110, %v86, 0
    %v136 = vsel %vm110, %v87, 0
    %v139 = vsel %vm110, %v88, 0
    %v142 = vsel %vm110, %v89, 0
    %v145 = vsel %vm110, %v90, 0
    %v148 = vsel %vm110, %v91, 0
    %v151 = vsel %vm110, %v92, 0
    %v154 = vsel %vm110, %v93, 0
    %v157 = vsel %vm110, %v94, 0
    %159 = vmatprep.subr.mxu0 0.0
    %160 = vmatpush1.msra.mxu0 %v95
    %161 = vmatprep.subr.mxu0 0.0
    %162 = vmatpush1.msra.mxu0 %v96
    %163 = vmatprep.subr.mxu0 0.0
    %164 = vmatpush1.msra.mxu0 %v97
    %165 = vmatprep.subr.mxu0 0.0
    %166 = vmatpush1.msra.mxu0 %v98
    %167 = vmatprep.subr.mxu0 0.0
    %168 = vmatpush1.msra.mxu0 0.0
    %169 = vmatprep.subr.mxu0 0.0
    %170 = vmatpush1.msra.mxu0 0.0
    %171 = vmatprep.subr.mxu0 0.0
    %172 = vmatpush1.msra.mxu0 0.0
    %173 = vmatprep.subr.mxu0 0.0
    %174 = vmatpush1.msra.mxu0 0.0
    %175 = vmatprep.subr.mxu0 0.0
    %176 = vmatpush1.msra.mxu0 0.0
    %177 = vmatprep.subr.mxu0 0.0
    %178 = vmatpush1.msra.mxu0 0.0
    %179 = vmatprep.subr.mxu0 0.0
    %180 = vmatpush1.msra.mxu0 0.0
    %181 = vmatprep.subr.mxu0 0.0
    %182 = vmatpush1.msra.mxu0 0.0
    %183 = vmatprep.subr.mxu0 0.0
    %184 = vmatpush1.msra.mxu0 0.0
    %185 = vmatprep.subr.mxu0 0.0
    %186 = vmatpush1.msra.mxu0 0.0
    %187 = vmatprep.subr.mxu0 0.0
    %188 = vmatpush1.msra.mxu0 0.0
    %189 = vmatprep.subr.mxu0 0.0
    %190 = vmatpush1.msra.mxu0 0.0
    %191 = vmatprep.subr.mxu0 0.0
    %192 = vmatpush1.msra.mxu0 0.0
    %193 = vmatprep.subr.mxu0 0.0
    %194 = vmatpush1.msra.mxu0 0.0
    %195 = vmatprep.subr.mxu0 0.0
    %196 = vmatpush1.msra.mxu0 0.0
    %197 = vmatprep.subr.mxu0 0.0
    %198 = vmatpush1.msra.mxu0 0.0
    %199 = vmatprep.subr.mxu0 0.0
    %200 = vmatpush1.msra.mxu0 0.0
    %201 = vmatprep.subr.mxu0 0.0
    %202 = vmatpush1.msra.mxu0 0.0
    %203 = vmatprep.subr.mxu0 0.0
    %204 = vmatpush1.msra.mxu0 0.0
    %205 = vmatprep.subr.mxu0 0.0
    %206 = vmatpush1.msra.mxu0 0.0
    %207 = vmatprep.subr.mxu0 0.0
    %208 = vmatpush1.msra.mxu0 0.0
    %209 = vmatprep.subr.mxu0 0.0
    %210 = vmatpush1.msra.mxu0 0.0
    %211 = vmatprep.subr.mxu0 0.0
    %212 = vmatpush1.msra.mxu0 0.0
    %213 = vmatprep.subr.mxu0 0.0
    %214 = vmatpush1.msra.mxu0 0.0
    %215 = vmatprep.subr.mxu0 0.0
    %216 = vmatpush1.msra.mxu0 0.0
    %217 = vmatprep.subr.mxu0 0.0
    %218 = vmatpush1.msra.mxu0 0.0
    %219 = vmatprep.subr.mxu0 0.0
    %220 = vmatpush1.msra.mxu0 0.0
    %221 = vmatprep.subr.mxu0 0.0
    %222 = vmatpush1.msra.mxu0 0.0
    %223 = vmatprep.mubr.f32.mxu0 0.0
    %224 = vmatmul.mubr.f32.gmra.mrb[0].mxu0 %v112
    %v225 = vpop.f32.mrb[0].mxu0
    %v226 = vadd.f32 %v108, %v225
    %v227 = vpop.f32.mrb[0].mxu0
    %228 = vmatprep.mubr.f32.mxu0 0.0
    %229 = vmatmul.mubr.f32.gmra.mrb[0].mxu0 %v115
    %v230 = vpop.f32.mrb[0].mxu0
    %v231 = vadd.f32 %v108, %v230
    %v232 = vpop.f32.mrb[0].mxu0
    %233 = vmatprep.mubr.f32.mxu0 0.0
    %234 = vmatmul.mubr.f32.gmra.mrb[0].mxu0 %v118
    %v235 = vpop.f32.mrb[0].mxu0
    %v236 = vadd.f32 %v108, %v235
    %v237 = vpop.f32.mrb[0].mxu0
    %238 = vmatprep.mubr.f32.mxu0 0.0
    %239 = vmatmul.mubr.f32.gmra.mrb[0].mxu0 %v121
    %v240 = vpop.f32.mrb[0].mxu0
    %v241 = vadd.f32 %v108, %v240
    %v242 = vpop.f32.mrb[0].mxu0
    %243 = vmatprep.mubr.f32.mxu0 0.0
    %244 = vmatmul.mubr.f32.gmra.mrb[0].mxu0 %v124
    %v245 = vpop.f32.mrb[0].mxu0
    %v246 = vadd.f32 %v108, %v245
    %v247 = vpop.f32.mrb[0].mxu0
    %248 = vmatprep.mubr.f32.mxu0 0.0
    %249 = vmatmul.mubr.f32.gmra.mrb[0].mxu0 %v127
    %v250 = vpop.f32.mrb[0].mxu0
    %v251 = vadd.f32 %v108, %v250
    %v252 = vpop.f32.mrb[0].mxu0
    %253 = vmatprep.mubr.f32.mxu0 0.0
    %254 = vmatmul.mubr.f32.gmra.mrb[0].mxu0 %v130
    %v255 = vpop.f32.mrb[0].mxu0
    %v256 = vadd.f32 %v108, %v255
    %v257 = vpop.f32.mrb[0].mxu0
    %258 = vmatprep.mubr.f32.mxu0 0.0
    %259 = vmatmul.mubr.f32.gmra.mrb[0].mxu0 %v133
    %v260 = vpop.f32.mrb[0].mxu0
    %v261 = vadd.f32 %v108, %v260
    %v262 = vpop.f32.mrb[0].mxu0
    %263 = vmatprep.mubr.f32.mxu0 0.0
    %264 = vmatmul.mubr.f32.gmra.mrb[0].mxu0 %v136
    %v265 = vpop.f32.mrb[0].mxu0
    %v266 = vadd.f32 %v108, %v265
    %v267 = vpop.f32.mrb[0].mxu0
    %268 = vmatprep.mubr.f32.mxu0 0.0
    %269 = vmatmul.mubr.f32.gmra.mrb[0].mxu0 %v139
    %v270 = vpop.f32.mrb[0].mxu0
    %v271 = vadd.f32 %v108, %v270
    %v272 = vpop.f32.mrb[0].mxu0
    %273 = vmatprep.mubr.f32.mxu0 0.0
    %274 = vmatmul.mubr.f32.gmra.mrb[0].mxu0 %v142
    %v275 = vpop.f32.mrb[0].mxu0
    %v276 = vadd.f32 %v108, %v275
    %v277 = vpop.f32.mrb[0].mxu0
    %278 = vmatprep.mubr.f32.mxu0 0.0
    %279 = vmatmul.mubr.f32.gmra.mrb[0].mxu0 %v145
    %v280 = vpop.f32.mrb[0].mxu0
    %v281 = vadd.f32 %v108, %v280
    %v282 = vpop.f32.mrb[0].mxu0
    %283 = vmatprep.mubr.f32.mxu0 0.0
    %284 = vmatmul.mubr.f32.gmra.mrb[0].mxu0 %v148
    %v285 = vpop.f32.mrb[0].mxu0
    %v286 = vadd.f32 %v108, %v285
    %v287 = vpop.f32.mrb[0].mxu0
    %288 = vmatprep.mubr.f32.mxu0 0.0
    %289 = vmatmul.mubr.f32.gmra.mrb[0].mxu0 %v151
    %v290 = vpop.f32.mrb[0].mxu0
    %v291 = vadd.f32 %v108, %v290
    %v292 = vpop.f32.mrb[0].mxu0
    %293 = vmatprep.mubr.f32.mxu0 0.0
    %294 = vmatmul.mubr.f32.gmra.mrb[0].mxu0 %v154
    %v295 = vpop.f32.mrb[0].mxu0
    %v296 = vadd.f32 %v108, %v295
    %v297 = vpop.f32.mrb[0].mxu0
    %298 = vmatprep.mubr.f32.mxu0 0.0
    %299 = vmatmul.mubr.f32.gmra.mrb[0].mxu0 %v157
    %v300 = vpop.f32.mrb[0].mxu0
    %v301 = vadd.f32 %v108, %v300
    %v302 = vpop.f32.mrb[0].mxu0
    %303 = vdwg.mxu0
    %v304 = vld [vmem:[#allocation5] sm:$0xff]
    %v305 = vld [vmem:[#allocation5 + $0x8] sm:$0xff]
    %v306 = vld [vmem:[#allocation5 + $0x10] sm:$0xff]
    %v307 = vld [vmem:[#allocation5 + $0x18] sm:$0xff]
    %v308 = vld [vmem:[#allocation5 + $0x20] sm:$0xff]
    %v309 = vld [vmem:[#allocation5 + $0x28] sm:$0xff]
    %v310 = vld [vmem:[#allocation5 + $0x30] sm:$0xff]
    %v311 = vld [vmem:[#allocation5 + $0x38] sm:$0xff]
    %v312 = vmul.f32 %v226, 0.35355338
    %v313 = vmul.f32 %v231, 0.35355338
    %v314 = vmul.f32 %v236, 0.35355338
    %v315 = vmul.f32 %v241, 0.35355338
    %v316 = vmul.f32 %v246, 0.35355338
    %v317 = vmul.f32 %v251, 0.35355338
    %v318 = vmul.f32 %v256, 0.35355338
    %v319 = vmul.f32 %v261, 0.35355338
    %v320 = vmul.f32 %v266, 0.35355338
    %v321 = vmul.f32 %v271, 0.35355338
    %v322 = vmul.f32 %v276, 0.35355338
    %v323 = vmul.f32 %v281, 0.35355338
    %v324 = vmul.f32 %v286, 0.35355338
    %v325 = vmul.f32 %v291, 0.35355338
    %v326 = vmul.f32 %v296, 0.35355338
    %v327 = vmul.f32 %v301, 0.35355338
    %330 = vrot.lane.b32.xlu0 %v226, 96
    %v331 = vpop.permute.xlu0 %330
    %332 = vrot.lane.b32.xlu0 %v231, 96
    %v333 = vpop.permute.xlu0 %332
    %vm334 = vcmask 64512
    %v336 = vsel %vm334, %v312, 0
    %v339 = vsel %vm334, %v313, 0
    %v341 = vsel %vm334, %v331, 0
    %v343 = vsel %vm334, %v333, 0
    %345 = vmatprep.subr.mxu0 0.0
    %346 = vmatpush1.xpose.msra.mxu0 %v341
    %347 = vmatprep.subr.mxu0 0.0
    %348 = vmatpush1.xpose.msra.mxu0 %v343
    %349 = vmatprep.subr.mxu0 0.0
    %350 = vmatpush1.xpose.msra.mxu0 0.0
    %351 = vmatprep.subr.mxu0 0.0
    %352 = vmatpush1.xpose.msra.mxu0 0.0
    %353 = vmatprep.subr.mxu0 0.0
    %354 = vmatpush1.xpose.msra.mxu0 0.0
    %355 = vmatprep.subr.mxu0 0.0
    %356 = vmatpush1.xpose.msra.mxu0 0.0
    %357 = vmatprep.subr.mxu0 0.0
    %358 = vmatpush1.xpose.msra.mxu0 0.0
    %359 = vmatprep.subr.mxu0 0.0
    %360 = vmatpush1.xpose.msra.mxu0 0.0
    %361 = vmatprep.subr.mxu0 0.0
    %362 = vmatpush1.xpose.msra.mxu0 0.0
    %363 = vmatprep.subr.mxu0 0.0
    %364 = vmatpush1.xpose.msra.mxu0 0.0
    %365 = vmatprep.subr.mxu0 0.0
    %366 = vmatpush1.xpose.msra.mxu0 0.0
    %367 = vmatprep.subr.mxu0 0.0
    %368 = vmatpush1.xpose.msra.mxu0 0.0
    %369 = vmatprep.subr.mxu0 0.0
    %370 = vmatpush1.xpose.msra.mxu0 0.0
    %371 = vmatprep.subr.mxu0 0.0
    %372 = vmatpush1.xpose.msra.mxu0 0.0
    %373 = vmatprep.subr.mxu0 0.0
    %374 = vmatpush1.xpose.msra.mxu0 0.0
    %375 = vmatprep.subr.mxu0 0.0
    %376 = vmatpush1.xpose.msra.mxu0 0.0
    %377 = vmatprep.subr.mxu0 0.0
    %378 = vmatpush1.xpose.msra.mxu0 0.0
    %379 = vmatprep.subr.mxu0 0.0
    %380 = vmatpush1.xpose.msra.mxu0 0.0
    %381 = vmatprep.subr.mxu0 0.0
    %382 = vmatpush1.xpose.msra.mxu0 0.0
    %383 = vmatprep.subr.mxu0 0.0
    %384 = vmatpush1.xpose.msra.mxu0 0.0
    %385 = vmatprep.subr.mxu0 0.0
    %386 = vmatpush1.xpose.msra.mxu0 0.0
    %387 = vmatprep.subr.mxu0 0.0
    %388 = vmatpush1.xpose.msra.mxu0 0.0
    %389 = vmatprep.subr.mxu0 0.0
    %390 = vmatpush1.xpose.msra.mxu0 0.0
    %391 = vmatprep.subr.mxu0 0.0
    %392 = vmatpush1.xpose.msra.mxu0 0.0
    %393 = vmatprep.subr.mxu0 0.0
    %394 = vmatpush1.xpose.msra.mxu0 0.0
    %395 = vmatprep.subr.mxu0 0.0
    %396 = vmatpush1.xpose.msra.mxu0 0.0
    %397 = vmatprep.subr.mxu0 0.0
    %398 = vmatpush1.xpose.msra.mxu0 0.0
    %399 = vmatprep.subr.mxu0 0.0
    %400 = vmatpush1.xpose.msra.mxu0 0.0
    %401 = vmatprep.subr.mxu0 0.0
    %402 = vmatpush1.xpose.msra.mxu0 0.0
    %403 = vmatprep.subr.mxu0 0.0
    %404 = vmatpush1.xpose.msra.mxu0 0.0
    %405 = vmatprep.subr.mxu0 0.0
    %406 = vmatpush1.xpose.msra.mxu0 0.0
    %407 = vmatprep.subr.mxu0 0.0
    %408 = vmatpush1.xpose.msra.mxu0 0.0
    %409 = vmatprep.mubr.f32.mxu0 0.0
    %410 = vmatmul.mubr.f32.gmra.mrb[0].mxu0 %v336
    %v411 = vpop.f32.mrb[0].mxu0
    %v412 = vadd.f32 0.0, %v411
    %v413 = vpop.f32.mrb[0].mxu0
    %414 = vmatprep.mubr.f32.mxu0 0.0
    %415 = vmatmul.mubr.f32.gmra.mrb[0].mxu0 %v339
    %v416 = vpop.f32.mrb[0].mxu0
    %v417 = vadd.f32 0.0, %v416
    %v418 = vpop.f32.mrb[0].mxu0
    %419 = vdwg.mxu0
    %422 = vrot.lane.b32.xlu0 %v236, 96
    %v423 = vpop.permute.xlu0 %422
    %424 = vrot.lane.b32.xlu0 %v241, 96
    %v425 = vpop.permute.xlu0 %424
    %v427 = vsel %vm334, %v314, 0
    %v430 = vsel %vm334, %v315, 0
    %v432 = vsel %vm334, %v423, 0
    %v434 = vsel %vm334, %v425, 0
    %436 = vmatprep.subr.mxu0 0.0
    %437 = vmatpush1.xpose.msra.mxu0 %v432
    %438 = vmatprep.subr.mxu0 0.0
    %439 = vmatpush1.xpose.msra.mxu0 %v434
    %440 = vmatprep.subr.mxu0 0.0
    %441 = vmatpush1.xpose.msra.mxu0 0.0
    %442 = vmatprep.subr.mxu0 0.0
    %443 = vmatpush1.xpose.msra.mxu0 0.0
    %444 = vmatprep.subr.mxu0 0.0
    %445 = vmatpush1.xpose.msra.mxu0 0.0
    %446 = vmatprep.subr.mxu0 0.0
    %447 = vmatpush1.xpose.msra.mxu0 0.0
    %448 = vmatprep.subr.mxu0 0.0
    %449 = vmatpush1.xpose.msra.mxu0 0.0
    %450 = vmatprep.subr.mxu0 0.0
    %451 = vmatpush1.xpose.msra.mxu0 0.0
    %452 = vmatprep.subr.mxu0 0.0
    %453 = vmatpush1.xpose.msra.mxu0 0.0
    %454 = vmatprep.subr.mxu0 0.0
    %455 = vmatpush1.xpose.msra.mxu0 0.0
    %456 = vmatprep.subr.mxu0 0.0
    %457 = vmatpush1.xpose.msra.mxu0 0.0
    %458 = vmatprep.subr.mxu0 0.0
    %459 = vmatpush1.xpose.msra.mxu0 0.0
    %460 = vmatprep.subr.mxu0 0.0
    %461 = vmatpush1.xpose.msra.mxu0 0.0
    %462 = vmatprep.subr.mxu0 0.0
    %463 = vmatpush1.xpose.msra.mxu0 0.0
    %464 = vmatprep.subr.mxu0 0.0
    %465 = vmatpush1.xpose.msra.mxu0 0.0
    %466 = vmatprep.subr.mxu0 0.0
    %467 = vmatpush1.xpose.msra.mxu0 0.0
    %468 = vmatprep.subr.mxu0 0.0
    %469 = vmatpush1.xpose.msra.mxu0 0.0
    %470 = vmatprep.subr.mxu0 0.0
    %471 = vmatpush1.xpose.msra.mxu0 0.0
    %472 = vmatprep.subr.mxu0 0.0
    %473 = vmatpush1.xpose.msra.mxu0 0.0
    %474 = vmatprep.subr.mxu0 0.0
    %475 = vmatpush1.xpose.msra.mxu0 0.0
    %476 = vmatprep.subr.mxu0 0.0
    %477 = vmatpush1.xpose.msra.mxu0 0.0
    %478 = vmatprep.subr.mxu0 0.0
    %479 = vmatpush1.xpose.msra.mxu0 0.0
    %480 = vmatprep.subr.mxu0 0.0
    %481 = vmatpush1.xpose.msra.mxu0 0.0
    %482 = vmatprep.subr.mxu0 0.0
    %483 = vmatpush1.xpose.msra.mxu0 0.0
    %484 = vmatprep.subr.mxu0 0.0
    %485 = vmatpush1.xpose.msra.mxu0 0.0
    %486 = vmatprep.subr.mxu0 0.0
    %487 = vmatpush1.xpose.msra.mxu0 0.0
    %488 = vmatprep.subr.mxu0 0.0
    %489 = vmatpush1.xpose.msra.mxu0 0.0
    %490 = vmatprep.subr.mxu0 0.0
    %491 = vmatpush1.xpose.msra.mxu0 0.0
    %492 = vmatprep.subr.mxu0 0.0
    %493 = vmatpush1.xpose.msra.mxu0 0.0
    %494 = vmatprep.subr.mxu0 0.0
    %495 = vmatpush1.xpose.msra.mxu0 0.0
    %496 = vmatprep.subr.mxu0 0.0
    %497 = vmatpush1.xpose.msra.mxu0 0.0
    %498 = vmatprep.subr.mxu0 0.0
    %499 = vmatpush1.xpose.msra.mxu0 0.0
    %500 = vmatprep.mubr.f32.mxu0 0.0
    %501 = vmatmul.mubr.f32.gmra.mrb[0].mxu0 %v427
    %v502 = vpop.f32.mrb[0].mxu0
    %v503 = vadd.f32 0.0, %v502
    %v504 = vpop.f32.mrb[0].mxu0
    %505 = vmatprep.mubr.f32.mxu0 0.0
    %506 = vmatmul.mubr.f32.gmra.mrb[0].mxu0 %v430
    %v507 = vpop.f32.mrb[0].mxu0
    %v508 = vadd.f32 0.0, %v507
    %v509 = vpop.f32.mrb[0].mxu0
    %510 = vdwg.mxu0
    %513 = vrot.lane.b32.xlu0 %v246, 96
    %v514 = vpop.permute.xlu0 %513
    %515 = vrot.lane.b32.xlu0 %v251, 96
    %v516 = vpop.permute.xlu0 %515
    %v518 = vsel %vm334, %v316, 0
    %v521 = vsel %vm334, %v317, 0
    %v523 = vsel %vm334, %v514, 0
    %v525 = vsel %vm334, %v516, 0
    %527 = vmatprep.subr.mxu0 0.0
    %528 = vmatpush1.xpose.msra.mxu0 %v523
    %529 = vmatprep.subr.mxu0 0.0
    %530 = vmatpush1.xpose.msra.mxu0 %v525
    %531 = vmatprep.subr.mxu0 0.0
    %532 = vmatpush1.xpose.msra.mxu0 0.0
    %533 = vmatprep.subr.mxu0 0.0
    %534 = vmatpush1.xpose.msra.mxu0 0.0
    %535 = vmatprep.subr.mxu0 0.0
    %536 = vmatpush1.xpose.msra.mxu0 0.0
    %537 = vmatprep.subr.mxu0 0.0
    %538 = vmatpush1.xpose.msra.mxu0 0.0
    %539 = vmatprep.subr.mxu0 0.0
    %540 = vmatpush1.xpose.msra.mxu0 0.0
    %541 = vmatprep.subr.mxu0 0.0
    %542 = vmatpush1.xpose.msra.mxu0 0.0
    %543 = vmatprep.subr.mxu0 0.0
    %544 = vmatpush1.xpose.msra.mxu0 0.0
    %545 = vmatprep.subr.mxu0 0.0
    %546 = vmatpush1.xpose.msra.mxu0 0.0
    %547 = vmatprep.subr.mxu0 0.0
    %548 = vmatpush1.xpose.msra.mxu0 0.0
    %549 = vmatprep.subr.mxu0 0.0
    %550 = vmatpush1.xpose.msra.mxu0 0.0
    %551 = vmatprep.subr.mxu0 0.0
    %552 = vmatpush1.xpose.msra.mxu0 0.0
    %553 = vmatprep.subr.mxu0 0.0
    %554 = vmatpush1.xpose.msra.mxu0 0.0
    %555 = vmatprep.subr.mxu0 0.0
    %556 = vmatpush1.xpose.msra.mxu0 0.0
    %557 = vmatprep.subr.mxu0 0.0
    %558 = vmatpush1.xpose.msra.mxu0 0.0
    %559 = vmatprep.subr.mxu0 0.0
    %560 = vmatpush1.xpose.msra.mxu0 0.0
    %561 = vmatprep.subr.mxu0 0.0
    %562 = vmatpush1.xpose.msra.mxu0 0.0
    %563 = vmatprep.subr.mxu0 0.0
    %564 = vmatpush1.xpose.msra.mxu0 0.0
    %565 = vmatprep.subr.mxu0 0.0
    %566 = vmatpush1.xpose.msra.mxu0 0.0
    %567 = vmatprep.subr.mxu0 0.0
    %568 = vmatpush1.xpose.msra.mxu0 0.0
    %569 = vmatprep.subr.mxu0 0.0
    %570 = vmatpush1.xpose.msra.mxu0 0.0
    %571 = vmatprep.subr.mxu0 0.0
    %572 = vmatpush1.xpose.msra.mxu0 0.0
    %573 = vmatprep.subr.mxu0 0.0
    %574 = vmatpush1.xpose.msra.mxu0 0.0
    %575 = vmatprep.subr.mxu0 0.0
    %576 = vmatpush1.xpose.msra.mxu0 0.0
    %577 = vmatprep.subr.mxu0 0.0
    %578 = vmatpush1.xpose.msra.mxu0 0.0
    %579 = vmatprep.subr.mxu0 0.0
    %580 = vmatpush1.xpose.msra.mxu0 0.0
    %581 = vmatprep.subr.mxu0 0.0
    %582 = vmatpush1.xpose.msra.mxu0 0.0
    %583 = vmatprep.subr.mxu0 0.0
    %584 = vmatpush1.xpose.msra.mxu0 0.0
    %585 = vmatprep.subr.mxu0 0.0
    %586 = vmatpush1.xpose.msra.mxu0 0.0
    %587 = vmatprep.subr.mxu0 0.0
    %588 = vmatpush1.xpose.msra.mxu0 0.0
    %589 = vmatprep.subr.mxu0 0.0
    %590 = vmatpush1.xpose.msra.mxu0 0.0
    %591 = vmatprep.mubr.f32.mxu0 0.0
    %592 = vmatmul.mubr.f32.gmra.mrb[0].mxu0 %v518
    %v593 = vpop.f32.mrb[0].mxu0
    %v594 = vadd.f32 0.0, %v593
    %v595 = vpop.f32.mrb[0].mxu0
    %596 = vmatprep.mubr.f32.mxu0 0.0
    %597 = vmatmul.mubr.f32.gmra.mrb[0].mxu0 %v521
    %v598 = vpop.f32.mrb[0].mxu0
    %v599 = vadd.f32 0.0, %v598
    %v600 = vpop.f32.mrb[0].mxu0
    %601 = vdwg.mxu0
    %604 = vrot.lane.b32.xlu0 %v256, 96
    %v605 = vpop.permute.xlu0 %604
    %606 = vrot.lane.b32.xlu0 %v261, 96
    %v607 = vpop.permute.xlu0 %606
    %v609 = vsel %vm334, %v318, 0
    %v612 = vsel %vm334, %v319, 0
    %v614 = vsel %vm334, %v605, 0
    %v616 = vsel %vm334, %v607, 0
    %618 = vmatprep.subr.mxu0 0.0
    %619 = vmatpush1.xpose.msra.mxu0 %v614
    %620 = vmatprep.subr.mxu0 0.0
    %621 = vmatpush1.xpose.msra.mxu0 %v616
    %622 = vmatprep.subr.mxu0 0.0
    %623 = vmatpush1.xpose.msra.mxu0 0.0
    %624 = vmatprep.subr.mxu0 0.0
    %625 = vmatpush1.xpose.msra.mxu0 0.0
    %626 = vmatprep.subr.mxu0 0.0
    %627 = vmatpush1.xpose.msra.mxu0 0.0
    %628 = vmatprep.subr.mxu0 0.0
    %629 = vmatpush1.xpose.msra.mxu0 0.0
    %630 = vmatprep.subr.mxu0 0.0
    %631 = vmatpush1.xpose.msra.mxu0 0.0
    %632 = vmatprep.subr.mxu0 0.0
    %633 = vmatpush1.xpose.msra.mxu0 0.0
    %634 = vmatprep.subr.mxu0 0.0
    %635 = vmatpush1.xpose.msra.mxu0 0.0
    %636 = vmatprep.subr.mxu0 0.0
    %637 = vmatpush1.xpose.msra.mxu0 0.0
    %638 = vmatprep.subr.mxu0 0.0
    %639 = vmatpush1.xpose.msra.mxu0 0.0
    %640 = vmatprep.subr.mxu0 0.0
    %641 = vmatpush1.xpose.msra.mxu0 0.0
    %642 = vmatprep.subr.mxu0 0.0
    %643 = vmatpush1.xpose.msra.mxu0 0.0
    %644 = vmatprep.subr.mxu0 0.0
    %645 = vmatpush1.xpose.msra.mxu0 0.0
    %646 = vmatprep.subr.mxu0 0.0
    %647 = vmatpush1.xpose.msra.mxu0 0.0
    %648 = vmatprep.subr.mxu0 0.0
    %649 = vmatpush1.xpose.msra.mxu0 0.0
    %650 = vmatprep.subr.mxu0 0.0
    %651 = vmatpush1.xpose.msra.mxu0 0.0
    %652 = vmatprep.subr.mxu0 0.0
    %653 = vmatpush1.xpose.msra.mxu0 0.0
    %654 = vmatprep.subr.mxu0 0.0
    %655 = vmatpush1.xpose.msra.mxu0 0.0
    %656 = vmatprep.subr.mxu0 0.0
    %657 = vmatpush1.xpose.msra.mxu0 0.0
    %658 = vmatprep.subr.mxu0 0.0
    %659 = vmatpush1.xpose.msra.mxu0 0.0
    %660 = vmatprep.subr.mxu0 0.0
    %661 = vmatpush1.xpose.msra.mxu0 0.0
    %662 = vmatprep.subr.mxu0 0.0
    %663 = vmatpush1.xpose.msra.mxu0 0.0
    %664 = vmatprep.subr.mxu0 0.0
    %665 = vmatpush1.xpose.msra.mxu0 0.0
    %666 = vmatprep.subr.mxu0 0.0
    %667 = vmatpush1.xpose.msra.mxu0 0.0
    %668 = vmatprep.subr.mxu0 0.0
    %669 = vmatpush1.xpose.msra.mxu0 0.0
    %670 = vmatprep.subr.mxu0 0.0
    %671 = vmatpush1.xpose.msra.mxu0 0.0
    %672 = vmatprep.subr.mxu0 0.0
    %673 = vmatpush1.xpose.msra.mxu0 0.0
    %674 = vmatprep.subr.mxu0 0.0
    %675 = vmatpush1.xpose.msra.mxu0 0.0
    %676 = vmatprep.subr.mxu0 0.0
    %677 = vmatpush1.xpose.msra.mxu0 0.0
    %678 = vmatprep.subr.mxu0 0.0
    %679 = vmatpush1.xpose.msra.mxu0 0.0
    %680 = vmatprep.subr.mxu0 0.0
    %681 = vmatpush1.xpose.msra.mxu0 0.0
    %682 = vmatprep.mubr.f32.mxu0 0.0
    %683 = vmatmul.mubr.f32.gmra.mrb[0].mxu0 %v609
    %v684 = vpop.f32.mrb[0].mxu0
    %v685 = vadd.f32 0.0, %v684
    %v686 = vpop.f32.mrb[0].mxu0
    %687 = vmatprep.mubr.f32.mxu0 0.0
    %688 = vmatmul.mubr.f32.gmra.mrb[0].mxu0 %v612
    %v689 = vpop.f32.mrb[0].mxu0
    %v690 = vadd.f32 0.0, %v689
    %v691 = vpop.f32.mrb[0].mxu0
    %692 = vdwg.mxu0
    %695 = vrot.lane.b32.xlu0 %v266, 96
    %v696 = vpop.permute.xlu0 %695
    %697 = vrot.lane.b32.xlu0 %v271, 96
    %v698 = vpop.permute.xlu0 %697
    %v700 = vsel %vm334, %v320, 0
    %v703 = vsel %vm334, %v321, 0
    %v705 = vsel %vm334, %v696, 0
    %v707 = vsel %vm334, %v698, 0
    %709 = vmatprep.subr.mxu0 0.0
    %710 = vmatpush1.xpose.msra.mxu0 %v705
    %711 = vmatprep.subr.mxu0 0.0
    %712 = vmatpush1.xpose.msra.mxu0 %v707
    %713 = vmatprep.subr.mxu0 0.0
    %714 = vmatpush1.xpose.msra.mxu0 0.0
    %715 = vmatprep.subr.mxu0 0.0
    %716 = vmatpush1.xpose.msra.mxu0 0.0
    %717 = vmatprep.subr.mxu0 0.0
    %718 = vmatpush1.xpose.msra.mxu0 0.0
    %719 = vmatprep.subr.mxu0 0.0
    %720 = vmatpush1.xpose.msra.mxu0 0.0
    %721 = vmatprep.subr.mxu0 0.0
    %722 = vmatpush1.xpose.msra.mxu0 0.0
    %723 = vmatprep.subr.mxu0 0.0
    %724 = vmatpush1.xpose.msra.mxu0 0.0
    %725 = vmatprep.subr.mxu0 0.0
    %726 = vmatpush1.xpose.msra.mxu0 0.0
    %727 = vmatprep.subr.mxu0 0.0
    %728 = vmatpush1.xpose.msra.mxu0 0.0
    %729 = vmatprep.subr.mxu0 0.0
    %730 = vmatpush1.xpose.msra.mxu0 0.0
    %731 = vmatprep.subr.mxu0 0.0
    %732 = vmatpush1.xpose.msra.mxu0 0.0
    %733 = vmatprep.subr.mxu0 0.0
    %734 = vmatpush1.xpose.msra.mxu0 0.0
    %735 = vmatprep.subr.mxu0 0.0
    %736 = vmatpush1.xpose.msra.mxu0 0.0
    %737 = vmatprep.subr.mxu0 0.0
    %738 = vmatpush1.xpose.msra.mxu0 0.0
    %739 = vmatprep.subr.mxu0 0.0
    %740 = vmatpush1.xpose.msra.mxu0 0.0
    %741 = vmatprep.subr.mxu0 0.0
    %742 = vmatpush1.xpose.msra.mxu0 0.0
    %743 = vmatprep.subr.mxu0 0.0
    %744 = vmatpush1.xpose.msra.mxu0 0.0
    %745 = vmatprep.subr.mxu0 0.0
    %746 = vmatpush1.xpose.msra.mxu0 0.0
    %747 = vmatprep.subr.mxu0 0.0
    %748 = vmatpush1.xpose.msra.mxu0 0.0
    %749 = vmatprep.subr.mxu0 0.0
    %750 = vmatpush1.xpose.msra.mxu0 0.0
    %751 = vmatprep.subr.mxu0 0.0
    %752 = vmatpush1.xpose.msra.mxu0 0.0
    %753 = vmatprep.subr.mxu0 0.0
    %754 = vmatpush1.xpose.msra.mxu0 0.0
    %755 = vmatprep.subr.mxu0 0.0
    %756 = vmatpush1.xpose.msra.mxu0 0.0
    %757 = vmatprep.subr.mxu0 0.0
    %758 = vmatpush1.xpose.msra.mxu0 0.0
    %759 = vmatprep.subr.mxu0 0.0
    %760 = vmatpush1.xpose.msra.mxu0 0.0
    %761 = vmatprep.subr.mxu0 0.0
    %762 = vmatpush1.xpose.msra.mxu0 0.0
    %763 = vmatprep.subr.mxu0 0.0
    %764 = vmatpush1.xpose.msra.mxu0 0.0
    %765 = vmatprep.subr.mxu0 0.0
    %766 = vmatpush1.xpose.msra.mxu0 0.0
    %767 = vmatprep.subr.mxu0 0.0
    %768 = vmatpush1.xpose.msra.mxu0 0.0
    %769 = vmatprep.subr.mxu0 0.0
    %770 = vmatpush1.xpose.msra.mxu0 0.0
    %771 = vmatprep.subr.mxu0 0.0
    %772 = vmatpush1.xpose.msra.mxu0 0.0
    %773 = vmatprep.mubr.f32.mxu0 0.0
    %774 = vmatmul.mubr.f32.gmra.mrb[0].mxu0 %v700
    %v775 = vpop.f32.mrb[0].mxu0
    %v776 = vadd.f32 0.0, %v775
    %v777 = vpop.f32.mrb[0].mxu0
    %778 = vmatprep.mubr.f32.mxu0 0.0
    %779 = vmatmul.mubr.f32.gmra.mrb[0].mxu0 %v703
    %v780 = vpop.f32.mrb[0].mxu0
    %v781 = vadd.f32 0.0, %v780
    %v782 = vpop.f32.mrb[0].mxu0
    %783 = vdwg.mxu0
    %786 = vrot.lane.b32.xlu0 %v276, 96
    %v787 = vpop.permute.xlu0 %786
    %788 = vrot.lane.b32.xlu0 %v281, 96
    %v789 = vpop.permute.xlu0 %788
    %v791 = vsel %vm334, %v322, 0
    %v794 = vsel %vm334, %v323, 0
    %v796 = vsel %vm334, %v787, 0
    %v798 = vsel %vm334, %v789, 0
    %800 = vmatprep.subr.mxu0 0.0
    %801 = vmatpush1.xpose.msra.mxu0 %v796
    %802 = vmatprep.subr.mxu0 0.0
    %803 = vmatpush1.xpose.msra.mxu0 %v798
    %804 = vmatprep.subr.mxu0 0.0
    %805 = vmatpush1.xpose.msra.mxu0 0.0
    %806 = vmatprep.subr.mxu0 0.0
    %807 = vmatpush1.xpose.msra.mxu0 0.0
    %808 = vmatprep.subr.mxu0 0.0
    %809 = vmatpush1.xpose.msra.mxu0 0.0
    %810 = vmatprep.subr.mxu0 0.0
    %811 = vmatpush1.xpose.msra.mxu0 0.0
    %812 = vmatprep.subr.mxu0 0.0
    %813 = vmatpush1.xpose.msra.mxu0 0.0
    %814 = vmatprep.subr.mxu0 0.0
    %815 = vmatpush1.xpose.msra.mxu0 0.0
    %816 = vmatprep.subr.mxu0 0.0
    %817 = vmatpush1.xpose.msra.mxu0 0.0
    %818 = vmatprep.subr.mxu0 0.0
    %819 = vmatpush1.xpose.msra.mxu0 0.0
    %820 = vmatprep.subr.mxu0 0.0
    %821 = vmatpush1.xpose.msra.mxu0 0.0
    %822 = vmatprep.subr.mxu0 0.0
    %823 = vmatpush1.xpose.msra.mxu0 0.0
    %824 = vmatprep.subr.mxu0 0.0
    %825 = vmatpush1.xpose.msra.mxu0 0.0
    %826 = vmatprep.subr.mxu0 0.0
    %827 = vmatpush1.xpose.msra.mxu0 0.0
    %828 = vmatprep.subr.mxu0 0.0
    %829 = vmatpush1.xpose.msra.mxu0 0.0
    %830 = vmatprep.subr.mxu0 0.0
    %831 = vmatpush1.xpose.msra.mxu0 0.0
    %832 = vmatprep.subr.mxu0 0.0
    %833 = vmatpush1.xpose.msra.mxu0 0.0
    %834 = vmatprep.subr.mxu0 0.0
    %835 = vmatpush1.xpose.msra.mxu0 0.0
    %836 = vmatprep.subr.mxu0 0.0
    %837 = vmatpush1.xpose.msra.mxu0 0.0
    %838 = vmatprep.subr.mxu0 0.0
    %839 = vmatpush1.xpose.msra.mxu0 0.0
    %840 = vmatprep.subr.mxu0 0.0
    %841 = vmatpush1.xpose.msra.mxu0 0.0
    %842 = vmatprep.subr.mxu0 0.0
    %843 = vmatpush1.xpose.msra.mxu0 0.0
    %844 = vmatprep.subr.mxu0 0.0
    %845 = vmatpush1.xpose.msra.mxu0 0.0
    %846 = vmatprep.subr.mxu0 0.0
    %847 = vmatpush1.xpose.msra.mxu0 0.0
    %848 = vmatprep.subr.mxu0 0.0
    %849 = vmatpush1.xpose.msra.mxu0 0.0
    %850 = vmatprep.subr.mxu0 0.0
    %851 = vmatpush1.xpose.msra.mxu0 0.0
    %852 = vmatprep.subr.mxu0 0.0
    %853 = vmatpush1.xpose.msra.mxu0 0.0
    %854 = vmatprep.subr.mxu0 0.0
    %855 = vmatpush1.xpose.msra.mxu0 0.0
    %856 = vmatprep.subr.mxu0 0.0
    %857 = vmatpush1.xpose.msra.mxu0 0.0
    %858 = vmatprep.subr.mxu0 0.0
    %859 = vmatpush1.xpose.msra.mxu0 0.0
    %860 = vmatprep.subr.mxu0 0.0
    %861 = vmatpush1.xpose.msra.mxu0 0.0
    %862 = vmatprep.subr.mxu0 0.0
    %863 = vmatpush1.xpose.msra.mxu0 0.0
    %864 = vmatprep.mubr.f32.mxu0 0.0
    %865 = vmatmul.mubr.f32.gmra.mrb[0].mxu0 %v791
    %v866 = vpop.f32.mrb[0].mxu0
    %v867 = vadd.f32 0.0, %v866
    %v868 = vpop.f32.mrb[0].mxu0
    %869 = vmatprep.mubr.f32.mxu0 0.0
    %870 = vmatmul.mubr.f32.gmra.mrb[0].mxu0 %v794
    %v871 = vpop.f32.mrb[0].mxu0
    %v872 = vadd.f32 0.0, %v871
    %v873 = vpop.f32.mrb[0].mxu0
    %874 = vdwg.mxu0
    %877 = vrot.lane.b32.xlu0 %v286, 96
    %v878 = vpop.permute.xlu0 %877
    %879 = vrot.lane.b32.xlu0 %v291, 96
    %v880 = vpop.permute.xlu0 %879
    %v882 = vsel %vm334, %v324, 0
    %v885 = vsel %vm334, %v325, 0
    %v887 = vsel %vm334, %v878, 0
    %v889 = vsel %vm334, %v880, 0
    %891 = vmatprep.subr.mxu0 0.0
    %892 = vmatpush1.xpose.msra.mxu0 %v887
    %893 = vmatprep.subr.mxu0 0.0
    %894 = vmatpush1.xpose.msra.mxu0 %v889
    %895 = vmatprep.subr.mxu0 0.0
    %896 = vmatpush1.xpose.msra.mxu0 0.0
    %897 = vmatprep.subr.mxu0 0.0
    %898 = vmatpush1.xpose.msra.mxu0 0.0
    %899 = vmatprep.subr.mxu0 0.0
    %900 = vmatpush1.xpose.msra.mxu0 0.0
    %901 = vmatprep.subr.mxu0 0.0
    %902 = vmatpush1.xpose.msra.mxu0 0.0
    %903 = vmatprep.subr.mxu0 0.0
    %904 = vmatpush1.xpose.msra.mxu0 0.0
    %905 = vmatprep.subr.mxu0 0.0
    %906 = vmatpush1.xpose.msra.mxu0 0.0
    %907 = vmatprep.subr.mxu0 0.0
    %908 = vmatpush1.xpose.msra.mxu0 0.0
    %909 = vmatprep.subr.mxu0 0.0
    %910 = vmatpush1.xpose.msra.mxu0 0.0
    %911 = vmatprep.subr.mxu0 0.0
    %912 = vmatpush1.xpose.msra.mxu0 0.0
    %913 = vmatprep.subr.mxu0 0.0
    %914 = vmatpush1.xpose.msra.mxu0 0.0
    %915 = vmatprep.subr.mxu0 0.0
    %916 = vmatpush1.xpose.msra.mxu0 0.0
    %917 = vmatprep.subr.mxu0 0.0
    %918 = vmatpush1.xpose.msra.mxu0 0.0
    %919 = vmatprep.subr.mxu0 0.0
    %920 = vmatpush1.xpose.msra.mxu0 0.0
    %921 = vmatprep.subr.mxu0 0.0
    %922 = vmatpush1.xpose.msra.mxu0 0.0
    %923 = vmatprep.subr.mxu0 0.0
    %924 = vmatpush1.xpose.msra.mxu0 0.0
    %925 = vmatprep.subr.mxu0 0.0
    %926 = vmatpush1.xpose.msra.mxu0 0.0
    %927 = vmatprep.subr.mxu0 0.0
    %928 = vmatpush1.xpose.msra.mxu0 0.0
    %929 = vmatprep.subr.mxu0 0.0
    %930 = vmatpush1.xpose.msra.mxu0 0.0
    %931 = vmatprep.subr.mxu0 0.0
    %932 = vmatpush1.xpose.msra.mxu0 0.0
    %933 = vmatprep.subr.mxu0 0.0
    %934 = vmatpush1.xpose.msra.mxu0 0.0
    %935 = vmatprep.subr.mxu0 0.0
    %936 = vmatpush1.xpose.msra.mxu0 0.0
    %937 = vmatprep.subr.mxu0 0.0
    %938 = vmatpush1.xpose.msra.mxu0 0.0
    %939 = vmatprep.subr.mxu0 0.0
    %940 = vmatpush1.xpose.msra.mxu0 0.0
    %941 = vmatprep.subr.mxu0 0.0
    %942 = vmatpush1.xpose.msra.mxu0 0.0
    %943 = vmatprep.subr.mxu0 0.0
    %944 = vmatpush1.xpose.msra.mxu0 0.0
    %945 = vmatprep.subr.mxu0 0.0
    %946 = vmatpush1.xpose.msra.mxu0 0.0
    %947 = vmatprep.subr.mxu0 0.0
    %948 = vmatpush1.xpose.msra.mxu0 0.0
    %949 = vmatprep.subr.mxu0 0.0
    %950 = vmatpush1.xpose.msra.mxu0 0.0
    %951 = vmatprep.subr.mxu0 0.0
    %952 = vmatpush1.xpose.msra.mxu0 0.0
    %953 = vmatprep.subr.mxu0 0.0
    %954 = vmatpush1.xpose.msra.mxu0 0.0
    %955 = vmatprep.mubr.f32.mxu0 0.0
    %956 = vmatmul.mubr.f32.gmra.mrb[0].mxu0 %v882
    %v957 = vpop.f32.mrb[0].mxu0
    %v958 = vadd.f32 0.0, %v957
    %v959 = vpop.f32.mrb[0].mxu0
    %960 = vmatprep.mubr.f32.mxu0 0.0
    %961 = vmatmul.mubr.f32.gmra.mrb[0].mxu0 %v885
    %v962 = vpop.f32.mrb[0].mxu0
    %v963 = vadd.f32 0.0, %v962
    %v964 = vpop.f32.mrb[0].mxu0
    %965 = vdwg.mxu0
    %968 = vrot.lane.b32.xlu0 %v296, 96
    %v969 = vpop.permute.xlu0 %968
    %970 = vrot.lane.b32.xlu0 %v301, 96
    %v971 = vpop.permute.xlu0 %970
    %v973 = vsel %vm334, %v326, 0
    %v976 = vsel %vm334, %v327, 0
    %v978 = vsel %vm334, %v969, 0
    %v980 = vsel %vm334, %v971, 0
    %982 = vmatprep.subr.mxu0 0.0
    %983 = vmatpush1.xpose.msra.mxu0 %v978
    %984 = vmatprep.subr.mxu0 0.0
    %985 = vmatpush1.xpose.msra.mxu0 %v980
    %986 = vmatprep.subr.mxu0 0.0
    %987 = vmatpush1.xpose.msra.mxu0 0.0
    %988 = vmatprep.subr.mxu0 0.0
    %989 = vmatpush1.xpose.msra.mxu0 0.0
    %990 = vmatprep.subr.mxu0 0.0
    %991 = vmatpush1.xpose.msra.mxu0 0.0
    %992 = vmatprep.subr.mxu0 0.0
    %993 = vmatpush1.xpose.msra.mxu0 0.0
    %994 = vmatprep.subr.mxu0 0.0
    %995 = vmatpush1.xpose.msra.mxu0 0.0
    %996 = vmatprep.subr.mxu0 0.0
    %997 = vmatpush1.xpose.msra.mxu0 0.0
    %998 = vmatprep.subr.mxu0 0.0
    %999 = vmatpush1.xpose.msra.mxu0 0.0
    %1000 = vmatprep.subr.mxu0 0.0
    %1001 = vmatpush1.xpose.msra.mxu0 0.0
    %1002 = vmatprep.subr.mxu0 0.0
    %1003 = vmatpush1.xpose.msra.mxu0 0.0
    %1004 = vmatprep.subr.mxu0 0.0
    %1005 = vmatpush1.xpose.msra.mxu0 0.0
    %1006 = vmatprep.subr.mxu0 0.0
    %1007 = vmatpush1.xpose.msra.mxu0 0.0
    %1008 = vmatprep.subr.mxu0 0.0
    %1009 = vmatpush1.xpose.msra.mxu0 0.0
    %1010 = vmatprep.subr.mxu0 0.0
    %1011 = vmatpush1.xpose.msra.mxu0 0.0
    %1012 = vmatprep.subr.mxu0 0.0
    %1013 = vmatpush1.xpose.msra.mxu0 0.0
    %1014 = vmatprep.subr.mxu0 0.0
    %1015 = vmatpush1.xpose.msra.mxu0 0.0
    %1016 = vmatprep.subr.mxu0 0.0
    %1017 = vmatpush1.xpose.msra.mxu0 0.0
    %1018 = vmatprep.subr.mxu0 0.0
    %1019 = vmatpush1.xpose.msra.mxu0 0.0
    %1020 = vmatprep.subr.mxu0 0.0
    %1021 = vmatpush1.xpose.msra.mxu0 0.0
    %1022 = vmatprep.subr.mxu0 0.0
    %1023 = vmatpush1.xpose.msra.mxu0 0.0
    %1024 = vmatprep.subr.mxu0 0.0
    %1025 = vmatpush1.xpose.msra.mxu0 0.0
    %1026 = vmatprep.subr.mxu0 0.0
    %1027 = vmatpush1.xpose.msra.mxu0 0.0
    %1028 = vmatprep.subr.mxu0 0.0
    %1029 = vmatpush1.xpose.msra.mxu0 0.0
    %1030 = vmatprep.subr.mxu0 0.0
    %1031 = vmatpush1.xpose.msra.mxu0 0.0
    %1032 = vmatprep.subr.mxu0 0.0
    %1033 = vmatpush1.xpose.msra.mxu0 0.0
    %1034 = vmatprep.subr.mxu0 0.0
    %1035 = vmatpush1.xpose.msra.mxu0 0.0
    %1036 = vmatprep.subr.mxu0 0.0
    %1037 = vmatpush1.xpose.msra.mxu0 0.0
    %1038 = vmatprep.subr.mxu0 0.0
    %1039 = vmatpush1.xpose.msra.mxu0 0.0
    %1040 = vmatprep.subr.mxu0 0.0
    %1041 = vmatpush1.xpose.msra.mxu0 0.0
    %1042 = vmatprep.subr.mxu0 0.0
    %1043 = vmatpush1.xpose.msra.mxu0 0.0
    %1044 = vmatprep.subr.mxu0 0.0
    %1045 = vmatpush1.xpose.msra.mxu0 0.0
    %1046 = vmatprep.mubr.f32.mxu0 0.0
    %1047 = vmatmul.mubr.f32.gmra.mrb[0].mxu0 %v973
    %v1048 = vpop.f32.mrb[0].mxu0
    %v1049 = vadd.f32 0.0, %v1048
    %v1050 = vpop.f32.mrb[0].mxu0
    %1051 = vmatprep.mubr.f32.mxu0 0.0
    %1052 = vmatmul.mubr.f32.gmra.mrb[0].mxu0 %v976
    %v1053 = vpop.f32.mrb[0].mxu0
    %v1054 = vadd.f32 0.0, %v1053
    %v1055 = vpop.f32.mrb[0].mxu0
    %1056 = vdwg.mxu0
    %v1057 = vadd.f32 %v412, %v304
    %v1058 = vadd.f32 %v417, %v305
    %v1059 = vadd.f32 %v503, %v304
    %v1060 = vadd.f32 %v508, %v305
    %v1061 = vadd.f32 %v594, %v304
    %v1062 = vadd.f32 %v599, %v305
    %v1063 = vadd.f32 %v685, %v304
    %v1064 = vadd.f32 %v690, %v305
    %v1065 = vadd.f32 %v776, %v304
    %v1066 = vadd.f32 %v781, %v305
    %v1067 = vadd.f32 %v867, %v304
    %v1068 = vadd.f32 %v872, %v305
    %v1069 = vadd.f32 %v958, %v304
    %v1070 = vadd.f32 %v963, %v305
    %v1071 = vadd.f32 %v1049, %v304
    %v1072 = vadd.f32 %v1054, %v305
    %vm1073 = vcmask 130048
    %v1074 = vsel %vm1073, %v1057, -inf
    %1075 = vmax.xlane.f32.xlu0 %v1074
    %v1076 = vpop.xlane.xlu0 %1075
    %v1077 = vsel %vm1073, %v1058, -inf
    %1078 = vmax.xlane.f32.xlu0 %v1077
    %v1079 = vpop.xlane.xlu0 %1078
    %v1080 = vsel %vm1073, %v1059, -inf
    %1081 = vmax.xlane.f32.xlu0 %v1080
    %v1082 = vpop.xlane.xlu0 %1081
    %v1083 = vsel %vm1073, %v1060, -inf
    %1084 = vmax.xlane.f32.xlu0 %v1083
    %v1085 = vpop.xlane.xlu0 %1084
    %v1086 = vsel %vm1073, %v1061, -inf
    %1087 = vmax.xlane.f32.xlu0 %v1086
    %v1088 = vpop.xlane.xlu0 %1087
    %v1089 = vsel %vm1073, %v1062, -inf
    %1090 = vmax.xlane.f32.xlu0 %v1089
    %v1091 = vpop.xlane.xlu0 %1090
    %v1092 = vsel %vm1073, %v1063, -inf
    %1093 = vmax.xlane.f32.xlu0 %v1092
    %v1094 = vpop.xlane.xlu0 %1093
    %v1095 = vsel %vm1073, %v1064, -inf
    %1096 = vmax.xlane.f32.xlu0 %v1095
    %v1097 = vpop.xlane.xlu0 %1096
    %v1098 = vsel %vm1073, %v1065, -inf
    %1099 = vmax.xlane.f32.xlu0 %v1098
    %v1100 = vpop.xlane.xlu0 %1099
    %v1101 = vsel %vm1073, %v1066, -inf
    %1102 = vmax.xlane.f32.xlu0 %v1101
    %v1103 = vpop.xlane.xlu0 %1102
    %v1104 = vsel %vm1073, %v1067, -inf
    %1105 = vmax.xlane.f32.xlu0 %v1104
    %v1106 = vpop.xlane.xlu0 %1105
    %v1107 = vsel %vm1073, %v1068, -inf
    %1108 = vmax.xlane.f32.xlu0 %v1107
    %v1109 = vpop.xlane.xlu0 %1108
    %v1110 = vsel %vm1073, %v1069, -inf
    %1111 = vmax.xlane.f32.xlu0 %v1110
    %v1112 = vpop.xlane.xlu0 %1111
    %v1113 = vsel %vm1073, %v1070, -inf
    %1114 = vmax.xlane.f32.xlu0 %v1113
    %v1115 = vpop.xlane.xlu0 %1114
    %v1116 = vsel %vm1073, %v1071, -inf
    %1117 = vmax.xlane.f32.xlu0 %v1116
    %v1118 = vpop.xlane.xlu0 %1117
    %v1119 = vsel %vm1073, %v1072, -inf
    %1120 = vmax.xlane.f32.xlu0 %v1119
    %v1121 = vpop.xlane.xlu0 %1120
    %v1122 = vsub.f32 %v1057, %v1076
    %v1123 = vsub.f32 %v1058, %v1079
    %v1124 = vsub.f32 %v1059, %v1082
    %v1125 = vsub.f32 %v1060, %v1085
    %v1126 = vsub.f32 %v1061, %v1088
    %v1127 = vsub.f32 %v1062, %v1091
    %v1128 = vsub.f32 %v1063, %v1094
    %v1129 = vsub.f32 %v1064, %v1097
    %v1130 = vsub.f32 %v1065, %v1100
    %v1131 = vsub.f32 %v1066, %v1103
    %v1132 = vsub.f32 %v1067, %v1106
    %v1133 = vsub.f32 %v1068, %v1109
    %v1134 = vsub.f32 %v1069, %v1112
    %v1135 = vsub.f32 %v1070, %v1115
    %v1136 = vsub.f32 %v1071, %v1118
    %v1137 = vsub.f32 %v1072, %v1121
    %v1138 = vmul.f32 %v1122, 1.442695
    %v1139 = vpow.pop %v1138
    %v1140 = vmul.f32 %v1123, 1.442695
    %v1141 = vpow.pop %v1140
    %v1142 = vmul.f32 %v1124, 1.442695
    %v1143 = vpow.pop %v1142
    %v1144 = vmul.f32 %v1125, 1.442695
    %v1145 = vpow.pop %v1144
    %v1146 = vmul.f32 %v1126, 1.442695
    %v1147 = vpow.pop %v1146
    %v1148 = vmul.f32 %v1127, 1.442695
    %v1149 = vpow.pop %v1148
    %v1150 = vmul.f32 %v1128, 1.442695
    %v1151 = vpow.pop %v1150
    %v1152 = vmul.f32 %v1129, 1.442695
    %v1153 = vpow.pop %v1152
    %v1154 = vmul.f32 %v1130, 1.442695
    %v1155 = vpow.pop %v1154
    %v1156 = vmul.f32 %v1131, 1.442695
    %v1157 = vpow.pop %v1156
    %v1158 = vmul.f32 %v1132, 1.442695
    %v1159 = vpow.pop %v1158
    %v1160 = vmul.f32 %v1133, 1.442695
    %v1161 = vpow.pop %v1160
    %v1162 = vmul.f32 %v1134, 1.442695
    %v1163 = vpow.pop %v1162
    %v1164 = vmul.f32 %v1135, 1.442695
    %v1165 = vpow.pop %v1164
    %v1166 = vmul.f32 %v1136, 1.442695
    %v1167 = vpow.pop %v1166
    %v1168 = vmul.f32 %v1137, 1.442695
    %v1169 = vpow.pop %v1168
    %v1170 = vsel %vm1073, %v1139, 0.0
    %1171 = vadd.xlane.f32.xlu0 %v1170
    %v1172 = vpop.xlane.xlu0 %1171
    %v1173 = vsel %vm1073, %v1141, 0.0
    %1174 = vadd.xlane.f32.xlu0 %v1173
    %v1175 = vpop.xlane.xlu0 %1174
    %v1176 = vsel %vm1073, %v1143, 0.0
    %1177 = vadd.xlane.f32.xlu0 %v1176
    %v1178 = vpop.xlane.xlu0 %1177
    %v1179 = vsel %vm1073, %v1145, 0.0
    %1180 = vadd.xlane.f32.xlu0 %v1179
    %v1181 = vpop.xlane.xlu0 %1180
    %v1182 = vsel %vm1073, %v1147, 0.0
    %1183 = vadd.xlane.f32.xlu0 %v1182
    %v1184 = vpop.xlane.xlu0 %1183
    %v1185 = vsel %vm1073, %v1149, 0.0
    %1186 = vadd.xlane.f32.xlu0 %v1185
    %v1187 = vpop.xlane.xlu0 %1186
    %v1188 = vsel %vm1073, %v1151, 0.0
    %1189 = vadd.xlane.f32.xlu0 %v1188
    %v1190 = vpop.xlane.xlu0 %1189
    %v1191 = vsel %vm1073, %v1153, 0.0
    %1192 = vadd.xlane.f32.xlu0 %v1191
    %v1193 = vpop.xlane.xlu0 %1192
    %v1194 = vsel %vm1073, %v1155, 0.0
    %1195 = vadd.xlane.f32.xlu0 %v1194
    %v1196 = vpop.xlane.xlu0 %1195
    %v1197 = vsel %vm1073, %v1157, 0.0
    %1198 = vadd.xlane.f32.xlu0 %v1197
    %v1199 = vpop.xlane.xlu0 %1198
    %v1200 = vsel %vm1073, %v1159, 0.0
    %1201 = vadd.xlane.f32.xlu0 %v1200
    %v1202 = vpop.xlane.xlu0 %1201
    %v1203 = vsel %vm1073, %v1161, 0.0
    %1204 = vadd.xlane.f32.xlu0 %v1203
    %v1205 = vpop.xlane.xlu0 %1204
    %v1206 = vsel %vm1073, %v1163, 0.0
    %1207 = vadd.xlane.f32.xlu0 %v1206
    %v1208 = vpop.xlane.xlu0 %1207
    %v1209 = vsel %vm1073, %v1165, 0.0
    %1210 = vadd.xlane.f32.xlu0 %v1209
    %v1211 = vpop.xlane.xlu0 %1210
    %v1212 = vsel %vm1073, %v1167, 0.0
    %1213 = vadd.xlane.f32.xlu0 %v1212
    %v1214 = vpop.xlane.xlu0 %1213
    %v1215 = vsel %vm1073, %v1169, 0.0
    %1216 = vadd.xlane.f32.xlu0 %v1215
    %v1217 = vpop.xlane.xlu0 %1216
    %v1218 = vrcp.pop %v1172
    %v1219 = vrcp.pop %v1175
    %v1220 = vrcp.pop %v1178
    %v1221 = vrcp.pop %v1181
    %v1222 = vrcp.pop %v1184
    %v1223 = vrcp.pop %v1187
    %v1224 = vrcp.pop %v1190
    %v1225 = vrcp.pop %v1193
    %v1226 = vrcp.pop %v1196
    %v1227 = vrcp.pop %v1199
    %v1228 = vrcp.pop %v1202
    %v1229 = vrcp.pop %v1205
    %v1230 = vrcp.pop %v1208
    %v1231 = vrcp.pop %v1211
    %v1232 = vrcp.pop %v1214
    %v1233 = vrcp.pop %v1217
    %v1234 = vmul.f32 %v1139, %v1218
    %v1235 = vmul.f32 %v1141, %v1219
    %v1236 = vmul.f32 %v1143, %v1220
    %v1237 = vmul.f32 %v1145, %v1221
    %v1238 = vmul.f32 %v1147, %v1222
    %v1239 = vmul.f32 %v1149, %v1223
    %v1240 = vmul.f32 %v1151, %v1224
    %v1241 = vmul.f32 %v1153, %v1225
    %v1242 = vmul.f32 %v1155, %v1226
    %v1243 = vmul.f32 %v1157, %v1227
    %v1244 = vmul.f32 %v1159, %v1228
    %v1245 = vmul.f32 %v1161, %v1229
    %v1246 = vmul.f32 %v1163, %v1230
    %v1247 = vmul.f32 %v1165, %v1231
    %v1248 = vmul.f32 %v1167, %v1232
    %v1249 = vmul.f32 %v1169, %v1233
    %1250 = vrot.lane.b32.xlu0 %v226, 64
    %v1251 = vpop.permute.xlu0 %1250
    %1252 = vrot.lane.b32.xlu0 %v231, 64
    %v1253 = vpop.permute.xlu0 %1252
    %v1257 = vsel %vm1073, %v1234, 0
    %v1260 = vsel %vm1073, %v1235, 0
    %1262 = vmatprep.subr.mxu0 0.0
    %1263 = vmatpush1.msra.mxu0 %v1251
    %1264 = vmatprep.subr.mxu0 0.0
    %1265 = vmatpush1.msra.mxu0 %v1253
    %1266 = vmatprep.subr.mxu0 0.0
    %1267 = vmatpush1.msra.mxu0 0.0
    %1268 = vmatprep.subr.mxu0 0.0
    %1269 = vmatpush1.msra.mxu0 0.0
    %1270 = vmatprep.subr.mxu0 0.0
    %1271 = vmatpush1.msra.mxu0 0.0
    %1272 = vmatprep.subr.mxu0 0.0
    %1273 = vmatpush1.msra.mxu0 0.0
    %1274 = vmatprep.subr.mxu0 0.0
    %1275 = vmatpush1.msra.mxu0 0.0
    %1276 = vmatprep.subr.mxu0 0.0
    %1277 = vmatpush1.msra.mxu0 0.0
    %1278 = vmatprep.subr.mxu0 0.0
    %1279 = vmatpush1.msra.mxu0 0.0
    %1280 = vmatprep.subr.mxu0 0.0
    %1281 = vmatpush1.msra.mxu0 0.0
    %1282 = vmatprep.subr.mxu0 0.0
    %1283 = vmatpush1.msra.mxu0 0.0
    %1284 = vmatprep.subr.mxu0 0.0
    %1285 = vmatpush1.msra.mxu0 0.0
    %1286 = vmatprep.subr.mxu0 0.0
    %1287 = vmatpush1.msra.mxu0 0.0
    %1288 = vmatprep.subr.mxu0 0.0
    %1289 = vmatpush1.msra.mxu0 0.0
    %1290 = vmatprep.subr.mxu0 0.0
    %1291 = vmatpush1.msra.mxu0 0.0
    %1292 = vmatprep.subr.mxu0 0.0
    %1293 = vmatpush1.msra.mxu0 0.0
    %1294 = vmatprep.subr.mxu0 0.0
    %1295 = vmatpush1.msra.mxu0 0.0
    %1296 = vmatprep.subr.mxu0 0.0
    %1297 = vmatpush1.msra.mxu0 0.0
    %1298 = vmatprep.subr.mxu0 0.0
    %1299 = vmatpush1.msra.mxu0 0.0
    %1300 = vmatprep.subr.mxu0 0.0
    %1301 = vmatpush1.msra.mxu0 0.0
    %1302 = vmatprep.subr.mxu0 0.0
    %1303 = vmatpush1.msra.mxu0 0.0
    %1304 = vmatprep.subr.mxu0 0.0
    %1305 = vmatpush1.msra.mxu0 0.0
    %1306 = vmatprep.subr.mxu0 0.0
    %1307 = vmatpush1.msra.mxu0 0.0
    %1308 = vmatprep.subr.mxu0 0.0
    %1309 = vmatpush1.msra.mxu0 0.0
    %1310 = vmatprep.subr.mxu0 0.0
    %1311 = vmatpush1.msra.mxu0 0.0
    %1312 = vmatprep.subr.mxu0 0.0
    %1313 = vmatpush1.msra.mxu0 0.0
    %1314 = vmatprep.subr.mxu0 0.0
    %1315 = vmatpush1.msra.mxu0 0.0
    %1316 = vmatprep.subr.mxu0 0.0
    %1317 = vmatpush1.msra.mxu0 0.0
    %1318 = vmatprep.subr.mxu0 0.0
    %1319 = vmatpush1.msra.mxu0 0.0
    %1320 = vmatprep.subr.mxu0 0.0
    %1321 = vmatpush1.msra.mxu0 0.0
    %1322 = vmatprep.subr.mxu0 0.0
    %1323 = vmatpush1.msra.mxu0 0.0
    %1324 = vmatprep.subr.mxu0 0.0
    %1325 = vmatpush1.msra.mxu0 0.0
    %1326 = vmatprep.mubr.f32.mxu0 0.0
    %1327 = vmatmul.mubr.f32.gmra.mrb[0].mxu0 %v1257
    %v1328 = vpop.f32.mrb[0].mxu0
    %v1329 = vadd.f32 0.0, %v1328
    %v1330 = vpop.f32.mrb[0].mxu0
    %1331 = vmatprep.mubr.f32.mxu0 0.0
    %1332 = vmatmul.mubr.f32.gmra.mrb[0].mxu0 %v1260
    %v1333 = vpop.f32.mrb[0].mxu0
    %v1334 = vadd.f32 0.0, %v1333
    %v1335 = vpop.f32.mrb[0].mxu0
    %1336 = vdwg.mxu0
    %1337 = vrot.lane.b32.xlu0 %v236, 64
    %v1338 = vpop.permute.xlu0 %1337
    %1339 = vrot.lane.b32.xlu0 %v241, 64
    %v1340 = vpop.permute.xlu0 %1339
    %v1344 = vsel %vm1073, %v1236, 0
    %v1347 = vsel %vm1073, %v1237, 0
    %1349 = vmatprep.subr.mxu0 0.0
    %1350 = vmatpush1.msra.mxu0 %v1338
    %1351 = vmatprep.subr.mxu0 0.0
    %1352 = vmatpush1.msra.mxu0 %v1340
    %1353 = vmatprep.subr.mxu0 0.0
    %1354 = vmatpush1.msra.mxu0 0.0
    %1355 = vmatprep.subr.mxu0 0.0
    %1356 = vmatpush1.msra.mxu0 0.0
    %1357 = vmatprep.subr.mxu0 0.0
    %1358 = vmatpush1.msra.mxu0 0.0
    %1359 = vmatprep.subr.mxu0 0.0
    %1360 = vmatpush1.msra.mxu0 0.0
    %1361 = vmatprep.subr.mxu0 0.0
    %1362 = vmatpush1.msra.mxu0 0.0
    %1363 = vmatprep.subr.mxu0 0.0
    %1364 = vmatpush1.msra.mxu0 0.0
    %1365 = vmatprep.subr.mxu0 0.0
    %1366 = vmatpush1.msra.mxu0 0.0
    %1367 = vmatprep.subr.mxu0 0.0
    %1368 = vmatpush1.msra.mxu0 0.0
    %1369 = vmatprep.subr.mxu0 0.0
    %1370 = vmatpush1.msra.mxu0 0.0
    %1371 = vmatprep.subr.mxu0 0.0
    %1372 = vmatpush1.msra.mxu0 0.0
    %1373 = vmatprep.subr.mxu0 0.0
    %1374 = vmatpush1.msra.mxu0 0.0
    %1375 = vmatprep.subr.mxu0 0.0
    %1376 = vmatpush1.msra.mxu0 0.0
    %1377 = vmatprep.subr.mxu0 0.0
    %1378 = vmatpush1.msra.mxu0 0.0
    %1379 = vmatprep.subr.mxu0 0.0
    %1380 = vmatpush1.msra.mxu0 0.0
    %1381 = vmatprep.subr.mxu0 0.0
    %1382 = vmatpush1.msra.mxu0 0.0
    %1383 = vmatprep.subr.mxu0 0.0
    %1384 = vmatpush1.msra.mxu0 0.0
    %1385 = vmatprep.subr.mxu0 0.0
    %1386 = vmatpush1.msra.mxu0 0.0
    %1387 = vmatprep.subr.mxu0 0.0
    %1388 = vmatpush1.msra.mxu0 0.0
    %1389 = vmatprep.subr.mxu0 0.0
    %1390 = vmatpush1.msra.mxu0 0.0
    %1391 = vmatprep.subr.mxu0 0.0
    %1392 = vmatpush1.msra.mxu0 0.0
    %1393 = vmatprep.subr.mxu0 0.0
    %1394 = vmatpush1.msra.mxu0 0.0
    %1395 = vmatprep.subr.mxu0 0.0
    %1396 = vmatpush1.msra.mxu0 0.0
    %1397 = vmatprep.subr.mxu0 0.0
    %1398 = vmatpush1.msra.mxu0 0.0
    %1399 = vmatprep.subr.mxu0 0.0
    %1400 = vmatpush1.msra.mxu0 0.0
    %1401 = vmatprep.subr.mxu0 0.0
    %1402 = vmatpush1.msra.mxu0 0.0
    %1403 = vmatprep.subr.mxu0 0.0
    %1404 = vmatpush1.msra.mxu0 0.0
    %1405 = vmatprep.subr.mxu0 0.0
    %1406 = vmatpush1.msra.mxu0 0.0
    %1407 = vmatprep.subr.mxu0 0.0
    %1408 = vmatpush1.msra.mxu0 0.0
    %1409 = vmatprep.subr.mxu0 0.0
    %1410 = vmatpush1.msra.mxu0 0.0
    %1411 = vmatprep.subr.mxu0 0.0
    %1412 = vmatpush1.msra.mxu0 0.0
    %1413 = vmatprep.mubr.f32.mxu0 0.0
    %1414 = vmatmul.mubr.f32.gmra.mrb[0].mxu0 %v1344
    %v1415 = vpop.f32.mrb[0].mxu0
    %v1416 = vadd.f32 0.0, %v1415
    %v1417 = vpop.f32.mrb[0].mxu0
    %1418 = vmatprep.mubr.f32.mxu0 0.0
    %1419 = vmatmul.mubr.f32.gmra.mrb[0].mxu0 %v1347
    %v1420 = vpop.f32.mrb[0].mxu0
    %v1421 = vadd.f32 0.0, %v1420
    %v1422 = vpop.f32.mrb[0].mxu0
    %1423 = vdwg.mxu0
    %1424 = vrot.lane.b32.xlu0 %v246, 64
    %v1425 = vpop.permute.xlu0 %1424
    %1426 = vrot.lane.b32.xlu0 %v251, 64
    %v1427 = vpop.permute.xlu0 %1426
    %v1431 = vsel %vm1073, %v1238, 0
    %v1434 = vsel %vm1073, %v1239, 0
    %1436 = vmatprep.subr.mxu0 0.0
    %1437 = vmatpush1.msra.mxu0 %v1425
    %1438 = vmatprep.subr.mxu0 0.0
    %1439 = vmatpush1.msra.mxu0 %v1427
    %1440 = vmatprep.subr.mxu0 0.0
    %1441 = vmatpush1.msra.mxu0 0.0
    %1442 = vmatprep.subr.mxu0 0.0
    %1443 = vmatpush1.msra.mxu0 0.0
    %1444 = vmatprep.subr.mxu0 0.0
    %1445 = vmatpush1.msra.mxu0 0.0
    %1446 = vmatprep.subr.mxu0 0.0
    %1447 = vmatpush1.msra.mxu0 0.0
    %1448 = vmatprep.subr.mxu0 0.0
    %1449 = vmatpush1.msra.mxu0 0.0
    %1450 = vmatprep.subr.mxu0 0.0
    %1451 = vmatpush1.msra.mxu0 0.0
    %1452 = vmatprep.subr.mxu0 0.0
    %1453 = vmatpush1.msra.mxu0 0.0
    %1454 = vmatprep.subr.mxu0 0.0
    %1455 = vmatpush1.msra.mxu0 0.0
    %1456 = vmatprep.subr.mxu0 0.0
    %1457 = vmatpush1.msra.mxu0 0.0
    %1458 = vmatprep.subr.mxu0 0.0
    %1459 = vmatpush1.msra.mxu0 0.0
    %1460 = vmatprep.subr.mxu0 0.0
    %1461 = vmatpush1.msra.mxu0 0.0
    %1462 = vmatprep.subr.mxu0 0.0
    %1463 = vmatpush1.msra.mxu0 0.0
    %1464 = vmatprep.subr.mxu0 0.0
    %1465 = vmatpush1.msra.mxu0 0.0
    %1466 = vmatprep.subr.mxu0 0.0
    %1467 = vmatpush1.msra.mxu0 0.0
    %1468 = vmatprep.subr.mxu0 0.0
    %1469 = vmatpush1.msra.mxu0 0.0
    %1470 = vmatprep.subr.mxu0 0.0
    %1471 = vmatpush1.msra.mxu0 0.0
    %1472 = vmatprep.subr.mxu0 0.0
    %1473 = vmatpush1.msra.mxu0 0.0
    %1474 = vmatprep.subr.mxu0 0.0
    %1475 = vmatpush1.msra.mxu0 0.0
    %1476 = vmatprep.subr.mxu0 0.0
    %1477 = vmatpush1.msra.mxu0 0.0
    %1478 = vmatprep.subr.mxu0 0.0
    %1479 = vmatpush1.msra.mxu0 0.0
    %1480 = vmatprep.subr.mxu0 0.0
    %1481 = vmatpush1.msra.mxu0 0.0
    %1482 = vmatprep.subr.mxu0 0.0
    %1483 = vmatpush1.msra.mxu0 0.0
    %1484 = vmatprep.subr.mxu0 0.0
    %1485 = vmatpush1.msra.mxu0 0.0
    %1486 = vmatprep.subr.mxu0 0.0
    %1487 = vmatpush1.msra.mxu0 0.0
    %1488 = vmatprep.subr.mxu0 0.0
    %1489 = vmatpush1.msra.mxu0 0.0
    %1490 = vmatprep.subr.mxu0 0.0
    %1491 = vmatpush1.msra.mxu0 0.0
    %1492 = vmatprep.subr.mxu0 0.0
    %1493 = vmatpush1.msra.mxu0 0.0
    %1494 = vmatprep.subr.mxu0 0.0
    %1495 = vmatpush1.msra.mxu0 0.0
    %1496 = vmatprep.subr.mxu0 0.0
    %1497 = vmatpush1.msra.mxu0 0.0
    %1498 = vmatprep.subr.mxu0 0.0
    %1499 = vmatpush1.msra.mxu0 0.0
    %1500 = vmatprep.mubr.f32.mxu0 0.0
    %1501 = vmatmul.mubr.f32.gmra.mrb[0].mxu0 %v1431
    %v1502 = vpop.f32.mrb[0].mxu0
    %v1503 = vadd.f32 0.0, %v1502
    %v1504 = vpop.f32.mrb[0].mxu0
    %1505 = vmatprep.mubr.f32.mxu0 0.0
    %1506 = vmatmul.mubr.f32.gmra.mrb[0].mxu0 %v1434
    %v1507 = vpop.f32.mrb[0].mxu0
    %v1508 = vadd.f32 0.0, %v1507
    %v1509 = vpop.f32.mrb[0].mxu0
    %1510 = vdwg.mxu0
    %1511 = vrot.lane.b32.xlu0 %v256, 64
    %v1512 = vpop.permute.xlu0 %1511
    %1513 = vrot.lane.b32.xlu0 %v261, 64
    %v1514 = vpop.permute.xlu0 %1513
    %v1518 = vsel %vm1073, %v1240, 0
    %v1521 = vsel %vm1073, %v1241, 0
    %1523 = vmatprep.subr.mxu0 0.0
    %1524 = vmatpush1.msra.mxu0 %v1512
    %1525 = vmatprep.subr.mxu0 0.0
    %1526 = vmatpush1.msra.mxu0 %v1514
    %1527 = vmatprep.subr.mxu0 0.0
    %1528 = vmatpush1.msra.mxu0 0.0
    %1529 = vmatprep.subr.mxu0 0.0
    %1530 = vmatpush1.msra.mxu0 0.0
    %1531 = vmatprep.subr.mxu0 0.0
    %1532 = vmatpush1.msra.mxu0 0.0
    %1533 = vmatprep.subr.mxu0 0.0
    %1534 = vmatpush1.msra.mxu0 0.0
    %1535 = vmatprep.subr.mxu0 0.0
    %1536 = vmatpush1.msra.mxu0 0.0
    %1537 = vmatprep.subr.mxu0 0.0
    %1538 = vmatpush1.msra.mxu0 0.0
    %1539 = vmatprep.subr.mxu0 0.0
    %1540 = vmatpush1.msra.mxu0 0.0
    %1541 = vmatprep.subr.mxu0 0.0
    %1542 = vmatpush1.msra.mxu0 0.0
    %1543 = vmatprep.subr.mxu0 0.0
    %1544 = vmatpush1.msra.mxu0 0.0
    %1545 = vmatprep.subr.mxu0 0.0
    %1546 = vmatpush1.msra.mxu0 0.0
    %1547 = vmatprep.subr.mxu0 0.0
    %1548 = vmatpush1.msra.mxu0 0.0
    %1549 = vmatprep.subr.mxu0 0.0
    %1550 = vmatpush1.msra.mxu0 0.0
    %1551 = vmatprep.subr.mxu0 0.0
    %1552 = vmatpush1.msra.mxu0 0.0
    %1553 = vmatprep.subr.mxu0 0.0
    %1554 = vmatpush1.msra.mxu0 0.0
    %1555 = vmatprep.subr.mxu0 0.0
    %1556 = vmatpush1.msra.mxu0 0.0
    %1557 = vmatprep.subr.mxu0 0.0
    %1558 = vmatpush1.msra.mxu0 0.0
    %1559 = vmatprep.subr.mxu0 0.0
    %1560 = vmatpush1.msra.mxu0 0.0
    %1561 = vmatprep.subr.mxu0 0.0
    %1562 = vmatpush1.msra.mxu0 0.0
    %1563 = vmatprep.subr.mxu0 0.0
    %1564 = vmatpush1.msra.mxu0 0.0
    %1565 = vmatprep.subr.mxu0 0.0
    %1566 = vmatpush1.msra.mxu0 0.0
    %1567 = vmatprep.subr.mxu0 0.0
    %1568 = vmatpush1.msra.mxu0 0.0
    %1569 = vmatprep.subr.mxu0 0.0
    %1570 = vmatpush1.msra.mxu0 0.0
    %1571 = vmatprep.subr.mxu0 0.0
    %1572 = vmatpush1.msra.mxu0 0.0
    %1573 = vmatprep.subr.mxu0 0.0
    %1574 = vmatpush1.msra.mxu0 0.0
    %1575 = vmatprep.subr.mxu0 0.0
    %1576 = vmatpush1.msra.mxu0 0.0
    %1577 = vmatprep.subr.mxu0 0.0
    %1578 = vmatpush1.msra.mxu0 0.0
    %1579 = vmatprep.subr.mxu0 0.0
    %1580 = vmatpush1.msra.mxu0 0.0
    %1581 = vmatprep.subr.mxu0 0.0
    %1582 = vmatpush1.msra.mxu0 0.0
    %1583 = vmatprep.subr.mxu0 0.0
    %1584 = vmatpush1.msra.mxu0 0.0
    %1585 = vmatprep.subr.mxu0 0.0
    %1586 = vmatpush1.msra.mxu0 0.0
    %1587 = vmatprep.mubr.f32.mxu0 0.0
    %1588 = vmatmul.mubr.f32.gmra.mrb[0].mxu0 %v1518
    %v1589 = vpop.f32.mrb[0].mxu0
    %v1590 = vadd.f32 0.0, %v1589
    %v1591 = vpop.f32.mrb[0].mxu0
    %1592 = vmatprep.mubr.f32.mxu0 0.0
    %1593 = vmatmul.mubr.f32.gmra.mrb[0].mxu0 %v1521
    %v1594 = vpop.f32.mrb[0].mxu0
    %v1595 = vadd.f32 0.0, %v1594
    %v1596 = vpop.f32.mrb[0].mxu0
    %1597 = vdwg.mxu0
    %1598 = vrot.lane.b32.xlu0 %v266, 64
    %v1599 = vpop.permute.xlu0 %1598
    %1600 = vrot.lane.b32.xlu0 %v271, 64
    %v1601 = vpop.permute.xlu0 %1600
    %v1605 = vsel %vm1073, %v1242, 0
    %v1608 = vsel %vm1073, %v1243, 0
    %1610 = vmatprep.subr.mxu0 0.0
    %1611 = vmatpush1.msra.mxu0 %v1599
    %1612 = vmatprep.subr.mxu0 0.0
    %1613 = vmatpush1.msra.mxu0 %v1601
    %1614 = vmatprep.subr.mxu0 0.0
    %1615 = vmatpush1.msra.mxu0 0.0
    %1616 = vmatprep.subr.mxu0 0.0
    %1617 = vmatpush1.msra.mxu0 0.0
    %1618 = vmatprep.subr.mxu0 0.0
    %1619 = vmatpush1.msra.mxu0 0.0
    %1620 = vmatprep.subr.mxu0 0.0
    %1621 = vmatpush1.msra.mxu0 0.0
    %1622 = vmatprep.subr.mxu0 0.0
    %1623 = vmatpush1.msra.mxu0 0.0
    %1624 = vmatprep.subr.mxu0 0.0
    %1625 = vmatpush1.msra.mxu0 0.0
    %1626 = vmatprep.subr.mxu0 0.0
    %1627 = vmatpush1.msra.mxu0 0.0
    %1628 = vmatprep.subr.mxu0 0.0
    %1629 = vmatpush1.msra.mxu0 0.0
    %1630 = vmatprep.subr.mxu0 0.0
    %1631 = vmatpush1.msra.mxu0 0.0
    %1632 = vmatprep.subr.mxu0 0.0
    %1633 = vmatpush1.msra.mxu0 0.0
    %1634 = vmatprep.subr.mxu0 0.0
    %1635 = vmatpush1.msra.mxu0 0.0
    %1636 = vmatprep.subr.mxu0 0.0
    %1637 = vmatpush1.msra.mxu0 0.0
    %1638 = vmatprep.subr.mxu0 0.0
    %1639 = vmatpush1.msra.mxu0 0.0
    %1640 = vmatprep.subr.mxu0 0.0
    %1641 = vmatpush1.msra.mxu0 0.0
    %1642 = vmatprep.subr.mxu0 0.0
    %1643 = vmatpush1.msra.mxu0 0.0
    %1644 = vmatprep.subr.mxu0 0.0
    %1645 = vmatpush1.msra.mxu0 0.0
    %1646 = vmatprep.subr.mxu0 0.0
    %1647 = vmatpush1.msra.mxu0 0.0
    %1648 = vmatprep.subr.mxu0 0.0
    %1649 = vmatpush1.msra.mxu0 0.0
    %1650 = vmatprep.subr.mxu0 0.0
    %1651 = vmatpush1.msra.mxu0 0.0
    %1652 = vmatprep.subr.mxu0 0.0
    %1653 = vmatpush1.msra.mxu0 0.0
    %1654 = vmatprep.subr.mxu0 0.0
    %1655 = vmatpush1.msra.mxu0 0.0
    %1656 = vmatprep.subr.mxu0 0.0
    %1657 = vmatpush1.msra.mxu0 0.0
    %1658 = vmatprep.subr.mxu0 0.0
    %1659 = vmatpush1.msra.mxu0 0.0
    %1660 = vmatprep.subr.mxu0 0.0
    %1661 = vmatpush1.msra.mxu0 0.0
    %1662 = vmatprep.subr.mxu0 0.0
    %1663 = vmatpush1.msra.mxu0 0.0
    %1664 = vmatprep.subr.mxu0 0.0
    %1665 = vmatpush1.msra.mxu0 0.0
    %1666 = vmatprep.subr.mxu0 0.0
    %1667 = vmatpush1.msra.mxu0 0.0
    %1668 = vmatprep.subr.mxu0 0.0
    %1669 = vmatpush1.msra.mxu0 0.0
    %1670 = vmatprep.subr.mxu0 0.0
    %1671 = vmatpush1.msra.mxu0 0.0
    %1672 = vmatprep.subr.mxu0 0.0
    %1673 = vmatpush1.msra.mxu0 0.0
    %1674 = vmatprep.mubr.f32.mxu0 0.0
    %1675 = vmatmul.mubr.f32.gmra.mrb[0].mxu0 %v1605
    %v1676 = vpop.f32.mrb[0].mxu0
    %v1677 = vadd.f32 0.0, %v1676
    %v1678 = vpop.f32.mrb[0].mxu0
    %1679 = vmatprep.mubr.f32.mxu0 0.0
    %1680 = vmatmul.mubr.f32.gmra.mrb[0].mxu0 %v1608
    %v1681 = vpop.f32.mrb[0].mxu0
    %v1682 = vadd.f32 0.0, %v1681
    %v1683 = vpop.f32.mrb[0].mxu0
    %1684 = vdwg.mxu0
    %1685 = vrot.lane.b32.xlu0 %v276, 64
    %v1686 = vpop.permute.xlu0 %1685
    %1687 = vrot.lane.b32.xlu0 %v281, 64
    %v1688 = vpop.permute.xlu0 %1687
    %v1692 = vsel %vm1073, %v1244, 0
    %v1695 = vsel %vm1073, %v1245, 0
    %1697 = vmatprep.subr.mxu0 0.0
    %1698 = vmatpush1.msra.mxu0 %v1686
    %1699 = vmatprep.subr.mxu0 0.0
    %1700 = vmatpush1.msra.mxu0 %v1688
    %1701 = vmatprep.subr.mxu0 0.0
    %1702 = vmatpush1.msra.mxu0 0.0
    %1703 = vmatprep.subr.mxu0 0.0
    %1704 = vmatpush1.msra.mxu0 0.0
    %1705 = vmatprep.subr.mxu0 0.0
    %1706 = vmatpush1.msra.mxu0 0.0
    %1707 = vmatprep.subr.mxu0 0.0
    %1708 = vmatpush1.msra.mxu0 0.0
    %1709 = vmatprep.subr.mxu0 0.0
    %1710 = vmatpush1.msra.mxu0 0.0
    %1711 = vmatprep.subr.mxu0 0.0
    %1712 = vmatpush1.msra.mxu0 0.0
    %1713 = vmatprep.subr.mxu0 0.0
    %1714 = vmatpush1.msra.mxu0 0.0
    %1715 = vmatprep.subr.mxu0 0.0
    %1716 = vmatpush1.msra.mxu0 0.0
    %1717 = vmatprep.subr.mxu0 0.0
    %1718 = vmatpush1.msra.mxu0 0.0
    %1719 = vmatprep.subr.mxu0 0.0
    %1720 = vmatpush1.msra.mxu0 0.0
    %1721 = vmatprep.subr.mxu0 0.0
    %1722 = vmatpush1.msra.mxu0 0.0
    %1723 = vmatprep.subr.mxu0 0.0
    %1724 = vmatpush1.msra.mxu0 0.0
    %1725 = vmatprep.subr.mxu0 0.0
    %1726 = vmatpush1.msra.mxu0 0.0
    %1727 = vmatprep.subr.mxu0 0.0
    %1728 = vmatpush1.msra.mxu0 0.0
    %1729 = vmatprep.subr.mxu0 0.0
    %1730 = vmatpush1.msra.mxu0 0.0
    %1731 = vmatprep.subr.mxu0 0.0
    %1732 = vmatpush1.msra.mxu0 0.0
    %1733 = vmatprep.subr.mxu0 0.0
    %1734 = vmatpush1.msra.mxu0 0.0
    %1735 = vmatprep.subr.mxu0 0.0
    %1736 = vmatpush1.msra.mxu0 0.0
    %1737 = vmatprep.subr.mxu0 0.0
    %1738 = vmatpush1.msra.mxu0 0.0
    %1739 = vmatprep.subr.mxu0 0.0
    %1740 = vmatpush1.msra.mxu0 0.0
    %1741 = vmatprep.subr.mxu0 0.0
    %1742 = vmatpush1.msra.mxu0 0.0
    %1743 = vmatprep.subr.mxu0 0.0
    %1744 = vmatpush1.msra.mxu0 0.0
    %1745 = vmatprep.subr.mxu0 0.0
    %1746 = vmatpush1.msra.mxu0 0.0
    %1747 = vmatprep.subr.mxu0 0.0
    %1748 = vmatpush1.msra.mxu0 0.0
    %1749 = vmatprep.subr.mxu0 0.0
    %1750 = vmatpush1.msra.mxu0 0.0
    %1751 = vmatprep.subr.mxu0 0.0
    %1752 = vmatpush1.msra.mxu0 0.0
    %1753 = vmatprep.subr.mxu0 0.0
    %1754 = vmatpush1.msra.mxu0 0.0
    %1755 = vmatprep.subr.mxu0 0.0
    %1756 = vmatpush1.msra.mxu0 0.0
    %1757 = vmatprep.subr.mxu0 0.0
    %1758 = vmatpush1.msra.mxu0 0.0
    %1759 = vmatprep.subr.mxu0 0.0
    %1760 = vmatpush1.msra.mxu0 0.0
    %1761 = vmatprep.mubr.f32.mxu0 0.0
    %1762 = vmatmul.mubr.f32.gmra.mrb[0].mxu0 %v1692
    %v1763 = vpop.f32.mrb[0].mxu0
    %v1764 = vadd.f32 0.0, %v1763
    %v1765 = vpop.f32.mrb[0].mxu0
    %1766 = vmatprep.mubr.f32.mxu0 0.0
    %1767 = vmatmul.mubr.f32.gmra.mrb[0].mxu0 %v1695
    %v1768 = vpop.f32.mrb[0].mxu0
    %v1769 = vadd.f32 0.0, %v1768
    %v1770 = vpop.f32.mrb[0].mxu0
    %1771 = vdwg.mxu0
    %1772 = vrot.lane.b32.xlu0 %v286, 64
    %v1773 = vpop.permute.xlu0 %1772
    %1774 = vrot.lane.b32.xlu0 %v291, 64
    %v1775 = vpop.permute.xlu0 %1774
    %v1779 = vsel %vm1073, %v1246, 0
    %v1782 = vsel %vm1073, %v1247, 0
    %1784 = vmatprep.subr.mxu0 0.0
    %1785 = vmatpush1.msra.mxu0 %v1773
    %1786 = vmatprep.subr.mxu0 0.0
    %1787 = vmatpush1.msra.mxu0 %v1775
    %1788 = vmatprep.subr.mxu0 0.0
    %1789 = vmatpush1.msra.mxu0 0.0
    %1790 = vmatprep.subr.mxu0 0.0
    %1791 = vmatpush1.msra.mxu0 0.0
    %1792 = vmatprep.subr.mxu0 0.0
    %1793 = vmatpush1.msra.mxu0 0.0
    %1794 = vmatprep.subr.mxu0 0.0
    %1795 = vmatpush1.msra.mxu0 0.0
    %1796 = vmatprep.subr.mxu0 0.0
    %1797 = vmatpush1.msra.mxu0 0.0
    %1798 = vmatprep.subr.mxu0 0.0
    %1799 = vmatpush1.msra.mxu0 0.0
    %1800 = vmatprep.subr.mxu0 0.0
    %1801 = vmatpush1.msra.mxu0 0.0
    %1802 = vmatprep.subr.mxu0 0.0
    %1803 = vmatpush1.msra.mxu0 0.0
    %1804 = vmatprep.subr.mxu0 0.0
    %1805 = vmatpush1.msra.mxu0 0.0
    %1806 = vmatprep.subr.mxu0 0.0
    %1807 = vmatpush1.msra.mxu0 0.0
    %1808 = vmatprep.subr.mxu0 0.0
    %1809 = vmatpush1.msra.mxu0 0.0
    %1810 = vmatprep.subr.mxu0 0.0
    %1811 = vmatpush1.msra.mxu0 0.0
    %1812 = vmatprep.subr.mxu0 0.0
    %1813 = vmatpush1.msra.mxu0 0.0
    %1814 = vmatprep.subr.mxu0 0.0
    %1815 = vmatpush1.msra.mxu0 0.0
    %1816 = vmatprep.subr.mxu0 0.0
    %1817 = vmatpush1.msra.mxu0 0.0
    %1818 = vmatprep.subr.mxu0 0.0
    %1819 = vmatpush1.msra.mxu0 0.0
    %1820 = vmatprep.subr.mxu0 0.0
    %1821 = vmatpush1.msra.mxu0 0.0
    %1822 = vmatprep.subr.mxu0 0.0
    %1823 = vmatpush1.msra.mxu0 0.0
    %1824 = vmatprep.subr.mxu0 0.0
    %1825 = vmatpush1.msra.mxu0 0.0
    %1826 = vmatprep.subr.mxu0 0.0
    %1827 = vmatpush1.msra.mxu0 0.0
    %1828 = vmatprep.subr.mxu0 0.0
    %1829 = vmatpush1.msra.mxu0 0.0
    %1830 = vmatprep.subr.mxu0 0.0
    %1831 = vmatpush1.msra.mxu0 0.0
    %1832 = vmatprep.subr.mxu0 0.0
    %1833 = vmatpush1.msra.mxu0 0.0
    %1834 = vmatprep.subr.mxu0 0.0
    %1835 = vmatpush1.msra.mxu0 0.0
    %1836 = vmatprep.subr.mxu0 0.0
    %1837 = vmatpush1.msra.mxu0 0.0
    %1838 = vmatprep.subr.mxu0 0.0
    %1839 = vmatpush1.msra.mxu0 0.0
    %1840 = vmatprep.subr.mxu0 0.0
    %1841 = vmatpush1.msra.mxu0 0.0
    %1842 = vmatprep.subr.mxu0 0.0
    %1843 = vmatpush1.msra.mxu0 0.0
    %1844 = vmatprep.subr.mxu0 0.0
    %1845 = vmatpush1.msra.mxu0 0.0
    %1846 = vmatprep.subr.mxu0 0.0
    %1847 = vmatpush1.msra.mxu0 0.0
    %1848 = vmatprep.mubr.f32.mxu0 0.0
    %1849 = vmatmul.mubr.f32.gmra.mrb[0].mxu0 %v1779
    %v1850 = vpop.f32.mrb[0].mxu0
    %v1851 = vadd.f32 0.0, %v1850
    %v1852 = vpop.f32.mrb[0].mxu0
    %1853 = vmatprep.mubr.f32.mxu0 0.0
    %1854 = vmatmul.mubr.f32.gmra.mrb[0].mxu0 %v1782
    %v1855 = vpop.f32.mrb[0].mxu0
    %v1856 = vadd.f32 0.0, %v1855
    %v1857 = vpop.f32.mrb[0].mxu0
    %1858 = vdwg.mxu0
    %1859 = vrot.lane.b32.xlu0 %v296, 64
    %v1860 = vpop.permute.xlu0 %1859
    %1861 = vrot.lane.b32.xlu0 %v301, 64
    %v1862 = vpop.permute.xlu0 %1861
    %v1866 = vsel %vm1073, %v1248, 0
    %v1869 = vsel %vm1073, %v1249, 0
    %1871 = vmatprep.subr.mxu0 0.0
    %1872 = vmatpush1.msra.mxu0 %v1860
    %1873 = vmatprep.subr.mxu0 0.0
    %1874 = vmatpush1.msra.mxu0 %v1862
    %1875 = vmatprep.subr.mxu0 0.0
    %1876 = vmatpush1.msra.mxu0 0.0
    %1877 = vmatprep.subr.mxu0 0.0
    %1878 = vmatpush1.msra.mxu0 0.0
    %1879 = vmatprep.subr.mxu0 0.0
    %1880 = vmatpush1.msra.mxu0 0.0
    %1881 = vmatprep.subr.mxu0 0.0
    %1882 = vmatpush1.msra.mxu0 0.0
    %1883 = vmatprep.subr.mxu0 0.0
    %1884 = vmatpush1.msra.mxu0 0.0
    %1885 = vmatprep.subr.mxu0 0.0
    %1886 = vmatpush1.msra.mxu0 0.0
    %1887 = vmatprep.subr.mxu0 0.0
    %1888 = vmatpush1.msra.mxu0 0.0
    %1889 = vmatprep.subr.mxu0 0.0
    %1890 = vmatpush1.msra.mxu0 0.0
    %1891 = vmatprep.subr.mxu0 0.0
    %1892 = vmatpush1.msra.mxu0 0.0
    %1893 = vmatprep.subr.mxu0 0.0
    %1894 = vmatpush1.msra.mxu0 0.0
    %1895 = vmatprep.subr.mxu0 0.0
    %1896 = vmatpush1.msra.mxu0 0.0
    %1897 = vmatprep.subr.mxu0 0.0
    %1898 = vmatpush1.msra.mxu0 0.0
    %1899 = vmatprep.subr.mxu0 0.0
    %1900 = vmatpush1.msra.mxu0 0.0
    %1901 = vmatprep.subr.mxu0 0.0
    %1902 = vmatpush1.msra.mxu0 0.0
    %1903 = vmatprep.subr.mxu0 0.0
    %1904 = vmatpush1.msra.mxu0 0.0
    %1905 = vmatprep.subr.mxu0 0.0
    %1906 = vmatpush1.msra.mxu0 0.0
    %1907 = vmatprep.subr.mxu0 0.0
    %1908 = vmatpush1.msra.mxu0 0.0
    %1909 = vmatprep.subr.mxu0 0.0
    %1910 = vmatpush1.msra.mxu0 0.0
    %1911 = vmatprep.subr.mxu0 0.0
    %1912 = vmatpush1.msra.mxu0 0.0
    %1913 = vmatprep.subr.mxu0 0.0
    %1914 = vmatpush1.msra.mxu0 0.0
    %1915 = vmatprep.subr.mxu0 0.0
    %1916 = vmatpush1.msra.mxu0 0.0
    %1917 = vmatprep.subr.mxu0 0.0
    %1918 = vmatpush1.msra.mxu0 0.0
    %1919 = vmatprep.subr.mxu0 0.0
    %1920 = vmatpush1.msra.mxu0 0.0
    %1921 = vmatprep.subr.mxu0 0.0
    %1922 = vmatpush1.msra.mxu0 0.0
    %1923 = vmatprep.subr.mxu0 0.0
    %1924 = vmatpush1.msra.mxu0 0.0
    %1925 = vmatprep.subr.mxu0 0.0
    %1926 = vmatpush1.msra.mxu0 0.0
    %1927 = vmatprep.subr.mxu0 0.0
    %1928 = vmatpush1.msra.mxu0 0.0
    %1929 = vmatprep.subr.mxu0 0.0
    %1930 = vmatpush1.msra.mxu0 0.0
    %1931 = vmatprep.subr.mxu0 0.0
    %1932 = vmatpush1.msra.mxu0 0.0
    %1933 = vmatprep.subr.mxu0 0.0
    %1934 = vmatpush1.msra.mxu0 0.0
    %1935 = vmatprep.mubr.f32.mxu0 0.0
    %1936 = vmatmul.mubr.f32.gmra.mrb[0].mxu0 %v1866
    %v1937 = vpop.f32.mrb[0].mxu0
    %v1938 = vadd.f32 0.0, %v1937
    %v1939 = vpop.f32.mrb[0].mxu0
    %1940 = vmatprep.mubr.f32.mxu0 0.0
    %1941 = vmatmul.mubr.f32.gmra.mrb[0].mxu0 %v1869
    %v1942 = vpop.f32.mrb[0].mxu0
    %v1943 = vadd.f32 0.0, %v1942
    %v1944 = vpop.f32.mrb[0].mxu0
    %1945 = vdwg.mxu0
    %1946 = vrot.lane.b32.xlu0 %v312, 120
    %v1947 = vpop.permute.xlu0 %1946
    %1948 = vrot.lane.b32.xlu0 %v313, 120
    %v1949 = vpop.permute.xlu0 %1948
    %1950 = vrot.lane.b32.xlu0 %v226, 88
    %v1951 = vpop.permute.xlu0 %1950
    %1952 = vrot.lane.b32.xlu0 %v231, 88
    %v1953 = vpop.permute.xlu0 %1952
    %v1954 = vsel %vm334, %v1947, 0
    %v1956 = vsel %vm334, %v1949, 0
    %v1958 = vsel %vm334, %v1951, 0
    %v1960 = vsel %vm334, %v1953, 0
    %1962 = vmatprep.subr.mxu0 0.0
    %1963 = vmatpush1.xpose.msra.mxu0 %v1958
    %1964 = vmatprep.subr.mxu0 0.0
    %1965 = vmatpush1.xpose.msra.mxu0 %v1960
    %1966 = vmatprep.subr.mxu0 0.0
    %1967 = vmatpush1.xpose.msra.mxu0 0.0
    %1968 = vmatprep.subr.mxu0 0.0
    %1969 = vmatpush1.xpose.msra.mxu0 0.0
    %1970 = vmatprep.subr.mxu0 0.0
    %1971 = vmatpush1.xpose.msra.mxu0 0.0
    %1972 = vmatprep.subr.mxu0 0.0
    %1973 = vmatpush1.xpose.msra.mxu0 0.0
    %1974 = vmatprep.subr.mxu0 0.0
    %1975 = vmatpush1.xpose.msra.mxu0 0.0
    %1976 = vmatprep.subr.mxu0 0.0
    %1977 = vmatpush1.xpose.msra.mxu0 0.0
    %1978 = vmatprep.subr.mxu0 0.0
    %1979 = vmatpush1.xpose.msra.mxu0 0.0
    %1980 = vmatprep.subr.mxu0 0.0
    %1981 = vmatpush1.xpose.msra.mxu0 0.0
    %1982 = vmatprep.subr.mxu0 0.0
    %1983 = vmatpush1.xpose.msra.mxu0 0.0
    %1984 = vmatprep.subr.mxu0 0.0
    %1985 = vmatpush1.xpose.msra.mxu0 0.0
    %1986 = vmatprep.subr.mxu0 0.0
    %1987 = vmatpush1.xpose.msra.mxu0 0.0
    %1988 = vmatprep.subr.mxu0 0.0
    %1989 = vmatpush1.xpose.msra.mxu0 0.0
    %1990 = vmatprep.subr.mxu0 0.0
    %1991 = vmatpush1.xpose.msra.mxu0 0.0
    %1992 = vmatprep.subr.mxu0 0.0
    %1993 = vmatpush1.xpose.msra.mxu0 0.0
    %1994 = vmatprep.subr.mxu0 0.0
    %1995 = vmatpush1.xpose.msra.mxu0 0.0
    %1996 = vmatprep.subr.mxu0 0.0
    %1997 = vmatpush1.xpose.msra.mxu0 0.0
    %1998 = vmatprep.subr.mxu0 0.0
    %1999 = vmatpush1.xpose.msra.mxu0 0.0
    %2000 = vmatprep.subr.mxu0 0.0
    %2001 = vmatpush1.xpose.msra.mxu0 0.0
    %2002 = vmatprep.subr.mxu0 0.0
    %2003 = vmatpush1.xpose.msra.mxu0 0.0
    %2004 = vmatprep.subr.mxu0 0.0
    %2005 = vmatpush1.xpose.msra.mxu0 0.0
    %2006 = vmatprep.subr.mxu0 0.0
    %2007 = vmatpush1.xpose.msra.mxu0 0.0
    %2008 = vmatprep.subr.mxu0 0.0
    %2009 = vmatpush1.xpose.msra.mxu0 0.0
    %2010 = vmatprep.subr.mxu0 0.0
    %2011 = vmatpush1.xpose.msra.mxu0 0.0
    %2012 = vmatprep.subr.mxu0 0.0
    %2013 = vmatpush1.xpose.msra.mxu0 0.0
    %2014 = vmatprep.subr.mxu0 0.0
    %2015 = vmatpush1.xpose.msra.mxu0 0.0
    %2016 = vmatprep.subr.mxu0 0.0
    %2017 = vmatpush1.xpose.msra.mxu0 0.0
    %2018 = vmatprep.subr.mxu0 0.0
    %2019 = vmatpush1.xpose.msra.mxu0 0.0
    %2020 = vmatprep.subr.mxu0 0.0
    %2021 = vmatpush1.xpose.msra.mxu0 0.0
    %2022 = vmatprep.subr.mxu0 0.0
    %2023 = vmatpush1.xpose.msra.mxu0 0.0
    %2024 = vmatprep.subr.mxu0 0.0
    %2025 = vmatpush1.xpose.msra.mxu0 0.0
    %2026 = vmatprep.mubr.f32.mxu0 0.0
    %2027 = vmatmul.mubr.f32.gmra.mrb[0].mxu0 %v1954
    %v2028 = vpop.f32.mrb[0].mxu0
    %v2029 = vadd.f32 0.0, %v2028
    %v2030 = vpop.f32.mrb[0].mxu0
    %2031 = vmatprep.mubr.f32.mxu0 0.0
    %2032 = vmatmul.mubr.f32.gmra.mrb[0].mxu0 %v1956
    %v2033 = vpop.f32.mrb[0].mxu0
    %v2034 = vadd.f32 0.0, %v2033
    %v2035 = vpop.f32.mrb[0].mxu0
    %2036 = vdwg.mxu0
    %2037 = vrot.lane.b32.xlu0 %v314, 120
    %v2038 = vpop.permute.xlu0 %2037
    %2039 = vrot.lane.b32.xlu0 %v315, 120
    %v2040 = vpop.permute.xlu0 %2039
    %2041 = vrot.lane.b32.xlu0 %v236, 88
    %v2042 = vpop.permute.xlu0 %2041
    %2043 = vrot.lane.b32.xlu0 %v241, 88
    %v2044 = vpop.permute.xlu0 %2043
    %v2045 = vsel %vm334, %v2038, 0
    %v2047 = vsel %vm334, %v2040, 0
    %v2049 = vsel %vm334, %v2042, 0
    %v2051 = vsel %vm334, %v2044, 0
    %2053 = vmatprep.subr.mxu0 0.0
    %2054 = vmatpush1.xpose.msra.mxu0 %v2049
    %2055 = vmatprep.subr.mxu0 0.0
    %2056 = vmatpush1.xpose.msra.mxu0 %v2051
    %2057 = vmatprep.subr.mxu0 0.0
    %2058 = vmatpush1.xpose.msra.mxu0 0.0
    %2059 = vmatprep.subr.mxu0 0.0
    %2060 = vmatpush1.xpose.msra.mxu0 0.0
    %2061 = vmatprep.subr.mxu0 0.0
    %2062 = vmatpush1.xpose.msra.mxu0 0.0
    %2063 = vmatprep.subr.mxu0 0.0
    %2064 = vmatpush1.xpose.msra.mxu0 0.0
    %2065 = vmatprep.subr.mxu0 0.0
    %2066 = vmatpush1.xpose.msra.mxu0 0.0
    %2067 = vmatprep.subr.mxu0 0.0
    %2068 = vmatpush1.xpose.msra.mxu0 0.0
    %2069 = vmatprep.subr.mxu0 0.0
    %2070 = vmatpush1.xpose.msra.mxu0 0.0
    %2071 = vmatprep.subr.mxu0 0.0
    %2072 = vmatpush1.xpose.msra.mxu0 0.0
    %2073 = vmatprep.subr.mxu0 0.0
    %2074 = vmatpush1.xpose.msra.mxu0 0.0
    %2075 = vmatprep.subr.mxu0 0.0
    %2076 = vmatpush1.xpose.msra.mxu0 0.0
    %2077 = vmatprep.subr.mxu0 0.0
    %2078 = vmatpush1.xpose.msra.mxu0 0.0
    %2079 = vmatprep.subr.mxu0 0.0
    %2080 = vmatpush1.xpose.msra.mxu0 0.0
    %2081 = vmatprep.subr.mxu0 0.0
    %2082 = vmatpush1.xpose.msra.mxu0 0.0
    %2083 = vmatprep.subr.mxu0 0.0
    %2084 = vmatpush1.xpose.msra.mxu0 0.0
    %2085 = vmatprep.subr.mxu0 0.0
    %2086 = vmatpush1.xpose.msra.mxu0 0.0
    %2087 = vmatprep.subr.mxu0 0.0
    %2088 = vmatpush1.xpose.msra.mxu0 0.0
    %2089 = vmatprep.subr.mxu0 0.0
    %2090 = vmatpush1.xpose.msra.mxu0 0.0
    %2091 = vmatprep.subr.mxu0 0.0
    %2092 = vmatpush1.xpose.msra.mxu0 0.0
    %2093 = vmatprep.subr.mxu0 0.0
    %2094 = vmatpush1.xpose.msra.mxu0 0.0
    %2095 = vmatprep.subr.mxu0 0.0
    %2096 = vmatpush1.xpose.msra.mxu0 0.0
    %2097 = vmatprep.subr.mxu0 0.0
    %2098 = vmatpush1.xpose.msra.mxu0 0.0
    %2099 = vmatprep.subr.mxu0 0.0
    %2100 = vmatpush1.xpose.msra.mxu0 0.0
    %2101 = vmatprep.subr.mxu0 0.0
    %2102 = vmatpush1.xpose.msra.mxu0 0.0
    %2103 = vmatprep.subr.mxu0 0.0
    %2104 = vmatpush1.xpose.msra.mxu0 0.0
    %2105 = vmatprep.subr.mxu0 0.0
    %2106 = vmatpush1.xpose.msra.mxu0 0.0
    %2107 = vmatprep.subr.mxu0 0.0
    %2108 = vmatpush1.xpose.msra.mxu0 0.0
    %2109 = vmatprep.subr.mxu0 0.0
    %2110 = vmatpush1.xpose.msra.mxu0 0.0
    %2111 = vmatprep.subr.mxu0 0.0
    %2112 = vmatpush1.xpose.msra.mxu0 0.0
    %2113 = vmatprep.subr.mxu0 0.0
    %2114 = vmatpush1.xpose.msra.mxu0 0.0
    %2115 = vmatprep.subr.mxu0 0.0
    %2116 = vmatpush1.xpose.msra.mxu0 0.0
    %2117 = vmatprep.mubr.f32.mxu0 0.0
    %2118 = vmatmul.mubr.f32.gmra.mrb[0].mxu0 %v2045
    %v2119 = vpop.f32.mrb[0].mxu0
    %v2120 = vadd.f32 0.0, %v2119
    %v2121 = vpop.f32.mrb[0].mxu0
    %2122 = vmatprep.mubr.f32.mxu0 0.0
    %2123 = vmatmul.mubr.f32.gmra.mrb[0].mxu0 %v2047
    %v2124 = vpop.f32.mrb[0].mxu0
    %v2125 = vadd.f32 0.0, %v2124
    %v2126 = vpop.f32.mrb[0].mxu0
    %2127 = vdwg.mxu0
    %2128 = vrot.lane.b32.xlu0 %v316, 120
    %v2129 = vpop.permute.xlu0 %2128
    %2130 = vrot.lane.b32.xlu0 %v317, 120
    %v2131 = vpop.permute.xlu0 %2130
    %2132 = vrot.lane.b32.xlu0 %v246, 88
    %v2133 = vpop.permute.xlu0 %2132
    %2134 = vrot.lane.b32.xlu0 %v251, 88
    %v2135 = vpop.permute.xlu0 %2134
    %v2136 = vsel %vm334, %v2129, 0
    %v2138 = vsel %vm334, %v2131, 0
    %v2140 = vsel %vm334, %v2133, 0
    %v2142 = vsel %vm334, %v2135, 0
    %2144 = vmatprep.subr.mxu0 0.0
    %2145 = vmatpush1.xpose.msra.mxu0 %v2140
    %2146 = vmatprep.subr.mxu0 0.0
    %2147 = vmatpush1.xpose.msra.mxu0 %v2142
    %2148 = vmatprep.subr.mxu0 0.0
    %2149 = vmatpush1.xpose.msra.mxu0 0.0
    %2150 = vmatprep.subr.mxu0 0.0
    %2151 = vmatpush1.xpose.msra.mxu0 0.0
    %2152 = vmatprep.subr.mxu0 0.0
    %2153 = vmatpush1.xpose.msra.mxu0 0.0
    %2154 = vmatprep.subr.mxu0 0.0
    %2155 = vmatpush1.xpose.msra.mxu0 0.0
    %2156 = vmatprep.subr.mxu0 0.0
    %2157 = vmatpush1.xpose.msra.mxu0 0.0
    %2158 = vmatprep.subr.mxu0 0.0
    %2159 = vmatpush1.xpose.msra.mxu0 0.0
    %2160 = vmatprep.subr.mxu0 0.0
    %2161 = vmatpush1.xpose.msra.mxu0 0.0
    %2162 = vmatprep.subr.mxu0 0.0
    %2163 = vmatpush1.xpose.msra.mxu0 0.0
    %2164 = vmatprep.subr.mxu0 0.0
    %2165 = vmatpush1.xpose.msra.mxu0 0.0
    %2166 = vmatprep.subr.mxu0 0.0
    %2167 = vmatpush1.xpose.msra.mxu0 0.0
    %2168 = vmatprep.subr.mxu0 0.0
    %2169 = vmatpush1.xpose.msra.mxu0 0.0
    %2170 = vmatprep.subr.mxu0 0.0
    %2171 = vmatpush1.xpose.msra.mxu0 0.0
    %2172 = vmatprep.subr.mxu0 0.0
    %2173 = vmatpush1.xpose.msra.mxu0 0.0
    %2174 = vmatprep.subr.mxu0 0.0
    %2175 = vmatpush1.xpose.msra.mxu0 0.0
    %2176 = vmatprep.subr.mxu0 0.0
    %2177 = vmatpush1.xpose.msra.mxu0 0.0
    %2178 = vmatprep.subr.mxu0 0.0
    %2179 = vmatpush1.xpose.msra.mxu0 0.0
    %2180 = vmatprep.subr.mxu0 0.0
    %2181 = vmatpush1.xpose.msra.mxu0 0.0
    %2182 = vmatprep.subr.mxu0 0.0
    %2183 = vmatpush1.xpose.msra.mxu0 0.0
    %2184 = vmatprep.subr.mxu0 0.0
    %2185 = vmatpush1.xpose.msra.mxu0 0.0
    %2186 = vmatprep.subr.mxu0 0.0
    %2187 = vmatpush1.xpose.msra.mxu0 0.0
    %2188 = vmatprep.subr.mxu0 0.0
    %2189 = vmatpush1.xpose.msra.mxu0 0.0
    %2190 = vmatprep.subr.mxu0 0.0
    %2191 = vmatpush1.xpose.msra.mxu0 0.0
    %2192 = vmatprep.subr.mxu0 0.0
    %2193 = vmatpush1.xpose.msra.mxu0 0.0
    %2194 = vmatprep.subr.mxu0 0.0
    %2195 = vmatpush1.xpose.msra.mxu0 0.0
    %2196 = vmatprep.subr.mxu0 0.0
    %2197 = vmatpush1.xpose.msra.mxu0 0.0
    %2198 = vmatprep.subr.mxu0 0.0
    %2199 = vmatpush1.xpose.msra.mxu0 0.0
    %2200 = vmatprep.subr.mxu0 0.0
    %2201 = vmatpush1.xpose.msra.mxu0 0.0
    %2202 = vmatprep.subr.mxu0 0.0
    %2203 = vmatpush1.xpose.msra.mxu0 0.0
    %2204 = vmatprep.subr.mxu0 0.0
    %2205 = vmatpush1.xpose.msra.mxu0 0.0
    %2206 = vmatprep.subr.mxu0 0.0
    %2207 = vmatpush1.xpose.msra.mxu0 0.0
    %2208 = vmatprep.mubr.f32.mxu0 0.0
    %2209 = vmatmul.mubr.f32.gmra.mrb[0].mxu0 %v2136
    %v2210 = vpop.f32.mrb[0].mxu0
    %v2211 = vadd.f32 0.0, %v2210
    %v2212 = vpop.f32.mrb[0].mxu0
    %2213 = vmatprep.mubr.f32.mxu0 0.0
    %2214 = vmatmul.mubr.f32.gmra.mrb[0].mxu0 %v2138
    %v2215 = vpop.f32.mrb[0].mxu0
    %v2216 = vadd.f32 0.0, %v2215
    %v2217 = vpop.f32.mrb[0].mxu0
    %2218 = vdwg.mxu0
    %2219 = vrot.lane.b32.xlu0 %v318, 120
    %v2220 = vpop.permute.xlu0 %2219
    %2221 = vrot.lane.b32.xlu0 %v319, 120
    %v2222 = vpop.permute.xlu0 %2221
    %2223 = vrot.lane.b32.xlu0 %v256, 88
    %v2224 = vpop.permute.xlu0 %2223
    %2225 = vrot.lane.b32.xlu0 %v261, 88
    %v2226 = vpop.permute.xlu0 %2225
    %v2227 = vsel %vm334, %v2220, 0
    %v2229 = vsel %vm334, %v2222, 0
    %v2231 = vsel %vm334, %v2224, 0
    %v2233 = vsel %vm334, %v2226, 0
    %2235 = vmatprep.subr.mxu0 0.0
    %2236 = vmatpush1.xpose.msra.mxu0 %v2231
    %2237 = vmatprep.subr.mxu0 0.0
    %2238 = vmatpush1.xpose.msra.mxu0 %v2233
    %2239 = vmatprep.subr.mxu0 0.0
    %2240 = vmatpush1.xpose.msra.mxu0 0.0
    %2241 = vmatprep.subr.mxu0 0.0
    %2242 = vmatpush1.xpose.msra.mxu0 0.0
    %2243 = vmatprep.subr.mxu0 0.0
    %2244 = vmatpush1.xpose.msra.mxu0 0.0
    %2245 = vmatprep.subr.mxu0 0.0
    %2246 = vmatpush1.xpose.msra.mxu0 0.0
    %2247 = vmatprep.subr.mxu0 0.0
    %2248 = vmatpush1.xpose.msra.mxu0 0.0
    %2249 = vmatprep.subr.mxu0 0.0
    %2250 = vmatpush1.xpose.msra.mxu0 0.0
    %2251 = vmatprep.subr.mxu0 0.0
    %2252 = vmatpush1.xpose.msra.mxu0 0.0
    %2253 = vmatprep.subr.mxu0 0.0
    %2254 = vmatpush1.xpose.msra.mxu0 0.0
    %2255 = vmatprep.subr.mxu0 0.0
    %2256 = vmatpush1.xpose.msra.mxu0 0.0
    %2257 = vmatprep.subr.mxu0 0.0
    %2258 = vmatpush1.xpose.msra.mxu0 0.0
    %2259 = vmatprep.subr.mxu0 0.0
    %2260 = vmatpush1.xpose.msra.mxu0 0.0
    %2261 = vmatprep.subr.mxu0 0.0
    %2262 = vmatpush1.xpose.msra.mxu0 0.0
    %2263 = vmatprep.subr.mxu0 0.0
    %2264 = vmatpush1.xpose.msra.mxu0 0.0
    %2265 = vmatprep.subr.mxu0 0.0
    %2266 = vmatpush1.xpose.msra.mxu0 0.0
    %2267 = vmatprep.subr.mxu0 0.0
    %2268 = vmatpush1.xpose.msra.mxu0 0.0
    %2269 = vmatprep.subr.mxu0 0.0
    %2270 = vmatpush1.xpose.msra.mxu0 0.0
    %2271 = vmatprep.subr.mxu0 0.0
    %2272 = vmatpush1.xpose.msra.mxu0 0.0
    %2273 = vmatprep.subr.mxu0 0.0
    %2274 = vmatpush1.xpose.msra.mxu0 0.0
    %2275 = vmatprep.subr.mxu0 0.0
    %2276 = vmatpush1.xpose.msra.mxu0 0.0
    %2277 = vmatprep.subr.mxu0 0.0
    %2278 = vmatpush1.xpose.msra.mxu0 0.0
    %2279 = vmatprep.subr.mxu0 0.0
    %2280 = vmatpush1.xpose.msra.mxu0 0.0
    %2281 = vmatprep.subr.mxu0 0.0
    %2282 = vmatpush1.xpose.msra.mxu0 0.0
    %2283 = vmatprep.subr.mxu0 0.0
    %2284 = vmatpush1.xpose.msra.mxu0 0.0
    %2285 = vmatprep.subr.mxu0 0.0
    %2286 = vmatpush1.xpose.msra.mxu0 0.0
    %2287 = vmatprep.subr.mxu0 0.0
    %2288 = vmatpush1.xpose.msra.mxu0 0.0
    %2289 = vmatprep.subr.mxu0 0.0
    %2290 = vmatpush1.xpose.msra.mxu0 0.0
    %2291 = vmatprep.subr.mxu0 0.0
    %2292 = vmatpush1.xpose.msra.mxu0 0.0
    %2293 = vmatprep.subr.mxu0 0.0
    %2294 = vmatpush1.xpose.msra.mxu0 0.0
    %2295 = vmatprep.subr.mxu0 0.0
    %2296 = vmatpush1.xpose.msra.mxu0 0.0
    %2297 = vmatprep.subr.mxu0 0.0
    %2298 = vmatpush1.xpose.msra.mxu0 0.0
    %2299 = vmatprep.mubr.f32.mxu0 0.0
    %2300 = vmatmul.mubr.f32.gmra.mrb[0].mxu0 %v2227
    %v2301 = vpop.f32.mrb[0].mxu0
    %v2302 = vadd.f32 0.0, %v2301
    %v2303 = vpop.f32.mrb[0].mxu0
    %2304 = vmatprep.mubr.f32.mxu0 0.0
    %2305 = vmatmul.mubr.f32.gmra.mrb[0].mxu0 %v2229
    %v2306 = vpop.f32.mrb[0].mxu0
    %v2307 = vadd.f32 0.0, %v2306
    %v2308 = vpop.f32.mrb[0].mxu0
    %2309 = vdwg.mxu0
    %2310 = vrot.lane.b32.xlu0 %v320, 120
    %v2311 = vpop.permute.xlu0 %2310
    %2312 = vrot.lane.b32.xlu0 %v321, 120
    %v2313 = vpop.permute.xlu0 %2312
    %2314 = vrot.lane.b32.xlu0 %v266, 88
    %v2315 = vpop.permute.xlu0 %2314
    %2316 = vrot.lane.b32.xlu0 %v271, 88
    %v2317 = vpop.permute.xlu0 %2316
    %v2318 = vsel %vm334, %v2311, 0
    %v2320 = vsel %vm334, %v2313, 0
    %v2322 = vsel %vm334, %v2315, 0
    %v2324 = vsel %vm334, %v2317, 0
    %2326 = vmatprep.subr.mxu0 0.0
    %2327 = vmatpush1.xpose.msra.mxu0 %v2322
    %2328 = vmatprep.subr.mxu0 0.0
    %2329 = vmatpush1.xpose.msra.mxu0 %v2324
    %2330 = vmatprep.subr.mxu0 0.0
    %2331 = vmatpush1.xpose.msra.mxu0 0.0
    %2332 = vmatprep.subr.mxu0 0.0
    %2333 = vmatpush1.xpose.msra.mxu0 0.0
    %2334 = vmatprep.subr.mxu0 0.0
    %2335 = vmatpush1.xpose.msra.mxu0 0.0
    %2336 = vmatprep.subr.mxu0 0.0
    %2337 = vmatpush1.xpose.msra.mxu0 0.0
    %2338 = vmatprep.subr.mxu0 0.0
    %2339 = vmatpush1.xpose.msra.mxu0 0.0
    %2340 = vmatprep.subr.mxu0 0.0
    %2341 = vmatpush1.xpose.msra.mxu0 0.0
    %2342 = vmatprep.subr.mxu0 0.0
    %2343 = vmatpush1.xpose.msra.mxu0 0.0
    %2344 = vmatprep.subr.mxu0 0.0
    %2345 = vmatpush1.xpose.msra.mxu0 0.0
    %2346 = vmatprep.subr.mxu0 0.0
    %2347 = vmatpush1.xpose.msra.mxu0 0.0
    %2348 = vmatprep.subr.mxu0 0.0
    %2349 = vmatpush1.xpose.msra.mxu0 0.0
    %2350 = vmatprep.subr.mxu0 0.0
    %2351 = vmatpush1.xpose.msra.mxu0 0.0
    %2352 = vmatprep.subr.mxu0 0.0
    %2353 = vmatpush1.xpose.msra.mxu0 0.0
    %2354 = vmatprep.subr.mxu0 0.0
    %2355 = vmatpush1.xpose.msra.mxu0 0.0
    %2356 = vmatprep.subr.mxu0 0.0
    %2357 = vmatpush1.xpose.msra.mxu0 0.0
    %2358 = vmatprep.subr.mxu0 0.0
    %2359 = vmatpush1.xpose.msra.mxu0 0.0
    %2360 = vmatprep.subr.mxu0 0.0
    %2361 = vmatpush1.xpose.msra.mxu0 0.0
    %2362 = vmatprep.subr.mxu0 0.0
    %2363 = vmatpush1.xpose.msra.mxu0 0.0
    %2364 = vmatprep.subr.mxu0 0.0
    %2365 = vmatpush1.xpose.msra.mxu0 0.0
    %2366 = vmatprep.subr.mxu0 0.0
    %2367 = vmatpush1.xpose.msra.mxu0 0.0
    %2368 = vmatprep.subr.mxu0 0.0
    %2369 = vmatpush1.xpose.msra.mxu0 0.0
    %2370 = vmatprep.subr.mxu0 0.0
    %2371 = vmatpush1.xpose.msra.mxu0 0.0
    %2372 = vmatprep.subr.mxu0 0.0
    %2373 = vmatpush1.xpose.msra.mxu0 0.0
    %2374 = vmatprep.subr.mxu0 0.0
    %2375 = vmatpush1.xpose.msra.mxu0 0.0
    %2376 = vmatprep.subr.mxu0 0.0
    %2377 = vmatpush1.xpose.msra.mxu0 0.0
    %2378 = vmatprep.subr.mxu0 0.0
    %2379 = vmatpush1.xpose.msra.mxu0 0.0
    %2380 = vmatprep.subr.mxu0 0.0
    %2381 = vmatpush1.xpose.msra.mxu0 0.0
    %2382 = vmatprep.subr.mxu0 0.0
    %2383 = vmatpush1.xpose.msra.mxu0 0.0
    %2384 = vmatprep.subr.mxu0 0.0
    %2385 = vmatpush1.xpose.msra.mxu0 0.0
    %2386 = vmatprep.subr.mxu0 0.0
    %2387 = vmatpush1.xpose.msra.mxu0 0.0
    %2388 = vmatprep.subr.mxu0 0.0
    %2389 = vmatpush1.xpose.msra.mxu0 0.0
    %2390 = vmatprep.mubr.f32.mxu0 0.0
    %2391 = vmatmul.mubr.f32.gmra.mrb[0].mxu0 %v2318
    %v2392 = vpop.f32.mrb[0].mxu0
    %v2393 = vadd.f32 0.0, %v2392
    %v2394 = vpop.f32.mrb[0].mxu0
    %2395 = vmatprep.mubr.f32.mxu0 0.0
    %2396 = vmatmul.mubr.f32.gmra.mrb[0].mxu0 %v2320
    %v2397 = vpop.f32.mrb[0].mxu0
    %v2398 = vadd.f32 0.0, %v2397
    %v2399 = vpop.f32.mrb[0].mxu0
    %2400 = vdwg.mxu0
    %2401 = vrot.lane.b32.xlu0 %v322, 120
    %v2402 = vpop.permute.xlu0 %2401
    %2403 = vrot.lane.b32.xlu0 %v323, 120
    %v2404 = vpop.permute.xlu0 %2403
    %2405 = vrot.lane.b32.xlu0 %v276, 88
    %v2406 = vpop.permute.xlu0 %2405
    %2407 = vrot.lane.b32.xlu0 %v281, 88
    %v2408 = vpop.permute.xlu0 %2407
    %v2409 = vsel %vm334, %v2402, 0
    %v2411 = vsel %vm334, %v2404, 0
    %v2413 = vsel %vm334, %v2406, 0
    %v2415 = vsel %vm334, %v2408, 0
    %2417 = vmatprep.subr.mxu0 0.0
    %2418 = vmatpush1.xpose.msra.mxu0 %v2413
    %2419 = vmatprep.subr.mxu0 0.0
    %2420 = vmatpush1.xpose.msra.mxu0 %v2415
    %2421 = vmatprep.subr.mxu0 0.0
    %2422 = vmatpush1.xpose.msra.mxu0 0.0
    %2423 = vmatprep.subr.mxu0 0.0
    %2424 = vmatpush1.xpose.msra.mxu0 0.0
    %2425 = vmatprep.subr.mxu0 0.0
    %2426 = vmatpush1.xpose.msra.mxu0 0.0
    %2427 = vmatprep.subr.mxu0 0.0
    %2428 = vmatpush1.xpose.msra.mxu0 0.0
    %2429 = vmatprep.subr.mxu0 0.0
    %2430 = vmatpush1.xpose.msra.mxu0 0.0
    %2431 = vmatprep.subr.mxu0 0.0
    %2432 = vmatpush1.xpose.msra.mxu0 0.0
    %2433 = vmatprep.subr.mxu0 0.0
    %2434 = vmatpush1.xpose.msra.mxu0 0.0
    %2435 = vmatprep.subr.mxu0 0.0
    %2436 = vmatpush1.xpose.msra.mxu0 0.0
    %2437 = vmatprep.subr.mxu0 0.0
    %2438 = vmatpush1.xpose.msra.mxu0 0.0
    %2439 = vmatprep.subr.mxu0 0.0
    %2440 = vmatpush1.xpose.msra.mxu0 0.0
    %2441 = vmatprep.subr.mxu0 0.0
    %2442 = vmatpush1.xpose.msra.mxu0 0.0
    %2443 = vmatprep.subr.mxu0 0.0
    %2444 = vmatpush1.xpose.msra.mxu0 0.0
    %2445 = vmatprep.subr.mxu0 0.0
    %2446 = vmatpush1.xpose.msra.mxu0 0.0
    %2447 = vmatprep.subr.mxu0 0.0
    %2448 = vmatpush1.xpose.msra.mxu0 0.0
    %2449 = vmatprep.subr.mxu0 0.0
    %2450 = vmatpush1.xpose.msra.mxu0 0.0
    %2451 = vmatprep.subr.mxu0 0.0
    %2452 = vmatpush1.xpose.msra.mxu0 0.0
    %2453 = vmatprep.subr.mxu0 0.0
    %2454 = vmatpush1.xpose.msra.mxu0 0.0
    %2455 = vmatprep.subr.mxu0 0.0
    %2456 = vmatpush1.xpose.msra.mxu0 0.0
    %2457 = vmatprep.subr.mxu0 0.0
    %2458 = vmatpush1.xpose.msra.mxu0 0.0
    %2459 = vmatprep.subr.mxu0 0.0
    %2460 = vmatpush1.xpose.msra.mxu0 0.0
    %2461 = vmatprep.subr.mxu0 0.0
    %2462 = vmatpush1.xpose.msra.mxu0 0.0
    %2463 = vmatprep.subr.mxu0 0.0
    %2464 = vmatpush1.xpose.msra.mxu0 0.0
    %2465 = vmatprep.subr.mxu0 0.0
    %2466 = vmatpush1.xpose.msra.mxu0 0.0
    %2467 = vmatprep.subr.mxu0 0.0
    %2468 = vmatpush1.xpose.msra.mxu0 0.0
    %2469 = vmatprep.subr.mxu0 0.0
    %2470 = vmatpush1.xpose.msra.mxu0 0.0
    %2471 = vmatprep.subr.mxu0 0.0
    %2472 = vmatpush1.xpose.msra.mxu0 0.0
    %2473 = vmatprep.subr.mxu0 0.0
    %2474 = vmatpush1.xpose.msra.mxu0 0.0
    %2475 = vmatprep.subr.mxu0 0.0
    %2476 = vmatpush1.xpose.msra.mxu0 0.0
    %2477 = vmatprep.subr.mxu0 0.0
    %2478 = vmatpush1.xpose.msra.mxu0 0.0
    %2479 = vmatprep.subr.mxu0 0.0
    %2480 = vmatpush1.xpose.msra.mxu0 0.0
    %2481 = vmatprep.mubr.f32.mxu0 0.0
    %2482 = vmatmul.mubr.f32.gmra.mrb[0].mxu0 %v2409
    %v2483 = vpop.f32.mrb[0].mxu0
    %v2484 = vadd.f32 0.0, %v2483
    %v2485 = vpop.f32.mrb[0].mxu0
    %2486 = vmatprep.mubr.f32.mxu0 0.0
    %2487 = vmatmul.mubr.f32.gmra.mrb[0].mxu0 %v2411
    %v2488 = vpop.f32.mrb[0].mxu0
    %v2489 = vadd.f32 0.0, %v2488
    %v2490 = vpop.f32.mrb[0].mxu0
    %2491 = vdwg.mxu0
    %2492 = vrot.lane.b32.xlu0 %v324, 120
    %v2493 = vpop.permute.xlu0 %2492
    %2494 = vrot.lane.b32.xlu0 %v325, 120
    %v2495 = vpop.permute.xlu0 %2494
    %2496 = vrot.lane.b32.xlu0 %v286, 88
    %v2497 = vpop.permute.xlu0 %2496
    %2498 = vrot.lane.b32.xlu0 %v291, 88
    %v2499 = vpop.permute.xlu0 %2498
    %v2500 = vsel %vm334, %v2493, 0
    %v2502 = vsel %vm334, %v2495, 0
    %v2504 = vsel %vm334, %v2497, 0
    %v2506 = vsel %vm334, %v2499, 0
    %2508 = vmatprep.subr.mxu0 0.0
    %2509 = vmatpush1.xpose.msra.mxu0 %v2504
    %2510 = vmatprep.subr.mxu0 0.0
    %2511 = vmatpush1.xpose.msra.mxu0 %v2506
    %2512 = vmatprep.subr.mxu0 0.0
    %2513 = vmatpush1.xpose.msra.mxu0 0.0
    %2514 = vmatprep.subr.mxu0 0.0
    %2515 = vmatpush1.xpose.msra.mxu0 0.0
    %2516 = vmatprep.subr.mxu0 0.0
    %2517 = vmatpush1.xpose.msra.mxu0 0.0
    %2518 = vmatprep.subr.mxu0 0.0
    %2519 = vmatpush1.xpose.msra.mxu0 0.0
    %2520 = vmatprep.subr.mxu0 0.0
    %2521 = vmatpush1.xpose.msra.mxu0 0.0
    %2522 = vmatprep.subr.mxu0 0.0
    %2523 = vmatpush1.xpose.msra.mxu0 0.0
    %2524 = vmatprep.subr.mxu0 0.0
    %2525 = vmatpush1.xpose.msra.mxu0 0.0
    %2526 = vmatprep.subr.mxu0 0.0
    %2527 = vmatpush1.xpose.msra.mxu0 0.0
    %2528 = vmatprep.subr.mxu0 0.0
    %2529 = vmatpush1.xpose.msra.mxu0 0.0
    %2530 = vmatprep.subr.mxu0 0.0
    %2531 = vmatpush1.xpose.msra.mxu0 0.0
    %2532 = vmatprep.subr.mxu0 0.0
    %2533 = vmatpush1.xpose.msra.mxu0 0.0
    %2534 = vmatprep.subr.mxu0 0.0
    %2535 = vmatpush1.xpose.msra.mxu0 0.0
    %2536 = vmatprep.subr.mxu0 0.0
    %2537 = vmatpush1.xpose.msra.mxu0 0.0
    %2538 = vmatprep.subr.mxu0 0.0
    %2539 = vmatpush1.xpose.msra.mxu0 0.0
    %2540 = vmatprep.subr.mxu0 0.0
    %2541 = vmatpush1.xpose.msra.mxu0 0.0
    %2542 = vmatprep.subr.mxu0 0.0
    %2543 = vmatpush1.xpose.msra.mxu0 0.0
    %2544 = vmatprep.subr.mxu0 0.0
    %2545 = vmatpush1.xpose.msra.mxu0 0.0
    %2546 = vmatprep.subr.mxu0 0.0
    %2547 = vmatpush1.xpose.msra.mxu0 0.0
    %2548 = vmatprep.subr.mxu0 0.0
    %2549 = vmatpush1.xpose.msra.mxu0 0.0
    %2550 = vmatprep.subr.mxu0 0.0
    %2551 = vmatpush1.xpose.msra.mxu0 0.0
    %2552 = vmatprep.subr.mxu0 0.0
    %2553 = vmatpush1.xpose.msra.mxu0 0.0
    %2554 = vmatprep.subr.mxu0 0.0
    %2555 = vmatpush1.xpose.msra.mxu0 0.0
    %2556 = vmatprep.subr.mxu0 0.0
    %2557 = vmatpush1.xpose.msra.mxu0 0.0
    %2558 = vmatprep.subr.mxu0 0.0
    %2559 = vmatpush1.xpose.msra.mxu0 0.0
    %2560 = vmatprep.subr.mxu0 0.0
    %2561 = vmatpush1.xpose.msra.mxu0 0.0
    %2562 = vmatprep.subr.mxu0 0.0
    %2563 = vmatpush1.xpose.msra.mxu0 0.0
    %2564 = vmatprep.subr.mxu0 0.0
    %2565 = vmatpush1.xpose.msra.mxu0 0.0
    %2566 = vmatprep.subr.mxu0 0.0
    %2567 = vmatpush1.xpose.msra.mxu0 0.0
    %2568 = vmatprep.subr.mxu0 0.0
    %2569 = vmatpush1.xpose.msra.mxu0 0.0
    %2570 = vmatprep.subr.mxu0 0.0
    %2571 = vmatpush1.xpose.msra.mxu0 0.0
    %2572 = vmatprep.mubr.f32.mxu0 0.0
    %2573 = vmatmul.mubr.f32.gmra.mrb[0].mxu0 %v2500
    %v2574 = vpop.f32.mrb[0].mxu0
    %v2575 = vadd.f32 0.0, %v2574
    %v2576 = vpop.f32.mrb[0].mxu0
    %2577 = vmatprep.mubr.f32.mxu0 0.0
    %2578 = vmatmul.mubr.f32.gmra.mrb[0].mxu0 %v2502
    %v2579 = vpop.f32.mrb[0].mxu0
    %v2580 = vadd.f32 0.0, %v2579
    %v2581 = vpop.f32.mrb[0].mxu0
    %2582 = vdwg.mxu0
    %2583 = vrot.lane.b32.xlu0 %v326, 120
    %v2584 = vpop.permute.xlu0 %2583
    %2585 = vrot.lane.b32.xlu0 %v327, 120
    %v2586 = vpop.permute.xlu0 %2585
    %2587 = vrot.lane.b32.xlu0 %v296, 88
    %v2588 = vpop.permute.xlu0 %2587
    %2589 = vrot.lane.b32.xlu0 %v301, 88
    %v2590 = vpop.permute.xlu0 %2589
    %v2591 = vsel %vm334, %v2584, 0
    %v2593 = vsel %vm334, %v2586, 0
    %v2595 = vsel %vm334, %v2588, 0
    %v2597 = vsel %vm334, %v2590, 0
    %2599 = vmatprep.subr.mxu0 0.0
    %2600 = vmatpush1.xpose.msra.mxu0 %v2595
    %2601 = vmatprep.subr.mxu0 0.0
    %2602 = vmatpush1.xpose.msra.mxu0 %v2597
    %2603 = vmatprep.subr.mxu0 0.0
    %2604 = vmatpush1.xpose.msra.mxu0 0.0
    %2605 = vmatprep.subr.mxu0 0.0
    %2606 = vmatpush1.xpose.msra.mxu0 0.0
    %2607 = vmatprep.subr.mxu0 0.0
    %2608 = vmatpush1.xpose.msra.mxu0 0.0
    %2609 = vmatprep.subr.mxu0 0.0
    %2610 = vmatpush1.xpose.msra.mxu0 0.0
    %2611 = vmatprep.subr.mxu0 0.0
    %2612 = vmatpush1.xpose.msra.mxu0 0.0
    %2613 = vmatprep.subr.mxu0 0.0
    %2614 = vmatpush1.xpose.msra.mxu0 0.0
    %2615 = vmatprep.subr.mxu0 0.0
    %2616 = vmatpush1.xpose.msra.mxu0 0.0
    %2617 = vmatprep.subr.mxu0 0.0
    %2618 = vmatpush1.xpose.msra.mxu0 0.0
    %2619 = vmatprep.subr.mxu0 0.0
    %2620 = vmatpush1.xpose.msra.mxu0 0.0
    %2621 = vmatprep.subr.mxu0 0.0
    %2622 = vmatpush1.xpose.msra.mxu0 0.0
    %2623 = vmatprep.subr.mxu0 0.0
    %2624 = vmatpush1.xpose.msra.mxu0 0.0
    %2625 = vmatprep.subr.mxu0 0.0
    %2626 = vmatpush1.xpose.msra.mxu0 0.0
    %2627 = vmatprep.subr.mxu0 0.0
    %2628 = vmatpush1.xpose.msra.mxu0 0.0
    %2629 = vmatprep.subr.mxu0 0.0
    %2630 = vmatpush1.xpose.msra.mxu0 0.0
    %2631 = vmatprep.subr.mxu0 0.0
    %2632 = vmatpush1.xpose.msra.mxu0 0.0
    %2633 = vmatprep.subr.mxu0 0.0
    %2634 = vmatpush1.xpose.msra.mxu0 0.0
    %2635 = vmatprep.subr.mxu0 0.0
    %2636 = vmatpush1.xpose.msra.mxu0 0.0
    %2637 = vmatprep.subr.mxu0 0.0
    %2638 = vmatpush1.xpose.msra.mxu0 0.0
    %2639 = vmatprep.subr.mxu0 0.0
    %2640 = vmatpush1.xpose.msra.mxu0 0.0
    %2641 = vmatprep.subr.mxu0 0.0
    %2642 = vmatpush1.xpose.msra.mxu0 0.0
    %2643 = vmatprep.subr.mxu0 0.0
    %2644 = vmatpush1.xpose.msra.mxu0 0.0
    %2645 = vmatprep.subr.mxu0 0.0
    %2646 = vmatpush1.xpose.msra.mxu0 0.0
    %2647 = vmatprep.subr.mxu0 0.0
    %2648 = vmatpush1.xpose.msra.mxu0 0.0
    %2649 = vmatprep.subr.mxu0 0.0
    %2650 = vmatpush1.xpose.msra.mxu0 0.0
    %2651 = vmatprep.subr.mxu0 0.0
    %2652 = vmatpush1.xpose.msra.mxu0 0.0
    %2653 = vmatprep.subr.mxu0 0.0
    %2654 = vmatpush1.xpose.msra.mxu0 0.0
    %2655 = vmatprep.subr.mxu0 0.0
    %2656 = vmatpush1.xpose.msra.mxu0 0.0
    %2657 = vmatprep.subr.mxu0 0.0
    %2658 = vmatpush1.xpose.msra.mxu0 0.0
    %2659 = vmatprep.subr.mxu0 0.0
    %2660 = vmatpush1.xpose.msra.mxu0 0.0
    %2661 = vmatprep.subr.mxu0 0.0
    %2662 = vmatpush1.xpose.msra.mxu0 0.0
    %2663 = vmatprep.mubr.f32.mxu0 0.0
    %2664 = vmatmul.mubr.f32.gmra.mrb[0].mxu0 %v2591
    %v2665 = vpop.f32.mrb[0].mxu0
    %v2666 = vadd.f32 0.0, %v2665
    %v2667 = vpop.f32.mrb[0].mxu0
    %2668 = vmatprep.mubr.f32.mxu0 0.0
    %2669 = vmatmul.mubr.f32.gmra.mrb[0].mxu0 %v2593
    %v2670 = vpop.f32.mrb[0].mxu0
    %v2671 = vadd.f32 0.0, %v2670
    %v2672 = vpop.f32.mrb[0].mxu0
    %2673 = vdwg.mxu0
    %v2674 = vadd.f32 %v2029, %v306
    %v2675 = vadd.f32 %v2034, %v307
    %v2676 = vadd.f32 %v2120, %v306
    %v2677 = vadd.f32 %v2125, %v307
    %v2678 = vadd.f32 %v2211, %v306
    %v2679 = vadd.f32 %v2216, %v307
    %v2680 = vadd.f32 %v2302, %v306
    %v2681 = vadd.f32 %v2307, %v307
    %v2682 = vadd.f32 %v2393, %v306
    %v2683 = vadd.f32 %v2398, %v307
    %v2684 = vadd.f32 %v2484, %v306
    %v2685 = vadd.f32 %v2489, %v307
    %v2686 = vadd.f32 %v2575, %v306
    %v2687 = vadd.f32 %v2580, %v307
    %v2688 = vadd.f32 %v2666, %v306
    %v2689 = vadd.f32 %v2671, %v307
    %v2690 = vsel %vm1073, %v2674, -inf
    %2691 = vmax.xlane.f32.xlu0 %v2690
    %v2692 = vpop.xlane.xlu0 %2691
    %v2693 = vsel %vm1073, %v2675, -inf
    %2694 = vmax.xlane.f32.xlu0 %v2693
    %v2695 = vpop.xlane.xlu0 %2694
    %v2696 = vsel %vm1073, %v2676, -inf
    %2697 = vmax.xlane.f32.xlu0 %v2696
    %v2698 = vpop.xlane.xlu0 %2697
    %v2699 = vsel %vm1073, %v2677, -inf
    %2700 = vmax.xlane.f32.xlu0 %v2699
    %v2701 = vpop.xlane.xlu0 %2700
    %v2702 = vsel %vm1073, %v2678, -inf
    %2703 = vmax.xlane.f32.xlu0 %v2702
    %v2704 = vpop.xlane.xlu0 %2703
    %v2705 = vsel %vm1073, %v2679, -inf
    %2706 = vmax.xlane.f32.xlu0 %v2705
    %v2707 = vpop.xlane.xlu0 %2706
    %v2708 = vsel %vm1073, %v2680, -inf
    %2709 = vmax.xlane.f32.xlu0 %v2708
    %v2710 = vpop.xlane.xlu0 %2709
    %v2711 = vsel %vm1073, %v2681, -inf
    %2712 = vmax.xlane.f32.xlu0 %v2711
    %v2713 = vpop.xlane.xlu0 %2712
    %v2714 = vsel %vm1073, %v2682, -inf
    %2715 = vmax.xlane.f32.xlu0 %v2714
    %v2716 = vpop.xlane.xlu0 %2715
    %v2717 = vsel %vm1073, %v2683, -inf
    %2718 = vmax.xlane.f32.xlu0 %v2717
    %v2719 = vpop.xlane.xlu0 %2718
    %v2720 = vsel %vm1073, %v2684, -inf
    %2721 = vmax.xlane.f32.xlu0 %v2720
    %v2722 = vpop.xlane.xlu0 %2721
    %v2723 = vsel %vm1073, %v2685, -inf
    %2724 = vmax.xlane.f32.xlu0 %v2723
    %v2725 = vpop.xlane.xlu0 %2724
    %v2726 = vsel %vm1073, %v2686, -inf
    %2727 = vmax.xlane.f32.xlu0 %v2726
    %v2728 = vpop.xlane.xlu0 %2727
    %v2729 = vsel %vm1073, %v2687, -inf
    %2730 = vmax.xlane.f32.xlu0 %v2729
    %v2731 = vpop.xlane.xlu0 %2730
    %v2732 = vsel %vm1073, %v2688, -inf
    %2733 = vmax.xlane.f32.xlu0 %v2732
    %v2734 = vpop.xlane.xlu0 %2733
    %v2735 = vsel %vm1073, %v2689, -inf
    %2736 = vmax.xlane.f32.xlu0 %v2735
    %v2737 = vpop.xlane.xlu0 %2736
    %v2738 = vsub.f32 %v2674, %v2692
    %v2739 = vsub.f32 %v2675, %v2695
    %v2740 = vsub.f32 %v2676, %v2698
    %v2741 = vsub.f32 %v2677, %v2701
    %v2742 = vsub.f32 %v2678, %v2704
    %v2743 = vsub.f32 %v2679, %v2707
    %v2744 = vsub.f32 %v2680, %v2710
    %v2745 = vsub.f32 %v2681, %v2713
    %v2746 = vsub.f32 %v2682, %v2716
    %v2747 = vsub.f32 %v2683, %v2719
    %v2748 = vsub.f32 %v2684, %v2722
    %v2749 = vsub.f32 %v2685, %v2725
    %v2750 = vsub.f32 %v2686, %v2728
    %v2751 = vsub.f32 %v2687, %v2731
    %v2752 = vsub.f32 %v2688, %v2734
    %v2753 = vsub.f32 %v2689, %v2737
    %v2754 = vmul.f32 %v2738, 1.442695
    %v2755 = vpow.pop %v2754
    %v2756 = vmul.f32 %v2739, 1.442695
    %v2757 = vpow.pop %v2756
    %v2758 = vmul.f32 %v2740, 1.442695
    %v2759 = vpow.pop %v2758
    %v2760 = vmul.f32 %v2741, 1.442695
    %v2761 = vpow.pop %v2760
    %v2762 = vmul.f32 %v2742, 1.442695
    %v2763 = vpow.pop %v2762
    %v2764 = vmul.f32 %v2743, 1.442695
    %v2765 = vpow.pop %v2764
    %v2766 = vmul.f32 %v2744, 1.442695
    %v2767 = vpow.pop %v2766
    %v2768 = vmul.f32 %v2745, 1.442695
    %v2769 = vpow.pop %v2768
    %v2770 = vmul.f32 %v2746, 1.442695
    %v2771 = vpow.pop %v2770
    %v2772 = vmul.f32 %v2747, 1.442695
    %v2773 = vpow.pop %v2772
    %v2774 = vmul.f32 %v2748, 1.442695
    %v2775 = vpow.pop %v2774
    %v2776 = vmul.f32 %v2749, 1.442695
    %v2777 = vpow.pop %v2776
    %v2778 = vmul.f32 %v2750, 1.442695
    %v2779 = vpow.pop %v2778
    %v2780 = vmul.f32 %v2751, 1.442695
    %v2781 = vpow.pop %v2780
    %v2782 = vmul.f32 %v2752, 1.442695
    %v2783 = vpow.pop %v2782
    %v2784 = vmul.f32 %v2753, 1.442695
    %v2785 = vpow.pop %v2784
    %v2786 = vsel %vm1073, %v2755, 0.0
    %2787 = vadd.xlane.f32.xlu0 %v2786
    %v2788 = vpop.xlane.xlu0 %2787
    %v2789 = vsel %vm1073, %v2757, 0.0
    %2790 = vadd.xlane.f32.xlu0 %v2789
    %v2791 = vpop.xlane.xlu0 %2790
    %v2792 = vsel %vm1073, %v2759, 0.0
    %2793 = vadd.xlane.f32.xlu0 %v2792
    %v2794 = vpop.xlane.xlu0 %2793
    %v2795 = vsel %vm1073, %v2761, 0.0
    %2796 = vadd.xlane.f32.xlu0 %v2795
    %v2797 = vpop.xlane.xlu0 %2796
    %v2798 = vsel %vm1073, %v2763, 0.0
    %2799 = vadd.xlane.f32.xlu0 %v2798
    %v2800 = vpop.xlane.xlu0 %2799
    %v2801 = vsel %vm1073, %v2765, 0.0
    %2802 = vadd.xlane.f32.xlu0 %v2801
    %v2803 = vpop.xlane.xlu0 %2802
    %v2804 = vsel %vm1073, %v2767, 0.0
    %2805 = vadd.xlane.f32.xlu0 %v2804
    %v2806 = vpop.xlane.xlu0 %2805
    %v2807 = vsel %vm1073, %v2769, 0.0
    %2808 = vadd.xlane.f32.xlu0 %v2807
    %v2809 = vpop.xlane.xlu0 %2808
    %v2810 = vsel %vm1073, %v2771, 0.0
    %2811 = vadd.xlane.f32.xlu0 %v2810
    %v2812 = vpop.xlane.xlu0 %2811
    %v2813 = vsel %vm1073, %v2773, 0.0
    %2814 = vadd.xlane.f32.xlu0 %v2813
    %v2815 = vpop.xlane.xlu0 %2814
    %v2816 = vsel %vm1073, %v2775, 0.0
    %2817 = vadd.xlane.f32.xlu0 %v2816
    %v2818 = vpop.xlane.xlu0 %2817
    %v2819 = vsel %vm1073, %v2777, 0.0
    %2820 = vadd.xlane.f32.xlu0 %v2819
    %v2821 = vpop.xlane.xlu0 %2820
    %v2822 = vsel %vm1073, %v2779, 0.0
    %2823 = vadd.xlane.f32.xlu0 %v2822
    %v2824 = vpop.xlane.xlu0 %2823
    %v2825 = vsel %vm1073, %v2781, 0.0
    %2826 = vadd.xlane.f32.xlu0 %v2825
    %v2827 = vpop.xlane.xlu0 %2826
    %v2828 = vsel %vm1073, %v2783, 0.0
    %2829 = vadd.xlane.f32.xlu0 %v2828
    %v2830 = vpop.xlane.xlu0 %2829
    %v2831 = vsel %vm1073, %v2785, 0.0
    %2832 = vadd.xlane.f32.xlu0 %v2831
    %v2833 = vpop.xlane.xlu0 %2832
    %v2834 = vrcp.pop %v2788
    %v2835 = vrcp.pop %v2791
    %v2836 = vrcp.pop %v2794
    %v2837 = vrcp.pop %v2797
    %v2838 = vrcp.pop %v2800
    %v2839 = vrcp.pop %v2803
    %v2840 = vrcp.pop %v2806
    %v2841 = vrcp.pop %v2809
    %v2842 = vrcp.pop %v2812
    %v2843 = vrcp.pop %v2815
    %v2844 = vrcp.pop %v2818
    %v2845 = vrcp.pop %v2821
    %v2846 = vrcp.pop %v2824
    %v2847 = vrcp.pop %v2827
    %v2848 = vrcp.pop %v2830
    %v2849 = vrcp.pop %v2833
    %v2850 = vmul.f32 %v2755, %v2834
    %v2851 = vmul.f32 %v2757, %v2835
    %v2852 = vmul.f32 %v2759, %v2836
    %v2853 = vmul.f32 %v2761, %v2837
    %v2854 = vmul.f32 %v2763, %v2838
    %v2855 = vmul.f32 %v2765, %v2839
    %v2856 = vmul.f32 %v2767, %v2840
    %v2857 = vmul.f32 %v2769, %v2841
    %v2858 = vmul.f32 %v2771, %v2842
    %v2859 = vmul.f32 %v2773, %v2843
    %v2860 = vmul.f32 %v2775, %v2844
    %v2861 = vmul.f32 %v2777, %v2845
    %v2862 = vmul.f32 %v2779, %v2846
    %v2863 = vmul.f32 %v2781, %v2847
    %v2864 = vmul.f32 %v2783, %v2848
    %v2865 = vmul.f32 %v2785, %v2849
    %2866 = vrot.lane.b32.xlu0 %v226, 56
    %v2867 = vpop.permute.xlu0 %2866
    %2868 = vrot.lane.b32.xlu0 %v231, 56
    %v2869 = vpop.permute.xlu0 %2868
    %v2873 = vsel %vm1073, %v2850, 0
    %v2876 = vsel %vm1073, %v2851, 0
    %2878 = vmatprep.subr.mxu0 0.0
    %2879 = vmatpush1.msra.mxu0 %v2867
    %2880 = vmatprep.subr.mxu0 0.0
    %2881 = vmatpush1.msra.mxu0 %v2869
    %2882 = vmatprep.subr.mxu0 0.0
    %2883 = vmatpush1.msra.mxu0 0.0
    %2884 = vmatprep.subr.mxu0 0.0
    %2885 = vmatpush1.msra.mxu0 0.0
    %2886 = vmatprep.subr.mxu0 0.0
    %2887 = vmatpush1.msra.mxu0 0.0
    %2888 = vmatprep.subr.mxu0 0.0
    %2889 = vmatpush1.msra.mxu0 0.0
    %2890 = vmatprep.subr.mxu0 0.0
    %2891 = vmatpush1.msra.mxu0 0.0
    %2892 = vmatprep.subr.mxu0 0.0
    %2893 = vmatpush1.msra.mxu0 0.0
    %2894 = vmatprep.subr.mxu0 0.0
    %2895 = vmatpush1.msra.mxu0 0.0
    %2896 = vmatprep.subr.mxu0 0.0
    %2897 = vmatpush1.msra.mxu0 0.0
    %2898 = vmatprep.subr.mxu0 0.0
    %2899 = vmatpush1.msra.mxu0 0.0
    %2900 = vmatprep.subr.mxu0 0.0
    %2901 = vmatpush1.msra.mxu0 0.0
    %2902 = vmatprep.subr.mxu0 0.0
    %2903 = vmatpush1.msra.mxu0 0.0
    %2904 = vmatprep.subr.mxu0 0.0
    %2905 = vmatpush1.msra.mxu0 0.0
    %2906 = vmatprep.subr.mxu0 0.0
    %2907 = vmatpush1.msra.mxu0 0.0
    %2908 = vmatprep.subr.mxu0 0.0
    %2909 = vmatpush1.msra.mxu0 0.0
    %2910 = vmatprep.subr.mxu0 0.0
    %2911 = vmatpush1.msra.mxu0 0.0
    %2912 = vmatprep.subr.mxu0 0.0
    %2913 = vmatpush1.msra.mxu0 0.0
    %2914 = vmatprep.subr.mxu0 0.0
    %2915 = vmatpush1.msra.mxu0 0.0
    %2916 = vmatprep.subr.mxu0 0.0
    %2917 = vmatpush1.msra.mxu0 0.0
    %2918 = vmatprep.subr.mxu0 0.0
    %2919 = vmatpush1.msra.mxu0 0.0
    %2920 = vmatprep.subr.mxu0 0.0
    %2921 = vmatpush1.msra.mxu0 0.0
    %2922 = vmatprep.subr.mxu0 0.0
    %2923 = vmatpush1.msra.mxu0 0.0
    %2924 = vmatprep.subr.mxu0 0.0
    %2925 = vmatpush1.msra.mxu0 0.0
    %2926 = vmatprep.subr.mxu0 0.0
    %2927 = vmatpush1.msra.mxu0 0.0
    %2928 = vmatprep.subr.mxu0 0.0
    %2929 = vmatpush1.msra.mxu0 0.0
    %2930 = vmatprep.subr.mxu0 0.0
    %2931 = vmatpush1.msra.mxu0 0.0
    %2932 = vmatprep.subr.mxu0 0.0
    %2933 = vmatpush1.msra.mxu0 0.0
    %2934 = vmatprep.subr.mxu0 0.0
    %2935 = vmatpush1.msra.mxu0 0.0
    %2936 = vmatprep.subr.mxu0 0.0
    %2937 = vmatpush1.msra.mxu0 0.0
    %2938 = vmatprep.subr.mxu0 0.0
    %2939 = vmatpush1.msra.mxu0 0.0
    %2940 = vmatprep.subr.mxu0 0.0
    %2941 = vmatpush1.msra.mxu0 0.0
    %2942 = vmatprep.mubr.f32.mxu0 0.0
    %2943 = vmatmul.mubr.f32.gmra.mrb[0].mxu0 %v2873
    %v2944 = vpop.f32.mrb[0].mxu0
    %v2945 = vadd.f32 0.0, %v2944
    %v2946 = vpop.f32.mrb[0].mxu0
    %2947 = vmatprep.mubr.f32.mxu0 0.0
    %2948 = vmatmul.mubr.f32.gmra.mrb[0].mxu0 %v2876
    %v2949 = vpop.f32.mrb[0].mxu0
    %v2950 = vadd.f32 0.0, %v2949
    %v2951 = vpop.f32.mrb[0].mxu0
    %2952 = vdwg.mxu0
    %2953 = vrot.lane.b32.xlu0 %v236, 56
    %v2954 = vpop.permute.xlu0 %2953
    %2955 = vrot.lane.b32.xlu0 %v241, 56
    %v2956 = vpop.permute.xlu0 %2955
    %v2960 = vsel %vm1073, %v2852, 0
    %v2963 = vsel %vm1073, %v2853, 0
    %2965 = vmatprep.subr.mxu0 0.0
    %2966 = vmatpush1.msra.mxu0 %v2954
    %2967 = vmatprep.subr.mxu0 0.0
    %2968 = vmatpush1.msra.mxu0 %v2956
    %2969 = vmatprep.subr.mxu0 0.0
    %2970 = vmatpush1.msra.mxu0 0.0
    %2971 = vmatprep.subr.mxu0 0.0
    %2972 = vmatpush1.msra.mxu0 0.0
    %2973 = vmatprep.subr.mxu0 0.0
    %2974 = vmatpush1.msra.mxu0 0.0
    %2975 = vmatprep.subr.mxu0 0.0
    %2976 = vmatpush1.msra.mxu0 0.0
    %2977 = vmatprep.subr.mxu0 0.0
    %2978 = vmatpush1.msra.mxu0 0.0
    %2979 = vmatprep.subr.mxu0 0.0
    %2980 = vmatpush1.msra.mxu0 0.0
    %2981 = vmatprep.subr.mxu0 0.0
    %2982 = vmatpush1.msra.mxu0 0.0
    %2983 = vmatprep.subr.mxu0 0.0
    %2984 = vmatpush1.msra.mxu0 0.0
    %2985 = vmatprep.subr.mxu0 0.0
    %2986 = vmatpush1.msra.mxu0 0.0
    %2987 = vmatprep.subr.mxu0 0.0
    %2988 = vmatpush1.msra.mxu0 0.0
    %2989 = vmatprep.subr.mxu0 0.0
    %2990 = vmatpush1.msra.mxu0 0.0
    %2991 = vmatprep.subr.mxu0 0.0
    %2992 = vmatpush1.msra.mxu0 0.0
    %2993 = vmatprep.subr.mxu0 0.0
    %2994 = vmatpush1.msra.mxu0 0.0
    %2995 = vmatprep.subr.mxu0 0.0
    %2996 = vmatpush1.msra.mxu0 0.0
    %2997 = vmatprep.subr.mxu0 0.0
    %2998 = vmatpush1.msra.mxu0 0.0
    %2999 = vmatprep.subr.mxu0 0.0
    %3000 = vmatpush1.msra.mxu0 0.0
    %3001 = vmatprep.subr.mxu0 0.0
    %3002 = vmatpush1.msra.mxu0 0.0
    %3003 = vmatprep.subr.mxu0 0.0
    %3004 = vmatpush1.msra.mxu0 0.0
    %3005 = vmatprep.subr.mxu0 0.0
    %3006 = vmatpush1.msra.mxu0 0.0
    %3007 = vmatprep.subr.mxu0 0.0
    %3008 = vmatpush1.msra.mxu0 0.0
    %3009 = vmatprep.subr.mxu0 0.0
    %3010 = vmatpush1.msra.mxu0 0.0
    %3011 = vmatprep.subr.mxu0 0.0
    %3012 = vmatpush1.msra.mxu0 0.0
    %3013 = vmatprep.subr.mxu0 0.0
    %3014 = vmatpush1.msra.mxu0 0.0
    %3015 = vmatprep.subr.mxu0 0.0
    %3016 = vmatpush1.msra.mxu0 0.0
    %3017 = vmatprep.subr.mxu0 0.0
    %3018 = vmatpush1.msra.mxu0 0.0
    %3019 = vmatprep.subr.mxu0 0.0
    %3020 = vmatpush1.msra.mxu0 0.0
    %3021 = vmatprep.subr.mxu0 0.0
    %3022 = vmatpush1.msra.mxu0 0.0
    %3023 = vmatprep.subr.mxu0 0.0
    %3024 = vmatpush1.msra.mxu0 0.0
    %3025 = vmatprep.subr.mxu0 0.0
    %3026 = vmatpush1.msra.mxu0 0.0
    %3027 = vmatprep.subr.mxu0 0.0
    %3028 = vmatpush1.msra.mxu0 0.0
    %3029 = vmatprep.mubr.f32.mxu0 0.0
    %3030 = vmatmul.mubr.f32.gmra.mrb[0].mxu0 %v2960
    %v3031 = vpop.f32.mrb[0].mxu0
    %v3032 = vadd.f32 0.0, %v3031
    %v3033 = vpop.f32.mrb[0].mxu0
    %3034 = vmatprep.mubr.f32.mxu0 0.0
    %3035 = vmatmul.mubr.f32.gmra.mrb[0].mxu0 %v2963
    %v3036 = vpop.f32.mrb[0].mxu0
    %v3037 = vadd.f32 0.0, %v3036
    %v3038 = vpop.f32.mrb[0].mxu0
    %3039 = vdwg.mxu0
    %3040 = vrot.lane.b32.xlu0 %v246, 56
    %v3041 = vpop.permute.xlu0 %3040
    %3042 = vrot.lane.b32.xlu0 %v251, 56
    %v3043 = vpop.permute.xlu0 %3042
    %v3047 = vsel %vm1073, %v2854, 0
    %v3050 = vsel %vm1073, %v2855, 0
    %3052 = vmatprep.subr.mxu0 0.0
    %3053 = vmatpush1.msra.mxu0 %v3041
    %3054 = vmatprep.subr.mxu0 0.0
    %3055 = vmatpush1.msra.mxu0 %v3043
    %3056 = vmatprep.subr.mxu0 0.0
    %3057 = vmatpush1.msra.mxu0 0.0
    %3058 = vmatprep.subr.mxu0 0.0
    %3059 = vmatpush1.msra.mxu0 0.0
    %3060 = vmatprep.subr.mxu0 0.0
    %3061 = vmatpush1.msra.mxu0 0.0
    %3062 = vmatprep.subr.mxu0 0.0
    %3063 = vmatpush1.msra.mxu0 0.0
    %3064 = vmatprep.subr.mxu0 0.0
    %3065 = vmatpush1.msra.mxu0 0.0
    %3066 = vmatprep.subr.mxu0 0.0
    %3067 = vmatpush1.msra.mxu0 0.0
    %3068 = vmatprep.subr.mxu0 0.0
    %3069 = vmatpush1.msra.mxu0 0.0
    %3070 = vmatprep.subr.mxu0 0.0
    %3071 = vmatpush1.msra.mxu0 0.0
    %3072 = vmatprep.subr.mxu0 0.0
    %3073 = vmatpush1.msra.mxu0 0.0
    %3074 = vmatprep.subr.mxu0 0.0
    %3075 = vmatpush1.msra.mxu0 0.0
    %3076 = vmatprep.subr.mxu0 0.0
    %3077 = vmatpush1.msra.mxu0 0.0
    %3078 = vmatprep.subr.mxu0 0.0
    %3079 = vmatpush1.msra.mxu0 0.0
    %3080 = vmatprep.subr.mxu0 0.0
    %3081 = vmatpush1.msra.mxu0 0.0
    %3082 = vmatprep.subr.mxu0 0.0
    %3083 = vmatpush1.msra.mxu0 0.0
    %3084 = vmatprep.subr.mxu0 0.0
    %3085 = vmatpush1.msra.mxu0 0.0
    %3086 = vmatprep.subr.mxu0 0.0
    %3087 = vmatpush1.msra.mxu0 0.0
    %3088 = vmatprep.subr.mxu0 0.0
    %3089 = vmatpush1.msra.mxu0 0.0
    %3090 = vmatprep.subr.mxu0 0.0
    %3091 = vmatpush1.msra.mxu0 0.0
    %3092 = vmatprep.subr.mxu0 0.0
    %3093 = vmatpush1.msra.mxu0 0.0
    %3094 = vmatprep.subr.mxu0 0.0
    %3095 = vmatpush1.msra.mxu0 0.0
    %3096 = vmatprep.subr.mxu0 0.0
    %3097 = vmatpush1.msra.mxu0 0.0
    %3098 = vmatprep.subr.mxu0 0.0
    %3099 = vmatpush1.msra.mxu0 0.0
    %3100 = vmatprep.subr.mxu0 0.0
    %3101 = vmatpush1.msra.mxu0 0.0
    %3102 = vmatprep.subr.mxu0 0.0
    %3103 = vmatpush1.msra.mxu0 0.0
    %3104 = vmatprep.subr.mxu0 0.0
    %3105 = vmatpush1.msra.mxu0 0.0
    %3106 = vmatprep.subr.mxu0 0.0
    %3107 = vmatpush1.msra.mxu0 0.0
    %3108 = vmatprep.subr.mxu0 0.0
    %3109 = vmatpush1.msra.mxu0 0.0
    %3110 = vmatprep.subr.mxu0 0.0
    %3111 = vmatpush1.msra.mxu0 0.0
    %3112 = vmatprep.subr.mxu0 0.0
    %3113 = vmatpush1.msra.mxu0 0.0
    %3114 = vmatprep.subr.mxu0 0.0
    %3115 = vmatpush1.msra.mxu0 0.0
    %3116 = vmatprep.mubr.f32.mxu0 0.0
    %3117 = vmatmul.mubr.f32.gmra.mrb[0].mxu0 %v3047
    %v3118 = vpop.f32.mrb[0].mxu0
    %v3119 = vadd.f32 0.0, %v3118
    %v3120 = vpop.f32.mrb[0].mxu0
    %3121 = vmatprep.mubr.f32.mxu0 0.0
    %3122 = vmatmul.mubr.f32.gmra.mrb[0].mxu0 %v3050
    %v3123 = vpop.f32.mrb[0].mxu0
    %v3124 = vadd.f32 0.0, %v3123
    %v3125 = vpop.f32.mrb[0].mxu0
    %3126 = vdwg.mxu0
    %3127 = vrot.lane.b32.xlu0 %v256, 56
    %v3128 = vpop.permute.xlu0 %3127
    %3129 = vrot.lane.b32.xlu0 %v261, 56
    %v3130 = vpop.permute.xlu0 %3129
    %v3134 = vsel %vm1073, %v2856, 0
    %v3137 = vsel %vm1073, %v2857, 0
    %3139 = vmatprep.subr.mxu0 0.0
    %3140 = vmatpush1.msra.mxu0 %v3128
    %3141 = vmatprep.subr.mxu0 0.0
    %3142 = vmatpush1.msra.mxu0 %v3130
    %3143 = vmatprep.subr.mxu0 0.0
    %3144 = vmatpush1.msra.mxu0 0.0
    %3145 = vmatprep.subr.mxu0 0.0
    %3146 = vmatpush1.msra.mxu0 0.0
    %3147 = vmatprep.subr.mxu0 0.0
    %3148 = vmatpush1.msra.mxu0 0.0
    %3149 = vmatprep.subr.mxu0 0.0
    %3150 = vmatpush1.msra.mxu0 0.0
    %3151 = vmatprep.subr.mxu0 0.0
    %3152 = vmatpush1.msra.mxu0 0.0
    %3153 = vmatprep.subr.mxu0 0.0
    %3154 = vmatpush1.msra.mxu0 0.0
    %3155 = vmatprep.subr.mxu0 0.0
    %3156 = vmatpush1.msra.mxu0 0.0
    %3157 = vmatprep.subr.mxu0 0.0
    %3158 = vmatpush1.msra.mxu0 0.0
    %3159 = vmatprep.subr.mxu0 0.0
    %3160 = vmatpush1.msra.mxu0 0.0
    %3161 = vmatprep.subr.mxu0 0.0
    %3162 = vmatpush1.msra.mxu0 0.0
    %3163 = vmatprep.subr.mxu0 0.0
    %3164 = vmatpush1.msra.mxu0 0.0
    %3165 = vmatprep.subr.mxu0 0.0
    %3166 = vmatpush1.msra.mxu0 0.0
    %3167 = vmatprep.subr.mxu0 0.0
    %3168 = vmatpush1.msra.mxu0 0.0
    %3169 = vmatprep.subr.mxu0 0.0
    %3170 = vmatpush1.msra.mxu0 0.0
    %3171 = vmatprep.subr.mxu0 0.0
    %3172 = vmatpush1.msra.mxu0 0.0
    %3173 = vmatprep.subr.mxu0 0.0
    %3174 = vmatpush1.msra.mxu0 0.0
    %3175 = vmatprep.subr.mxu0 0.0
    %3176 = vmatpush1.msra.mxu0 0.0
    %3177 = vmatprep.subr.mxu0 0.0
    %3178 = vmatpush1.msra.mxu0 0.0
    %3179 = vmatprep.subr.mxu0 0.0
    %3180 = vmatpush1.msra.mxu0 0.0
    %3181 = vmatprep.subr.mxu0 0.0
    %3182 = vmatpush1.msra.mxu0 0.0
    %3183 = vmatprep.subr.mxu0 0.0
    %3184 = vmatpush1.msra.mxu0 0.0
    %3185 = vmatprep.subr.mxu0 0.0
    %3186 = vmatpush1.msra.mxu0 0.0
    %3187 = vmatprep.subr.mxu0 0.0
    %3188 = vmatpush1.msra.mxu0 0.0
    %3189 = vmatprep.subr.mxu0 0.0
    %3190 = vmatpush1.msra.mxu0 0.0
    %3191 = vmatprep.subr.mxu0 0.0
    %3192 = vmatpush1.msra.mxu0 0.0
    %3193 = vmatprep.subr.mxu0 0.0
    %3194 = vmatpush1.msra.mxu0 0.0
    %3195 = vmatprep.subr.mxu0 0.0
    %3196 = vmatpush1.msra.mxu0 0.0
    %3197 = vmatprep.subr.mxu0 0.0
    %3198 = vmatpush1.msra.mxu0 0.0
    %3199 = vmatprep.subr.mxu0 0.0
    %3200 = vmatpush1.msra.mxu0 0.0
    %3201 = vmatprep.subr.mxu0 0.0
    %3202 = vmatpush1.msra.mxu0 0.0
    %3203 = vmatprep.mubr.f32.mxu0 0.0
    %3204 = vmatmul.mubr.f32.gmra.mrb[0].mxu0 %v3134
    %v3205 = vpop.f32.mrb[0].mxu0
    %v3206 = vadd.f32 0.0, %v3205
    %v3207 = vpop.f32.mrb[0].mxu0
    %3208 = vmatprep.mubr.f32.mxu0 0.0
    %3209 = vmatmul.mubr.f32.gmra.mrb[0].mxu0 %v3137
    %v3210 = vpop.f32.mrb[0].mxu0
    %v3211 = vadd.f32 0.0, %v3210
    %v3212 = vpop.f32.mrb[0].mxu0
    %3213 = vdwg.mxu0
    %3214 = vrot.lane.b32.xlu0 %v266, 56
    %v3215 = vpop.permute.xlu0 %3214
    %3216 = vrot.lane.b32.xlu0 %v271, 56
    %v3217 = vpop.permute.xlu0 %3216
    %v3221 = vsel %vm1073, %v2858, 0
    %v3224 = vsel %vm1073, %v2859, 0
    %3226 = vmatprep.subr.mxu0 0.0
    %3227 = vmatpush1.msra.mxu0 %v3215
    %3228 = vmatprep.subr.mxu0 0.0
    %3229 = vmatpush1.msra.mxu0 %v3217
    %3230 = vmatprep.subr.mxu0 0.0
    %3231 = vmatpush1.msra.mxu0 0.0
    %3232 = vmatprep.subr.mxu0 0.0
    %3233 = vmatpush1.msra.mxu0 0.0
    %3234 = vmatprep.subr.mxu0 0.0
    %3235 = vmatpush1.msra.mxu0 0.0
    %3236 = vmatprep.subr.mxu0 0.0
    %3237 = vmatpush1.msra.mxu0 0.0
    %3238 = vmatprep.subr.mxu0 0.0
    %3239 = vmatpush1.msra.mxu0 0.0
    %3240 = vmatprep.subr.mxu0 0.0
    %3241 = vmatpush1.msra.mxu0 0.0
    %3242 = vmatprep.subr.mxu0 0.0
    %3243 = vmatpush1.msra.mxu0 0.0
    %3244 = vmatprep.subr.mxu0 0.0
    %3245 = vmatpush1.msra.mxu0 0.0
    %3246 = vmatprep.subr.mxu0 0.0
    %3247 = vmatpush1.msra.mxu0 0.0
    %3248 = vmatprep.subr.mxu0 0.0
    %3249 = vmatpush1.msra.mxu0 0.0
    %3250 = vmatprep.subr.mxu0 0.0
    %3251 = vmatpush1.msra.mxu0 0.0
    %3252 = vmatprep.subr.mxu0 0.0
    %3253 = vmatpush1.msra.mxu0 0.0
    %3254 = vmatprep.subr.mxu0 0.0
    %3255 = vmatpush1.msra.mxu0 0.0
    %3256 = vmatprep.subr.mxu0 0.0
    %3257 = vmatpush1.msra.mxu0 0.0
    %3258 = vmatprep.subr.mxu0 0.0
    %3259 = vmatpush1.msra.mxu0 0.0
    %3260 = vmatprep.subr.mxu0 0.0
    %3261 = vmatpush1.msra.mxu0 0.0
    %3262 = vmatprep.subr.mxu0 0.0
    %3263 = vmatpush1.msra.mxu0 0.0
    %3264 = vmatprep.subr.mxu0 0.0
    %3265 = vmatpush1.msra.mxu0 0.0
    %3266 = vmatprep.subr.mxu0 0.0
    %3267 = vmatpush1.msra.mxu0 0.0
    %3268 = vmatprep.subr.mxu0 0.0
    %3269 = vmatpush1.msra.mxu0 0.0
    %3270 = vmatprep.subr.mxu0 0.0
    %3271 = vmatpush1.msra.mxu0 0.0
    %3272 = vmatprep.subr.mxu0 0.0
    %3273 = vmatpush1.msra.mxu0 0.0
    %3274 = vmatprep.subr.mxu0 0.0
    %3275 = vmatpush1.msra.mxu0 0.0
    %3276 = vmatprep.subr.mxu0 0.0
    %3277 = vmatpush1.msra.mxu0 0.0
    %3278 = vmatprep.subr.mxu0 0.0
    %3279 = vmatpush1.msra.mxu0 0.0
    %3280 = vmatprep.subr.mxu0 0.0
    %3281 = vmatpush1.msra.mxu0 0.0
    %3282 = vmatprep.subr.mxu0 0.0
    %3283 = vmatpush1.msra.mxu0 0.0
    %3284 = vmatprep.subr.mxu0 0.0
    %3285 = vmatpush1.msra.mxu0 0.0
    %3286 = vmatprep.subr.mxu0 0.0
    %3287 = vmatpush1.msra.mxu0 0.0
    %3288 = vmatprep.subr.mxu0 0.0
    %3289 = vmatpush1.msra.mxu0 0.0
    %3290 = vmatprep.mubr.f32.mxu0 0.0
    %3291 = vmatmul.mubr.f32.gmra.mrb[0].mxu0 %v3221
    %v3292 = vpop.f32.mrb[0].mxu0
    %v3293 = vadd.f32 0.0, %v3292
    %v3294 = vpop.f32.mrb[0].mxu0
    %3295 = vmatprep.mubr.f32.mxu0 0.0
    %3296 = vmatmul.mubr.f32.gmra.mrb[0].mxu0 %v3224
    %v3297 = vpop.f32.mrb[0].mxu0
    %v3298 = vadd.f32 0.0, %v3297
    %v3299 = vpop.f32.mrb[0].mxu0
    %3300 = vdwg.mxu0
    %3301 = vrot.lane.b32.xlu0 %v276, 56
    %v3302 = vpop.permute.xlu0 %3301
    %3303 = vrot.lane.b32.xlu0 %v281, 56
    %v3304 = vpop.permute.xlu0 %3303
    %v3308 = vsel %vm1073, %v2860, 0
    %v3311 = vsel %vm1073, %v2861, 0
    %3313 = vmatprep.subr.mxu0 0.0
    %3314 = vmatpush1.msra.mxu0 %v3302
    %3315 = vmatprep.subr.mxu0 0.0
    %3316 = vmatpush1.msra.mxu0 %v3304
    %3317 = vmatprep.subr.mxu0 0.0
    %3318 = vmatpush1.msra.mxu0 0.0
    %3319 = vmatprep.subr.mxu0 0.0
    %3320 = vmatpush1.msra.mxu0 0.0
    %3321 = vmatprep.subr.mxu0 0.0
    %3322 = vmatpush1.msra.mxu0 0.0
    %3323 = vmatprep.subr.mxu0 0.0
    %3324 = vmatpush1.msra.mxu0 0.0
    %3325 = vmatprep.subr.mxu0 0.0
    %3326 = vmatpush1.msra.mxu0 0.0
    %3327 = vmatprep.subr.mxu0 0.0
    %3328 = vmatpush1.msra.mxu0 0.0
    %3329 = vmatprep.subr.mxu0 0.0
    %3330 = vmatpush1.msra.mxu0 0.0
    %3331 = vmatprep.subr.mxu0 0.0
    %3332 = vmatpush1.msra.mxu0 0.0
    %3333 = vmatprep.subr.mxu0 0.0
    %3334 = vmatpush1.msra.mxu0 0.0
    %3335 = vmatprep.subr.mxu0 0.0
    %3336 = vmatpush1.msra.mxu0 0.0
    %3337 = vmatprep.subr.mxu0 0.0
    %3338 = vmatpush1.msra.mxu0 0.0
    %3339 = vmatprep.subr.mxu0 0.0
    %3340 = vmatpush1.msra.mxu0 0.0
    %3341 = vmatprep.subr.mxu0 0.0
    %3342 = vmatpush1.msra.mxu0 0.0
    %3343 = vmatprep.subr.mxu0 0.0
    %3344 = vmatpush1.msra.mxu0 0.0
    %3345 = vmatprep.subr.mxu0 0.0
    %3346 = vmatpush1.msra.mxu0 0.0
    %3347 = vmatprep.subr.mxu0 0.0
    %3348 = vmatpush1.msra.mxu0 0.0
    %3349 = vmatprep.subr.mxu0 0.0
    %3350 = vmatpush1.msra.mxu0 0.0
    %3351 = vmatprep.subr.mxu0 0.0
    %3352 = vmatpush1.msra.mxu0 0.0
    %3353 = vmatprep.subr.mxu0 0.0
    %3354 = vmatpush1.msra.mxu0 0.0
    %3355 = vmatprep.subr.mxu0 0.0
    %3356 = vmatpush1.msra.mxu0 0.0
    %3357 = vmatprep.subr.mxu0 0.0
    %3358 = vmatpush1.msra.mxu0 0.0
    %3359 = vmatprep.subr.mxu0 0.0
    %3360 = vmatpush1.msra.mxu0 0.0
    %3361 = vmatprep.subr.mxu0 0.0
    %3362 = vmatpush1.msra.mxu0 0.0
    %3363 = vmatprep.subr.mxu0 0.0
    %3364 = vmatpush1.msra.mxu0 0.0
    %3365 = vmatprep.subr.mxu0 0.0
    %3366 = vmatpush1.msra.mxu0 0.0
    %3367 = vmatprep.subr.mxu0 0.0
    %3368 = vmatpush1.msra.mxu0 0.0
    %3369 = vmatprep.subr.mxu0 0.0
    %3370 = vmatpush1.msra.mxu0 0.0
    %3371 = vmatprep.subr.mxu0 0.0
    %3372 = vmatpush1.msra.mxu0 0.0
    %3373 = vmatprep.subr.mxu0 0.0
    %3374 = vmatpush1.msra.mxu0 0.0
    %3375 = vmatprep.subr.mxu0 0.0
    %3376 = vmatpush1.msra.mxu0 0.0
    %3377 = vmatprep.mubr.f32.mxu0 0.0
    %3378 = vmatmul.mubr.f32.gmra.mrb[0].mxu0 %v3308
    %v3379 = vpop.f32.mrb[0].mxu0
    %v3380 = vadd.f32 0.0, %v3379
    %v3381 = vpop.f32.mrb[0].mxu0
    %3382 = vmatprep.mubr.f32.mxu0 0.0
    %3383 = vmatmul.mubr.f32.gmra.mrb[0].mxu0 %v3311
    %v3384 = vpop.f32.mrb[0].mxu0
    %v3385 = vadd.f32 0.0, %v3384
    %v3386 = vpop.f32.mrb[0].mxu0
    %3387 = vdwg.mxu0
    %3388 = vrot.lane.b32.xlu0 %v286, 56
    %v3389 = vpop.permute.xlu0 %3388
    %3390 = vrot.lane.b32.xlu0 %v291, 56
    %v3391 = vpop.permute.xlu0 %3390
    %v3395 = vsel %vm1073, %v2862, 0
    %v3398 = vsel %vm1073, %v2863, 0
    %3400 = vmatprep.subr.mxu0 0.0
    %3401 = vmatpush1.msra.mxu0 %v3389
    %3402 = vmatprep.subr.mxu0 0.0
    %3403 = vmatpush1.msra.mxu0 %v3391
    %3404 = vmatprep.subr.mxu0 0.0
    %3405 = vmatpush1.msra.mxu0 0.0
    %3406 = vmatprep.subr.mxu0 0.0
    %3407 = vmatpush1.msra.mxu0 0.0
    %3408 = vmatprep.subr.mxu0 0.0
    %3409 = vmatpush1.msra.mxu0 0.0
    %3410 = vmatprep.subr.mxu0 0.0
    %3411 = vmatpush1.msra.mxu0 0.0
    %3412 = vmatprep.subr.mxu0 0.0
    %3413 = vmatpush1.msra.mxu0 0.0
    %3414 = vmatprep.subr.mxu0 0.0
    %3415 = vmatpush1.msra.mxu0 0.0
    %3416 = vmatprep.subr.mxu0 0.0
    %3417 = vmatpush1.msra.mxu0 0.0
    %3418 = vmatprep.subr.mxu0 0.0
    %3419 = vmatpush1.msra.mxu0 0.0
    %3420 = vmatprep.subr.mxu0 0.0
    %3421 = vmatpush1.msra.mxu0 0.0
    %3422 = vmatprep.subr.mxu0 0.0
    %3423 = vmatpush1.msra.mxu0 0.0
    %3424 = vmatprep.subr.mxu0 0.0
    %3425 = vmatpush1.msra.mxu0 0.0
    %3426 = vmatprep.subr.mxu0 0.0
    %3427 = vmatpush1.msra.mxu0 0.0
    %3428 = vmatprep.subr.mxu0 0.0
    %3429 = vmatpush1.msra.mxu0 0.0
    %3430 = vmatprep.subr.mxu0 0.0
    %3431 = vmatpush1.msra.mxu0 0.0
    %3432 = vmatprep.subr.mxu0 0.0
    %3433 = vmatpush1.msra.mxu0 0.0
    %3434 = vmatprep.subr.mxu0 0.0
    %3435 = vmatpush1.msra.mxu0 0.0
    %3436 = vmatprep.subr.mxu0 0.0
    %3437 = vmatpush1.msra.mxu0 0.0
    %3438 = vmatprep.subr.mxu0 0.0
    %3439 = vmatpush1.msra.mxu0 0.0
    %3440 = vmatprep.subr.mxu0 0.0
    %3441 = vmatpush1.msra.mxu0 0.0
    %3442 = vmatprep.subr.mxu0 0.0
    %3443 = vmatpush1.msra.mxu0 0.0
    %3444 = vmatprep.subr.mxu0 0.0
    %3445 = vmatpush1.msra.mxu0 0.0
    %3446 = vmatprep.subr.mxu0 0.0
    %3447 = vmatpush1.msra.mxu0 0.0
    %3448 = vmatprep.subr.mxu0 0.0
    %3449 = vmatpush1.msra.mxu0 0.0
    %3450 = vmatprep.subr.mxu0 0.0
    %3451 = vmatpush1.msra.mxu0 0.0
    %3452 = vmatprep.subr.mxu0 0.0
    %3453 = vmatpush1.msra.mxu0 0.0
    %3454 = vmatprep.subr.mxu0 0.0
    %3455 = vmatpush1.msra.mxu0 0.0
    %3456 = vmatprep.subr.mxu0 0.0
    %3457 = vmatpush1.msra.mxu0 0.0
    %3458 = vmatprep.subr.mxu0 0.0
    %3459 = vmatpush1.msra.mxu0 0.0
    %3460 = vmatprep.subr.mxu0 0.0
    %3461 = vmatpush1.msra.mxu0 0.0
    %3462 = vmatprep.subr.mxu0 0.0
    %3463 = vmatpush1.msra.mxu0 0.0
    %3464 = vmatprep.mubr.f32.mxu0 0.0
    %3465 = vmatmul.mubr.f32.gmra.mrb[0].mxu0 %v3395
    %v3466 = vpop.f32.mrb[0].mxu0
    %v3467 = vadd.f32 0.0, %v3466
    %v3468 = vpop.f32.mrb[0].mxu0
    %3469 = vmatprep.mubr.f32.mxu0 0.0
    %3470 = vmatmul.mubr.f32.gmra.mrb[0].mxu0 %v3398
    %v3471 = vpop.f32.mrb[0].mxu0
    %v3472 = vadd.f32 0.0, %v3471
    %v3473 = vpop.f32.mrb[0].mxu0
    %3474 = vdwg.mxu0
    %3475 = vrot.lane.b32.xlu0 %v296, 56
    %v3476 = vpop.permute.xlu0 %3475
    %3477 = vrot.lane.b32.xlu0 %v301, 56
    %v3478 = vpop.permute.xlu0 %3477
    %v3482 = vsel %vm1073, %v2864, 0
    %v3485 = vsel %vm1073, %v2865, 0
    %3487 = vmatprep.subr.mxu0 0.0
    %3488 = vmatpush1.msra.mxu0 %v3476
    %3489 = vmatprep.subr.mxu0 0.0
    %3490 = vmatpush1.msra.mxu0 %v3478
    %3491 = vmatprep.subr.mxu0 0.0
    %3492 = vmatpush1.msra.mxu0 0.0
    %3493 = vmatprep.subr.mxu0 0.0
    %3494 = vmatpush1.msra.mxu0 0.0
    %3495 = vmatprep.subr.mxu0 0.0
    %3496 = vmatpush1.msra.mxu0 0.0
    %3497 = vmatprep.subr.mxu0 0.0
    %3498 = vmatpush1.msra.mxu0 0.0
    %3499 = vmatprep.subr.mxu0 0.0
    %3500 = vmatpush1.msra.mxu0 0.0
    %3501 = vmatprep.subr.mxu0 0.0
    %3502 = vmatpush1.msra.mxu0 0.0
    %3503 = vmatprep.subr.mxu0 0.0
    %3504 = vmatpush1.msra.mxu0 0.0
    %3505 = vmatprep.subr.mxu0 0.0
    %3506 = vmatpush1.msra.mxu0 0.0
    %3507 = vmatprep.subr.mxu0 0.0
    %3508 = vmatpush1.msra.mxu0 0.0
    %3509 = vmatprep.subr.mxu0 0.0
    %3510 = vmatpush1.msra.mxu0 0.0
    %3511 = vmatprep.subr.mxu0 0.0
    %3512 = vmatpush1.msra.mxu0 0.0
    %3513 = vmatprep.subr.mxu0 0.0
    %3514 = vmatpush1.msra.mxu0 0.0
    %3515 = vmatprep.subr.mxu0 0.0
    %3516 = vmatpush1.msra.mxu0 0.0
    %3517 = vmatprep.subr.mxu0 0.0
    %3518 = vmatpush1.msra.mxu0 0.0
    %3519 = vmatprep.subr.mxu0 0.0
    %3520 = vmatpush1.msra.mxu0 0.0
    %3521 = vmatprep.subr.mxu0 0.0
    %3522 = vmatpush1.msra.mxu0 0.0
    %3523 = vmatprep.subr.mxu0 0.0
    %3524 = vmatpush1.msra.mxu0 0.0
    %3525 = vmatprep.subr.mxu0 0.0
    %3526 = vmatpush1.msra.mxu0 0.0
    %3527 = vmatprep.subr.mxu0 0.0
    %3528 = vmatpush1.msra.mxu0 0.0
    %3529 = vmatprep.subr.mxu0 0.0
    %3530 = vmatpush1.msra.mxu0 0.0
    %3531 = vmatprep.subr.mxu0 0.0
    %3532 = vmatpush1.msra.mxu0 0.0
    %3533 = vmatprep.subr.mxu0 0.0
    %3534 = vmatpush1.msra.mxu0 0.0
    %3535 = vmatprep.subr.mxu0 0.0
    %3536 = vmatpush1.msra.mxu0 0.0
    %3537 = vmatprep.subr.mxu0 0.0
    %3538 = vmatpush1.msra.mxu0 0.0
    %3539 = vmatprep.subr.mxu0 0.0
    %3540 = vmatpush1.msra.mxu0 0.0
    %3541 = vmatprep.subr.mxu0 0.0
    %3542 = vmatpush1.msra.mxu0 0.0
    %3543 = vmatprep.subr.mxu0 0.0
    %3544 = vmatpush1.msra.mxu0 0.0
    %3545 = vmatprep.subr.mxu0 0.0
    %3546 = vmatpush1.msra.mxu0 0.0
    %3547 = vmatprep.subr.mxu0 0.0
    %3548 = vmatpush1.msra.mxu0 0.0
    %3549 = vmatprep.subr.mxu0 0.0
    %3550 = vmatpush1.msra.mxu0 0.0
    %3551 = vmatprep.mubr.f32.mxu0 0.0
    %3552 = vmatmul.mubr.f32.gmra.mrb[0].mxu0 %v3482
    %v3553 = vpop.f32.mrb[0].mxu0
    %v3554 = vadd.f32 0.0, %v3553
    %v3555 = vpop.f32.mrb[0].mxu0
    %3556 = vmatprep.mubr.f32.mxu0 0.0
    %3557 = vmatmul.mubr.f32.gmra.mrb[0].mxu0 %v3485
    %v3558 = vpop.f32.mrb[0].mxu0
    %v3559 = vadd.f32 0.0, %v3558
    %v3560 = vpop.f32.mrb[0].mxu0
    %3561 = vdwg.mxu0
    %3562 = vrot.lane.b32.xlu0 %v312, 112
    %v3563 = vpop.permute.xlu0 %3562
    %3564 = vrot.lane.b32.xlu0 %v313, 112
    %v3565 = vpop.permute.xlu0 %3564
    %3566 = vrot.lane.b32.xlu0 %v226, 80
    %v3567 = vpop.permute.xlu0 %3566
    %3568 = vrot.lane.b32.xlu0 %v231, 80
    %v3569 = vpop.permute.xlu0 %3568
    %v3570 = vsel %vm334, %v3563, 0
    %v3572 = vsel %vm334, %v3565, 0
    %v3574 = vsel %vm334, %v3567, 0
    %v3576 = vsel %vm334, %v3569, 0
    %3578 = vmatprep.subr.mxu0 0.0
    %3579 = vmatpush1.xpose.msra.mxu0 %v3574
    %3580 = vmatprep.subr.mxu0 0.0
    %3581 = vmatpush1.xpose.msra.mxu0 %v3576
    %3582 = vmatprep.subr.mxu0 0.0
    %3583 = vmatpush1.xpose.msra.mxu0 0.0
    %3584 = vmatprep.subr.mxu0 0.0
    %3585 = vmatpush1.xpose.msra.mxu0 0.0
    %3586 = vmatprep.subr.mxu0 0.0
    %3587 = vmatpush1.xpose.msra.mxu0 0.0
    %3588 = vmatprep.subr.mxu0 0.0
    %3589 = vmatpush1.xpose.msra.mxu0 0.0
    %3590 = vmatprep.subr.mxu0 0.0
    %3591 = vmatpush1.xpose.msra.mxu0 0.0
    %3592 = vmatprep.subr.mxu0 0.0
    %3593 = vmatpush1.xpose.msra.mxu0 0.0
    %3594 = vmatprep.subr.mxu0 0.0
    %3595 = vmatpush1.xpose.msra.mxu0 0.0
    %3596 = vmatprep.subr.mxu0 0.0
    %3597 = vmatpush1.xpose.msra.mxu0 0.0
    %3598 = vmatprep.subr.mxu0 0.0
    %3599 = vmatpush1.xpose.msra.mxu0 0.0
    %3600 = vmatprep.subr.mxu0 0.0
    %3601 = vmatpush1.xpose.msra.mxu0 0.0
    %3602 = vmatprep.subr.mxu0 0.0
    %3603 = vmatpush1.xpose.msra.mxu0 0.0
    %3604 = vmatprep.subr.mxu0 0.0
    %3605 = vmatpush1.xpose.msra.mxu0 0.0
    %3606 = vmatprep.subr.mxu0 0.0
    %3607 = vmatpush1.xpose.msra.mxu0 0.0
    %3608 = vmatprep.subr.mxu0 0.0
    %3609 = vmatpush1.xpose.msra.mxu0 0.0
    %3610 = vmatprep.subr.mxu0 0.0
    %3611 = vmatpush1.xpose.msra.mxu0 0.0
    %3612 = vmatprep.subr.mxu0 0.0
    %3613 = vmatpush1.xpose.msra.mxu0 0.0
    %3614 = vmatprep.subr.mxu0 0.0
    %3615 = vmatpush1.xpose.msra.mxu0 0.0
    %3616 = vmatprep.subr.mxu0 0.0
    %3617 = vmatpush1.xpose.msra.mxu0 0.0
    %3618 = vmatprep.subr.mxu0 0.0
    %3619 = vmatpush1.xpose.msra.mxu0 0.0
    %3620 = vmatprep.subr.mxu0 0.0
    %3621 = vmatpush1.xpose.msra.mxu0 0.0
    %3622 = vmatprep.subr.mxu0 0.0
    %3623 = vmatpush1.xpose.msra.mxu0 0.0
    %3624 = vmatprep.subr.mxu0 0.0
    %3625 = vmatpush1.xpose.msra.mxu0 0.0
    %3626 = vmatprep.subr.mxu0 0.0
    %3627 = vmatpush1.xpose.msra.mxu0 0.0
    %3628 = vmatprep.subr.mxu0 0.0
    %3629 = vmatpush1.xpose.msra.mxu0 0.0
    %3630 = vmatprep.subr.mxu0 0.0
    %3631 = vmatpush1.xpose.msra.mxu0 0.0
    %3632 = vmatprep.subr.mxu0 0.0
    %3633 = vmatpush1.xpose.msra.mxu0 0.0
    %3634 = vmatprep.subr.mxu0 0.0
    %3635 = vmatpush1.xpose.msra.mxu0 0.0
    %3636 = vmatprep.subr.mxu0 0.0
    %3637 = vmatpush1.xpose.msra.mxu0 0.0
    %3638 = vmatprep.subr.mxu0 0.0
    %3639 = vmatpush1.xpose.msra.mxu0 0.0
    %3640 = vmatprep.subr.mxu0 0.0
    %3641 = vmatpush1.xpose.msra.mxu0 0.0
    %3642 = vmatprep.mubr.f32.mxu0 0.0
    %3643 = vmatmul.mubr.f32.gmra.mrb[0].mxu0 %v3570
    %v3644 = vpop.f32.mrb[0].mxu0
    %v3645 = vadd.f32 0.0, %v3644
    %v3646 = vpop.f32.mrb[0].mxu0
    %3647 = vmatprep.mubr.f32.mxu0 0.0
    %3648 = vmatmul.mubr.f32.gmra.mrb[0].mxu0 %v3572
    %v3649 = vpop.f32.mrb[0].mxu0
    %v3650 = vadd.f32 0.0, %v3649
    %v3651 = vpop.f32.mrb[0].mxu0
    %3652 = vdwg.mxu0
    %3653 = vrot.lane.b32.xlu0 %v314, 112
    %v3654 = vpop.permute.xlu0 %3653
    %3655 = vrot.lane.b32.xlu0 %v315, 112
    %v3656 = vpop.permute.xlu0 %3655
    %3657 = vrot.lane.b32.xlu0 %v236, 80
    %v3658 = vpop.permute.xlu0 %3657
    %3659 = vrot.lane.b32.xlu0 %v241, 80
    %v3660 = vpop.permute.xlu0 %3659
    %v3661 = vsel %vm334, %v3654, 0
    %v3663 = vsel %vm334, %v3656, 0
    %v3665 = vsel %vm334, %v3658, 0
    %v3667 = vsel %vm334, %v3660, 0
    %3669 = vmatprep.subr.mxu0 0.0
    %3670 = vmatpush1.xpose.msra.mxu0 %v3665
    %3671 = vmatprep.subr.mxu0 0.0
    %3672 = vmatpush1.xpose.msra.mxu0 %v3667
    %3673 = vmatprep.subr.mxu0 0.0
    %3674 = vmatpush1.xpose.msra.mxu0 0.0
    %3675 = vmatprep.subr.mxu0 0.0
    %3676 = vmatpush1.xpose.msra.mxu0 0.0
    %3677 = vmatprep.subr.mxu0 0.0
    %3678 = vmatpush1.xpose.msra.mxu0 0.0
    %3679 = vmatprep.subr.mxu0 0.0
    %3680 = vmatpush1.xpose.msra.mxu0 0.0
    %3681 = vmatprep.subr.mxu0 0.0
    %3682 = vmatpush1.xpose.msra.mxu0 0.0
    %3683 = vmatprep.subr.mxu0 0.0
    %3684 = vmatpush1.xpose.msra.mxu0 0.0
    %3685 = vmatprep.subr.mxu0 0.0
    %3686 = vmatpush1.xpose.msra.mxu0 0.0
    %3687 = vmatprep.subr.mxu0 0.0
    %3688 = vmatpush1.xpose.msra.mxu0 0.0
    %3689 = vmatprep.subr.mxu0 0.0
    %3690 = vmatpush1.xpose.msra.mxu0 0.0
    %3691 = vmatprep.subr.mxu0 0.0
    %3692 = vmatpush1.xpose.msra.mxu0 0.0
    %3693 = vmatprep.subr.mxu0 0.0
    %3694 = vmatpush1.xpose.msra.mxu0 0.0
    %3695 = vmatprep.subr.mxu0 0.0
    %3696 = vmatpush1.xpose.msra.mxu0 0.0
    %3697 = vmatprep.subr.mxu0 0.0
    %3698 = vmatpush1.xpose.msra.mxu0 0.0
    %3699 = vmatprep.subr.mxu0 0.0
    %3700 = vmatpush1.xpose.msra.mxu0 0.0
    %3701 = vmatprep.subr.mxu0 0.0
    %3702 = vmatpush1.xpose.msra.mxu0 0.0
    %3703 = vmatprep.subr.mxu0 0.0
    %3704 = vmatpush1.xpose.msra.mxu0 0.0
    %3705 = vmatprep.subr.mxu0 0.0
    %3706 = vmatpush1.xpose.msra.mxu0 0.0
    %3707 = vmatprep.subr.mxu0 0.0
    %3708 = vmatpush1.xpose.msra.mxu0 0.0
    %3709 = vmatprep.subr.mxu0 0.0
    %3710 = vmatpush1.xpose.msra.mxu0 0.0
    %3711 = vmatprep.subr.mxu0 0.0
    %3712 = vmatpush1.xpose.msra.mxu0 0.0
    %3713 = vmatprep.subr.mxu0 0.0
    %3714 = vmatpush1.xpose.msra.mxu0 0.0
    %3715 = vmatprep.subr.mxu0 0.0
    %3716 = vmatpush1.xpose.msra.mxu0 0.0
    %3717 = vmatprep.subr.mxu0 0.0
    %3718 = vmatpush1.xpose.msra.mxu0 0.0
    %3719 = vmatprep.subr.mxu0 0.0
    %3720 = vmatpush1.xpose.msra.mxu0 0.0
    %3721 = vmatprep.subr.mxu0 0.0
    %3722 = vmatpush1.xpose.msra.mxu0 0.0
    %3723 = vmatprep.subr.mxu0 0.0
    %3724 = vmatpush1.xpose.msra.mxu0 0.0
    %3725 = vmatprep.subr.mxu0 0.0
    %3726 = vmatpush1.xpose.msra.mxu0 0.0
    %3727 = vmatprep.subr.mxu0 0.0
    %3728 = vmatpush1.xpose.msra.mxu0 0.0
    %3729 = vmatprep.subr.mxu0 0.0
    %3730 = vmatpush1.xpose.msra.mxu0 0.0
    %3731 = vmatprep.subr.mxu0 0.0
    %3732 = vmatpush1.xpose.msra.mxu0 0.0
    %3733 = vmatprep.mubr.f32.mxu0 0.0
    %3734 = vmatmul.mubr.f32.gmra.mrb[0].mxu0 %v3661
    %v3735 = vpop.f32.mrb[0].mxu0
    %v3736 = vadd.f32 0.0, %v3735
    %v3737 = vpop.f32.mrb[0].mxu0
    %3738 = vmatprep.mubr.f32.mxu0 0.0
    %3739 = vmatmul.mubr.f32.gmra.mrb[0].mxu0 %v3663
    %v3740 = vpop.f32.mrb[0].mxu0
    %v3741 = vadd.f32 0.0, %v3740
    %v3742 = vpop.f32.mrb[0].mxu0
    %3743 = vdwg.mxu0
    %3744 = vrot.lane.b32.xlu0 %v316, 112
    %v3745 = vpop.permute.xlu0 %3744
    %3746 = vrot.lane.b32.xlu0 %v317, 112
    %v3747 = vpop.permute.xlu0 %3746
    %3748 = vrot.lane.b32.xlu0 %v246, 80
    %v3749 = vpop.permute.xlu0 %3748
    %3750 = vrot.lane.b32.xlu0 %v251, 80
    %v3751 = vpop.permute.xlu0 %3750
    %v3752 = vsel %vm334, %v3745, 0
    %v3754 = vsel %vm334, %v3747, 0
    %v3756 = vsel %vm334, %v3749, 0
    %v3758 = vsel %vm334, %v3751, 0
    %3760 = vmatprep.subr.mxu0 0.0
    %3761 = vmatpush1.xpose.msra.mxu0 %v3756
    %3762 = vmatprep.subr.mxu0 0.0
    %3763 = vmatpush1.xpose.msra.mxu0 %v3758
    %3764 = vmatprep.subr.mxu0 0.0
    %3765 = vmatpush1.xpose.msra.mxu0 0.0
    %3766 = vmatprep.subr.mxu0 0.0
    %3767 = vmatpush1.xpose.msra.mxu0 0.0
    %3768 = vmatprep.subr.mxu0 0.0
    %3769 = vmatpush1.xpose.msra.mxu0 0.0
    %3770 = vmatprep.subr.mxu0 0.0
    %3771 = vmatpush1.xpose.msra.mxu0 0.0
    %3772 = vmatprep.subr.mxu0 0.0
    %3773 = vmatpush1.xpose.msra.mxu0 0.0
    %3774 = vmatprep.subr.mxu0 0.0
    %3775 = vmatpush1.xpose.msra.mxu0 0.0
    %3776 = vmatprep.subr.mxu0 0.0
    %3777 = vmatpush1.xpose.msra.mxu0 0.0
    %3778 = vmatprep.subr.mxu0 0.0
    %3779 = vmatpush1.xpose.msra.mxu0 0.0
    %3780 = vmatprep.subr.mxu0 0.0
    %3781 = vmatpush1.xpose.msra.mxu0 0.0
    %3782 = vmatprep.subr.mxu0 0.0
    %3783 = vmatpush1.xpose.msra.mxu0 0.0
    %3784 = vmatprep.subr.mxu0 0.0
    %3785 = vmatpush1.xpose.msra.mxu0 0.0
    %3786 = vmatprep.subr.mxu0 0.0
    %3787 = vmatpush1.xpose.msra.mxu0 0.0
    %3788 = vmatprep.subr.mxu0 0.0
    %3789 = vmatpush1.xpose.msra.mxu0 0.0
    %3790 = vmatprep.subr.mxu0 0.0
    %3791 = vmatpush1.xpose.msra.mxu0 0.0
    %3792 = vmatprep.subr.mxu0 0.0
    %3793 = vmatpush1.xpose.msra.mxu0 0.0
    %3794 = vmatprep.subr.mxu0 0.0
    %3795 = vmatpush1.xpose.msra.mxu0 0.0
    %3796 = vmatprep.subr.mxu0 0.0
    %3797 = vmatpush1.xpose.msra.mxu0 0.0
    %3798 = vmatprep.subr.mxu0 0.0
    %3799 = vmatpush1.xpose.msra.mxu0 0.0
    %3800 = vmatprep.subr.mxu0 0.0
    %3801 = vmatpush1.xpose.msra.mxu0 0.0
    %3802 = vmatprep.subr.mxu0 0.0
    %3803 = vmatpush1.xpose.msra.mxu0 0.0
    %3804 = vmatprep.subr.mxu0 0.0
    %3805 = vmatpush1.xpose.msra.mxu0 0.0
    %3806 = vmatprep.subr.mxu0 0.0
    %3807 = vmatpush1.xpose.msra.mxu0 0.0
    %3808 = vmatprep.subr.mxu0 0.0
    %3809 = vmatpush1.xpose.msra.mxu0 0.0
    %3810 = vmatprep.subr.mxu0 0.0
    %3811 = vmatpush1.xpose.msra.mxu0 0.0
    %3812 = vmatprep.subr.mxu0 0.0
    %3813 = vmatpush1.xpose.msra.mxu0 0.0
    %3814 = vmatprep.subr.mxu0 0.0
    %3815 = vmatpush1.xpose.msra.mxu0 0.0
    %3816 = vmatprep.subr.mxu0 0.0
    %3817 = vmatpush1.xpose.msra.mxu0 0.0
    %3818 = vmatprep.subr.mxu0 0.0
    %3819 = vmatpush1.xpose.msra.mxu0 0.0
    %3820 = vmatprep.subr.mxu0 0.0
    %3821 = vmatpush1.xpose.msra.mxu0 0.0
    %3822 = vmatprep.subr.mxu0 0.0
    %3823 = vmatpush1.xpose.msra.mxu0 0.0
    %3824 = vmatprep.mubr.f32.mxu0 0.0
    %3825 = vmatmul.mubr.f32.gmra.mrb[0].mxu0 %v3752
    %v3826 = vpop.f32.mrb[0].mxu0
    %v3827 = vadd.f32 0.0, %v3826
    %v3828 = vpop.f32.mrb[0].mxu0
    %3829 = vmatprep.mubr.f32.mxu0 0.0
    %3830 = vmatmul.mubr.f32.gmra.mrb[0].mxu0 %v3754
    %v3831 = vpop.f32.mrb[0].mxu0
    %v3832 = vadd.f32 0.0, %v3831
    %v3833 = vpop.f32.mrb[0].mxu0
    %3834 = vdwg.mxu0
    %3835 = vrot.lane.b32.xlu0 %v318, 112
    %v3836 = vpop.permute.xlu0 %3835
    %3837 = vrot.lane.b32.xlu0 %v319, 112
    %v3838 = vpop.permute.xlu0 %3837
    %3839 = vrot.lane.b32.xlu0 %v256, 80
    %v3840 = vpop.permute.xlu0 %3839
    %3841 = vrot.lane.b32.xlu0 %v261, 80
    %v3842 = vpop.permute.xlu0 %3841
    %v3843 = vsel %vm334, %v3836, 0
    %v3845 = vsel %vm334, %v3838, 0
    %v3847 = vsel %vm334, %v3840, 0
    %v3849 = vsel %vm334, %v3842, 0
    %3851 = vmatprep.subr.mxu0 0.0
    %3852 = vmatpush1.xpose.msra.mxu0 %v3847
    %3853 = vmatprep.subr.mxu0 0.0
    %3854 = vmatpush1.xpose.msra.mxu0 %v3849
    %3855 = vmatprep.subr.mxu0 0.0
    %3856 = vmatpush1.xpose.msra.mxu0 0.0
    %3857 = vmatprep.subr.mxu0 0.0
    %3858 = vmatpush1.xpose.msra.mxu0 0.0
    %3859 = vmatprep.subr.mxu0 0.0
    %3860 = vmatpush1.xpose.msra.mxu0 0.0
    %3861 = vmatprep.subr.mxu0 0.0
    %3862 = vmatpush1.xpose.msra.mxu0 0.0
    %3863 = vmatprep.subr.mxu0 0.0
    %3864 = vmatpush1.xpose.msra.mxu0 0.0
    %3865 = vmatprep.subr.mxu0 0.0
    %3866 = vmatpush1.xpose.msra.mxu0 0.0
    %3867 = vmatprep.subr.mxu0 0.0
    %3868 = vmatpush1.xpose.msra.mxu0 0.0
    %3869 = vmatprep.subr.mxu0 0.0
    %3870 = vmatpush1.xpose.msra.mxu0 0.0
    %3871 = vmatprep.subr.mxu0 0.0
    %3872 = vmatpush1.xpose.msra.mxu0 0.0
    %3873 = vmatprep.subr.mxu0 0.0
    %3874 = vmatpush1.xpose.msra.mxu0 0.0
    %3875 = vmatprep.subr.mxu0 0.0
    %3876 = vmatpush1.xpose.msra.mxu0 0.0
    %3877 = vmatprep.subr.mxu0 0.0
    %3878 = vmatpush1.xpose.msra.mxu0 0.0
    %3879 = vmatprep.subr.mxu0 0.0
    %3880 = vmatpush1.xpose.msra.mxu0 0.0
    %3881 = vmatprep.subr.mxu0 0.0
    %3882 = vmatpush1.xpose.msra.mxu0 0.0
    %3883 = vmatprep.subr.mxu0 0.0
    %3884 = vmatpush1.xpose.msra.mxu0 0.0
    %3885 = vmatprep.subr.mxu0 0.0
    %3886 = vmatpush1.xpose.msra.mxu0 0.0
    %3887 = vmatprep.subr.mxu0 0.0
    %3888 = vmatpush1.xpose.msra.mxu0 0.0
    %3889 = vmatprep.subr.mxu0 0.0
    %3890 = vmatpush1.xpose.msra.mxu0 0.0
    %3891 = vmatprep.subr.mxu0 0.0
    %3892 = vmatpush1.xpose.msra.mxu0 0.0
    %3893 = vmatprep.subr.mxu0 0.0
    %3894 = vmatpush1.xpose.msra.mxu0 0.0
    %3895 = vmatprep.subr.mxu0 0.0
    %3896 = vmatpush1.xpose.msra.mxu0 0.0
    %3897 = vmatprep.subr.mxu0 0.0
    %3898 = vmatpush1.xpose.msra.mxu0 0.0
    %3899 = vmatprep.subr.mxu0 0.0
    %3900 = vmatpush1.xpose.msra.mxu0 0.0
    %3901 = vmatprep.subr.mxu0 0.0
    %3902 = vmatpush1.xpose.msra.mxu0 0.0
    %3903 = vmatprep.subr.mxu0 0.0
    %3904 = vmatpush1.xpose.msra.mxu0 0.0
    %3905 = vmatprep.subr.mxu0 0.0
    %3906 = vmatpush1.xpose.msra.mxu0 0.0
    %3907 = vmatprep.subr.mxu0 0.0
    %3908 = vmatpush1.xpose.msra.mxu0 0.0
    %3909 = vmatprep.subr.mxu0 0.0
    %3910 = vmatpush1.xpose.msra.mxu0 0.0
    %3911 = vmatprep.subr.mxu0 0.0
    %3912 = vmatpush1.xpose.msra.mxu0 0.0
    %3913 = vmatprep.subr.mxu0 0.0
    %3914 = vmatpush1.xpose.msra.mxu0 0.0
    %3915 = vmatprep.mubr.f32.mxu0 0.0
    %3916 = vmatmul.mubr.f32.gmra.mrb[0].mxu0 %v3843
    %v3917 = vpop.f32.mrb[0].mxu0
    %v3918 = vadd.f32 0.0, %v3917
    %v3919 = vpop.f32.mrb[0].mxu0
    %3920 = vmatprep.mubr.f32.mxu0 0.0
    %3921 = vmatmul.mubr.f32.gmra.mrb[0].mxu0 %v3845
    %v3922 = vpop.f32.mrb[0].mxu0
    %v3923 = vadd.f32 0.0, %v3922
    %v3924 = vpop.f32.mrb[0].mxu0
    %3925 = vdwg.mxu0
    %3926 = vrot.lane.b32.xlu0 %v320, 112
    %v3927 = vpop.permute.xlu0 %3926
    %3928 = vrot.lane.b32.xlu0 %v321, 112
    %v3929 = vpop.permute.xlu0 %3928
    %3930 = vrot.lane.b32.xlu0 %v266, 80
    %v3931 = vpop.permute.xlu0 %3930
    %3932 = vrot.lane.b32.xlu0 %v271, 80
    %v3933 = vpop.permute.xlu0 %3932
    %v3934 = vsel %vm334, %v3927, 0
    %v3936 = vsel %vm334, %v3929, 0
    %v3938 = vsel %vm334, %v3931, 0
    %v3940 = vsel %vm334, %v3933, 0
    %3942 = vmatprep.subr.mxu0 0.0
    %3943 = vmatpush1.xpose.msra.mxu0 %v3938
    %3944 = vmatprep.subr.mxu0 0.0
    %3945 = vmatpush1.xpose.msra.mxu0 %v3940
    %3946 = vmatprep.subr.mxu0 0.0
    %3947 = vmatpush1.xpose.msra.mxu0 0.0
    %3948 = vmatprep.subr.mxu0 0.0
    %3949 = vmatpush1.xpose.msra.mxu0 0.0
    %3950 = vmatprep.subr.mxu0 0.0
    %3951 = vmatpush1.xpose.msra.mxu0 0.0
    %3952 = vmatprep.subr.mxu0 0.0
    %3953 = vmatpush1.xpose.msra.mxu0 0.0
    %3954 = vmatprep.subr.mxu0 0.0
    %3955 = vmatpush1.xpose.msra.mxu0 0.0
    %3956 = vmatprep.subr.mxu0 0.0
    %3957 = vmatpush1.xpose.msra.mxu0 0.0
    %3958 = vmatprep.subr.mxu0 0.0
    %3959 = vmatpush1.xpose.msra.mxu0 0.0
    %3960 = vmatprep.subr.mxu0 0.0
    %3961 = vmatpush1.xpose.msra.mxu0 0.0
    %3962 = vmatprep.subr.mxu0 0.0
    %3963 = vmatpush1.xpose.msra.mxu0 0.0
    %3964 = vmatprep.subr.mxu0 0.0
    %3965 = vmatpush1.xpose.msra.mxu0 0.0
    %3966 = vmatprep.subr.mxu0 0.0
    %3967 = vmatpush1.xpose.msra.mxu0 0.0
    %3968 = vmatprep.subr.mxu0 0.0
    %3969 = vmatpush1.xpose.msra.mxu0 0.0
    %3970 = vmatprep.subr.mxu0 0.0
    %3971 = vmatpush1.xpose.msra.mxu0 0.0
    %3972 = vmatprep.subr.mxu0 0.0
    %3973 = vmatpush1.xpose.msra.mxu0 0.0
    %3974 = vmatprep.subr.mxu0 0.0
    %3975 = vmatpush1.xpose.msra.mxu0 0.0
    %3976 = vmatprep.subr.mxu0 0.0
    %3977 = vmatpush1.xpose.msra.mxu0 0.0
    %3978 = vmatprep.subr.mxu0 0.0
    %3979 = vmatpush1.xpose.msra.mxu0 0.0
    %3980 = vmatprep.subr.mxu0 0.0
    %3981 = vmatpush1.xpose.msra.mxu0 0.0
    %3982 = vmatprep.subr.mxu0 0.0
    %3983 = vmatpush1.xpose.msra.mxu0 0.0
    %3984 = vmatprep.subr.mxu0 0.0
    %3985 = vmatpush1.xpose.msra.mxu0 0.0
    %3986 = vmatprep.subr.mxu0 0.0
    %3987 = vmatpush1.xpose.msra.mxu0 0.0
    %3988 = vmatprep.subr.mxu0 0.0
    %3989 = vmatpush1.xpose.msra.mxu0 0.0
    %3990 = vmatprep.subr.mxu0 0.0
    %3991 = vmatpush1.xpose.msra.mxu0 0.0
    %3992 = vmatprep.subr.mxu0 0.0
    %3993 = vmatpush1.xpose.msra.mxu0 0.0
    %3994 = vmatprep.subr.mxu0 0.0
    %3995 = vmatpush1.xpose.msra.mxu0 0.0
    %3996 = vmatprep.subr.mxu0 0.0
    %3997 = vmatpush1.xpose.msra.mxu0 0.0
    %3998 = vmatprep.subr.mxu0 0.0
    %3999 = vmatpush1.xpose.msra.mxu0 0.0
    %4000 = vmatprep.subr.mxu0 0.0
    %4001 = vmatpush1.xpose.msra.mxu0 0.0
    %4002 = vmatprep.subr.mxu0 0.0
    %4003 = vmatpush1.xpose.msra.mxu0 0.0
    %4004 = vmatprep.subr.mxu0 0.0
    %4005 = vmatpush1.xpose.msra.mxu0 0.0
    %4006 = vmatprep.mubr.f32.mxu0 0.0
    %4007 = vmatmul.mubr.f32.gmra.mrb[0].mxu0 %v3934
    %v4008 = vpop.f32.mrb[0].mxu0
    %v4009 = vadd.f32 0.0, %v4008
    %v4010 = vpop.f32.mrb[0].mxu0
    %4011 = vmatprep.mubr.f32.mxu0 0.0
    %4012 = vmatmul.mubr.f32.gmra.mrb[0].mxu0 %v3936
    %v4013 = vpop.f32.mrb[0].mxu0
    %v4014 = vadd.f32 0.0, %v4013
    %v4015 = vpop.f32.mrb[0].mxu0
    %4016 = vdwg.mxu0
    %4017 = vrot.lane.b32.xlu0 %v322, 112
    %v4018 = vpop.permute.xlu0 %4017
    %4019 = vrot.lane.b32.xlu0 %v323, 112
    %v4020 = vpop.permute.xlu0 %4019
    %4021 = vrot.lane.b32.xlu0 %v276, 80
    %v4022 = vpop.permute.xlu0 %4021
    %4023 = vrot.lane.b32.xlu0 %v281, 80
    %v4024 = vpop.permute.xlu0 %4023
    %v4025 = vsel %vm334, %v4018, 0
    %v4027 = vsel %vm334, %v4020, 0
    %v4029 = vsel %vm334, %v4022, 0
    %v4031 = vsel %vm334, %v4024, 0
    %4033 = vmatprep.subr.mxu0 0.0
    %4034 = vmatpush1.xpose.msra.mxu0 %v4029
    %4035 = vmatprep.subr.mxu0 0.0
    %4036 = vmatpush1.xpose.msra.mxu0 %v4031
    %4037 = vmatprep.subr.mxu0 0.0
    %4038 = vmatpush1.xpose.msra.mxu0 0.0
    %4039 = vmatprep.subr.mxu0 0.0
    %4040 = vmatpush1.xpose.msra.mxu0 0.0
    %4041 = vmatprep.subr.mxu0 0.0
    %4042 = vmatpush1.xpose.msra.mxu0 0.0
    %4043 = vmatprep.subr.mxu0 0.0
    %4044 = vmatpush1.xpose.msra.mxu0 0.0
    %4045 = vmatprep.subr.mxu0 0.0
    %4046 = vmatpush1.xpose.msra.mxu0 0.0
    %4047 = vmatprep.subr.mxu0 0.0
    %4048 = vmatpush1.xpose.msra.mxu0 0.0
    %4049 = vmatprep.subr.mxu0 0.0
    %4050 = vmatpush1.xpose.msra.mxu0 0.0
    %4051 = vmatprep.subr.mxu0 0.0
    %4052 = vmatpush1.xpose.msra.mxu0 0.0
    %4053 = vmatprep.subr.mxu0 0.0
    %4054 = vmatpush1.xpose.msra.mxu0 0.0
    %4055 = vmatprep.subr.mxu0 0.0
    %4056 = vmatpush1.xpose.msra.mxu0 0.0
    %4057 = vmatprep.subr.mxu0 0.0
    %4058 = vmatpush1.xpose.msra.mxu0 0.0
    %4059 = vmatprep.subr.mxu0 0.0
    %4060 = vmatpush1.xpose.msra.mxu0 0.0
    %4061 = vmatprep.subr.mxu0 0.0
    %4062 = vmatpush1.xpose.msra.mxu0 0.0
    %4063 = vmatprep.subr.mxu0 0.0
    %4064 = vmatpush1.xpose.msra.mxu0 0.0
    %4065 = vmatprep.subr.mxu0 0.0
    %4066 = vmatpush1.xpose.msra.mxu0 0.0
    %4067 = vmatprep.subr.mxu0 0.0
    %4068 = vmatpush1.xpose.msra.mxu0 0.0
    %4069 = vmatprep.subr.mxu0 0.0
    %4070 = vmatpush1.xpose.msra.mxu0 0.0
    %4071 = vmatprep.subr.mxu0 0.0
    %4072 = vmatpush1.xpose.msra.mxu0 0.0
    %4073 = vmatprep.subr.mxu0 0.0
    %4074 = vmatpush1.xpose.msra.mxu0 0.0
    %4075 = vmatprep.subr.mxu0 0.0
    %4076 = vmatpush1.xpose.msra.mxu0 0.0
    %4077 = vmatprep.subr.mxu0 0.0
    %4078 = vmatpush1.xpose.msra.mxu0 0.0
    %4079 = vmatprep.subr.mxu0 0.0
    %4080 = vmatpush1.xpose.msra.mxu0 0.0
    %4081 = vmatprep.subr.mxu0 0.0
    %4082 = vmatpush1.xpose.msra.mxu0 0.0
    %4083 = vmatprep.subr.mxu0 0.0
    %4084 = vmatpush1.xpose.msra.mxu0 0.0
    %4085 = vmatprep.subr.mxu0 0.0
    %4086 = vmatpush1.xpose.msra.mxu0 0.0
    %4087 = vmatprep.subr.mxu0 0.0
    %4088 = vmatpush1.xpose.msra.mxu0 0.0
    %4089 = vmatprep.subr.mxu0 0.0
    %4090 = vmatpush1.xpose.msra.mxu0 0.0
    %4091 = vmatprep.subr.mxu0 0.0
    %4092 = vmatpush1.xpose.msra.mxu0 0.0
    %4093 = vmatprep.subr.mxu0 0.0
    %4094 = vmatpush1.xpose.msra.mxu0 0.0
    %4095 = vmatprep.subr.mxu0 0.0
    %4096 = vmatpush1.xpose.msra.mxu0 0.0
    %4097 = vmatprep.mubr.f32.mxu0 0.0
    %4098 = vmatmul.mubr.f32.gmra.mrb[0].mxu0 %v4025
    %v4099 = vpop.f32.mrb[0].mxu0
    %v4100 = vadd.f32 0.0, %v4099
    %v4101 = vpop.f32.mrb[0].mxu0
    %4102 = vmatprep.mubr.f32.mxu0 0.0
    %4103 = vmatmul.mubr.f32.gmra.mrb[0].mxu0 %v4027
    %v4104 = vpop.f32.mrb[0].mxu0
    %v4105 = vadd.f32 0.0, %v4104
    %v4106 = vpop.f32.mrb[0].mxu0
    %4107 = vdwg.mxu0
    %4108 = vrot.lane.b32.xlu0 %v324, 112
    %v4109 = vpop.permute.xlu0 %4108
    %4110 = vrot.lane.b32.xlu0 %v325, 112
    %v4111 = vpop.permute.xlu0 %4110
    %4112 = vrot.lane.b32.xlu0 %v286, 80
    %v4113 = vpop.permute.xlu0 %4112
    %4114 = vrot.lane.b32.xlu0 %v291, 80
    %v4115 = vpop.permute.xlu0 %4114
    %v4116 = vsel %vm334, %v4109, 0
    %v4118 = vsel %vm334, %v4111, 0
    %v4120 = vsel %vm334, %v4113, 0
    %v4122 = vsel %vm334, %v4115, 0
    %4124 = vmatprep.subr.mxu0 0.0
    %4125 = vmatpush1.xpose.msra.mxu0 %v4120
    %4126 = vmatprep.subr.mxu0 0.0
    %4127 = vmatpush1.xpose.msra.mxu0 %v4122
    %4128 = vmatprep.subr.mxu0 0.0
    %4129 = vmatpush1.xpose.msra.mxu0 0.0
    %4130 = vmatprep.subr.mxu0 0.0
    %4131 = vmatpush1.xpose.msra.mxu0 0.0
    %4132 = vmatprep.subr.mxu0 0.0
    %4133 = vmatpush1.xpose.msra.mxu0 0.0
    %4134 = vmatprep.subr.mxu0 0.0
    %4135 = vmatpush1.xpose.msra.mxu0 0.0
    %4136 = vmatprep.subr.mxu0 0.0
    %4137 = vmatpush1.xpose.msra.mxu0 0.0
    %4138 = vmatprep.subr.mxu0 0.0
    %4139 = vmatpush1.xpose.msra.mxu0 0.0
    %4140 = vmatprep.subr.mxu0 0.0
    %4141 = vmatpush1.xpose.msra.mxu0 0.0
    %4142 = vmatprep.subr.mxu0 0.0
    %4143 = vmatpush1.xpose.msra.mxu0 0.0
    %4144 = vmatprep.subr.mxu0 0.0
    %4145 = vmatpush1.xpose.msra.mxu0 0.0
    %4146 = vmatprep.subr.mxu0 0.0
    %4147 = vmatpush1.xpose.msra.mxu0 0.0
    %4148 = vmatprep.subr.mxu0 0.0
    %4149 = vmatpush1.xpose.msra.mxu0 0.0
    %4150 = vmatprep.subr.mxu0 0.0
    %4151 = vmatpush1.xpose.msra.mxu0 0.0
    %4152 = vmatprep.subr.mxu0 0.0
    %4153 = vmatpush1.xpose.msra.mxu0 0.0
    %4154 = vmatprep.subr.mxu0 0.0
    %4155 = vmatpush1.xpose.msra.mxu0 0.0
    %4156 = vmatprep.subr.mxu0 0.0
    %4157 = vmatpush1.xpose.msra.mxu0 0.0
    %4158 = vmatprep.subr.mxu0 0.0
    %4159 = vmatpush1.xpose.msra.mxu0 0.0
    %4160 = vmatprep.subr.mxu0 0.0
    %4161 = vmatpush1.xpose.msra.mxu0 0.0
    %4162 = vmatprep.subr.mxu0 0.0
    %4163 = vmatpush1.xpose.msra.mxu0 0.0
    %4164 = vmatprep.subr.mxu0 0.0
    %4165 = vmatpush1.xpose.msra.mxu0 0.0
    %4166 = vmatprep.subr.mxu0 0.0
    %4167 = vmatpush1.xpose.msra.mxu0 0.0
    %4168 = vmatprep.subr.mxu0 0.0
    %4169 = vmatpush1.xpose.msra.mxu0 0.0
    %4170 = vmatprep.subr.mxu0 0.0
    %4171 = vmatpush1.xpose.msra.mxu0 0.0
    %4172 = vmatprep.subr.mxu0 0.0
    %4173 = vmatpush1.xpose.msra.mxu0 0.0
    %4174 = vmatprep.subr.mxu0 0.0
    %4175 = vmatpush1.xpose.msra.mxu0 0.0
    %4176 = vmatprep.subr.mxu0 0.0
    %4177 = vmatpush1.xpose.msra.mxu0 0.0
    %4178 = vmatprep.subr.mxu0 0.0
    %4179 = vmatpush1.xpose.msra.mxu0 0.0
    %4180 = vmatprep.subr.mxu0 0.0
    %4181 = vmatpush1.xpose.msra.mxu0 0.0
    %4182 = vmatprep.subr.mxu0 0.0
    %4183 = vmatpush1.xpose.msra.mxu0 0.0
    %4184 = vmatprep.subr.mxu0 0.0
    %4185 = vmatpush1.xpose.msra.mxu0 0.0
    %4186 = vmatprep.subr.mxu0 0.0
    %4187 = vmatpush1.xpose.msra.mxu0 0.0
    %4188 = vmatprep.mubr.f32.mxu0 0.0
    %4189 = vmatmul.mubr.f32.gmra.mrb[0].mxu0 %v4116
    %v4190 = vpop.f32.mrb[0].mxu0
    %v4191 = vadd.f32 0.0, %v4190
    %v4192 = vpop.f32.mrb[0].mxu0
    %4193 = vmatprep.mubr.f32.mxu0 0.0
    %4194 = vmatmul.mubr.f32.gmra.mrb[0].mxu0 %v4118
    %v4195 = vpop.f32.mrb[0].mxu0
    %v4196 = vadd.f32 0.0, %v4195
    %v4197 = vpop.f32.mrb[0].mxu0
    %4198 = vdwg.mxu0
    %4199 = vrot.lane.b32.xlu0 %v326, 112
    %v4200 = vpop.permute.xlu0 %4199
    %4201 = vrot.lane.b32.xlu0 %v327, 112
    %v4202 = vpop.permute.xlu0 %4201
    %4203 = vrot.lane.b32.xlu0 %v296, 80
    %v4204 = vpop.permute.xlu0 %4203
    %4205 = vrot.lane.b32.xlu0 %v301, 80
    %v4206 = vpop.permute.xlu0 %4205
    %v4207 = vsel %vm334, %v4200, 0
    %v4209 = vsel %vm334, %v4202, 0
    %v4211 = vsel %vm334, %v4204, 0
    %v4213 = vsel %vm334, %v4206, 0
    %4215 = vmatprep.subr.mxu0 0.0
    %4216 = vmatpush1.xpose.msra.mxu0 %v4211
    %4217 = vmatprep.subr.mxu0 0.0
    %4218 = vmatpush1.xpose.msra.mxu0 %v4213
    %4219 = vmatprep.subr.mxu0 0.0
    %4220 = vmatpush1.xpose.msra.mxu0 0.0
    %4221 = vmatprep.subr.mxu0 0.0
    %4222 = vmatpush1.xpose.msra.mxu0 0.0
    %4223 = vmatprep.subr.mxu0 0.0
    %4224 = vmatpush1.xpose.msra.mxu0 0.0
    %4225 = vmatprep.subr.mxu0 0.0
    %4226 = vmatpush1.xpose.msra.mxu0 0.0
    %4227 = vmatprep.subr.mxu0 0.0
    %4228 = vmatpush1.xpose.msra.mxu0 0.0
    %4229 = vmatprep.subr.mxu0 0.0
    %4230 = vmatpush1.xpose.msra.mxu0 0.0
    %4231 = vmatprep.subr.mxu0 0.0
    %4232 = vmatpush1.xpose.msra.mxu0 0.0
    %4233 = vmatprep.subr.mxu0 0.0
    %4234 = vmatpush1.xpose.msra.mxu0 0.0
    %4235 = vmatprep.subr.mxu0 0.0
    %4236 = vmatpush1.xpose.msra.mxu0 0.0
    %4237 = vmatprep.subr.mxu0 0.0
    %4238 = vmatpush1.xpose.msra.mxu0 0.0
    %4239 = vmatprep.subr.mxu0 0.0
    %4240 = vmatpush1.xpose.msra.mxu0 0.0
    %4241 = vmatprep.subr.mxu0 0.0
    %4242 = vmatpush1.xpose.msra.mxu0 0.0
    %4243 = vmatprep.subr.mxu0 0.0
    %4244 = vmatpush1.xpose.msra.mxu0 0.0
    %4245 = vmatprep.subr.mxu0 0.0
    %4246 = vmatpush1.xpose.msra.mxu0 0.0
    %4247 = vmatprep.subr.mxu0 0.0
    %4248 = vmatpush1.xpose.msra.mxu0 0.0
    %4249 = vmatprep.subr.mxu0 0.0
    %4250 = vmatpush1.xpose.msra.mxu0 0.0
    %4251 = vmatprep.subr.mxu0 0.0
    %4252 = vmatpush1.xpose.msra.mxu0 0.0
    %4253 = vmatprep.subr.mxu0 0.0
    %4254 = vmatpush1.xpose.msra.mxu0 0.0
    %4255 = vmatprep.subr.mxu0 0.0
    %4256 = vmatpush1.xpose.msra.mxu0 0.0
    %4257 = vmatprep.subr.mxu0 0.0
    %4258 = vmatpush1.xpose.msra.mxu0 0.0
    %4259 = vmatprep.subr.mxu0 0.0
    %4260 = vmatpush1.xpose.msra.mxu0 0.0
    %4261 = vmatprep.subr.mxu0 0.0
    %4262 = vmatpush1.xpose.msra.mxu0 0.0
    %4263 = vmatprep.subr.mxu0 0.0
    %4264 = vmatpush1.xpose.msra.mxu0 0.0
    %4265 = vmatprep.subr.mxu0 0.0
    %4266 = vmatpush1.xpose.msra.mxu0 0.0
    %4267 = vmatprep.subr.mxu0 0.0
    %4268 = vmatpush1.xpose.msra.mxu0 0.0
    %4269 = vmatprep.subr.mxu0 0.0
    %4270 = vmatpush1.xpose.msra.mxu0 0.0
    %4271 = vmatprep.subr.mxu0 0.0
    %4272 = vmatpush1.xpose.msra.mxu0 0.0
    %4273 = vmatprep.subr.mxu0 0.0
    %4274 = vmatpush1.xpose.msra.mxu0 0.0
    %4275 = vmatprep.subr.mxu0 0.0
    %4276 = vmatpush1.xpose.msra.mxu0 0.0
    %4277 = vmatprep.subr.mxu0 0.0
    %4278 = vmatpush1.xpose.msra.mxu0 0.0
    %4279 = vmatprep.mubr.f32.mxu0 0.0
    %4280 = vmatmul.mubr.f32.gmra.mrb[0].mxu0 %v4207
    %v4281 = vpop.f32.mrb[0].mxu0
    %v4282 = vadd.f32 0.0, %v4281
    %v4283 = vpop.f32.mrb[0].mxu0
    %4284 = vmatprep.mubr.f32.mxu0 0.0
    %4285 = vmatmul.mubr.f32.gmra.mrb[0].mxu0 %v4209
    %v4286 = vpop.f32.mrb[0].mxu0
    %v4287 = vadd.f32 0.0, %v4286
    %v4288 = vpop.f32.mrb[0].mxu0
    %4289 = vdwg.mxu0
    %v4290 = vadd.f32 %v3645, %v308
    %v4291 = vadd.f32 %v3650, %v309
    %v4292 = vadd.f32 %v3736, %v308
    %v4293 = vadd.f32 %v3741, %v309
    %v4294 = vadd.f32 %v3827, %v308
    %v4295 = vadd.f32 %v3832, %v309
    %v4296 = vadd.f32 %v3918, %v308
    %v4297 = vadd.f32 %v3923, %v309
    %v4298 = vadd.f32 %v4009, %v308
    %v4299 = vadd.f32 %v4014, %v309
    %v4300 = vadd.f32 %v4100, %v308
    %v4301 = vadd.f32 %v4105, %v309
    %v4302 = vadd.f32 %v4191, %v308
    %v4303 = vadd.f32 %v4196, %v309
    %v4304 = vadd.f32 %v4282, %v308
    %v4305 = vadd.f32 %v4287, %v309
    %v4306 = vsel %vm1073, %v4290, -inf
    %4307 = vmax.xlane.f32.xlu0 %v4306
    %v4308 = vpop.xlane.xlu0 %4307
    %v4309 = vsel %vm1073, %v4291, -inf
    %4310 = vmax.xlane.f32.xlu0 %v4309
    %v4311 = vpop.xlane.xlu0 %4310
    %v4312 = vsel %vm1073, %v4292, -inf
    %4313 = vmax.xlane.f32.xlu0 %v4312
    %v4314 = vpop.xlane.xlu0 %4313
    %v4315 = vsel %vm1073, %v4293, -inf
    %4316 = vmax.xlane.f32.xlu0 %v4315
    %v4317 = vpop.xlane.xlu0 %4316
    %v4318 = vsel %vm1073, %v4294, -inf
    %4319 = vmax.xlane.f32.xlu0 %v4318
    %v4320 = vpop.xlane.xlu0 %4319
    %v4321 = vsel %vm1073, %v4295, -inf
    %4322 = vmax.xlane.f32.xlu0 %v4321
    %v4323 = vpop.xlane.xlu0 %4322
    %v4324 = vsel %vm1073, %v4296, -inf
    %4325 = vmax.xlane.f32.xlu0 %v4324
    %v4326 = vpop.xlane.xlu0 %4325
    %v4327 = vsel %vm1073, %v4297, -inf
    %4328 = vmax.xlane.f32.xlu0 %v4327
    %v4329 = vpop.xlane.xlu0 %4328
    %v4330 = vsel %vm1073, %v4298, -inf
    %4331 = vmax.xlane.f32.xlu0 %v4330
    %v4332 = vpop.xlane.xlu0 %4331
    %v4333 = vsel %vm1073, %v4299, -inf
    %4334 = vmax.xlane.f32.xlu0 %v4333
    %v4335 = vpop.xlane.xlu0 %4334
    %v4336 = vsel %vm1073, %v4300, -inf
    %4337 = vmax.xlane.f32.xlu0 %v4336
    %v4338 = vpop.xlane.xlu0 %4337
    %v4339 = vsel %vm1073, %v4301, -inf
    %4340 = vmax.xlane.f32.xlu0 %v4339
    %v4341 = vpop.xlane.xlu0 %4340
    %v4342 = vsel %vm1073, %v4302, -inf
    %4343 = vmax.xlane.f32.xlu0 %v4342
    %v4344 = vpop.xlane.xlu0 %4343
    %v4345 = vsel %vm1073, %v4303, -inf
    %4346 = vmax.xlane.f32.xlu0 %v4345
    %v4347 = vpop.xlane.xlu0 %4346
    %v4348 = vsel %vm1073, %v4304, -inf
    %4349 = vmax.xlane.f32.xlu0 %v4348
    %v4350 = vpop.xlane.xlu0 %4349
    %v4351 = vsel %vm1073, %v4305, -inf
    %4352 = vmax.xlane.f32.xlu0 %v4351
    %v4353 = vpop.xlane.xlu0 %4352
    %v4354 = vsub.f32 %v4290, %v4308
    %v4355 = vsub.f32 %v4291, %v4311
    %v4356 = vsub.f32 %v4292, %v4314
    %v4357 = vsub.f32 %v4293, %v4317
    %v4358 = vsub.f32 %v4294, %v4320
    %v4359 = vsub.f32 %v4295, %v4323
    %v4360 = vsub.f32 %v4296, %v4326
    %v4361 = vsub.f32 %v4297, %v4329
    %v4362 = vsub.f32 %v4298, %v4332
    %v4363 = vsub.f32 %v4299, %v4335
    %v4364 = vsub.f32 %v4300, %v4338
    %v4365 = vsub.f32 %v4301, %v4341
    %v4366 = vsub.f32 %v4302, %v4344
    %v4367 = vsub.f32 %v4303, %v4347
    %v4368 = vsub.f32 %v4304, %v4350
    %v4369 = vsub.f32 %v4305, %v4353
    %v4370 = vmul.f32 %v4354, 1.442695
    %v4371 = vpow.pop %v4370
    %v4372 = vmul.f32 %v4355, 1.442695
    %v4373 = vpow.pop %v4372
    %v4374 = vmul.f32 %v4356, 1.442695
    %v4375 = vpow.pop %v4374
    %v4376 = vmul.f32 %v4357, 1.442695
    %v4377 = vpow.pop %v4376
    %v4378 = vmul.f32 %v4358, 1.442695
    %v4379 = vpow.pop %v4378
    %v4380 = vmul.f32 %v4359, 1.442695
    %v4381 = vpow.pop %v4380
    %v4382 = vmul.f32 %v4360, 1.442695
    %v4383 = vpow.pop %v4382
    %v4384 = vmul.f32 %v4361, 1.442695
    %v4385 = vpow.pop %v4384
    %v4386 = vmul.f32 %v4362, 1.442695
    %v4387 = vpow.pop %v4386
    %v4388 = vmul.f32 %v4363, 1.442695
    %v4389 = vpow.pop %v4388
    %v4390 = vmul.f32 %v4364, 1.442695
    %v4391 = vpow.pop %v4390
    %v4392 = vmul.f32 %v4365, 1.442695
    %v4393 = vpow.pop %v4392
    %v4394 = vmul.f32 %v4366, 1.442695
    %v4395 = vpow.pop %v4394
    %v4396 = vmul.f32 %v4367, 1.442695
    %v4397 = vpow.pop %v4396
    %v4398 = vmul.f32 %v4368, 1.442695
    %v4399 = vpow.pop %v4398
    %v4400 = vmul.f32 %v4369, 1.442695
    %v4401 = vpow.pop %v4400
    %v4402 = vsel %vm1073, %v4371, 0.0
    %4403 = vadd.xlane.f32.xlu0 %v4402
    %v4404 = vpop.xlane.xlu0 %4403
    %v4405 = vsel %vm1073, %v4373, 0.0
    %4406 = vadd.xlane.f32.xlu0 %v4405
    %v4407 = vpop.xlane.xlu0 %4406
    %v4408 = vsel %vm1073, %v4375, 0.0
    %4409 = vadd.xlane.f32.xlu0 %v4408
    %v4410 = vpop.xlane.xlu0 %4409
    %v4411 = vsel %vm1073, %v4377, 0.0
    %4412 = vadd.xlane.f32.xlu0 %v4411
    %v4413 = vpop.xlane.xlu0 %4412
    %v4414 = vsel %vm1073, %v4379, 0.0
    %4415 = vadd.xlane.f32.xlu0 %v4414
    %v4416 = vpop.xlane.xlu0 %4415
    %v4417 = vsel %vm1073, %v4381, 0.0
    %4418 = vadd.xlane.f32.xlu0 %v4417
    %v4419 = vpop.xlane.xlu0 %4418
    %v4420 = vsel %vm1073, %v4383, 0.0
    %4421 = vadd.xlane.f32.xlu0 %v4420
    %v4422 = vpop.xlane.xlu0 %4421
    %v4423 = vsel %vm1073, %v4385, 0.0
    %4424 = vadd.xlane.f32.xlu0 %v4423
    %v4425 = vpop.xlane.xlu0 %4424
    %v4426 = vsel %vm1073, %v4387, 0.0
    %4427 = vadd.xlane.f32.xlu0 %v4426
    %v4428 = vpop.xlane.xlu0 %4427
    %v4429 = vsel %vm1073, %v4389, 0.0
    %4430 = vadd.xlane.f32.xlu0 %v4429
    %v4431 = vpop.xlane.xlu0 %4430
    %v4432 = vsel %vm1073, %v4391, 0.0
    %4433 = vadd.xlane.f32.xlu0 %v4432
    %v4434 = vpop.xlane.xlu0 %4433
    %v4435 = vsel %vm1073, %v4393, 0.0
    %4436 = vadd.xlane.f32.xlu0 %v4435
    %v4437 = vpop.xlane.xlu0 %4436
    %v4438 = vsel %vm1073, %v4395, 0.0
    %4439 = vadd.xlane.f32.xlu0 %v4438
    %v4440 = vpop.xlane.xlu0 %4439
    %v4441 = vsel %vm1073, %v4397, 0.0
    %4442 = vadd.xlane.f32.xlu0 %v4441
    %v4443 = vpop.xlane.xlu0 %4442
    %v4444 = vsel %vm1073, %v4399, 0.0
    %4445 = vadd.xlane.f32.xlu0 %v4444
    %v4446 = vpop.xlane.xlu0 %4445
    %v4447 = vsel %vm1073, %v4401, 0.0
    %4448 = vadd.xlane.f32.xlu0 %v4447
    %v4449 = vpop.xlane.xlu0 %4448
    %v4450 = vrcp.pop %v4404
    %v4451 = vrcp.pop %v4407
    %v4452 = vrcp.pop %v4410
    %v4453 = vrcp.pop %v4413
    %v4454 = vrcp.pop %v4416
    %v4455 = vrcp.pop %v4419
    %v4456 = vrcp.pop %v4422
    %v4457 = vrcp.pop %v4425
    %v4458 = vrcp.pop %v4428
    %v4459 = vrcp.pop %v4431
    %v4460 = vrcp.pop %v4434
    %v4461 = vrcp.pop %v4437
    %v4462 = vrcp.pop %v4440
    %v4463 = vrcp.pop %v4443
    %v4464 = vrcp.pop %v4446
    %v4465 = vrcp.pop %v4449
    %v4466 = vmul.f32 %v4371, %v4450
    %v4467 = vmul.f32 %v4373, %v4451
    %v4468 = vmul.f32 %v4375, %v4452
    %v4469 = vmul.f32 %v4377, %v4453
    %v4470 = vmul.f32 %v4379, %v4454
    %v4471 = vmul.f32 %v4381, %v4455
    %v4472 = vmul.f32 %v4383, %v4456
    %v4473 = vmul.f32 %v4385, %v4457
    %v4474 = vmul.f32 %v4387, %v4458
    %v4475 = vmul.f32 %v4389, %v4459
    %v4476 = vmul.f32 %v4391, %v4460
    %v4477 = vmul.f32 %v4393, %v4461
    %v4478 = vmul.f32 %v4395, %v4462
    %v4479 = vmul.f32 %v4397, %v4463
    %v4480 = vmul.f32 %v4399, %v4464
    %v4481 = vmul.f32 %v4401, %v4465
    %4482 = vrot.lane.b32.xlu0 %v226, 48
    %v4483 = vpop.permute.xlu0 %4482
    %4484 = vrot.lane.b32.xlu0 %v231, 48
    %v4485 = vpop.permute.xlu0 %4484
    %v4489 = vsel %vm1073, %v4466, 0
    %v4492 = vsel %vm1073, %v4467, 0
    %4494 = vmatprep.subr.mxu0 0.0
    %4495 = vmatpush1.msra.mxu0 %v4483
    %4496 = vmatprep.subr.mxu0 0.0
    %4497 = vmatpush1.msra.mxu0 %v4485
    %4498 = vmatprep.subr.mxu0 0.0
    %4499 = vmatpush1.msra.mxu0 0.0
    %4500 = vmatprep.subr.mxu0 0.0
    %4501 = vmatpush1.msra.mxu0 0.0
    %4502 = vmatprep.subr.mxu0 0.0
    %4503 = vmatpush1.msra.mxu0 0.0
    %4504 = vmatprep.subr.mxu0 0.0
    %4505 = vmatpush1.msra.mxu0 0.0
    %4506 = vmatprep.subr.mxu0 0.0
    %4507 = vmatpush1.msra.mxu0 0.0
    %4508 = vmatprep.subr.mxu0 0.0
    %4509 = vmatpush1.msra.mxu0 0.0
    %4510 = vmatprep.subr.mxu0 0.0
    %4511 = vmatpush1.msra.mxu0 0.0
    %4512 = vmatprep.subr.mxu0 0.0
    %4513 = vmatpush1.msra.mxu0 0.0
    %4514 = vmatprep.subr.mxu0 0.0
    %4515 = vmatpush1.msra.mxu0 0.0
    %4516 = vmatprep.subr.mxu0 0.0
    %4517 = vmatpush1.msra.mxu0 0.0
    %4518 = vmatprep.subr.mxu0 0.0
    %4519 = vmatpush1.msra.mxu0 0.0
    %4520 = vmatprep.subr.mxu0 0.0
    %4521 = vmatpush1.msra.mxu0 0.0
    %4522 = vmatprep.subr.mxu0 0.0
    %4523 = vmatpush1.msra.mxu0 0.0
    %4524 = vmatprep.subr.mxu0 0.0
    %4525 = vmatpush1.msra.mxu0 0.0
    %4526 = vmatprep.subr.mxu0 0.0
    %4527 = vmatpush1.msra.mxu0 0.0
    %4528 = vmatprep.subr.mxu0 0.0
    %4529 = vmatpush1.msra.mxu0 0.0
    %4530 = vmatprep.subr.mxu0 0.0
    %4531 = vmatpush1.msra.mxu0 0.0
    %4532 = vmatprep.subr.mxu0 0.0
    %4533 = vmatpush1.msra.mxu0 0.0
    %4534 = vmatprep.subr.mxu0 0.0
    %4535 = vmatpush1.msra.mxu0 0.0
    %4536 = vmatprep.subr.mxu0 0.0
    %4537 = vmatpush1.msra.mxu0 0.0
    %4538 = vmatprep.subr.mxu0 0.0
    %4539 = vmatpush1.msra.mxu0 0.0
    %4540 = vmatprep.subr.mxu0 0.0
    %4541 = vmatpush1.msra.mxu0 0.0
    %4542 = vmatprep.subr.mxu0 0.0
    %4543 = vmatpush1.msra.mxu0 0.0
    %4544 = vmatprep.subr.mxu0 0.0
    %4545 = vmatpush1.msra.mxu0 0.0
    %4546 = vmatprep.subr.mxu0 0.0
    %4547 = vmatpush1.msra.mxu0 0.0
    %4548 = vmatprep.subr.mxu0 0.0
    %4549 = vmatpush1.msra.mxu0 0.0
    %4550 = vmatprep.subr.mxu0 0.0
    %4551 = vmatpush1.msra.mxu0 0.0
    %4552 = vmatprep.subr.mxu0 0.0
    %4553 = vmatpush1.msra.mxu0 0.0
    %4554 = vmatprep.subr.mxu0 0.0
    %4555 = vmatpush1.msra.mxu0 0.0
    %4556 = vmatprep.subr.mxu0 0.0
    %4557 = vmatpush1.msra.mxu0 0.0
    %4558 = vmatprep.mubr.f32.mxu0 0.0
    %4559 = vmatmul.mubr.f32.gmra.mrb[0].mxu0 %v4489
    %v4560 = vpop.f32.mrb[0].mxu0
    %v4561 = vadd.f32 0.0, %v4560
    %v4562 = vpop.f32.mrb[0].mxu0
    %4563 = vmatprep.mubr.f32.mxu0 0.0
    %4564 = vmatmul.mubr.f32.gmra.mrb[0].mxu0 %v4492
    %v4565 = vpop.f32.mrb[0].mxu0
    %v4566 = vadd.f32 0.0, %v4565
    %v4567 = vpop.f32.mrb[0].mxu0
    %4568 = vdwg.mxu0
    %4569 = vrot.lane.b32.xlu0 %v236, 48
    %v4570 = vpop.permute.xlu0 %4569
    %4571 = vrot.lane.b32.xlu0 %v241, 48
    %v4572 = vpop.permute.xlu0 %4571
    %v4576 = vsel %vm1073, %v4468, 0
    %v4579 = vsel %vm1073, %v4469, 0
    %4581 = vmatprep.subr.mxu0 0.0
    %4582 = vmatpush1.msra.mxu0 %v4570
    %4583 = vmatprep.subr.mxu0 0.0
    %4584 = vmatpush1.msra.mxu0 %v4572
    %4585 = vmatprep.subr.mxu0 0.0
    %4586 = vmatpush1.msra.mxu0 0.0
    %4587 = vmatprep.subr.mxu0 0.0
    %4588 = vmatpush1.msra.mxu0 0.0
    %4589 = vmatprep.subr.mxu0 0.0
    %4590 = vmatpush1.msra.mxu0 0.0
    %4591 = vmatprep.subr.mxu0 0.0
    %4592 = vmatpush1.msra.mxu0 0.0
    %4593 = vmatprep.subr.mxu0 0.0
    %4594 = vmatpush1.msra.mxu0 0.0
    %4595 = vmatprep.subr.mxu0 0.0
    %4596 = vmatpush1.msra.mxu0 0.0
    %4597 = vmatprep.subr.mxu0 0.0
    %4598 = vmatpush1.msra.mxu0 0.0
    %4599 = vmatprep.subr.mxu0 0.0
    %4600 = vmatpush1.msra.mxu0 0.0
    %4601 = vmatprep.subr.mxu0 0.0
    %4602 = vmatpush1.msra.mxu0 0.0
    %4603 = vmatprep.subr.mxu0 0.0
    %4604 = vmatpush1.msra.mxu0 0.0
    %4605 = vmatprep.subr.mxu0 0.0
    %4606 = vmatpush1.msra.mxu0 0.0
    %4607 = vmatprep.subr.mxu0 0.0
    %4608 = vmatpush1.msra.mxu0 0.0
    %4609 = vmatprep.subr.mxu0 0.0
    %4610 = vmatpush1.msra.mxu0 0.0
    %4611 = vmatprep.subr.mxu0 0.0
    %4612 = vmatpush1.msra.mxu0 0.0
    %4613 = vmatprep.subr.mxu0 0.0
    %4614 = vmatpush1.msra.mxu0 0.0
    %4615 = vmatprep.subr.mxu0 0.0
    %4616 = vmatpush1.msra.mxu0 0.0
    %4617 = vmatprep.subr.mxu0 0.0
    %4618 = vmatpush1.msra.mxu0 0.0
    %4619 = vmatprep.subr.mxu0 0.0
    %4620 = vmatpush1.msra.mxu0 0.0
    %4621 = vmatprep.subr.mxu0 0.0
    %4622 = vmatpush1.msra.mxu0 0.0
    %4623 = vmatprep.subr.mxu0 0.0
    %4624 = vmatpush1.msra.mxu0 0.0
    %4625 = vmatprep.subr.mxu0 0.0
    %4626 = vmatpush1.msra.mxu0 0.0
    %4627 = vmatprep.subr.mxu0 0.0
    %4628 = vmatpush1.msra.mxu0 0.0
    %4629 = vmatprep.subr.mxu0 0.0
    %4630 = vmatpush1.msra.mxu0 0.0
    %4631 = vmatprep.subr.mxu0 0.0
    %4632 = vmatpush1.msra.mxu0 0.0
    %4633 = vmatprep.subr.mxu0 0.0
    %4634 = vmatpush1.msra.mxu0 0.0
    %4635 = vmatprep.subr.mxu0 0.0
    %4636 = vmatpush1.msra.mxu0 0.0
    %4637 = vmatprep.subr.mxu0 0.0
    %4638 = vmatpush1.msra.mxu0 0.0
    %4639 = vmatprep.subr.mxu0 0.0
    %4640 = vmatpush1.msra.mxu0 0.0
    %4641 = vmatprep.subr.mxu0 0.0
    %4642 = vmatpush1.msra.mxu0 0.0
    %4643 = vmatprep.subr.mxu0 0.0
    %4644 = vmatpush1.msra.mxu0 0.0
    %4645 = vmatprep.mubr.f32.mxu0 0.0
    %4646 = vmatmul.mubr.f32.gmra.mrb[0].mxu0 %v4576
    %v4647 = vpop.f32.mrb[0].mxu0
    %v4648 = vadd.f32 0.0, %v4647
    %v4649 = vpop.f32.mrb[0].mxu0
    %4650 = vmatprep.mubr.f32.mxu0 0.0
    %4651 = vmatmul.mubr.f32.gmra.mrb[0].mxu0 %v4579
    %v4652 = vpop.f32.mrb[0].mxu0
    %v4653 = vadd.f32 0.0, %v4652
    %v4654 = vpop.f32.mrb[0].mxu0
    %4655 = vdwg.mxu0
    %4656 = vrot.lane.b32.xlu0 %v246, 48
    %v4657 = vpop.permute.xlu0 %4656
    %4658 = vrot.lane.b32.xlu0 %v251, 48
    %v4659 = vpop.permute.xlu0 %4658
    %v4663 = vsel %vm1073, %v4470, 0
    %v4666 = vsel %vm1073, %v4471, 0
    %4668 = vmatprep.subr.mxu0 0.0
    %4669 = vmatpush1.msra.mxu0 %v4657
    %4670 = vmatprep.subr.mxu0 0.0
    %4671 = vmatpush1.msra.mxu0 %v4659
    %4672 = vmatprep.subr.mxu0 0.0
    %4673 = vmatpush1.msra.mxu0 0.0
    %4674 = vmatprep.subr.mxu0 0.0
    %4675 = vmatpush1.msra.mxu0 0.0
    %4676 = vmatprep.subr.mxu0 0.0
    %4677 = vmatpush1.msra.mxu0 0.0
    %4678 = vmatprep.subr.mxu0 0.0
    %4679 = vmatpush1.msra.mxu0 0.0
    %4680 = vmatprep.subr.mxu0 0.0
    %4681 = vmatpush1.msra.mxu0 0.0
    %4682 = vmatprep.subr.mxu0 0.0
    %4683 = vmatpush1.msra.mxu0 0.0
    %4684 = vmatprep.subr.mxu0 0.0
    %4685 = vmatpush1.msra.mxu0 0.0
    %4686 = vmatprep.subr.mxu0 0.0
    %4687 = vmatpush1.msra.mxu0 0.0
    %4688 = vmatprep.subr.mxu0 0.0
    %4689 = vmatpush1.msra.mxu0 0.0
    %4690 = vmatprep.subr.mxu0 0.0
    %4691 = vmatpush1.msra.mxu0 0.0
    %4692 = vmatprep.subr.mxu0 0.0
    %4693 = vmatpush1.msra.mxu0 0.0
    %4694 = vmatprep.subr.mxu0 0.0
    %4695 = vmatpush1.msra.mxu0 0.0
    %4696 = vmatprep.subr.mxu0 0.0
    %4697 = vmatpush1.msra.mxu0 0.0
    %4698 = vmatprep.subr.mxu0 0.0
    %4699 = vmatpush1.msra.mxu0 0.0
    %4700 = vmatprep.subr.mxu0 0.0
    %4701 = vmatpush1.msra.mxu0 0.0
    %4702 = vmatprep.subr.mxu0 0.0
    %4703 = vmatpush1.msra.mxu0 0.0
    %4704 = vmatprep.subr.mxu0 0.0
    %4705 = vmatpush1.msra.mxu0 0.0
    %4706 = vmatprep.subr.mxu0 0.0
    %4707 = vmatpush1.msra.mxu0 0.0
    %4708 = vmatprep.subr.mxu0 0.0
    %4709 = vmatpush1.msra.mxu0 0.0
    %4710 = vmatprep.subr.mxu0 0.0
    %4711 = vmatpush1.msra.mxu0 0.0
    %4712 = vmatprep.subr.mxu0 0.0
    %4713 = vmatpush1.msra.mxu0 0.0
    %4714 = vmatprep.subr.mxu0 0.0
    %4715 = vmatpush1.msra.mxu0 0.0
    %4716 = vmatprep.subr.mxu0 0.0
    %4717 = vmatpush1.msra.mxu0 0.0
    %4718 = vmatprep.subr.mxu0 0.0
    %4719 = vmatpush1.msra.mxu0 0.0
    %4720 = vmatprep.subr.mxu0 0.0
    %4721 = vmatpush1.msra.mxu0 0.0
    %4722 = vmatprep.subr.mxu0 0.0
    %4723 = vmatpush1.msra.mxu0 0.0
    %4724 = vmatprep.subr.mxu0 0.0
    %4725 = vmatpush1.msra.mxu0 0.0
    %4726 = vmatprep.subr.mxu0 0.0
    %4727 = vmatpush1.msra.mxu0 0.0
    %4728 = vmatprep.subr.mxu0 0.0
    %4729 = vmatpush1.msra.mxu0 0.0
    %4730 = vmatprep.subr.mxu0 0.0
    %4731 = vmatpush1.msra.mxu0 0.0
    %4732 = vmatprep.mubr.f32.mxu0 0.0
    %4733 = vmatmul.mubr.f32.gmra.mrb[0].mxu0 %v4663
    %v4734 = vpop.f32.mrb[0].mxu0
    %v4735 = vadd.f32 0.0, %v4734
    %v4736 = vpop.f32.mrb[0].mxu0
    %4737 = vmatprep.mubr.f32.mxu0 0.0
    %4738 = vmatmul.mubr.f32.gmra.mrb[0].mxu0 %v4666
    %v4739 = vpop.f32.mrb[0].mxu0
    %v4740 = vadd.f32 0.0, %v4739
    %v4741 = vpop.f32.mrb[0].mxu0
    %4742 = vdwg.mxu0
    %4743 = vrot.lane.b32.xlu0 %v256, 48
    %v4744 = vpop.permute.xlu0 %4743
    %4745 = vrot.lane.b32.xlu0 %v261, 48
    %v4746 = vpop.permute.xlu0 %4745
    %v4750 = vsel %vm1073, %v4472, 0
    %v4753 = vsel %vm1073, %v4473, 0
    %4755 = vmatprep.subr.mxu0 0.0
    %4756 = vmatpush1.msra.mxu0 %v4744
    %4757 = vmatprep.subr.mxu0 0.0
    %4758 = vmatpush1.msra.mxu0 %v4746
    %4759 = vmatprep.subr.mxu0 0.0
    %4760 = vmatpush1.msra.mxu0 0.0
    %4761 = vmatprep.subr.mxu0 0.0
    %4762 = vmatpush1.msra.mxu0 0.0
    %4763 = vmatprep.subr.mxu0 0.0
    %4764 = vmatpush1.msra.mxu0 0.0
    %4765 = vmatprep.subr.mxu0 0.0
    %4766 = vmatpush1.msra.mxu0 0.0
    %4767 = vmatprep.subr.mxu0 0.0
    %4768 = vmatpush1.msra.mxu0 0.0
    %4769 = vmatprep.subr.mxu0 0.0
    %4770 = vmatpush1.msra.mxu0 0.0
    %4771 = vmatprep.subr.mxu0 0.0
    %4772 = vmatpush1.msra.mxu0 0.0
    %4773 = vmatprep.subr.mxu0 0.0
    %4774 = vmatpush1.msra.mxu0 0.0
    %4775 = vmatprep.subr.mxu0 0.0
    %4776 = vmatpush1.msra.mxu0 0.0
    %4777 = vmatprep.subr.mxu0 0.0
    %4778 = vmatpush1.msra.mxu0 0.0
    %4779 = vmatprep.subr.mxu0 0.0
    %4780 = vmatpush1.msra.mxu0 0.0
    %4781 = vmatprep.subr.mxu0 0.0
    %4782 = vmatpush1.msra.mxu0 0.0
    %4783 = vmatprep.subr.mxu0 0.0
    %4784 = vmatpush1.msra.mxu0 0.0
    %4785 = vmatprep.subr.mxu0 0.0
    %4786 = vmatpush1.msra.mxu0 0.0
    %4787 = vmatprep.subr.mxu0 0.0
    %4788 = vmatpush1.msra.mxu0 0.0
    %4789 = vmatprep.subr.mxu0 0.0
    %4790 = vmatpush1.msra.mxu0 0.0
    %4791 = vmatprep.subr.mxu0 0.0
    %4792 = vmatpush1.msra.mxu0 0.0
    %4793 = vmatprep.subr.mxu0 0.0
    %4794 = vmatpush1.msra.mxu0 0.0
    %4795 = vmatprep.subr.mxu0 0.0
    %4796 = vmatpush1.msra.mxu0 0.0
    %4797 = vmatprep.subr.mxu0 0.0
    %4798 = vmatpush1.msra.mxu0 0.0
    %4799 = vmatprep.subr.mxu0 0.0
    %4800 = vmatpush1.msra.mxu0 0.0
    %4801 = vmatprep.subr.mxu0 0.0
    %4802 = vmatpush1.msra.mxu0 0.0
    %4803 = vmatprep.subr.mxu0 0.0
    %4804 = vmatpush1.msra.mxu0 0.0
    %4805 = vmatprep.subr.mxu0 0.0
    %4806 = vmatpush1.msra.mxu0 0.0
    %4807 = vmatprep.subr.mxu0 0.0
    %4808 = vmatpush1.msra.mxu0 0.0
    %4809 = vmatprep.subr.mxu0 0.0
    %4810 = vmatpush1.msra.mxu0 0.0
    %4811 = vmatprep.subr.mxu0 0.0
    %4812 = vmatpush1.msra.mxu0 0.0
    %4813 = vmatprep.subr.mxu0 0.0
    %4814 = vmatpush1.msra.mxu0 0.0
    %4815 = vmatprep.subr.mxu0 0.0
    %4816 = vmatpush1.msra.mxu0 0.0
    %4817 = vmatprep.subr.mxu0 0.0
    %4818 = vmatpush1.msra.mxu0 0.0
    %4819 = vmatprep.mubr.f32.mxu0 0.0
    %4820 = vmatmul.mubr.f32.gmra.mrb[0].mxu0 %v4750
    %v4821 = vpop.f32.mrb[0].mxu0
    %v4822 = vadd.f32 0.0, %v4821
    %v4823 = vpop.f32.mrb[0].mxu0
    %4824 = vmatprep.mubr.f32.mxu0 0.0
    %4825 = vmatmul.mubr.f32.gmra.mrb[0].mxu0 %v4753
    %v4826 = vpop.f32.mrb[0].mxu0
    %v4827 = vadd.f32 0.0, %v4826
    %v4828 = vpop.f32.mrb[0].mxu0
    %4829 = vdwg.mxu0
    %4830 = vrot.lane.b32.xlu0 %v266, 48
    %v4831 = vpop.permute.xlu0 %4830
    %4832 = vrot.lane.b32.xlu0 %v271, 48
    %v4833 = vpop.permute.xlu0 %4832
    %v4837 = vsel %vm1073, %v4474, 0
    %v4840 = vsel %vm1073, %v4475, 0
    %4842 = vmatprep.subr.mxu0 0.0
    %4843 = vmatpush1.msra.mxu0 %v4831
    %4844 = vmatprep.subr.mxu0 0.0
    %4845 = vmatpush1.msra.mxu0 %v4833
    %4846 = vmatprep.subr.mxu0 0.0
    %4847 = vmatpush1.msra.mxu0 0.0
    %4848 = vmatprep.subr.mxu0 0.0
    %4849 = vmatpush1.msra.mxu0 0.0
    %4850 = vmatprep.subr.mxu0 0.0
    %4851 = vmatpush1.msra.mxu0 0.0
    %4852 = vmatprep.subr.mxu0 0.0
    %4853 = vmatpush1.msra.mxu0 0.0
    %4854 = vmatprep.subr.mxu0 0.0
    %4855 = vmatpush1.msra.mxu0 0.0
    %4856 = vmatprep.subr.mxu0 0.0
    %4857 = vmatpush1.msra.mxu0 0.0
    %4858 = vmatprep.subr.mxu0 0.0
    %4859 = vmatpush1.msra.mxu0 0.0
    %4860 = vmatprep.subr.mxu0 0.0
    %4861 = vmatpush1.msra.mxu0 0.0
    %4862 = vmatprep.subr.mxu0 0.0
    %4863 = vmatpush1.msra.mxu0 0.0
    %4864 = vmatprep.subr.mxu0 0.0
    %4865 = vmatpush1.msra.mxu0 0.0
    %4866 = vmatprep.subr.mxu0 0.0
    %4867 = vmatpush1.msra.mxu0 0.0
    %4868 = vmatprep.subr.mxu0 0.0
    %4869 = vmatpush1.msra.mxu0 0.0
    %4870 = vmatprep.subr.mxu0 0.0
    %4871 = vmatpush1.msra.mxu0 0.0
    %4872 = vmatprep.subr.mxu0 0.0
    %4873 = vmatpush1.msra.mxu0 0.0
    %4874 = vmatprep.subr.mxu0 0.0
    %4875 = vmatpush1.msra.mxu0 0.0
    %4876 = vmatprep.subr.mxu0 0.0
    %4877 = vmatpush1.msra.mxu0 0.0
    %4878 = vmatprep.subr.mxu0 0.0
    %4879 = vmatpush1.msra.mxu0 0.0
    %4880 = vmatprep.subr.mxu0 0.0
    %4881 = vmatpush1.msra.mxu0 0.0
    %4882 = vmatprep.subr.mxu0 0.0
    %4883 = vmatpush1.msra.mxu0 0.0
    %4884 = vmatprep.subr.mxu0 0.0
    %4885 = vmatpush1.msra.mxu0 0.0
    %4886 = vmatprep.subr.mxu0 0.0
    %4887 = vmatpush1.msra.mxu0 0.0
    %4888 = vmatprep.subr.mxu0 0.0
    %4889 = vmatpush1.msra.mxu0 0.0
    %4890 = vmatprep.subr.mxu0 0.0
    %4891 = vmatpush1.msra.mxu0 0.0
    %4892 = vmatprep.subr.mxu0 0.0
    %4893 = vmatpush1.msra.mxu0 0.0
    %4894 = vmatprep.subr.mxu0 0.0
    %4895 = vmatpush1.msra.mxu0 0.0
    %4896 = vmatprep.subr.mxu0 0.0
    %4897 = vmatpush1.msra.mxu0 0.0
    %4898 = vmatprep.subr.mxu0 0.0
    %4899 = vmatpush1.msra.mxu0 0.0
    %4900 = vmatprep.subr.mxu0 0.0
    %4901 = vmatpush1.msra.mxu0 0.0
    %4902 = vmatprep.subr.mxu0 0.0
    %4903 = vmatpush1.msra.mxu0 0.0
    %4904 = vmatprep.subr.mxu0 0.0
    %4905 = vmatpush1.msra.mxu0 0.0
    %4906 = vmatprep.mubr.f32.mxu0 0.0
    %4907 = vmatmul.mubr.f32.gmra.mrb[0].mxu0 %v4837
    %v4908 = vpop.f32.mrb[0].mxu0
    %v4909 = vadd.f32 0.0, %v4908
    %v4910 = vpop.f32.mrb[0].mxu0
    %4911 = vmatprep.mubr.f32.mxu0 0.0
    %4912 = vmatmul.mubr.f32.gmra.mrb[0].mxu0 %v4840
    %v4913 = vpop.f32.mrb[0].mxu0
    %v4914 = vadd.f32 0.0, %v4913
    %v4915 = vpop.f32.mrb[0].mxu0
    %4916 = vdwg.mxu0
    %4917 = vrot.lane.b32.xlu0 %v276, 48
    %v4918 = vpop.permute.xlu0 %4917
    %4919 = vrot.lane.b32.xlu0 %v281, 48
    %v4920 = vpop.permute.xlu0 %4919
    %v4924 = vsel %vm1073, %v4476, 0
    %v4927 = vsel %vm1073, %v4477, 0
    %4929 = vmatprep.subr.mxu0 0.0
    %4930 = vmatpush1.msra.mxu0 %v4918
    %4931 = vmatprep.subr.mxu0 0.0
    %4932 = vmatpush1.msra.mxu0 %v4920
    %4933 = vmatprep.subr.mxu0 0.0
    %4934 = vmatpush1.msra.mxu0 0.0
    %4935 = vmatprep.subr.mxu0 0.0
    %4936 = vmatpush1.msra.mxu0 0.0
    %4937 = vmatprep.subr.mxu0 0.0
    %4938 = vmatpush1.msra.mxu0 0.0
    %4939 = vmatprep.subr.mxu0 0.0
    %4940 = vmatpush1.msra.mxu0 0.0
    %4941 = vmatprep.subr.mxu0 0.0
    %4942 = vmatpush1.msra.mxu0 0.0
    %4943 = vmatprep.subr.mxu0 0.0
    %4944 = vmatpush1.msra.mxu0 0.0
    %4945 = vmatprep.subr.mxu0 0.0
    %4946 = vmatpush1.msra.mxu0 0.0
    %4947 = vmatprep.subr.mxu0 0.0
    %4948 = vmatpush1.msra.mxu0 0.0
    %4949 = vmatprep.subr.mxu0 0.0
    %4950 = vmatpush1.msra.mxu0 0.0
    %4951 = vmatprep.subr.mxu0 0.0
    %4952 = vmatpush1.msra.mxu0 0.0
    %4953 = vmatprep.subr.mxu0 0.0
    %4954 = vmatpush1.msra.mxu0 0.0
    %4955 = vmatprep.subr.mxu0 0.0
    %4956 = vmatpush1.msra.mxu0 0.0
    %4957 = vmatprep.subr.mxu0 0.0
    %4958 = vmatpush1.msra.mxu0 0.0
    %4959 = vmatprep.subr.mxu0 0.0
    %4960 = vmatpush1.msra.mxu0 0.0
    %4961 = vmatprep.subr.mxu0 0.0
    %4962 = vmatpush1.msra.mxu0 0.0
    %4963 = vmatprep.subr.mxu0 0.0
    %4964 = vmatpush1.msra.mxu0 0.0
    %4965 = vmatprep.subr.mxu0 0.0
    %4966 = vmatpush1.msra.mxu0 0.0
    %4967 = vmatprep.subr.mxu0 0.0
    %4968 = vmatpush1.msra.mxu0 0.0
    %4969 = vmatprep.subr.mxu0 0.0
    %4970 = vmatpush1.msra.mxu0 0.0
    %4971 = vmatprep.subr.mxu0 0.0
    %4972 = vmatpush1.msra.mxu0 0.0
    %4973 = vmatprep.subr.mxu0 0.0
    %4974 = vmatpush1.msra.mxu0 0.0
    %4975 = vmatprep.subr.mxu0 0.0
    %4976 = vmatpush1.msra.mxu0 0.0
    %4977 = vmatprep.subr.mxu0 0.0
    %4978 = vmatpush1.msra.mxu0 0.0
    %4979 = vmatprep.subr.mxu0 0.0
    %4980 = vmatpush1.msra.mxu0 0.0
    %4981 = vmatprep.subr.mxu0 0.0
    %4982 = vmatpush1.msra.mxu0 0.0
    %4983 = vmatprep.subr.mxu0 0.0
    %4984 = vmatpush1.msra.mxu0 0.0
    %4985 = vmatprep.subr.mxu0 0.0
    %4986 = vmatpush1.msra.mxu0 0.0
    %4987 = vmatprep.subr.mxu0 0.0
    %4988 = vmatpush1.msra.mxu0 0.0
    %4989 = vmatprep.subr.mxu0 0.0
    %4990 = vmatpush1.msra.mxu0 0.0
    %4991 = vmatprep.subr.mxu0 0.0
    %4992 = vmatpush1.msra.mxu0 0.0
    %4993 = vmatprep.mubr.f32.mxu0 0.0
    %4994 = vmatmul.mubr.f32.gmra.mrb[0].mxu0 %v4924
    %v4995 = vpop.f32.mrb[0].mxu0
    %v4996 = vadd.f32 0.0, %v4995
    %v4997 = vpop.f32.mrb[0].mxu0
    %4998 = vmatprep.mubr.f32.mxu0 0.0
    %4999 = vmatmul.mubr.f32.gmra.mrb[0].mxu0 %v4927
    %v5000 = vpop.f32.mrb[0].mxu0
    %v5001 = vadd.f32 0.0, %v5000
    %v5002 = vpop.f32.mrb[0].mxu0
    %5003 = vdwg.mxu0
    %5004 = vrot.lane.b32.xlu0 %v286, 48
    %v5005 = vpop.permute.xlu0 %5004
    %5006 = vrot.lane.b32.xlu0 %v291, 48
    %v5007 = vpop.permute.xlu0 %5006
    %v5011 = vsel %vm1073, %v4478, 0
    %v5014 = vsel %vm1073, %v4479, 0
    %5016 = vmatprep.subr.mxu0 0.0
    %5017 = vmatpush1.msra.mxu0 %v5005
    %5018 = vmatprep.subr.mxu0 0.0
    %5019 = vmatpush1.msra.mxu0 %v5007
    %5020 = vmatprep.subr.mxu0 0.0
    %5021 = vmatpush1.msra.mxu0 0.0
    %5022 = vmatprep.subr.mxu0 0.0
    %5023 = vmatpush1.msra.mxu0 0.0
    %5024 = vmatprep.subr.mxu0 0.0
    %5025 = vmatpush1.msra.mxu0 0.0
    %5026 = vmatprep.subr.mxu0 0.0
    %5027 = vmatpush1.msra.mxu0 0.0
    %5028 = vmatprep.subr.mxu0 0.0
    %5029 = vmatpush1.msra.mxu0 0.0
    %5030 = vmatprep.subr.mxu0 0.0
    %5031 = vmatpush1.msra.mxu0 0.0
    %5032 = vmatprep.subr.mxu0 0.0
    %5033 = vmatpush1.msra.mxu0 0.0
    %5034 = vmatprep.subr.mxu0 0.0
    %5035 = vmatpush1.msra.mxu0 0.0
    %5036 = vmatprep.subr.mxu0 0.0
    %5037 = vmatpush1.msra.mxu0 0.0
    %5038 = vmatprep.subr.mxu0 0.0
    %5039 = vmatpush1.msra.mxu0 0.0
    %5040 = vmatprep.subr.mxu0 0.0
    %5041 = vmatpush1.msra.mxu0 0.0
    %5042 = vmatprep.subr.mxu0 0.0
    %5043 = vmatpush1.msra.mxu0 0.0
    %5044 = vmatprep.subr.mxu0 0.0
    %5045 = vmatpush1.msra.mxu0 0.0
    %5046 = vmatprep.subr.mxu0 0.0
    %5047 = vmatpush1.msra.mxu0 0.0
    %5048 = vmatprep.subr.mxu0 0.0
    %5049 = vmatpush1.msra.mxu0 0.0
    %5050 = vmatprep.subr.mxu0 0.0
    %5051 = vmatpush1.msra.mxu0 0.0
    %5052 = vmatprep.subr.mxu0 0.0
    %5053 = vmatpush1.msra.mxu0 0.0
    %5054 = vmatprep.subr.mxu0 0.0
    %5055 = vmatpush1.msra.mxu0 0.0
    %5056 = vmatprep.subr.mxu0 0.0
    %5057 = vmatpush1.msra.mxu0 0.0
    %5058 = vmatprep.subr.mxu0 0.0
    %5059 = vmatpush1.msra.mxu0 0.0
    %5060 = vmatprep.subr.mxu0 0.0
    %5061 = vmatpush1.msra.mxu0 0.0
    %5062 = vmatprep.subr.mxu0 0.0
    %5063 = vmatpush1.msra.mxu0 0.0
    %5064 = vmatprep.subr.mxu0 0.0
    %5065 = vmatpush1.msra.mxu0 0.0
    %5066 = vmatprep.subr.mxu0 0.0
    %5067 = vmatpush1.msra.mxu0 0.0
    %5068 = vmatprep.subr.mxu0 0.0
    %5069 = vmatpush1.msra.mxu0 0.0
    %5070 = vmatprep.subr.mxu0 0.0
    %5071 = vmatpush1.msra.mxu0 0.0
    %5072 = vmatprep.subr.mxu0 0.0
    %5073 = vmatpush1.msra.mxu0 0.0
    %5074 = vmatprep.subr.mxu0 0.0
    %5075 = vmatpush1.msra.mxu0 0.0
    %5076 = vmatprep.subr.mxu0 0.0
    %5077 = vmatpush1.msra.mxu0 0.0
    %5078 = vmatprep.subr.mxu0 0.0
    %5079 = vmatpush1.msra.mxu0 0.0
    %5080 = vmatprep.mubr.f32.mxu0 0.0
    %5081 = vmatmul.mubr.f32.gmra.mrb[0].mxu0 %v5011
    %v5082 = vpop.f32.mrb[0].mxu0
    %v5083 = vadd.f32 0.0, %v5082
    %v5084 = vpop.f32.mrb[0].mxu0
    %5085 = vmatprep.mubr.f32.mxu0 0.0
    %5086 = vmatmul.mubr.f32.gmra.mrb[0].mxu0 %v5014
    %v5087 = vpop.f32.mrb[0].mxu0
    %v5088 = vadd.f32 0.0, %v5087
    %v5089 = vpop.f32.mrb[0].mxu0
    %5090 = vdwg.mxu0
    %5091 = vrot.lane.b32.xlu0 %v296, 48
    %v5092 = vpop.permute.xlu0 %5091
    %5093 = vrot.lane.b32.xlu0 %v301, 48
    %v5094 = vpop.permute.xlu0 %5093
    %v5098 = vsel %vm1073, %v4480, 0
    %v5101 = vsel %vm1073, %v4481, 0
    %5103 = vmatprep.subr.mxu0 0.0
    %5104 = vmatpush1.msra.mxu0 %v5092
    %5105 = vmatprep.subr.mxu0 0.0
    %5106 = vmatpush1.msra.mxu0 %v5094
    %5107 = vmatprep.subr.mxu0 0.0
    %5108 = vmatpush1.msra.mxu0 0.0
    %5109 = vmatprep.subr.mxu0 0.0
    %5110 = vmatpush1.msra.mxu0 0.0
    %5111 = vmatprep.subr.mxu0 0.0
    %5112 = vmatpush1.msra.mxu0 0.0
    %5113 = vmatprep.subr.mxu0 0.0
    %5114 = vmatpush1.msra.mxu0 0.0
    %5115 = vmatprep.subr.mxu0 0.0
    %5116 = vmatpush1.msra.mxu0 0.0
    %5117 = vmatprep.subr.mxu0 0.0
    %5118 = vmatpush1.msra.mxu0 0.0
    %5119 = vmatprep.subr.mxu0 0.0
    %5120 = vmatpush1.msra.mxu0 0.0
    %5121 = vmatprep.subr.mxu0 0.0
    %5122 = vmatpush1.msra.mxu0 0.0
    %5123 = vmatprep.subr.mxu0 0.0
    %5124 = vmatpush1.msra.mxu0 0.0
    %5125 = vmatprep.subr.mxu0 0.0
    %5126 = vmatpush1.msra.mxu0 0.0
    %5127 = vmatprep.subr.mxu0 0.0
    %5128 = vmatpush1.msra.mxu0 0.0
    %5129 = vmatprep.subr.mxu0 0.0
    %5130 = vmatpush1.msra.mxu0 0.0
    %5131 = vmatprep.subr.mxu0 0.0
    %5132 = vmatpush1.msra.mxu0 0.0
    %5133 = vmatprep.subr.mxu0 0.0
    %5134 = vmatpush1.msra.mxu0 0.0
    %5135 = vmatprep.subr.mxu0 0.0
    %5136 = vmatpush1.msra.mxu0 0.0
    %5137 = vmatprep.subr.mxu0 0.0
    %5138 = vmatpush1.msra.mxu0 0.0
    %5139 = vmatprep.subr.mxu0 0.0
    %5140 = vmatpush1.msra.mxu0 0.0
    %5141 = vmatprep.subr.mxu0 0.0
    %5142 = vmatpush1.msra.mxu0 0.0
    %5143 = vmatprep.subr.mxu0 0.0
    %5144 = vmatpush1.msra.mxu0 0.0
    %5145 = vmatprep.subr.mxu0 0.0
    %5146 = vmatpush1.msra.mxu0 0.0
    %5147 = vmatprep.subr.mxu0 0.0
    %5148 = vmatpush1.msra.mxu0 0.0
    %5149 = vmatprep.subr.mxu0 0.0
    %5150 = vmatpush1.msra.mxu0 0.0
    %5151 = vmatprep.subr.mxu0 0.0
    %5152 = vmatpush1.msra.mxu0 0.0
    %5153 = vmatprep.subr.mxu0 0.0
    %5154 = vmatpush1.msra.mxu0 0.0
    %5155 = vmatprep.subr.mxu0 0.0
    %5156 = vmatpush1.msra.mxu0 0.0
    %5157 = vmatprep.subr.mxu0 0.0
    %5158 = vmatpush1.msra.mxu0 0.0
    %5159 = vmatprep.subr.mxu0 0.0
    %5160 = vmatpush1.msra.mxu0 0.0
    %5161 = vmatprep.subr.mxu0 0.0
    %5162 = vmatpush1.msra.mxu0 0.0
    %5163 = vmatprep.subr.mxu0 0.0
    %5164 = vmatpush1.msra.mxu0 0.0
    %5165 = vmatprep.subr.mxu0 0.0
    %5166 = vmatpush1.msra.mxu0 0.0
    %5167 = vmatprep.mubr.f32.mxu0 0.0
    %5168 = vmatmul.mubr.f32.gmra.mrb[0].mxu0 %v5098
    %v5169 = vpop.f32.mrb[0].mxu0
    %v5170 = vadd.f32 0.0, %v5169
    %v5171 = vpop.f32.mrb[0].mxu0
    %5172 = vmatprep.mubr.f32.mxu0 0.0
    %5173 = vmatmul.mubr.f32.gmra.mrb[0].mxu0 %v5101
    %v5174 = vpop.f32.mrb[0].mxu0
    %v5175 = vadd.f32 0.0, %v5174
    %v5176 = vpop.f32.mrb[0].mxu0
    %5177 = vdwg.mxu0
    %5178 = vrot.lane.b32.xlu0 %v312, 104
    %v5179 = vpop.permute.xlu0 %5178
    %5180 = vrot.lane.b32.xlu0 %v313, 104
    %v5181 = vpop.permute.xlu0 %5180
    %5182 = vrot.lane.b32.xlu0 %v226, 72
    %v5183 = vpop.permute.xlu0 %5182
    %5184 = vrot.lane.b32.xlu0 %v231, 72
    %v5185 = vpop.permute.xlu0 %5184
    %v5186 = vsel %vm334, %v5179, 0
    %v5188 = vsel %vm334, %v5181, 0
    %v5190 = vsel %vm334, %v5183, 0
    %v5192 = vsel %vm334, %v5185, 0
    %5194 = vmatprep.subr.mxu0 0.0
    %5195 = vmatpush1.xpose.msra.mxu0 %v5190
    %5196 = vmatprep.subr.mxu0 0.0
    %5197 = vmatpush1.xpose.msra.mxu0 %v5192
    %5198 = vmatprep.subr.mxu0 0.0
    %5199 = vmatpush1.xpose.msra.mxu0 0.0
    %5200 = vmatprep.subr.mxu0 0.0
    %5201 = vmatpush1.xpose.msra.mxu0 0.0
    %5202 = vmatprep.subr.mxu0 0.0
    %5203 = vmatpush1.xpose.msra.mxu0 0.0
    %5204 = vmatprep.subr.mxu0 0.0
    %5205 = vmatpush1.xpose.msra.mxu0 0.0
    %5206 = vmatprep.subr.mxu0 0.0
    %5207 = vmatpush1.xpose.msra.mxu0 0.0
    %5208 = vmatprep.subr.mxu0 0.0
    %5209 = vmatpush1.xpose.msra.mxu0 0.0
    %5210 = vmatprep.subr.mxu0 0.0
    %5211 = vmatpush1.xpose.msra.mxu0 0.0
    %5212 = vmatprep.subr.mxu0 0.0
    %5213 = vmatpush1.xpose.msra.mxu0 0.0
    %5214 = vmatprep.subr.mxu0 0.0
    %5215 = vmatpush1.xpose.msra.mxu0 0.0
    %5216 = vmatprep.subr.mxu0 0.0
    %5217 = vmatpush1.xpose.msra.mxu0 0.0
    %5218 = vmatprep.subr.mxu0 0.0
    %5219 = vmatpush1.xpose.msra.mxu0 0.0
    %5220 = vmatprep.subr.mxu0 0.0
    %5221 = vmatpush1.xpose.msra.mxu0 0.0
    %5222 = vmatprep.subr.mxu0 0.0
    %5223 = vmatpush1.xpose.msra.mxu0 0.0
    %5224 = vmatprep.subr.mxu0 0.0
    %5225 = vmatpush1.xpose.msra.mxu0 0.0
    %5226 = vmatprep.subr.mxu0 0.0
    %5227 = vmatpush1.xpose.msra.mxu0 0.0
    %5228 = vmatprep.subr.mxu0 0.0
    %5229 = vmatpush1.xpose.msra.mxu0 0.0
    %5230 = vmatprep.subr.mxu0 0.0
    %5231 = vmatpush1.xpose.msra.mxu0 0.0
    %5232 = vmatprep.subr.mxu0 0.0
    %5233 = vmatpush1.xpose.msra.mxu0 0.0
    %5234 = vmatprep.subr.mxu0 0.0
    %5235 = vmatpush1.xpose.msra.mxu0 0.0
    %5236 = vmatprep.subr.mxu0 0.0
    %5237 = vmatpush1.xpose.msra.mxu0 0.0
    %5238 = vmatprep.subr.mxu0 0.0
    %5239 = vmatpush1.xpose.msra.mxu0 0.0
    %5240 = vmatprep.subr.mxu0 0.0
    %5241 = vmatpush1.xpose.msra.mxu0 0.0
    %5242 = vmatprep.subr.mxu0 0.0
    %5243 = vmatpush1.xpose.msra.mxu0 0.0
    %5244 = vmatprep.subr.mxu0 0.0
    %5245 = vmatpush1.xpose.msra.mxu0 0.0
    %5246 = vmatprep.subr.mxu0 0.0
    %5247 = vmatpush1.xpose.msra.mxu0 0.0
    %5248 = vmatprep.subr.mxu0 0.0
    %5249 = vmatpush1.xpose.msra.mxu0 0.0
    %5250 = vmatprep.subr.mxu0 0.0
    %5251 = vmatpush1.xpose.msra.mxu0 0.0
    %5252 = vmatprep.subr.mxu0 0.0
    %5253 = vmatpush1.xpose.msra.mxu0 0.0
    %5254 = vmatprep.subr.mxu0 0.0
    %5255 = vmatpush1.xpose.msra.mxu0 0.0
    %5256 = vmatprep.subr.mxu0 0.0
    %5257 = vmatpush1.xpose.msra.mxu0 0.0
    %5258 = vmatprep.mubr.f32.mxu0 0.0
    %5259 = vmatmul.mubr.f32.gmra.mrb[0].mxu0 %v5186
    %v5260 = vpop.f32.mrb[0].mxu0
    %v5261 = vadd.f32 0.0, %v5260
    %v5262 = vpop.f32.mrb[0].mxu0
    %5263 = vmatprep.mubr.f32.mxu0 0.0
    %5264 = vmatmul.mubr.f32.gmra.mrb[0].mxu0 %v5188
    %v5265 = vpop.f32.mrb[0].mxu0
    %v5266 = vadd.f32 0.0, %v5265
    %v5267 = vpop.f32.mrb[0].mxu0
    %5268 = vdwg.mxu0
    %5269 = vrot.lane.b32.xlu0 %v314, 104
    %v5270 = vpop.permute.xlu0 %5269
    %5271 = vrot.lane.b32.xlu0 %v315, 104
    %v5272 = vpop.permute.xlu0 %5271
    %5273 = vrot.lane.b32.xlu0 %v236, 72
    %v5274 = vpop.permute.xlu0 %5273
    %5275 = vrot.lane.b32.xlu0 %v241, 72
    %v5276 = vpop.permute.xlu0 %5275
    %v5277 = vsel %vm334, %v5270, 0
    %v5279 = vsel %vm334, %v5272, 0
    %v5281 = vsel %vm334, %v5274, 0
    %v5283 = vsel %vm334, %v5276, 0
    %5285 = vmatprep.subr.mxu0 0.0
    %5286 = vmatpush1.xpose.msra.mxu0 %v5281
    %5287 = vmatprep.subr.mxu0 0.0
    %5288 = vmatpush1.xpose.msra.mxu0 %v5283
    %5289 = vmatprep.subr.mxu0 0.0
    %5290 = vmatpush1.xpose.msra.mxu0 0.0
    %5291 = vmatprep.subr.mxu0 0.0
    %5292 = vmatpush1.xpose.msra.mxu0 0.0
    %5293 = vmatprep.subr.mxu0 0.0
    %5294 = vmatpush1.xpose.msra.mxu0 0.0
    %5295 = vmatprep.subr.mxu0 0.0
    %5296 = vmatpush1.xpose.msra.mxu0 0.0
    %5297 = vmatprep.subr.mxu0 0.0
    %5298 = vmatpush1.xpose.msra.mxu0 0.0
    %5299 = vmatprep.subr.mxu0 0.0
    %5300 = vmatpush1.xpose.msra.mxu0 0.0
    %5301 = vmatprep.subr.mxu0 0.0
    %5302 = vmatpush1.xpose.msra.mxu0 0.0
    %5303 = vmatprep.subr.mxu0 0.0
    %5304 = vmatpush1.xpose.msra.mxu0 0.0
    %5305 = vmatprep.subr.mxu0 0.0
    %5306 = vmatpush1.xpose.msra.mxu0 0.0
    %5307 = vmatprep.subr.mxu0 0.0
    %5308 = vmatpush1.xpose.msra.mxu0 0.0
    %5309 = vmatprep.subr.mxu0 0.0
    %5310 = vmatpush1.xpose.msra.mxu0 0.0
    %5311 = vmatprep.subr.mxu0 0.0
    %5312 = vmatpush1.xpose.msra.mxu0 0.0
    %5313 = vmatprep.subr.mxu0 0.0
    %5314 = vmatpush1.xpose.msra.mxu0 0.0
    %5315 = vmatprep.subr.mxu0 0.0
    %5316 = vmatpush1.xpose.msra.mxu0 0.0
    %5317 = vmatprep.subr.mxu0 0.0
    %5318 = vmatpush1.xpose.msra.mxu0 0.0
    %5319 = vmatprep.subr.mxu0 0.0
    %5320 = vmatpush1.xpose.msra.mxu0 0.0
    %5321 = vmatprep.subr.mxu0 0.0
    %5322 = vmatpush1.xpose.msra.mxu0 0.0
    %5323 = vmatprep.subr.mxu0 0.0
    %5324 = vmatpush1.xpose.msra.mxu0 0.0
    %5325 = vmatprep.subr.mxu0 0.0
    %5326 = vmatpush1.xpose.msra.mxu0 0.0
    %5327 = vmatprep.subr.mxu0 0.0
    %5328 = vmatpush1.xpose.msra.mxu0 0.0
    %5329 = vmatprep.subr.mxu0 0.0
    %5330 = vmatpush1.xpose.msra.mxu0 0.0
    %5331 = vmatprep.subr.mxu0 0.0
    %5332 = vmatpush1.xpose.msra.mxu0 0.0
    %5333 = vmatprep.subr.mxu0 0.0
    %5334 = vmatpush1.xpose.msra.mxu0 0.0
    %5335 = vmatprep.subr.mxu0 0.0
    %5336 = vmatpush1.xpose.msra.mxu0 0.0
    %5337 = vmatprep.subr.mxu0 0.0
    %5338 = vmatpush1.xpose.msra.mxu0 0.0
    %5339 = vmatprep.subr.mxu0 0.0
    %5340 = vmatpush1.xpose.msra.mxu0 0.0
    %5341 = vmatprep.subr.mxu0 0.0
    %5342 = vmatpush1.xpose.msra.mxu0 0.0
    %5343 = vmatprep.subr.mxu0 0.0
    %5344 = vmatpush1.xpose.msra.mxu0 0.0
    %5345 = vmatprep.subr.mxu0 0.0
    %5346 = vmatpush1.xpose.msra.mxu0 0.0
    %5347 = vmatprep.subr.mxu0 0.0
    %5348 = vmatpush1.xpose.msra.mxu0 0.0
    %5349 = vmatprep.mubr.f32.mxu0 0.0
    %5350 = vmatmul.mubr.f32.gmra.mrb[0].mxu0 %v5277
    %v5351 = vpop.f32.mrb[0].mxu0
    %v5352 = vadd.f32 0.0, %v5351
    %v5353 = vpop.f32.mrb[0].mxu0
    %5354 = vmatprep.mubr.f32.mxu0 0.0
    %5355 = vmatmul.mubr.f32.gmra.mrb[0].mxu0 %v5279
    %v5356 = vpop.f32.mrb[0].mxu0
    %v5357 = vadd.f32 0.0, %v5356
    %v5358 = vpop.f32.mrb[0].mxu0
    %5359 = vdwg.mxu0
    %5360 = vrot.lane.b32.xlu0 %v316, 104
    %v5361 = vpop.permute.xlu0 %5360
    %5362 = vrot.lane.b32.xlu0 %v317, 104
    %v5363 = vpop.permute.xlu0 %5362
    %5364 = vrot.lane.b32.xlu0 %v246, 72
    %v5365 = vpop.permute.xlu0 %5364
    %5366 = vrot.lane.b32.xlu0 %v251, 72
    %v5367 = vpop.permute.xlu0 %5366
    %v5368 = vsel %vm334, %v5361, 0
    %v5370 = vsel %vm334, %v5363, 0
    %v5372 = vsel %vm334, %v5365, 0
    %v5374 = vsel %vm334, %v5367, 0
    %5376 = vmatprep.subr.mxu0 0.0
    %5377 = vmatpush1.xpose.msra.mxu0 %v5372
    %5378 = vmatprep.subr.mxu0 0.0
    %5379 = vmatpush1.xpose.msra.mxu0 %v5374
    %5380 = vmatprep.subr.mxu0 0.0
    %5381 = vmatpush1.xpose.msra.mxu0 0.0
    %5382 = vmatprep.subr.mxu0 0.0
    %5383 = vmatpush1.xpose.msra.mxu0 0.0
    %5384 = vmatprep.subr.mxu0 0.0
    %5385 = vmatpush1.xpose.msra.mxu0 0.0
    %5386 = vmatprep.subr.mxu0 0.0
    %5387 = vmatpush1.xpose.msra.mxu0 0.0
    %5388 = vmatprep.subr.mxu0 0.0
    %5389 = vmatpush1.xpose.msra.mxu0 0.0
    %5390 = vmatprep.subr.mxu0 0.0
    %5391 = vmatpush1.xpose.msra.mxu0 0.0
    %5392 = vmatprep.subr.mxu0 0.0
    %5393 = vmatpush1.xpose.msra.mxu0 0.0
    %5394 = vmatprep.subr.mxu0 0.0
    %5395 = vmatpush1.xpose.msra.mxu0 0.0
    %5396 = vmatprep.subr.mxu0 0.0
    %5397 = vmatpush1.xpose.msra.mxu0 0.0
    %5398 = vmatprep.subr.mxu0 0.0
    %5399 = vmatpush1.xpose.msra.mxu0 0.0
    %5400 = vmatprep.subr.mxu0 0.0
    %5401 = vmatpush1.xpose.msra.mxu0 0.0
    %5402 = vmatprep.subr.mxu0 0.0
    %5403 = vmatpush1.xpose.msra.mxu0 0.0
    %5404 = vmatprep.subr.mxu0 0.0
    %5405 = vmatpush1.xpose.msra.mxu0 0.0
    %5406 = vmatprep.subr.mxu0 0.0
    %5407 = vmatpush1.xpose.msra.mxu0 0.0
    %5408 = vmatprep.subr.mxu0 0.0
    %5409 = vmatpush1.xpose.msra.mxu0 0.0
    %5410 = vmatprep.subr.mxu0 0.0
    %5411 = vmatpush1.xpose.msra.mxu0 0.0
    %5412 = vmatprep.subr.mxu0 0.0
    %5413 = vmatpush1.xpose.msra.mxu0 0.0
    %5414 = vmatprep.subr.mxu0 0.0
    %5415 = vmatpush1.xpose.msra.mxu0 0.0
    %5416 = vmatprep.subr.mxu0 0.0
    %5417 = vmatpush1.xpose.msra.mxu0 0.0
    %5418 = vmatprep.subr.mxu0 0.0
    %5419 = vmatpush1.xpose.msra.mxu0 0.0
    %5420 = vmatprep.subr.mxu0 0.0
    %5421 = vmatpush1.xpose.msra.mxu0 0.0
    %5422 = vmatprep.subr.mxu0 0.0
    %5423 = vmatpush1.xpose.msra.mxu0 0.0
    %5424 = vmatprep.subr.mxu0 0.0
    %5425 = vmatpush1.xpose.msra.mxu0 0.0
    %5426 = vmatprep.subr.mxu0 0.0
    %5427 = vmatpush1.xpose.msra.mxu0 0.0
    %5428 = vmatprep.subr.mxu0 0.0
    %5429 = vmatpush1.xpose.msra.mxu0 0.0
    %5430 = vmatprep.subr.mxu0 0.0
    %5431 = vmatpush1.xpose.msra.mxu0 0.0
    %5432 = vmatprep.subr.mxu0 0.0
    %5433 = vmatpush1.xpose.msra.mxu0 0.0
    %5434 = vmatprep.subr.mxu0 0.0
    %5435 = vmatpush1.xpose.msra.mxu0 0.0
    %5436 = vmatprep.subr.mxu0 0.0
    %5437 = vmatpush1.xpose.msra.mxu0 0.0
    %5438 = vmatprep.subr.mxu0 0.0
    %5439 = vmatpush1.xpose.msra.mxu0 0.0
    %5440 = vmatprep.mubr.f32.mxu0 0.0
    %5441 = vmatmul.mubr.f32.gmra.mrb[0].mxu0 %v5368
    %v5442 = vpop.f32.mrb[0].mxu0
    %v5443 = vadd.f32 0.0, %v5442
    %v5444 = vpop.f32.mrb[0].mxu0
    %5445 = vmatprep.mubr.f32.mxu0 0.0
    %5446 = vmatmul.mubr.f32.gmra.mrb[0].mxu0 %v5370
    %v5447 = vpop.f32.mrb[0].mxu0
    %v5448 = vadd.f32 0.0, %v5447
    %v5449 = vpop.f32.mrb[0].mxu0
    %5450 = vdwg.mxu0
    %5451 = vrot.lane.b32.xlu0 %v318, 104
    %v5452 = vpop.permute.xlu0 %5451
    %5453 = vrot.lane.b32.xlu0 %v319, 104
    %v5454 = vpop.permute.xlu0 %5453
    %5455 = vrot.lane.b32.xlu0 %v256, 72
    %v5456 = vpop.permute.xlu0 %5455
    %5457 = vrot.lane.b32.xlu0 %v261, 72
    %v5458 = vpop.permute.xlu0 %5457
    %v5459 = vsel %vm334, %v5452, 0
    %v5461 = vsel %vm334, %v5454, 0
    %v5463 = vsel %vm334, %v5456, 0
    %v5465 = vsel %vm334, %v5458, 0
    %5467 = vmatprep.subr.mxu0 0.0
    %5468 = vmatpush1.xpose.msra.mxu0 %v5463
    %5469 = vmatprep.subr.mxu0 0.0
    %5470 = vmatpush1.xpose.msra.mxu0 %v5465
    %5471 = vmatprep.subr.mxu0 0.0
    %5472 = vmatpush1.xpose.msra.mxu0 0.0
    %5473 = vmatprep.subr.mxu0 0.0
    %5474 = vmatpush1.xpose.msra.mxu0 0.0
    %5475 = vmatprep.subr.mxu0 0.0
    %5476 = vmatpush1.xpose.msra.mxu0 0.0
    %5477 = vmatprep.subr.mxu0 0.0
    %5478 = vmatpush1.xpose.msra.mxu0 0.0
    %5479 = vmatprep.subr.mxu0 0.0
    %5480 = vmatpush1.xpose.msra.mxu0 0.0
    %5481 = vmatprep.subr.mxu0 0.0
    %5482 = vmatpush1.xpose.msra.mxu0 0.0
    %5483 = vmatprep.subr.mxu0 0.0
    %5484 = vmatpush1.xpose.msra.mxu0 0.0
    %5485 = vmatprep.subr.mxu0 0.0
    %5486 = vmatpush1.xpose.msra.mxu0 0.0
    %5487 = vmatprep.subr.mxu0 0.0
    %5488 = vmatpush1.xpose.msra.mxu0 0.0
    %5489 = vmatprep.subr.mxu0 0.0
    %5490 = vmatpush1.xpose.msra.mxu0 0.0
    %5491 = vmatprep.subr.mxu0 0.0
    %5492 = vmatpush1.xpose.msra.mxu0 0.0
    %5493 = vmatprep.subr.mxu0 0.0
    %5494 = vmatpush1.xpose.msra.mxu0 0.0
    %5495 = vmatprep.subr.mxu0 0.0
    %5496 = vmatpush1.xpose.msra.mxu0 0.0
    %5497 = vmatprep.subr.mxu0 0.0
    %5498 = vmatpush1.xpose.msra.mxu0 0.0
    %5499 = vmatprep.subr.mxu0 0.0
    %5500 = vmatpush1.xpose.msra.mxu0 0.0
    %5501 = vmatprep.subr.mxu0 0.0
    %5502 = vmatpush1.xpose.msra.mxu0 0.0
    %5503 = vmatprep.subr.mxu0 0.0
    %5504 = vmatpush1.xpose.msra.mxu0 0.0
    %5505 = vmatprep.subr.mxu0 0.0
    %5506 = vmatpush1.xpose.msra.mxu0 0.0
    %5507 = vmatprep.subr.mxu0 0.0
    %5508 = vmatpush1.xpose.msra.mxu0 0.0
    %5509 = vmatprep.subr.mxu0 0.0
    %5510 = vmatpush1.xpose.msra.mxu0 0.0
    %5511 = vmatprep.subr.mxu0 0.0
    %5512 = vmatpush1.xpose.msra.mxu0 0.0
    %5513 = vmatprep.subr.mxu0 0.0
    %5514 = vmatpush1.xpose.msra.mxu0 0.0
    %5515 = vmatprep.subr.mxu0 0.0
    %5516 = vmatpush1.xpose.msra.mxu0 0.0
    %5517 = vmatprep.subr.mxu0 0.0
    %5518 = vmatpush1.xpose.msra.mxu0 0.0
    %5519 = vmatprep.subr.mxu0 0.0
    %5520 = vmatpush1.xpose.msra.mxu0 0.0
    %5521 = vmatprep.subr.mxu0 0.0
    %5522 = vmatpush1.xpose.msra.mxu0 0.0
    %5523 = vmatprep.subr.mxu0 0.0
    %5524 = vmatpush1.xpose.msra.mxu0 0.0
    %5525 = vmatprep.subr.mxu0 0.0
    %5526 = vmatpush1.xpose.msra.mxu0 0.0
    %5527 = vmatprep.subr.mxu0 0.0
    %5528 = vmatpush1.xpose.msra.mxu0 0.0
    %5529 = vmatprep.subr.mxu0 0.0
    %5530 = vmatpush1.xpose.msra.mxu0 0.0
    %5531 = vmatprep.mubr.f32.mxu0 0.0
    %5532 = vmatmul.mubr.f32.gmra.mrb[0].mxu0 %v5459
    %v5533 = vpop.f32.mrb[0].mxu0
    %v5534 = vadd.f32 0.0, %v5533
    %v5535 = vpop.f32.mrb[0].mxu0
    %5536 = vmatprep.mubr.f32.mxu0 0.0
    %5537 = vmatmul.mubr.f32.gmra.mrb[0].mxu0 %v5461
    %v5538 = vpop.f32.mrb[0].mxu0
    %v5539 = vadd.f32 0.0, %v5538
    %v5540 = vpop.f32.mrb[0].mxu0
    %5541 = vdwg.mxu0
    %5542 = vrot.lane.b32.xlu0 %v320, 104
    %v5543 = vpop.permute.xlu0 %5542
    %5544 = vrot.lane.b32.xlu0 %v321, 104
    %v5545 = vpop.permute.xlu0 %5544
    %5546 = vrot.lane.b32.xlu0 %v266, 72
    %v5547 = vpop.permute.xlu0 %5546
    %5548 = vrot.lane.b32.xlu0 %v271, 72
    %v5549 = vpop.permute.xlu0 %5548
    %v5550 = vsel %vm334, %v5543, 0
    %v5552 = vsel %vm334, %v5545, 0
    %v5554 = vsel %vm334, %v5547, 0
    %v5556 = vsel %vm334, %v5549, 0
    %5558 = vmatprep.subr.mxu0 0.0
    %5559 = vmatpush1.xpose.msra.mxu0 %v5554
    %5560 = vmatprep.subr.mxu0 0.0
    %5561 = vmatpush1.xpose.msra.mxu0 %v5556
    %5562 = vmatprep.subr.mxu0 0.0
    %5563 = vmatpush1.xpose.msra.mxu0 0.0
    %5564 = vmatprep.subr.mxu0 0.0
    %5565 = vmatpush1.xpose.msra.mxu0 0.0
    %5566 = vmatprep.subr.mxu0 0.0
    %5567 = vmatpush1.xpose.msra.mxu0 0.0
    %5568 = vmatprep.subr.mxu0 0.0
    %5569 = vmatpush1.xpose.msra.mxu0 0.0
    %5570 = vmatprep.subr.mxu0 0.0
    %5571 = vmatpush1.xpose.msra.mxu0 0.0
    %5572 = vmatprep.subr.mxu0 0.0
    %5573 = vmatpush1.xpose.msra.mxu0 0.0
    %5574 = vmatprep.subr.mxu0 0.0
    %5575 = vmatpush1.xpose.msra.mxu0 0.0
    %5576 = vmatprep.subr.mxu0 0.0
    %5577 = vmatpush1.xpose.msra.mxu0 0.0
    %5578 = vmatprep.subr.mxu0 0.0
    %5579 = vmatpush1.xpose.msra.mxu0 0.0
    %5580 = vmatprep.subr.mxu0 0.0
    %5581 = vmatpush1.xpose.msra.mxu0 0.0
    %5582 = vmatprep.subr.mxu0 0.0
    %5583 = vmatpush1.xpose.msra.mxu0 0.0
    %5584 = vmatprep.subr.mxu0 0.0
    %5585 = vmatpush1.xpose.msra.mxu0 0.0
    %5586 = vmatprep.subr.mxu0 0.0
    %5587 = vmatpush1.xpose.msra.mxu0 0.0
    %5588 = vmatprep.subr.mxu0 0.0
    %5589 = vmatpush1.xpose.msra.mxu0 0.0
    %5590 = vmatprep.subr.mxu0 0.0
    %5591 = vmatpush1.xpose.msra.mxu0 0.0
    %5592 = vmatprep.subr.mxu0 0.0
    %5593 = vmatpush1.xpose.msra.mxu0 0.0
    %5594 = vmatprep.subr.mxu0 0.0
    %5595 = vmatpush1.xpose.msra.mxu0 0.0
    %5596 = vmatprep.subr.mxu0 0.0
    %5597 = vmatpush1.xpose.msra.mxu0 0.0
    %5598 = vmatprep.subr.mxu0 0.0
    %5599 = vmatpush1.xpose.msra.mxu0 0.0
    %5600 = vmatprep.subr.mxu0 0.0
    %5601 = vmatpush1.xpose.msra.mxu0 0.0
    %5602 = vmatprep.subr.mxu0 0.0
    %5603 = vmatpush1.xpose.msra.mxu0 0.0
    %5604 = vmatprep.subr.mxu0 0.0
    %5605 = vmatpush1.xpose.msra.mxu0 0.0
    %5606 = vmatprep.subr.mxu0 0.0
    %5607 = vmatpush1.xpose.msra.mxu0 0.0
    %5608 = vmatprep.subr.mxu0 0.0
    %5609 = vmatpush1.xpose.msra.mxu0 0.0
    %5610 = vmatprep.subr.mxu0 0.0
    %5611 = vmatpush1.xpose.msra.mxu0 0.0
    %5612 = vmatprep.subr.mxu0 0.0
    %5613 = vmatpush1.xpose.msra.mxu0 0.0
    %5614 = vmatprep.subr.mxu0 0.0
    %5615 = vmatpush1.xpose.msra.mxu0 0.0
    %5616 = vmatprep.subr.mxu0 0.0
    %5617 = vmatpush1.xpose.msra.mxu0 0.0
    %5618 = vmatprep.subr.mxu0 0.0
    %5619 = vmatpush1.xpose.msra.mxu0 0.0
    %5620 = vmatprep.subr.mxu0 0.0
    %5621 = vmatpush1.xpose.msra.mxu0 0.0
    %5622 = vmatprep.mubr.f32.mxu0 0.0
    %5623 = vmatmul.mubr.f32.gmra.mrb[0].mxu0 %v5550
    %v5624 = vpop.f32.mrb[0].mxu0
    %v5625 = vadd.f32 0.0, %v5624
    %v5626 = vpop.f32.mrb[0].mxu0
    %5627 = vmatprep.mubr.f32.mxu0 0.0
    %5628 = vmatmul.mubr.f32.gmra.mrb[0].mxu0 %v5552
    %v5629 = vpop.f32.mrb[0].mxu0
    %v5630 = vadd.f32 0.0, %v5629
    %v5631 = vpop.f32.mrb[0].mxu0
    %5632 = vdwg.mxu0
    %5633 = vrot.lane.b32.xlu0 %v322, 104
    %v5634 = vpop.permute.xlu0 %5633
    %5635 = vrot.lane.b32.xlu0 %v323, 104
    %v5636 = vpop.permute.xlu0 %5635
    %5637 = vrot.lane.b32.xlu0 %v276, 72
    %v5638 = vpop.permute.xlu0 %5637
    %5639 = vrot.lane.b32.xlu0 %v281, 72
    %v5640 = vpop.permute.xlu0 %5639
    %v5641 = vsel %vm334, %v5634, 0
    %v5643 = vsel %vm334, %v5636, 0
    %v5645 = vsel %vm334, %v5638, 0
    %v5647 = vsel %vm334, %v5640, 0
    %5649 = vmatprep.subr.mxu0 0.0
    %5650 = vmatpush1.xpose.msra.mxu0 %v5645
    %5651 = vmatprep.subr.mxu0 0.0
    %5652 = vmatpush1.xpose.msra.mxu0 %v5647
    %5653 = vmatprep.subr.mxu0 0.0
    %5654 = vmatpush1.xpose.msra.mxu0 0.0
    %5655 = vmatprep.subr.mxu0 0.0
    %5656 = vmatpush1.xpose.msra.mxu0 0.0
    %5657 = vmatprep.subr.mxu0 0.0
    %5658 = vmatpush1.xpose.msra.mxu0 0.0
    %5659 = vmatprep.subr.mxu0 0.0
    %5660 = vmatpush1.xpose.msra.mxu0 0.0
    %5661 = vmatprep.subr.mxu0 0.0
    %5662 = vmatpush1.xpose.msra.mxu0 0.0
    %5663 = vmatprep.subr.mxu0 0.0
    %5664 = vmatpush1.xpose.msra.mxu0 0.0
    %5665 = vmatprep.subr.mxu0 0.0
    %5666 = vmatpush1.xpose.msra.mxu0 0.0
    %5667 = vmatprep.subr.mxu0 0.0
    %5668 = vmatpush1.xpose.msra.mxu0 0.0
    %5669 = vmatprep.subr.mxu0 0.0
    %5670 = vmatpush1.xpose.msra.mxu0 0.0
    %5671 = vmatprep.subr.mxu0 0.0
    %5672 = vmatpush1.xpose.msra.mxu0 0.0
    %5673 = vmatprep.subr.mxu0 0.0
    %5674 = vmatpush1.xpose.msra.mxu0 0.0
    %5675 = vmatprep.subr.mxu0 0.0
    %5676 = vmatpush1.xpose.msra.mxu0 0.0
    %5677 = vmatprep.subr.mxu0 0.0
    %5678 = vmatpush1.xpose.msra.mxu0 0.0
    %5679 = vmatprep.subr.mxu0 0.0
    %5680 = vmatpush1.xpose.msra.mxu0 0.0
    %5681 = vmatprep.subr.mxu0 0.0
    %5682 = vmatpush1.xpose.msra.mxu0 0.0
    %5683 = vmatprep.subr.mxu0 0.0
    %5684 = vmatpush1.xpose.msra.mxu0 0.0
    %5685 = vmatprep.subr.mxu0 0.0
    %5686 = vmatpush1.xpose.msra.mxu0 0.0
    %5687 = vmatprep.subr.mxu0 0.0
    %5688 = vmatpush1.xpose.msra.mxu0 0.0
    %5689 = vmatprep.subr.mxu0 0.0
    %5690 = vmatpush1.xpose.msra.mxu0 0.0
    %5691 = vmatprep.subr.mxu0 0.0
    %5692 = vmatpush1.xpose.msra.mxu0 0.0
    %5693 = vmatprep.subr.mxu0 0.0
    %5694 = vmatpush1.xpose.msra.mxu0 0.0
    %5695 = vmatprep.subr.mxu0 0.0
    %5696 = vmatpush1.xpose.msra.mxu0 0.0
    %5697 = vmatprep.subr.mxu0 0.0
    %5698 = vmatpush1.xpose.msra.mxu0 0.0
    %5699 = vmatprep.subr.mxu0 0.0
    %5700 = vmatpush1.xpose.msra.mxu0 0.0
    %5701 = vmatprep.subr.mxu0 0.0
    %5702 = vmatpush1.xpose.msra.mxu0 0.0
    %5703 = vmatprep.subr.mxu0 0.0
    %5704 = vmatpush1.xpose.msra.mxu0 0.0
    %5705 = vmatprep.subr.mxu0 0.0
    %5706 = vmatpush1.xpose.msra.mxu0 0.0
    %5707 = vmatprep.subr.mxu0 0.0
    %5708 = vmatpush1.xpose.msra.mxu0 0.0
    %5709 = vmatprep.subr.mxu0 0.0
    %5710 = vmatpush1.xpose.msra.mxu0 0.0
    %5711 = vmatprep.subr.mxu0 0.0
    %5712 = vmatpush1.xpose.msra.mxu0 0.0
    %5713 = vmatprep.mubr.f32.mxu0 0.0
    %5714 = vmatmul.mubr.f32.gmra.mrb[0].mxu0 %v5641
    %v5715 = vpop.f32.mrb[0].mxu0
    %v5716 = vadd.f32 0.0, %v5715
    %v5717 = vpop.f32.mrb[0].mxu0
    %5718 = vmatprep.mubr.f32.mxu0 0.0
    %5719 = vmatmul.mubr.f32.gmra.mrb[0].mxu0 %v5643
    %v5720 = vpop.f32.mrb[0].mxu0
    %v5721 = vadd.f32 0.0, %v5720
    %v5722 = vpop.f32.mrb[0].mxu0
    %5723 = vdwg.mxu0
    %5724 = vrot.lane.b32.xlu0 %v324, 104
    %v5725 = vpop.permute.xlu0 %5724
    %5726 = vrot.lane.b32.xlu0 %v325, 104
    %v5727 = vpop.permute.xlu0 %5726
    %5728 = vrot.lane.b32.xlu0 %v286, 72
    %v5729 = vpop.permute.xlu0 %5728
    %5730 = vrot.lane.b32.xlu0 %v291, 72
    %v5731 = vpop.permute.xlu0 %5730
    %v5732 = vsel %vm334, %v5725, 0
    %v5734 = vsel %vm334, %v5727, 0
    %v5736 = vsel %vm334, %v5729, 0
    %v5738 = vsel %vm334, %v5731, 0
    %5740 = vmatprep.subr.mxu0 0.0
    %5741 = vmatpush1.xpose.msra.mxu0 %v5736
    %5742 = vmatprep.subr.mxu0 0.0
    %5743 = vmatpush1.xpose.msra.mxu0 %v5738
    %5744 = vmatprep.subr.mxu0 0.0
    %5745 = vmatpush1.xpose.msra.mxu0 0.0
    %5746 = vmatprep.subr.mxu0 0.0
    %5747 = vmatpush1.xpose.msra.mxu0 0.0
    %5748 = vmatprep.subr.mxu0 0.0
    %5749 = vmatpush1.xpose.msra.mxu0 0.0
    %5750 = vmatprep.subr.mxu0 0.0
    %5751 = vmatpush1.xpose.msra.mxu0 0.0
    %5752 = vmatprep.subr.mxu0 0.0
    %5753 = vmatpush1.xpose.msra.mxu0 0.0
    %5754 = vmatprep.subr.mxu0 0.0
    %5755 = vmatpush1.xpose.msra.mxu0 0.0
    %5756 = vmatprep.subr.mxu0 0.0
    %5757 = vmatpush1.xpose.msra.mxu0 0.0
    %5758 = vmatprep.subr.mxu0 0.0
    %5759 = vmatpush1.xpose.msra.mxu0 0.0
    %5760 = vmatprep.subr.mxu0 0.0
    %5761 = vmatpush1.xpose.msra.mxu0 0.0
    %5762 = vmatprep.subr.mxu0 0.0
    %5763 = vmatpush1.xpose.msra.mxu0 0.0
    %5764 = vmatprep.subr.mxu0 0.0
    %5765 = vmatpush1.xpose.msra.mxu0 0.0
    %5766 = vmatprep.subr.mxu0 0.0
    %5767 = vmatpush1.xpose.msra.mxu0 0.0
    %5768 = vmatprep.subr.mxu0 0.0
    %5769 = vmatpush1.xpose.msra.mxu0 0.0
    %5770 = vmatprep.subr.mxu0 0.0
    %5771 = vmatpush1.xpose.msra.mxu0 0.0
    %5772 = vmatprep.subr.mxu0 0.0
    %5773 = vmatpush1.xpose.msra.mxu0 0.0
    %5774 = vmatprep.subr.mxu0 0.0
    %5775 = vmatpush1.xpose.msra.mxu0 0.0
    %5776 = vmatprep.subr.mxu0 0.0
    %5777 = vmatpush1.xpose.msra.mxu0 0.0
    %5778 = vmatprep.subr.mxu0 0.0
    %5779 = vmatpush1.xpose.msra.mxu0 0.0
    %5780 = vmatprep.subr.mxu0 0.0
    %5781 = vmatpush1.xpose.msra.mxu0 0.0
    %5782 = vmatprep.subr.mxu0 0.0
    %5783 = vmatpush1.xpose.msra.mxu0 0.0
    %5784 = vmatprep.subr.mxu0 0.0
    %5785 = vmatpush1.xpose.msra.mxu0 0.0
    %5786 = vmatprep.subr.mxu0 0.0
    %5787 = vmatpush1.xpose.msra.mxu0 0.0
    %5788 = vmatprep.subr.mxu0 0.0
    %5789 = vmatpush1.xpose.msra.mxu0 0.0
    %5790 = vmatprep.subr.mxu0 0.0
    %5791 = vmatpush1.xpose.msra.mxu0 0.0
    %5792 = vmatprep.subr.mxu0 0.0
    %5793 = vmatpush1.xpose.msra.mxu0 0.0
    %5794 = vmatprep.subr.mxu0 0.0
    %5795 = vmatpush1.xpose.msra.mxu0 0.0
    %5796 = vmatprep.subr.mxu0 0.0
    %5797 = vmatpush1.xpose.msra.mxu0 0.0
    %5798 = vmatprep.subr.mxu0 0.0
    %5799 = vmatpush1.xpose.msra.mxu0 0.0
    %5800 = vmatprep.subr.mxu0 0.0
    %5801 = vmatpush1.xpose.msra.mxu0 0.0
    %5802 = vmatprep.subr.mxu0 0.0
    %5803 = vmatpush1.xpose.msra.mxu0 0.0
    %5804 = vmatprep.mubr.f32.mxu0 0.0
    %5805 = vmatmul.mubr.f32.gmra.mrb[0].mxu0 %v5732
    %v5806 = vpop.f32.mrb[0].mxu0
    %v5807 = vadd.f32 0.0, %v5806
    %v5808 = vpop.f32.mrb[0].mxu0
    %5809 = vmatprep.mubr.f32.mxu0 0.0
    %5810 = vmatmul.mubr.f32.gmra.mrb[0].mxu0 %v5734
    %v5811 = vpop.f32.mrb[0].mxu0
    %v5812 = vadd.f32 0.0, %v5811
    %v5813 = vpop.f32.mrb[0].mxu0
    %5814 = vdwg.mxu0
    %5815 = vrot.lane.b32.xlu0 %v326, 104
    %v5816 = vpop.permute.xlu0 %5815
    %5817 = vrot.lane.b32.xlu0 %v327, 104
    %v5818 = vpop.permute.xlu0 %5817
    %5819 = vrot.lane.b32.xlu0 %v296, 72
    %v5820 = vpop.permute.xlu0 %5819
    %5821 = vrot.lane.b32.xlu0 %v301, 72
    %v5822 = vpop.permute.xlu0 %5821
    %v5823 = vsel %vm334, %v5816, 0
    %v5825 = vsel %vm334, %v5818, 0
    %v5827 = vsel %vm334, %v5820, 0
    %v5829 = vsel %vm334, %v5822, 0
    %5831 = vmatprep.subr.mxu0 0.0
    %5832 = vmatpush1.xpose.msra.mxu0 %v5827
    %5833 = vmatprep.subr.mxu0 0.0
    %5834 = vmatpush1.xpose.msra.mxu0 %v5829
    %5835 = vmatprep.subr.mxu0 0.0
    %5836 = vmatpush1.xpose.msra.mxu0 0.0
    %5837 = vmatprep.subr.mxu0 0.0
    %5838 = vmatpush1.xpose.msra.mxu0 0.0
    %5839 = vmatprep.subr.mxu0 0.0
    %5840 = vmatpush1.xpose.msra.mxu0 0.0
    %5841 = vmatprep.subr.mxu0 0.0
    %5842 = vmatpush1.xpose.msra.mxu0 0.0
    %5843 = vmatprep.subr.mxu0 0.0
    %5844 = vmatpush1.xpose.msra.mxu0 0.0
    %5845 = vmatprep.subr.mxu0 0.0
    %5846 = vmatpush1.xpose.msra.mxu0 0.0
    %5847 = vmatprep.subr.mxu0 0.0
    %5848 = vmatpush1.xpose.msra.mxu0 0.0
    %5849 = vmatprep.subr.mxu0 0.0
    %5850 = vmatpush1.xpose.msra.mxu0 0.0
    %5851 = vmatprep.subr.mxu0 0.0
    %5852 = vmatpush1.xpose.msra.mxu0 0.0
    %5853 = vmatprep.subr.mxu0 0.0
    %5854 = vmatpush1.xpose.msra.mxu0 0.0
    %5855 = vmatprep.subr.mxu0 0.0
    %5856 = vmatpush1.xpose.msra.mxu0 0.0
    %5857 = vmatprep.subr.mxu0 0.0
    %5858 = vmatpush1.xpose.msra.mxu0 0.0
    %5859 = vmatprep.subr.mxu0 0.0
    %5860 = vmatpush1.xpose.msra.mxu0 0.0
    %5861 = vmatprep.subr.mxu0 0.0
    %5862 = vmatpush1.xpose.msra.mxu0 0.0
    %5863 = vmatprep.subr.mxu0 0.0
    %5864 = vmatpush1.xpose.msra.mxu0 0.0
    %5865 = vmatprep.subr.mxu0 0.0
    %5866 = vmatpush1.xpose.msra.mxu0 0.0
    %5867 = vmatprep.subr.mxu0 0.0
    %5868 = vmatpush1.xpose.msra.mxu0 0.0
    %5869 = vmatprep.subr.mxu0 0.0
    %5870 = vmatpush1.xpose.msra.mxu0 0.0
    %5871 = vmatprep.subr.mxu0 0.0
    %5872 = vmatpush1.xpose.msra.mxu0 0.0
    %5873 = vmatprep.subr.mxu0 0.0
    %5874 = vmatpush1.xpose.msra.mxu0 0.0
    %5875 = vmatprep.subr.mxu0 0.0
    %5876 = vmatpush1.xpose.msra.mxu0 0.0
    %5877 = vmatprep.subr.mxu0 0.0
    %5878 = vmatpush1.xpose.msra.mxu0 0.0
    %5879 = vmatprep.subr.mxu0 0.0
    %5880 = vmatpush1.xpose.msra.mxu0 0.0
    %5881 = vmatprep.subr.mxu0 0.0
    %5882 = vmatpush1.xpose.msra.mxu0 0.0
    %5883 = vmatprep.subr.mxu0 0.0
    %5884 = vmatpush1.xpose.msra.mxu0 0.0
    %5885 = vmatprep.subr.mxu0 0.0
    %5886 = vmatpush1.xpose.msra.mxu0 0.0
    %5887 = vmatprep.subr.mxu0 0.0
    %5888 = vmatpush1.xpose.msra.mxu0 0.0
    %5889 = vmatprep.subr.mxu0 0.0
    %5890 = vmatpush1.xpose.msra.mxu0 0.0
    %5891 = vmatprep.subr.mxu0 0.0
    %5892 = vmatpush1.xpose.msra.mxu0 0.0
    %5893 = vmatprep.subr.mxu0 0.0
    %5894 = vmatpush1.xpose.msra.mxu0 0.0
    %5895 = vmatprep.mubr.f32.mxu0 0.0
    %5896 = vmatmul.mubr.f32.gmra.mrb[0].mxu0 %v5823
    %v5897 = vpop.f32.mrb[0].mxu0
    %v5898 = vadd.f32 0.0, %v5897
    %v5899 = vpop.f32.mrb[0].mxu0
    %5900 = vmatprep.mubr.f32.mxu0 0.0
    %5901 = vmatmul.mubr.f32.gmra.mrb[0].mxu0 %v5825
    %v5902 = vpop.f32.mrb[0].mxu0
    %v5903 = vadd.f32 0.0, %v5902
    %v5904 = vpop.f32.mrb[0].mxu0
    %5905 = vdwg.mxu0
    %v5906 = vadd.f32 %v5261, %v310
    %v5907 = vadd.f32 %v5266, %v311
    %v5908 = vadd.f32 %v5352, %v310
    %v5909 = vadd.f32 %v5357, %v311
    %v5910 = vadd.f32 %v5443, %v310
    %v5911 = vadd.f32 %v5448, %v311
    %v5912 = vadd.f32 %v5534, %v310
    %v5913 = vadd.f32 %v5539, %v311
    %v5914 = vadd.f32 %v5625, %v310
    %v5915 = vadd.f32 %v5630, %v311
    %v5916 = vadd.f32 %v5716, %v310
    %v5917 = vadd.f32 %v5721, %v311
    %v5918 = vadd.f32 %v5807, %v310
    %v5919 = vadd.f32 %v5812, %v311
    %v5920 = vadd.f32 %v5898, %v310
    %v5921 = vadd.f32 %v5903, %v311
    %v5922 = vsel %vm1073, %v5906, -inf
    %5923 = vmax.xlane.f32.xlu0 %v5922
    %v5924 = vpop.xlane.xlu0 %5923
    %v5925 = vsel %vm1073, %v5907, -inf
    %5926 = vmax.xlane.f32.xlu0 %v5925
    %v5927 = vpop.xlane.xlu0 %5926
    %v5928 = vsel %vm1073, %v5908, -inf
    %5929 = vmax.xlane.f32.xlu0 %v5928
    %v5930 = vpop.xlane.xlu0 %5929
    %v5931 = vsel %vm1073, %v5909, -inf
    %5932 = vmax.xlane.f32.xlu0 %v5931
    %v5933 = vpop.xlane.xlu0 %5932
    %v5934 = vsel %vm1073, %v5910, -inf
    %5935 = vmax.xlane.f32.xlu0 %v5934
    %v5936 = vpop.xlane.xlu0 %5935
    %v5937 = vsel %vm1073, %v5911, -inf
    %5938 = vmax.xlane.f32.xlu0 %v5937
    %v5939 = vpop.xlane.xlu0 %5938
    %v5940 = vsel %vm1073, %v5912, -inf
    %5941 = vmax.xlane.f32.xlu0 %v5940
    %v5942 = vpop.xlane.xlu0 %5941
    %v5943 = vsel %vm1073, %v5913, -inf
    %5944 = vmax.xlane.f32.xlu0 %v5943
    %v5945 = vpop.xlane.xlu0 %5944
    %v5946 = vsel %vm1073, %v5914, -inf
    %5947 = vmax.xlane.f32.xlu0 %v5946
    %v5948 = vpop.xlane.xlu0 %5947
    %v5949 = vsel %vm1073, %v5915, -inf
    %5950 = vmax.xlane.f32.xlu0 %v5949
    %v5951 = vpop.xlane.xlu0 %5950
    %v5952 = vsel %vm1073, %v5916, -inf
    %5953 = vmax.xlane.f32.xlu0 %v5952
    %v5954 = vpop.xlane.xlu0 %5953
    %v5955 = vsel %vm1073, %v5917, -inf
    %5956 = vmax.xlane.f32.xlu0 %v5955
    %v5957 = vpop.xlane.xlu0 %5956
    %v5958 = vsel %vm1073, %v5918, -inf
    %5959 = vmax.xlane.f32.xlu0 %v5958
    %v5960 = vpop.xlane.xlu0 %5959
    %v5961 = vsel %vm1073, %v5919, -inf
    %5962 = vmax.xlane.f32.xlu0 %v5961
    %v5963 = vpop.xlane.xlu0 %5962
    %v5964 = vsel %vm1073, %v5920, -inf
    %5965 = vmax.xlane.f32.xlu0 %v5964
    %v5966 = vpop.xlane.xlu0 %5965
    %v5967 = vsel %vm1073, %v5921, -inf
    %5968 = vmax.xlane.f32.xlu0 %v5967
    %v5969 = vpop.xlane.xlu0 %5968
    %v5970 = vsub.f32 %v5906, %v5924
    %v5971 = vsub.f32 %v5907, %v5927
    %v5972 = vsub.f32 %v5908, %v5930
    %v5973 = vsub.f32 %v5909, %v5933
    %v5974 = vsub.f32 %v5910, %v5936
    %v5975 = vsub.f32 %v5911, %v5939
    %v5976 = vsub.f32 %v5912, %v5942
    %v5977 = vsub.f32 %v5913, %v5945
    %v5978 = vsub.f32 %v5914, %v5948
    %v5979 = vsub.f32 %v5915, %v5951
    %v5980 = vsub.f32 %v5916, %v5954
    %v5981 = vsub.f32 %v5917, %v5957
    %v5982 = vsub.f32 %v5918, %v5960
    %v5983 = vsub.f32 %v5919, %v5963
    %v5984 = vsub.f32 %v5920, %v5966
    %v5985 = vsub.f32 %v5921, %v5969
    %v5986 = vmul.f32 %v5970, 1.442695
    %v5987 = vpow.pop %v5986
    %v5988 = vmul.f32 %v5971, 1.442695
    %v5989 = vpow.pop %v5988
    %v5990 = vmul.f32 %v5972, 1.442695
    %v5991 = vpow.pop %v5990
    %v5992 = vmul.f32 %v5973, 1.442695
    %v5993 = vpow.pop %v5992
    %v5994 = vmul.f32 %v5974, 1.442695
    %v5995 = vpow.pop %v5994
    %v5996 = vmul.f32 %v5975, 1.442695
    %v5997 = vpow.pop %v5996
    %v5998 = vmul.f32 %v5976, 1.442695
    %v5999 = vpow.pop %v5998
    %v6000 = vmul.f32 %v5977, 1.442695
    %v6001 = vpow.pop %v6000
    %v6002 = vmul.f32 %v5978, 1.442695
    %v6003 = vpow.pop %v6002
    %v6004 = vmul.f32 %v5979, 1.442695
    %v6005 = vpow.pop %v6004
    %v6006 = vmul.f32 %v5980, 1.442695
    %v6007 = vpow.pop %v6006
    %v6008 = vmul.f32 %v5981, 1.442695
    %v6009 = vpow.pop %v6008
    %v6010 = vmul.f32 %v5982, 1.442695
    %v6011 = vpow.pop %v6010
    %v6012 = vmul.f32 %v5983, 1.442695
    %v6013 = vpow.pop %v6012
    %v6014 = vmul.f32 %v5984, 1.442695
    %v6015 = vpow.pop %v6014
    %v6016 = vmul.f32 %v5985, 1.442695
    %v6017 = vpow.pop %v6016
    %v6018 = vsel %vm1073, %v5987, 0.0
    %6019 = vadd.xlane.f32.xlu0 %v6018
    %v6020 = vpop.xlane.xlu0 %6019
    %v6021 = vsel %vm1073, %v5989, 0.0
    %6022 = vadd.xlane.f32.xlu0 %v6021
    %v6023 = vpop.xlane.xlu0 %6022
    %v6024 = vsel %vm1073, %v5991, 0.0
    %6025 = vadd.xlane.f32.xlu0 %v6024
    %v6026 = vpop.xlane.xlu0 %6025
    %v6027 = vsel %vm1073, %v5993, 0.0
    %6028 = vadd.xlane.f32.xlu0 %v6027
    %v6029 = vpop.xlane.xlu0 %6028
    %v6030 = vsel %vm1073, %v5995, 0.0
    %6031 = vadd.xlane.f32.xlu0 %v6030
    %v6032 = vpop.xlane.xlu0 %6031
    %v6033 = vsel %vm1073, %v5997, 0.0
    %6034 = vadd.xlane.f32.xlu0 %v6033
    %v6035 = vpop.xlane.xlu0 %6034
    %v6036 = vsel %vm1073, %v5999, 0.0
    %6037 = vadd.xlane.f32.xlu0 %v6036
    %v6038 = vpop.xlane.xlu0 %6037
    %v6039 = vsel %vm1073, %v6001, 0.0
    %6040 = vadd.xlane.f32.xlu0 %v6039
    %v6041 = vpop.xlane.xlu0 %6040
    %v6042 = vsel %vm1073, %v6003, 0.0
    %6043 = vadd.xlane.f32.xlu0 %v6042
    %v6044 = vpop.xlane.xlu0 %6043
    %v6045 = vsel %vm1073, %v6005, 0.0
    %6046 = vadd.xlane.f32.xlu0 %v6045
    %v6047 = vpop.xlane.xlu0 %6046
    %v6048 = vsel %vm1073, %v6007, 0.0
    %6049 = vadd.xlane.f32.xlu0 %v6048
    %v6050 = vpop.xlane.xlu0 %6049
    %v6051 = vsel %vm1073, %v6009, 0.0
    %6052 = vadd.xlane.f32.xlu0 %v6051
    %v6053 = vpop.xlane.xlu0 %6052
    %v6054 = vsel %vm1073, %v6011, 0.0
    %6055 = vadd.xlane.f32.xlu0 %v6054
    %v6056 = vpop.xlane.xlu0 %6055
    %v6057 = vsel %vm1073, %v6013, 0.0
    %6058 = vadd.xlane.f32.xlu0 %v6057
    %v6059 = vpop.xlane.xlu0 %6058
    %v6060 = vsel %vm1073, %v6015, 0.0
    %6061 = vadd.xlane.f32.xlu0 %v6060
    %v6062 = vpop.xlane.xlu0 %6061
    %v6063 = vsel %vm1073, %v6017, 0.0
    %6064 = vadd.xlane.f32.xlu0 %v6063
    %v6065 = vpop.xlane.xlu0 %6064
    %v6066 = vrcp.pop %v6020
    %v6067 = vrcp.pop %v6023
    %v6068 = vrcp.pop %v6026
    %v6069 = vrcp.pop %v6029
    %v6070 = vrcp.pop %v6032
    %v6071 = vrcp.pop %v6035
    %v6072 = vrcp.pop %v6038
    %v6073 = vrcp.pop %v6041
    %v6074 = vrcp.pop %v6044
    %v6075 = vrcp.pop %v6047
    %v6076 = vrcp.pop %v6050
    %v6077 = vrcp.pop %v6053
    %v6078 = vrcp.pop %v6056
    %v6079 = vrcp.pop %v6059
    %v6080 = vrcp.pop %v6062
    %v6081 = vrcp.pop %v6065
    %v6082 = vmul.f32 %v5987, %v6066
    %v6083 = vmul.f32 %v5989, %v6067
    %v6084 = vmul.f32 %v5991, %v6068
    %v6085 = vmul.f32 %v5993, %v6069
    %v6086 = vmul.f32 %v5995, %v6070
    %v6087 = vmul.f32 %v5997, %v6071
    %v6088 = vmul.f32 %v5999, %v6072
    %v6089 = vmul.f32 %v6001, %v6073
    %v6090 = vmul.f32 %v6003, %v6074
    %v6091 = vmul.f32 %v6005, %v6075
    %v6092 = vmul.f32 %v6007, %v6076
    %v6093 = vmul.f32 %v6009, %v6077
    %v6094 = vmul.f32 %v6011, %v6078
    %v6095 = vmul.f32 %v6013, %v6079
    %v6096 = vmul.f32 %v6015, %v6080
    %v6097 = vmul.f32 %v6017, %v6081
    %6098 = vrot.lane.b32.xlu0 %v226, 40
    %v6099 = vpop.permute.xlu0 %6098
    %6100 = vrot.lane.b32.xlu0 %v231, 40
    %v6101 = vpop.permute.xlu0 %6100
    %v6105 = vsel %vm1073, %v6082, 0
    %v6108 = vsel %vm1073, %v6083, 0
    %6110 = vmatprep.subr.mxu0 0.0
    %6111 = vmatpush1.msra.mxu0 %v6099
    %6112 = vmatprep.subr.mxu0 0.0
    %6113 = vmatpush1.msra.mxu0 %v6101
    %6114 = vmatprep.subr.mxu0 0.0
    %6115 = vmatpush1.msra.mxu0 0.0
    %6116 = vmatprep.subr.mxu0 0.0
    %6117 = vmatpush1.msra.mxu0 0.0
    %6118 = vmatprep.subr.mxu0 0.0
    %6119 = vmatpush1.msra.mxu0 0.0
    %6120 = vmatprep.subr.mxu0 0.0
    %6121 = vmatpush1.msra.mxu0 0.0
    %6122 = vmatprep.subr.mxu0 0.0
    %6123 = vmatpush1.msra.mxu0 0.0
    %6124 = vmatprep.subr.mxu0 0.0
    %6125 = vmatpush1.msra.mxu0 0.0
    %6126 = vmatprep.subr.mxu0 0.0
    %6127 = vmatpush1.msra.mxu0 0.0
    %6128 = vmatprep.subr.mxu0 0.0
    %6129 = vmatpush1.msra.mxu0 0.0
    %6130 = vmatprep.subr.mxu0 0.0
    %6131 = vmatpush1.msra.mxu0 0.0
    %6132 = vmatprep.subr.mxu0 0.0
    %6133 = vmatpush1.msra.mxu0 0.0
    %6134 = vmatprep.subr.mxu0 0.0
    %6135 = vmatpush1.msra.mxu0 0.0
    %6136 = vmatprep.subr.mxu0 0.0
    %6137 = vmatpush1.msra.mxu0 0.0
    %6138 = vmatprep.subr.mxu0 0.0
    %6139 = vmatpush1.msra.mxu0 0.0
    %6140 = vmatprep.subr.mxu0 0.0
    %6141 = vmatpush1.msra.mxu0 0.0
    %6142 = vmatprep.subr.mxu0 0.0
    %6143 = vmatpush1.msra.mxu0 0.0
    %6144 = vmatprep.subr.mxu0 0.0
    %6145 = vmatpush1.msra.mxu0 0.0
    %6146 = vmatprep.subr.mxu0 0.0
    %6147 = vmatpush1.msra.mxu0 0.0
    %6148 = vmatprep.subr.mxu0 0.0
    %6149 = vmatpush1.msra.mxu0 0.0
    %6150 = vmatprep.subr.mxu0 0.0
    %6151 = vmatpush1.msra.mxu0 0.0
    %6152 = vmatprep.subr.mxu0 0.0
    %6153 = vmatpush1.msra.mxu0 0.0
    %6154 = vmatprep.subr.mxu0 0.0
    %6155 = vmatpush1.msra.mxu0 0.0
    %6156 = vmatprep.subr.mxu0 0.0
    %6157 = vmatpush1.msra.mxu0 0.0
    %6158 = vmatprep.subr.mxu0 0.0
    %6159 = vmatpush1.msra.mxu0 0.0
    %6160 = vmatprep.subr.mxu0 0.0
    %6161 = vmatpush1.msra.mxu0 0.0
    %6162 = vmatprep.subr.mxu0 0.0
    %6163 = vmatpush1.msra.mxu0 0.0
    %6164 = vmatprep.subr.mxu0 0.0
    %6165 = vmatpush1.msra.mxu0 0.0
    %6166 = vmatprep.subr.mxu0 0.0
    %6167 = vmatpush1.msra.mxu0 0.0
    %6168 = vmatprep.subr.mxu0 0.0
    %6169 = vmatpush1.msra.mxu0 0.0
    %6170 = vmatprep.subr.mxu0 0.0
    %6171 = vmatpush1.msra.mxu0 0.0
    %6172 = vmatprep.subr.mxu0 0.0
    %6173 = vmatpush1.msra.mxu0 0.0
    %6174 = vmatprep.mubr.f32.mxu0 0.0
    %6175 = vmatmul.mubr.f32.gmra.mrb[0].mxu0 %v6105
    %v6176 = vpop.f32.mrb[0].mxu0
    %v6177 = vadd.f32 0.0, %v6176
    %v6178 = vpop.f32.mrb[0].mxu0
    %6179 = vmatprep.mubr.f32.mxu0 0.0
    %6180 = vmatmul.mubr.f32.gmra.mrb[0].mxu0 %v6108
    %v6181 = vpop.f32.mrb[0].mxu0
    %v6182 = vadd.f32 0.0, %v6181
    %v6183 = vpop.f32.mrb[0].mxu0
    %6184 = vdwg.mxu0
    %6185 = vrot.lane.b32.xlu0 %v236, 40
    %v6186 = vpop.permute.xlu0 %6185
    %6187 = vrot.lane.b32.xlu0 %v241, 40
    %v6188 = vpop.permute.xlu0 %6187
    %v6192 = vsel %vm1073, %v6084, 0
    %v6195 = vsel %vm1073, %v6085, 0
    %6197 = vmatprep.subr.mxu0 0.0
    %6198 = vmatpush1.msra.mxu0 %v6186
    %6199 = vmatprep.subr.mxu0 0.0
    %6200 = vmatpush1.msra.mxu0 %v6188
    %6201 = vmatprep.subr.mxu0 0.0
    %6202 = vmatpush1.msra.mxu0 0.0
    %6203 = vmatprep.subr.mxu0 0.0
    %6204 = vmatpush1.msra.mxu0 0.0
    %6205 = vmatprep.subr.mxu0 0.0
    %6206 = vmatpush1.msra.mxu0 0.0
    %6207 = vmatprep.subr.mxu0 0.0
    %6208 = vmatpush1.msra.mxu0 0.0
    %6209 = vmatprep.subr.mxu0 0.0
    %6210 = vmatpush1.msra.mxu0 0.0
    %6211 = vmatprep.subr.mxu0 0.0
    %6212 = vmatpush1.msra.mxu0 0.0
    %6213 = vmatprep.subr.mxu0 0.0
    %6214 = vmatpush1.msra.mxu0 0.0
    %6215 = vmatprep.subr.mxu0 0.0
    %6216 = vmatpush1.msra.mxu0 0.0
    %6217 = vmatprep.subr.mxu0 0.0
    %6218 = vmatpush1.msra.mxu0 0.0
    %6219 = vmatprep.subr.mxu0 0.0
    %6220 = vmatpush1.msra.mxu0 0.0
    %6221 = vmatprep.subr.mxu0 0.0
    %6222 = vmatpush1.msra.mxu0 0.0
    %6223 = vmatprep.subr.mxu0 0.0
    %6224 = vmatpush1.msra.mxu0 0.0
    %6225 = vmatprep.subr.mxu0 0.0
    %6226 = vmatpush1.msra.mxu0 0.0
    %6227 = vmatprep.subr.mxu0 0.0
    %6228 = vmatpush1.msra.mxu0 0.0
    %6229 = vmatprep.subr.mxu0 0.0
    %6230 = vmatpush1.msra.mxu0 0.0
    %6231 = vmatprep.subr.mxu0 0.0
    %6232 = vmatpush1.msra.mxu0 0.0
    %6233 = vmatprep.subr.mxu0 0.0
    %6234 = vmatpush1.msra.mxu0 0.0
    %6235 = vmatprep.subr.mxu0 0.0
    %6236 = vmatpush1.msra.mxu0 0.0
    %6237 = vmatprep.subr.mxu0 0.0
    %6238 = vmatpush1.msra.mxu0 0.0
    %6239 = vmatprep.subr.mxu0 0.0
    %6240 = vmatpush1.msra.mxu0 0.0
    %6241 = vmatprep.subr.mxu0 0.0
    %6242 = vmatpush1.msra.mxu0 0.0
    %6243 = vmatprep.subr.mxu0 0.0
    %6244 = vmatpush1.msra.mxu0 0.0
    %6245 = vmatprep.subr.mxu0 0.0
    %6246 = vmatpush1.msra.mxu0 0.0
    %6247 = vmatprep.subr.mxu0 0.0
    %6248 = vmatpush1.msra.mxu0 0.0
    %6249 = vmatprep.subr.mxu0 0.0
    %6250 = vmatpush1.msra.mxu0 0.0
    %6251 = vmatprep.subr.mxu0 0.0
    %6252 = vmatpush1.msra.mxu0 0.0
    %6253 = vmatprep.subr.mxu0 0.0
    %6254 = vmatpush1.msra.mxu0 0.0
    %6255 = vmatprep.subr.mxu0 0.0
    %6256 = vmatpush1.msra.mxu0 0.0
    %6257 = vmatprep.subr.mxu0 0.0
    %6258 = vmatpush1.msra.mxu0 0.0
    %6259 = vmatprep.subr.mxu0 0.0
    %6260 = vmatpush1.msra.mxu0 0.0
    %6261 = vmatprep.mubr.f32.mxu0 0.0
    %6262 = vmatmul.mubr.f32.gmra.mrb[0].mxu0 %v6192
    %v6263 = vpop.f32.mrb[0].mxu0
    %v6264 = vadd.f32 0.0, %v6263
    %v6265 = vpop.f32.mrb[0].mxu0
    %6266 = vmatprep.mubr.f32.mxu0 0.0
    %6267 = vmatmul.mubr.f32.gmra.mrb[0].mxu0 %v6195
    %v6268 = vpop.f32.mrb[0].mxu0
    %v6269 = vadd.f32 0.0, %v6268
    %v6270 = vpop.f32.mrb[0].mxu0
    %6271 = vdwg.mxu0
    %6272 = vrot.lane.b32.xlu0 %v246, 40
    %v6273 = vpop.permute.xlu0 %6272
    %6274 = vrot.lane.b32.xlu0 %v251, 40
    %v6275 = vpop.permute.xlu0 %6274
    %v6279 = vsel %vm1073, %v6086, 0
    %v6282 = vsel %vm1073, %v6087, 0
    %6284 = vmatprep.subr.mxu0 0.0
    %6285 = vmatpush1.msra.mxu0 %v6273
    %6286 = vmatprep.subr.mxu0 0.0
    %6287 = vmatpush1.msra.mxu0 %v6275
    %6288 = vmatprep.subr.mxu0 0.0
    %6289 = vmatpush1.msra.mxu0 0.0
    %6290 = vmatprep.subr.mxu0 0.0
    %6291 = vmatpush1.msra.mxu0 0.0
    %6292 = vmatprep.subr.mxu0 0.0
    %6293 = vmatpush1.msra.mxu0 0.0
    %6294 = vmatprep.subr.mxu0 0.0
    %6295 = vmatpush1.msra.mxu0 0.0
    %6296 = vmatprep.subr.mxu0 0.0
    %6297 = vmatpush1.msra.mxu0 0.0
    %6298 = vmatprep.subr.mxu0 0.0
    %6299 = vmatpush1.msra.mxu0 0.0
    %6300 = vmatprep.subr.mxu0 0.0
    %6301 = vmatpush1.msra.mxu0 0.0
    %6302 = vmatprep.subr.mxu0 0.0
    %6303 = vmatpush1.msra.mxu0 0.0
    %6304 = vmatprep.subr.mxu0 0.0
    %6305 = vmatpush1.msra.mxu0 0.0
    %6306 = vmatprep.subr.mxu0 0.0
    %6307 = vmatpush1.msra.mxu0 0.0
    %6308 = vmatprep.subr.mxu0 0.0
    %6309 = vmatpush1.msra.mxu0 0.0
    %6310 = vmatprep.subr.mxu0 0.0
    %6311 = vmatpush1.msra.mxu0 0.0
    %6312 = vmatprep.subr.mxu0 0.0
    %6313 = vmatpush1.msra.mxu0 0.0
    %6314 = vmatprep.subr.mxu0 0.0
    %6315 = vmatpush1.msra.mxu0 0.0
    %6316 = vmatprep.subr.mxu0 0.0
    %6317 = vmatpush1.msra.mxu0 0.0
    %6318 = vmatprep.subr.mxu0 0.0
    %6319 = vmatpush1.msra.mxu0 0.0
    %6320 = vmatprep.subr.mxu0 0.0
    %6321 = vmatpush1.msra.mxu0 0.0
    %6322 = vmatprep.subr.mxu0 0.0
    %6323 = vmatpush1.msra.mxu0 0.0
    %6324 = vmatprep.subr.mxu0 0.0
    %6325 = vmatpush1.msra.mxu0 0.0
    %6326 = vmatprep.subr.mxu0 0.0
    %6327 = vmatpush1.msra.mxu0 0.0
    %6328 = vmatprep.subr.mxu0 0.0
    %6329 = vmatpush1.msra.mxu0 0.0
    %6330 = vmatprep.subr.mxu0 0.0
    %6331 = vmatpush1.msra.mxu0 0.0
    %6332 = vmatprep.subr.mxu0 0.0
    %6333 = vmatpush1.msra.mxu0 0.0
    %6334 = vmatprep.subr.mxu0 0.0
    %6335 = vmatpush1.msra.mxu0 0.0
    %6336 = vmatprep.subr.mxu0 0.0
    %6337 = vmatpush1.msra.mxu0 0.0
    %6338 = vmatprep.subr.mxu0 0.0
    %6339 = vmatpush1.msra.mxu0 0.0
    %6340 = vmatprep.subr.mxu0 0.0
    %6341 = vmatpush1.msra.mxu0 0.0
    %6342 = vmatprep.subr.mxu0 0.0
    %6343 = vmatpush1.msra.mxu0 0.0
    %6344 = vmatprep.subr.mxu0 0.0
    %6345 = vmatpush1.msra.mxu0 0.0
    %6346 = vmatprep.subr.mxu0 0.0
    %6347 = vmatpush1.msra.mxu0 0.0
    %6348 = vmatprep.mubr.f32.mxu0 0.0
    %6349 = vmatmul.mubr.f32.gmra.mrb[0].mxu0 %v6279
    %v6350 = vpop.f32.mrb[0].mxu0
    %v6351 = vadd.f32 0.0, %v6350
    %v6352 = vpop.f32.mrb[0].mxu0
    %6353 = vmatprep.mubr.f32.mxu0 0.0
    %6354 = vmatmul.mubr.f32.gmra.mrb[0].mxu0 %v6282
    %v6355 = vpop.f32.mrb[0].mxu0
    %v6356 = vadd.f32 0.0, %v6355
    %v6357 = vpop.f32.mrb[0].mxu0
    %6358 = vdwg.mxu0
    %6359 = vrot.lane.b32.xlu0 %v256, 40
    %v6360 = vpop.permute.xlu0 %6359
    %6361 = vrot.lane.b32.xlu0 %v261, 40
    %v6362 = vpop.permute.xlu0 %6361
    %v6366 = vsel %vm1073, %v6088, 0
    %v6369 = vsel %vm1073, %v6089, 0
    %6371 = vmatprep.subr.mxu0 0.0
    %6372 = vmatpush1.msra.mxu0 %v6360
    %6373 = vmatprep.subr.mxu0 0.0
    %6374 = vmatpush1.msra.mxu0 %v6362
    %6375 = vmatprep.subr.mxu0 0.0
    %6376 = vmatpush1.msra.mxu0 0.0
    %6377 = vmatprep.subr.mxu0 0.0
    %6378 = vmatpush1.msra.mxu0 0.0
    %6379 = vmatprep.subr.mxu0 0.0
    %6380 = vmatpush1.msra.mxu0 0.0
    %6381 = vmatprep.subr.mxu0 0.0
    %6382 = vmatpush1.msra.mxu0 0.0
    %6383 = vmatprep.subr.mxu0 0.0
    %6384 = vmatpush1.msra.mxu0 0.0
    %6385 = vmatprep.subr.mxu0 0.0
    %6386 = vmatpush1.msra.mxu0 0.0
    %6387 = vmatprep.subr.mxu0 0.0
    %6388 = vmatpush1.msra.mxu0 0.0
    %6389 = vmatprep.subr.mxu0 0.0
    %6390 = vmatpush1.msra.mxu0 0.0
    %6391 = vmatprep.subr.mxu0 0.0
    %6392 = vmatpush1.msra.mxu0 0.0
    %6393 = vmatprep.subr.mxu0 0.0
    %6394 = vmatpush1.msra.mxu0 0.0
    %6395 = vmatprep.subr.mxu0 0.0
    %6396 = vmatpush1.msra.mxu0 0.0
    %6397 = vmatprep.subr.mxu0 0.0
    %6398 = vmatpush1.msra.mxu0 0.0
    %6399 = vmatprep.subr.mxu0 0.0
    %6400 = vmatpush1.msra.mxu0 0.0
    %6401 = vmatprep.subr.mxu0 0.0
    %6402 = vmatpush1.msra.mxu0 0.0
    %6403 = vmatprep.subr.mxu0 0.0
    %6404 = vmatpush1.msra.mxu0 0.0
    %6405 = vmatprep.subr.mxu0 0.0
    %6406 = vmatpush1.msra.mxu0 0.0
    %6407 = vmatprep.subr.mxu0 0.0
    %6408 = vmatpush1.msra.mxu0 0.0
    %6409 = vmatprep.subr.mxu0 0.0
    %6410 = vmatpush1.msra.mxu0 0.0
    %6411 = vmatprep.subr.mxu0 0.0
    %6412 = vmatpush1.msra.mxu0 0.0
    %6413 = vmatprep.subr.mxu0 0.0
    %6414 = vmatpush1.msra.mxu0 0.0
    %6415 = vmatprep.subr.mxu0 0.0
    %6416 = vmatpush1.msra.mxu0 0.0
    %6417 = vmatprep.subr.mxu0 0.0
    %6418 = vmatpush1.msra.mxu0 0.0
    %6419 = vmatprep.subr.mxu0 0.0
    %6420 = vmatpush1.msra.mxu0 0.0
    %6421 = vmatprep.subr.mxu0 0.0
    %6422 = vmatpush1.msra.mxu0 0.0
    %6423 = vmatprep.subr.mxu0 0.0
    %6424 = vmatpush1.msra.mxu0 0.0
    %6425 = vmatprep.subr.mxu0 0.0
    %6426 = vmatpush1.msra.mxu0 0.0
    %6427 = vmatprep.subr.mxu0 0.0
    %6428 = vmatpush1.msra.mxu0 0.0
    %6429 = vmatprep.subr.mxu0 0.0
    %6430 = vmatpush1.msra.mxu0 0.0
    %6431 = vmatprep.subr.mxu0 0.0
    %6432 = vmatpush1.msra.mxu0 0.0
    %6433 = vmatprep.subr.mxu0 0.0
    %6434 = vmatpush1.msra.mxu0 0.0
    %6435 = vmatprep.mubr.f32.mxu0 0.0
    %6436 = vmatmul.mubr.f32.gmra.mrb[0].mxu0 %v6366
    %v6437 = vpop.f32.mrb[0].mxu0
    %v6438 = vadd.f32 0.0, %v6437
    %v6439 = vpop.f32.mrb[0].mxu0
    %6440 = vmatprep.mubr.f32.mxu0 0.0
    %6441 = vmatmul.mubr.f32.gmra.mrb[0].mxu0 %v6369
    %v6442 = vpop.f32.mrb[0].mxu0
    %v6443 = vadd.f32 0.0, %v6442
    %v6444 = vpop.f32.mrb[0].mxu0
    %6445 = vdwg.mxu0
    %6446 = vrot.lane.b32.xlu0 %v266, 40
    %v6447 = vpop.permute.xlu0 %6446
    %6448 = vrot.lane.b32.xlu0 %v271, 40
    %v6449 = vpop.permute.xlu0 %6448
    %v6453 = vsel %vm1073, %v6090, 0
    %v6456 = vsel %vm1073, %v6091, 0
    %6458 = vmatprep.subr.mxu0 0.0
    %6459 = vmatpush1.msra.mxu0 %v6447
    %6460 = vmatprep.subr.mxu0 0.0
    %6461 = vmatpush1.msra.mxu0 %v6449
    %6462 = vmatprep.subr.mxu0 0.0
    %6463 = vmatpush1.msra.mxu0 0.0
    %6464 = vmatprep.subr.mxu0 0.0
    %6465 = vmatpush1.msra.mxu0 0.0
    %6466 = vmatprep.subr.mxu0 0.0
    %6467 = vmatpush1.msra.mxu0 0.0
    %6468 = vmatprep.subr.mxu0 0.0
    %6469 = vmatpush1.msra.mxu0 0.0
    %6470 = vmatprep.subr.mxu0 0.0
    %6471 = vmatpush1.msra.mxu0 0.0
    %6472 = vmatprep.subr.mxu0 0.0
    %6473 = vmatpush1.msra.mxu0 0.0
    %6474 = vmatprep.subr.mxu0 0.0
    %6475 = vmatpush1.msra.mxu0 0.0
    %6476 = vmatprep.subr.mxu0 0.0
    %6477 = vmatpush1.msra.mxu0 0.0
    %6478 = vmatprep.subr.mxu0 0.0
    %6479 = vmatpush1.msra.mxu0 0.0
    %6480 = vmatprep.subr.mxu0 0.0
    %6481 = vmatpush1.msra.mxu0 0.0
    %6482 = vmatprep.subr.mxu0 0.0
    %6483 = vmatpush1.msra.mxu0 0.0
    %6484 = vmatprep.subr.mxu0 0.0
    %6485 = vmatpush1.msra.mxu0 0.0
    %6486 = vmatprep.subr.mxu0 0.0
    %6487 = vmatpush1.msra.mxu0 0.0
    %6488 = vmatprep.subr.mxu0 0.0
    %6489 = vmatpush1.msra.mxu0 0.0
    %6490 = vmatprep.subr.mxu0 0.0
    %6491 = vmatpush1.msra.mxu0 0.0
    %6492 = vmatprep.subr.mxu0 0.0
    %6493 = vmatpush1.msra.mxu0 0.0
    %6494 = vmatprep.subr.mxu0 0.0
    %6495 = vmatpush1.msra.mxu0 0.0
    %6496 = vmatprep.subr.mxu0 0.0
    %6497 = vmatpush1.msra.mxu0 0.0
    %6498 = vmatprep.subr.mxu0 0.0
    %6499 = vmatpush1.msra.mxu0 0.0
    %6500 = vmatprep.subr.mxu0 0.0
    %6501 = vmatpush1.msra.mxu0 0.0
    %6502 = vmatprep.subr.mxu0 0.0
    %6503 = vmatpush1.msra.mxu0 0.0
    %6504 = vmatprep.subr.mxu0 0.0
    %6505 = vmatpush1.msra.mxu0 0.0
    %6506 = vmatprep.subr.mxu0 0.0
    %6507 = vmatpush1.msra.mxu0 0.0
    %6508 = vmatprep.subr.mxu0 0.0
    %6509 = vmatpush1.msra.mxu0 0.0
    %6510 = vmatprep.subr.mxu0 0.0
    %6511 = vmatpush1.msra.mxu0 0.0
    %6512 = vmatprep.subr.mxu0 0.0
    %6513 = vmatpush1.msra.mxu0 0.0
    %6514 = vmatprep.subr.mxu0 0.0
    %6515 = vmatpush1.msra.mxu0 0.0
    %6516 = vmatprep.subr.mxu0 0.0
    %6517 = vmatpush1.msra.mxu0 0.0
    %6518 = vmatprep.subr.mxu0 0.0
    %6519 = vmatpush1.msra.mxu0 0.0
    %6520 = vmatprep.subr.mxu0 0.0
    %6521 = vmatpush1.msra.mxu0 0.0
    %6522 = vmatprep.mubr.f32.mxu0 0.0
    %6523 = vmatmul.mubr.f32.gmra.mrb[0].mxu0 %v6453
    %v6524 = vpop.f32.mrb[0].mxu0
    %v6525 = vadd.f32 0.0, %v6524
    %v6526 = vpop.f32.mrb[0].mxu0
    %6527 = vmatprep.mubr.f32.mxu0 0.0
    %6528 = vmatmul.mubr.f32.gmra.mrb[0].mxu0 %v6456
    %v6529 = vpop.f32.mrb[0].mxu0
    %v6530 = vadd.f32 0.0, %v6529
    %v6531 = vpop.f32.mrb[0].mxu0
    %6532 = vdwg.mxu0
    %6533 = vrot.lane.b32.xlu0 %v276, 40
    %v6534 = vpop.permute.xlu0 %6533
    %6535 = vrot.lane.b32.xlu0 %v281, 40
    %v6536 = vpop.permute.xlu0 %6535
    %v6540 = vsel %vm1073, %v6092, 0
    %v6543 = vsel %vm1073, %v6093, 0
    %6545 = vmatprep.subr.mxu0 0.0
    %6546 = vmatpush1.msra.mxu0 %v6534
    %6547 = vmatprep.subr.mxu0 0.0
    %6548 = vmatpush1.msra.mxu0 %v6536
    %6549 = vmatprep.subr.mxu0 0.0
    %6550 = vmatpush1.msra.mxu0 0.0
    %6551 = vmatprep.subr.mxu0 0.0
    %6552 = vmatpush1.msra.mxu0 0.0
    %6553 = vmatprep.subr.mxu0 0.0
    %6554 = vmatpush1.msra.mxu0 0.0
    %6555 = vmatprep.subr.mxu0 0.0
    %6556 = vmatpush1.msra.mxu0 0.0
    %6557 = vmatprep.subr.mxu0 0.0
    %6558 = vmatpush1.msra.mxu0 0.0
    %6559 = vmatprep.subr.mxu0 0.0
    %6560 = vmatpush1.msra.mxu0 0.0
    %6561 = vmatprep.subr.mxu0 0.0
    %6562 = vmatpush1.msra.mxu0 0.0
    %6563 = vmatprep.subr.mxu0 0.0
    %6564 = vmatpush1.msra.mxu0 0.0
    %6565 = vmatprep.subr.mxu0 0.0
    %6566 = vmatpush1.msra.mxu0 0.0
    %6567 = vmatprep.subr.mxu0 0.0
    %6568 = vmatpush1.msra.mxu0 0.0
    %6569 = vmatprep.subr.mxu0 0.0
    %6570 = vmatpush1.msra.mxu0 0.0
    %6571 = vmatprep.subr.mxu0 0.0
    %6572 = vmatpush1.msra.mxu0 0.0
    %6573 = vmatprep.subr.mxu0 0.0
    %6574 = vmatpush1.msra.mxu0 0.0
    %6575 = vmatprep.subr.mxu0 0.0
    %6576 = vmatpush1.msra.mxu0 0.0
    %6577 = vmatprep.subr.mxu0 0.0
    %6578 = vmatpush1.msra.mxu0 0.0
    %6579 = vmatprep.subr.mxu0 0.0
    %6580 = vmatpush1.msra.mxu0 0.0
    %6581 = vmatprep.subr.mxu0 0.0
    %6582 = vmatpush1.msra.mxu0 0.0
    %6583 = vmatprep.subr.mxu0 0.0
    %6584 = vmatpush1.msra.mxu0 0.0
    %6585 = vmatprep.subr.mxu0 0.0
    %6586 = vmatpush1.msra.mxu0 0.0
    %6587 = vmatprep.subr.mxu0 0.0
    %6588 = vmatpush1.msra.mxu0 0.0
    %6589 = vmatprep.subr.mxu0 0.0
    %6590 = vmatpush1.msra.mxu0 0.0
    %6591 = vmatprep.subr.mxu0 0.0
    %6592 = vmatpush1.msra.mxu0 0.0
    %6593 = vmatprep.subr.mxu0 0.0
    %6594 = vmatpush1.msra.mxu0 0.0
    %6595 = vmatprep.subr.mxu0 0.0
    %6596 = vmatpush1.msra.mxu0 0.0
    %6597 = vmatprep.subr.mxu0 0.0
    %6598 = vmatpush1.msra.mxu0 0.0
    %6599 = vmatprep.subr.mxu0 0.0
    %6600 = vmatpush1.msra.mxu0 0.0
    %6601 = vmatprep.subr.mxu0 0.0
    %6602 = vmatpush1.msra.mxu0 0.0
    %6603 = vmatprep.subr.mxu0 0.0
    %6604 = vmatpush1.msra.mxu0 0.0
    %6605 = vmatprep.subr.mxu0 0.0
    %6606 = vmatpush1.msra.mxu0 0.0
    %6607 = vmatprep.subr.mxu0 0.0
    %6608 = vmatpush1.msra.mxu0 0.0
    %6609 = vmatprep.mubr.f32.mxu0 0.0
    %6610 = vmatmul.mubr.f32.gmra.mrb[0].mxu0 %v6540
    %v6611 = vpop.f32.mrb[0].mxu0
    %v6612 = vadd.f32 0.0, %v6611
    %v6613 = vpop.f32.mrb[0].mxu0
    %6614 = vmatprep.mubr.f32.mxu0 0.0
    %6615 = vmatmul.mubr.f32.gmra.mrb[0].mxu0 %v6543
    %v6616 = vpop.f32.mrb[0].mxu0
    %v6617 = vadd.f32 0.0, %v6616
    %v6618 = vpop.f32.mrb[0].mxu0
    %6619 = vdwg.mxu0
    %6620 = vrot.lane.b32.xlu0 %v286, 40
    %v6621 = vpop.permute.xlu0 %6620
    %6622 = vrot.lane.b32.xlu0 %v291, 40
    %v6623 = vpop.permute.xlu0 %6622
    %v6627 = vsel %vm1073, %v6094, 0
    %v6630 = vsel %vm1073, %v6095, 0
    %6632 = vmatprep.subr.mxu0 0.0
    %6633 = vmatpush1.msra.mxu0 %v6621
    %6634 = vmatprep.subr.mxu0 0.0
    %6635 = vmatpush1.msra.mxu0 %v6623
    %6636 = vmatprep.subr.mxu0 0.0
    %6637 = vmatpush1.msra.mxu0 0.0
    %6638 = vmatprep.subr.mxu0 0.0
    %6639 = vmatpush1.msra.mxu0 0.0
    %6640 = vmatprep.subr.mxu0 0.0
    %6641 = vmatpush1.msra.mxu0 0.0
    %6642 = vmatprep.subr.mxu0 0.0
    %6643 = vmatpush1.msra.mxu0 0.0
    %6644 = vmatprep.subr.mxu0 0.0
    %6645 = vmatpush1.msra.mxu0 0.0
    %6646 = vmatprep.subr.mxu0 0.0
    %6647 = vmatpush1.msra.mxu0 0.0
    %6648 = vmatprep.subr.mxu0 0.0
    %6649 = vmatpush1.msra.mxu0 0.0
    %6650 = vmatprep.subr.mxu0 0.0
    %6651 = vmatpush1.msra.mxu0 0.0
    %6652 = vmatprep.subr.mxu0 0.0
    %6653 = vmatpush1.msra.mxu0 0.0
    %6654 = vmatprep.subr.mxu0 0.0
    %6655 = vmatpush1.msra.mxu0 0.0
    %6656 = vmatprep.subr.mxu0 0.0
    %6657 = vmatpush1.msra.mxu0 0.0
    %6658 = vmatprep.subr.mxu0 0.0
    %6659 = vmatpush1.msra.mxu0 0.0
    %6660 = vmatprep.subr.mxu0 0.0
    %6661 = vmatpush1.msra.mxu0 0.0
    %6662 = vmatprep.subr.mxu0 0.0
    %6663 = vmatpush1.msra.mxu0 0.0
    %6664 = vmatprep.subr.mxu0 0.0
    %6665 = vmatpush1.msra.mxu0 0.0
    %6666 = vmatprep.subr.mxu0 0.0
    %6667 = vmatpush1.msra.mxu0 0.0
    %6668 = vmatprep.subr.mxu0 0.0
    %6669 = vmatpush1.msra.mxu0 0.0
    %6670 = vmatprep.subr.mxu0 0.0
    %6671 = vmatpush1.msra.mxu0 0.0
    %6672 = vmatprep.subr.mxu0 0.0
    %6673 = vmatpush1.msra.mxu0 0.0
    %6674 = vmatprep.subr.mxu0 0.0
    %6675 = vmatpush1.msra.mxu0 0.0
    %6676 = vmatprep.subr.mxu0 0.0
    %6677 = vmatpush1.msra.mxu0 0.0
    %6678 = vmatprep.subr.mxu0 0.0
    %6679 = vmatpush1.msra.mxu0 0.0
    %6680 = vmatprep.subr.mxu0 0.0
    %6681 = vmatpush1.msra.mxu0 0.0
    %6682 = vmatprep.subr.mxu0 0.0
    %6683 = vmatpush1.msra.mxu0 0.0
    %6684 = vmatprep.subr.mxu0 0.0
    %6685 = vmatpush1.msra.mxu0 0.0
    %6686 = vmatprep.subr.mxu0 0.0
    %6687 = vmatpush1.msra.mxu0 0.0
    %6688 = vmatprep.subr.mxu0 0.0
    %6689 = vmatpush1.msra.mxu0 0.0
    %6690 = vmatprep.subr.mxu0 0.0
    %6691 = vmatpush1.msra.mxu0 0.0
    %6692 = vmatprep.subr.mxu0 0.0
    %6693 = vmatpush1.msra.mxu0 0.0
    %6694 = vmatprep.subr.mxu0 0.0
    %6695 = vmatpush1.msra.mxu0 0.0
    %6696 = vmatprep.mubr.f32.mxu0 0.0
    %6697 = vmatmul.mubr.f32.gmra.mrb[0].mxu0 %v6627
    %v6698 = vpop.f32.mrb[0].mxu0
    %v6699 = vadd.f32 0.0, %v6698
    %v6700 = vpop.f32.mrb[0].mxu0
    %6701 = vmatprep.mubr.f32.mxu0 0.0
    %6702 = vmatmul.mubr.f32.gmra.mrb[0].mxu0 %v6630
    %v6703 = vpop.f32.mrb[0].mxu0
    %v6704 = vadd.f32 0.0, %v6703
    %v6705 = vpop.f32.mrb[0].mxu0
    %6706 = vdwg.mxu0
    %6707 = vrot.lane.b32.xlu0 %v296, 40
    %v6708 = vpop.permute.xlu0 %6707
    %6709 = vrot.lane.b32.xlu0 %v301, 40
    %v6710 = vpop.permute.xlu0 %6709
    %v6714 = vsel %vm1073, %v6096, 0
    %v6717 = vsel %vm1073, %v6097, 0
    %6719 = vmatprep.subr.mxu0 0.0
    %6720 = vmatpush1.msra.mxu0 %v6708
    %6721 = vmatprep.subr.mxu0 0.0
    %6722 = vmatpush1.msra.mxu0 %v6710
    %6723 = vmatprep.subr.mxu0 0.0
    %6724 = vmatpush1.msra.mxu0 0.0
    %6725 = vmatprep.subr.mxu0 0.0
    %6726 = vmatpush1.msra.mxu0 0.0
    %6727 = vmatprep.subr.mxu0 0.0
    %6728 = vmatpush1.msra.mxu0 0.0
    %6729 = vmatprep.subr.mxu0 0.0
    %6730 = vmatpush1.msra.mxu0 0.0
    %6731 = vmatprep.subr.mxu0 0.0
    %6732 = vmatpush1.msra.mxu0 0.0
    %6733 = vmatprep.subr.mxu0 0.0
    %6734 = vmatpush1.msra.mxu0 0.0
    %6735 = vmatprep.subr.mxu0 0.0
    %6736 = vmatpush1.msra.mxu0 0.0
    %6737 = vmatprep.subr.mxu0 0.0
    %6738 = vmatpush1.msra.mxu0 0.0
    %6739 = vmatprep.subr.mxu0 0.0
    %6740 = vmatpush1.msra.mxu0 0.0
    %6741 = vmatprep.subr.mxu0 0.0
    %6742 = vmatpush1.msra.mxu0 0.0
    %6743 = vmatprep.subr.mxu0 0.0
    %6744 = vmatpush1.msra.mxu0 0.0
    %6745 = vmatprep.subr.mxu0 0.0
    %6746 = vmatpush1.msra.mxu0 0.0
    %6747 = vmatprep.subr.mxu0 0.0
    %6748 = vmatpush1.msra.mxu0 0.0
    %6749 = vmatprep.subr.mxu0 0.0
    %6750 = vmatpush1.msra.mxu0 0.0
    %6751 = vmatprep.subr.mxu0 0.0
    %6752 = vmatpush1.msra.mxu0 0.0
    %6753 = vmatprep.subr.mxu0 0.0
    %6754 = vmatpush1.msra.mxu0 0.0
    %6755 = vmatprep.subr.mxu0 0.0
    %6756 = vmatpush1.msra.mxu0 0.0
    %6757 = vmatprep.subr.mxu0 0.0
    %6758 = vmatpush1.msra.mxu0 0.0
    %6759 = vmatprep.subr.mxu0 0.0
    %6760 = vmatpush1.msra.mxu0 0.0
    %6761 = vmatprep.subr.mxu0 0.0
    %6762 = vmatpush1.msra.mxu0 0.0
    %6763 = vmatprep.subr.mxu0 0.0
    %6764 = vmatpush1.msra.mxu0 0.0
    %6765 = vmatprep.subr.mxu0 0.0
    %6766 = vmatpush1.msra.mxu0 0.0
    %6767 = vmatprep.subr.mxu0 0.0
    %6768 = vmatpush1.msra.mxu0 0.0
    %6769 = vmatprep.subr.mxu0 0.0
    %6770 = vmatpush1.msra.mxu0 0.0
    %6771 = vmatprep.subr.mxu0 0.0
    %6772 = vmatpush1.msra.mxu0 0.0
    %6773 = vmatprep.subr.mxu0 0.0
    %6774 = vmatpush1.msra.mxu0 0.0
    %6775 = vmatprep.subr.mxu0 0.0
    %6776 = vmatpush1.msra.mxu0 0.0
    %6777 = vmatprep.subr.mxu0 0.0
    %6778 = vmatpush1.msra.mxu0 0.0
    %6779 = vmatprep.subr.mxu0 0.0
    %6780 = vmatpush1.msra.mxu0 0.0
    %6781 = vmatprep.subr.mxu0 0.0
    %6782 = vmatpush1.msra.mxu0 0.0
    %6783 = vmatprep.mubr.f32.mxu0 0.0
    %6784 = vmatmul.mubr.f32.gmra.mrb[0].mxu0 %v6714
    %v6785 = vpop.f32.mrb[0].mxu0
    %v6786 = vadd.f32 0.0, %v6785
    %v6787 = vpop.f32.mrb[0].mxu0
    %6788 = vmatprep.mubr.f32.mxu0 0.0
    %6789 = vmatmul.mubr.f32.gmra.mrb[0].mxu0 %v6717
    %v6790 = vpop.f32.mrb[0].mxu0
    %v6791 = vadd.f32 0.0, %v6790
    %v6792 = vpop.f32.mrb[0].mxu0
    %6793 = vdwg.mxu0
    %6810 = vrot.lane.b32.xlu0 %v2945, 8
    %v6811 = vpop.permute.xlu0 %6810
    %6812 = vrot.lane.b32.xlu0 %v2950, 8
    %v6813 = vpop.permute.xlu0 %6812
    %6814 = vrot.lane.b32.xlu0 %v3032, 8
    %v6815 = vpop.permute.xlu0 %6814
    %6816 = vrot.lane.b32.xlu0 %v3037, 8
    %v6817 = vpop.permute.xlu0 %6816
    %6818 = vrot.lane.b32.xlu0 %v3119, 8
    %v6819 = vpop.permute.xlu0 %6818
    %6820 = vrot.lane.b32.xlu0 %v3124, 8
    %v6821 = vpop.permute.xlu0 %6820
    %6822 = vrot.lane.b32.xlu0 %v3206, 8
    %v6823 = vpop.permute.xlu0 %6822
    %6824 = vrot.lane.b32.xlu0 %v3211, 8
    %v6825 = vpop.permute.xlu0 %6824
    %6826 = vrot.lane.b32.xlu0 %v3293, 8
    %v6827 = vpop.permute.xlu0 %6826
    %6828 = vrot.lane.b32.xlu0 %v3298, 8
    %v6829 = vpop.permute.xlu0 %6828
    %6830 = vrot.lane.b32.xlu0 %v3380, 8
    %v6831 = vpop.permute.xlu0 %6830
    %6832 = vrot.lane.b32.xlu0 %v3385, 8
    %v6833 = vpop.permute.xlu0 %6832
    %6834 = vrot.lane.b32.xlu0 %v3467, 8
    %v6835 = vpop.permute.xlu0 %6834
    %6836 = vrot.lane.b32.xlu0 %v3472, 8
    %v6837 = vpop.permute.xlu0 %6836
    %6838 = vrot.lane.b32.xlu0 %v3554, 8
    %v6839 = vpop.permute.xlu0 %6838
    %6840 = vrot.lane.b32.xlu0 %v3559, 8
    %v6841 = vpop.permute.xlu0 %6840
    %6874 = vrot.lane.b32.xlu0 %v4561, 16
    %v6875 = vpop.permute.xlu0 %6874
    %6876 = vrot.lane.b32.xlu0 %v4566, 16
    %v6877 = vpop.permute.xlu0 %6876
    %6878 = vrot.lane.b32.xlu0 %v4648, 16
    %v6879 = vpop.permute.xlu0 %6878
    %6880 = vrot.lane.b32.xlu0 %v4653, 16
    %v6881 = vpop.permute.xlu0 %6880
    %6882 = vrot.lane.b32.xlu0 %v4735, 16
    %v6883 = vpop.permute.xlu0 %6882
    %6884 = vrot.lane.b32.xlu0 %v4740, 16
    %v6885 = vpop.permute.xlu0 %6884
    %6886 = vrot.lane.b32.xlu0 %v4822, 16
    %v6887 = vpop.permute.xlu0 %6886
    %6888 = vrot.lane.b32.xlu0 %v4827, 16
    %v6889 = vpop.permute.xlu0 %6888
    %6890 = vrot.lane.b32.xlu0 %v4909, 16
    %v6891 = vpop.permute.xlu0 %6890
    %6892 = vrot.lane.b32.xlu0 %v4914, 16
    %v6893 = vpop.permute.xlu0 %6892
    %6894 = vrot.lane.b32.xlu0 %v4996, 16
    %v6895 = vpop.permute.xlu0 %6894
    %6896 = vrot.lane.b32.xlu0 %v5001, 16
    %v6897 = vpop.permute.xlu0 %6896
    %6898 = vrot.lane.b32.xlu0 %v5083, 16
    %v6899 = vpop.permute.xlu0 %6898
    %6900 = vrot.lane.b32.xlu0 %v5088, 16
    %v6901 = vpop.permute.xlu0 %6900
    %6902 = vrot.lane.b32.xlu0 %v5170, 16
    %v6903 = vpop.permute.xlu0 %6902
    %6904 = vrot.lane.b32.xlu0 %v5175, 16
    %v6905 = vpop.permute.xlu0 %6904
    %6938 = vrot.lane.b32.xlu0 %v6177, 24
    %v6939 = vpop.permute.xlu0 %6938
    %6940 = vrot.lane.b32.xlu0 %v6182, 24
    %v6941 = vpop.permute.xlu0 %6940
    %6942 = vrot.lane.b32.xlu0 %v6264, 24
    %v6943 = vpop.permute.xlu0 %6942
    %6944 = vrot.lane.b32.xlu0 %v6269, 24
    %v6945 = vpop.permute.xlu0 %6944
    %6946 = vrot.lane.b32.xlu0 %v6351, 24
    %v6947 = vpop.permute.xlu0 %6946
    %6948 = vrot.lane.b32.xlu0 %v6356, 24
    %v6949 = vpop.permute.xlu0 %6948
    %6950 = vrot.lane.b32.xlu0 %v6438, 24
    %v6951 = vpop.permute.xlu0 %6950
    %6952 = vrot.lane.b32.xlu0 %v6443, 24
    %v6953 = vpop.permute.xlu0 %6952
    %6954 = vrot.lane.b32.xlu0 %v6525, 24
    %v6955 = vpop.permute.xlu0 %6954
    %6956 = vrot.lane.b32.xlu0 %v6530, 24
    %v6957 = vpop.permute.xlu0 %6956
    %6958 = vrot.lane.b32.xlu0 %v6612, 24
    %v6959 = vpop.permute.xlu0 %6958
    %6960 = vrot.lane.b32.xlu0 %v6617, 24
    %v6961 = vpop.permute.xlu0 %6960
    %6962 = vrot.lane.b32.xlu0 %v6699, 24
    %v6963 = vpop.permute.xlu0 %6962
    %6964 = vrot.lane.b32.xlu0 %v6704, 24
    %v6965 = vpop.permute.xlu0 %6964
    %6966 = vrot.lane.b32.xlu0 %v6786, 24
    %v6967 = vpop.permute.xlu0 %6966
    %6968 = vrot.lane.b32.xlu0 %v6791, 24
    %v6969 = vpop.permute.xlu0 %6968
    %v6986 = vsel %vm334, %v1329, %v6811
    %v6987 = vsel %vm334, %v1334, %v6813
    %v6988 = vsel %vm334, %v1416, %v6815
    %v6989 = vsel %vm334, %v1421, %v6817
    %v6990 = vsel %vm334, %v1503, %v6819
    %v6991 = vsel %vm334, %v1508, %v6821
    %v6992 = vsel %vm334, %v1590, %v6823
    %v6993 = vsel %vm334, %v1595, %v6825
    %v6994 = vsel %vm334, %v1677, %v6827
    %v6995 = vsel %vm334, %v1682, %v6829
    %v6996 = vsel %vm334, %v1764, %v6831
    %v6997 = vsel %vm334, %v1769, %v6833
    %v6998 = vsel %vm334, %v1851, %v6835
    %v6999 = vsel %vm334, %v1856, %v6837
    %v7000 = vsel %vm334, %v1938, %v6839
    %v7001 = vsel %vm334, %v1943, %v6841
    %v7002 = vsel %vm1073, %v6986, %v6875
    %v7003 = vsel %vm1073, %v6987, %v6877
    %v7004 = vsel %vm1073, %v6988, %v6879
    %v7005 = vsel %vm1073, %v6989, %v6881
    %v7006 = vsel %vm1073, %v6990, %v6883
    %v7007 = vsel %vm1073, %v6991, %v6885
    %v7008 = vsel %vm1073, %v6992, %v6887
    %v7009 = vsel %vm1073, %v6993, %v6889
    %v7010 = vsel %vm1073, %v6994, %v6891
    %v7011 = vsel %vm1073, %v6995, %v6893
    %v7012 = vsel %vm1073, %v6996, %v6895
    %v7013 = vsel %vm1073, %v6997, %v6897
    %v7014 = vsel %vm1073, %v6998, %v6899
    %v7015 = vsel %vm1073, %v6999, %v6901
    %v7016 = vsel %vm1073, %v7000, %v6903
    %v7017 = vsel %vm1073, %v7001, %v6905
    %vm7018 = vcmask 195584
    %v7019 = vsel %vm7018, %v7002, %v6939
    %v7020 = vsel %vm7018, %v7003, %v6941
    %v7021 = vsel %vm7018, %v7004, %v6943
    %v7022 = vsel %vm7018, %v7005, %v6945
    %v7023 = vsel %vm7018, %v7006, %v6947
    %v7024 = vsel %vm7018, %v7007, %v6949
    %v7025 = vsel %vm7018, %v7008, %v6951
    %v7026 = vsel %vm7018, %v7009, %v6953
    %v7027 = vsel %vm7018, %v7010, %v6955
    %v7028 = vsel %vm7018, %v7011, %v6957
    %v7029 = vsel %vm7018, %v7012, %v6959
    %v7030 = vsel %vm7018, %v7013, %v6961
    %v7031 = vsel %vm7018, %v7014, %v6963
    %v7032 = vsel %vm7018, %v7015, %v6965
    %v7033 = vsel %vm7018, %v7016, %v6967
    %v7034 = vsel %vm7018, %v7017, %v6969
    %v7035 = vld [vmem:[%s5] sm:$0x1]
    %v7037 = vlaneseq
    %v7038 = vshrl.u32 %v7037, 7
    %v7039 = vsub.s32 0, %v7038
    %v7040 = vrot.slane %v7035, %v7039
    %v7043 = vsel %vm110, %v7019, 0
    %v7046 = vsel %vm110, %v7020, 0
    %v7049 = vsel %vm110, %v7021, 0
    %v7052 = vsel %vm110, %v7022, 0
    %v7055 = vsel %vm110, %v7023, 0
    %v7058 = vsel %vm110, %v7024, 0
    %v7061 = vsel %vm110, %v7025, 0
    %v7064 = vsel %vm110, %v7026, 0
    %v7067 = vsel %vm110, %v7027, 0
    %v7070 = vsel %vm110, %v7028, 0
    %v7073 = vsel %vm110, %v7029, 0
    %v7076 = vsel %vm110, %v7030, 0
    %v7079 = vsel %vm110, %v7031, 0
    %v7082 = vsel %vm110, %v7032, 0
    %v7085 = vsel %vm110, %v7033, 0
    %v7088 = vsel %vm110, %v7034, 0
    %7090 = vmatprep.subr.mxu0 0.0
    %7091 = vmatpush1.msra.mxu0 %v99
    %7092 = vmatprep.subr.mxu0 0.0
    %7093 = vmatpush1.msra.mxu0 %v100
    %7094 = vmatprep.subr.mxu0 0.0
    %7095 = vmatpush1.msra.mxu0 %v101
    %7096 = vmatprep.subr.mxu0 0.0
    %7097 = vmatpush1.msra.mxu0 %v102
    %7098 = vmatprep.subr.mxu0 0.0
    %7099 = vmatpush1.msra.mxu0 0.0
    %7100 = vmatprep.subr.mxu0 0.0
    %7101 = vmatpush1.msra.mxu0 0.0
    %7102 = vmatprep.subr.mxu0 0.0
    %7103 = vmatpush1.msra.mxu0 0.0
    %7104 = vmatprep.subr.mxu0 0.0
    %7105 = vmatpush1.msra.mxu0 0.0
    %7106 = vmatprep.subr.mxu0 0.0
    %7107 = vmatpush1.msra.mxu0 0.0
    %7108 = vmatprep.subr.mxu0 0.0
    %7109 = vmatpush1.msra.mxu0 0.0
    %7110 = vmatprep.subr.mxu0 0.0
    %7111 = vmatpush1.msra.mxu0 0.0
    %7112 = vmatprep.subr.mxu0 0.0
    %7113 = vmatpush1.msra.mxu0 0.0
    %7114 = vmatprep.subr.mxu0 0.0
    %7115 = vmatpush1.msra.mxu0 0.0
    %7116 = vmatprep.subr.mxu0 0.0
    %7117 = vmatpush1.msra.mxu0 0.0
    %7118 = vmatprep.subr.mxu0 0.0
    %7119 = vmatpush1.msra.mxu0 0.0
    %7120 = vmatprep.subr.mxu0 0.0
    %7121 = vmatpush1.msra.mxu0 0.0
    %7122 = vmatprep.subr.mxu0 0.0
    %7123 = vmatpush1.msra.mxu0 0.0
    %7124 = vmatprep.subr.mxu0 0.0
    %7125 = vmatpush1.msra.mxu0 0.0
    %7126 = vmatprep.subr.mxu0 0.0
    %7127 = vmatpush1.msra.mxu0 0.0
    %7128 = vmatprep.subr.mxu0 0.0
    %7129 = vmatpush1.msra.mxu0 0.0
    %7130 = vmatprep.subr.mxu0 0.0
    %7131 = vmatpush1.msra.mxu0 0.0
    %7132 = vmatprep.subr.mxu0 0.0
    %7133 = vmatpush1.msra.mxu0 0.0
    %7134 = vmatprep.subr.mxu0 0.0
    %7135 = vmatpush1.msra.mxu0 0.0
    %7136 = vmatprep.subr.mxu0 0.0
    %7137 = vmatpush1.msra.mxu0 0.0
    %7138 = vmatprep.subr.mxu0 0.0
    %7139 = vmatpush1.msra.mxu0 0.0
    %7140 = vmatprep.subr.mxu0 0.0
    %7141 = vmatpush1.msra.mxu0 0.0
    %7142 = vmatprep.subr.mxu0 0.0
    %7143 = vmatpush1.msra.mxu0 0.0
    %7144 = vmatprep.subr.mxu0 0.0
    %7145 = vmatpush1.msra.mxu0 0.0
    %7146 = vmatprep.subr.mxu0 0.0
    %7147 = vmatpush1.msra.mxu0 0.0
    %7148 = vmatprep.subr.mxu0 0.0
    %7149 = vmatpush1.msra.mxu0 0.0
    %7150 = vmatprep.subr.mxu0 0.0
    %7151 = vmatpush1.msra.mxu0 0.0
    %7152 = vmatprep.subr.mxu0 0.0
    %7153 = vmatpush1.msra.mxu0 0.0
    %7154 = vmatprep.mubr.f32.mxu0 0.0
    %7155 = vmatmul.mubr.f32.gmra.mrb[0].mxu0 %v7043
    %v7156 = vpop.f32.mrb[0].mxu0
    %v7157 = vadd.f32 %v7040, %v7156
    %v7158 = vpop.f32.mrb[0].mxu0
    %7159 = vmatprep.mubr.f32.mxu0 0.0
    %7160 = vmatmul.mubr.f32.gmra.mrb[0].mxu0 %v7046
    %v7161 = vpop.f32.mrb[0].mxu0
    %v7162 = vadd.f32 %v7040, %v7161
    %v7163 = vpop.f32.mrb[0].mxu0
    %7164 = vmatprep.mubr.f32.mxu0 0.0
    %7165 = vmatmul.mubr.f32.gmra.mrb[0].mxu0 %v7049
    %v7166 = vpop.f32.mrb[0].mxu0
    %v7167 = vadd.f32 %v7040, %v7166
    %v7168 = vpop.f32.mrb[0].mxu0
    %7169 = vmatprep.mubr.f32.mxu0 0.0
    %7170 = vmatmul.mubr.f32.gmra.mrb[0].mxu0 %v7052
    %v7171 = vpop.f32.mrb[0].mxu0
    %v7172 = vadd.f32 %v7040, %v7171
    %v7173 = vpop.f32.mrb[0].mxu0
    %7174 = vmatprep.mubr.f32.mxu0 0.0
    %7175 = vmatmul.mubr.f32.gmra.mrb[0].mxu0 %v7055
    %v7176 = vpop.f32.mrb[0].mxu0
    %v7177 = vadd.f32 %v7040, %v7176
    %v7178 = vpop.f32.mrb[0].mxu0
    %7179 = vmatprep.mubr.f32.mxu0 0.0
    %7180 = vmatmul.mubr.f32.gmra.mrb[0].mxu0 %v7058
    %v7181 = vpop.f32.mrb[0].mxu0
    %v7182 = vadd.f32 %v7040, %v7181
    %v7183 = vpop.f32.mrb[0].mxu0
    %7184 = vmatprep.mubr.f32.mxu0 0.0
    %7185 = vmatmul.mubr.f32.gmra.mrb[0].mxu0 %v7061
    %v7186 = vpop.f32.mrb[0].mxu0
    %v7187 = vadd.f32 %v7040, %v7186
    %v7188 = vpop.f32.mrb[0].mxu0
    %7189 = vmatprep.mubr.f32.mxu0 0.0
    %7190 = vmatmul.mubr.f32.gmra.mrb[0].mxu0 %v7064
    %v7191 = vpop.f32.mrb[0].mxu0
    %v7192 = vadd.f32 %v7040, %v7191
    %v7193 = vpop.f32.mrb[0].mxu0
    %7194 = vmatprep.mubr.f32.mxu0 0.0
    %7195 = vmatmul.mubr.f32.gmra.mrb[0].mxu0 %v7067
    %v7196 = vpop.f32.mrb[0].mxu0
    %v7197 = vadd.f32 %v7040, %v7196
    %v7198 = vpop.f32.mrb[0].mxu0
    %7199 = vmatprep.mubr.f32.mxu0 0.0
    %7200 = vmatmul.mubr.f32.gmra.mrb[0].mxu0 %v7070
    %v7201 = vpop.f32.mrb[0].mxu0
    %v7202 = vadd.f32 %v7040, %v7201
    %v7203 = vpop.f32.mrb[0].mxu0
    %7204 = vmatprep.mubr.f32.mxu0 0.0
    %7205 = vmatmul.mubr.f32.gmra.mrb[0].mxu0 %v7073
    %v7206 = vpop.f32.mrb[0].mxu0
    %v7207 = vadd.f32 %v7040, %v7206
    %v7208 = vpop.f32.mrb[0].mxu0
    %7209 = vmatprep.mubr.f32.mxu0 0.0
    %7210 = vmatmul.mubr.f32.gmra.mrb[0].mxu0 %v7076
    %v7211 = vpop.f32.mrb[0].mxu0
    %v7212 = vadd.f32 %v7040, %v7211
    %v7213 = vpop.f32.mrb[0].mxu0
    %7214 = vmatprep.mubr.f32.mxu0 0.0
    %7215 = vmatmul.mubr.f32.gmra.mrb[0].mxu0 %v7079
    %v7216 = vpop.f32.mrb[0].mxu0
    %v7217 = vadd.f32 %v7040, %v7216
    %v7218 = vpop.f32.mrb[0].mxu0
    %7219 = vmatprep.mubr.f32.mxu0 0.0
    %7220 = vmatmul.mubr.f32.gmra.mrb[0].mxu0 %v7082
    %v7221 = vpop.f32.mrb[0].mxu0
    %v7222 = vadd.f32 %v7040, %v7221
    %v7223 = vpop.f32.mrb[0].mxu0
    %7224 = vmatprep.mubr.f32.mxu0 0.0
    %7225 = vmatmul.mubr.f32.gmra.mrb[0].mxu0 %v7085
    %v7226 = vpop.f32.mrb[0].mxu0
    %v7227 = vadd.f32 %v7040, %v7226
    %v7228 = vpop.f32.mrb[0].mxu0
    %7229 = vmatprep.mubr.f32.mxu0 0.0
    %7230 = vmatmul.mubr.f32.gmra.mrb[0].mxu0 %v7088
    %v7231 = vpop.f32.mrb[0].mxu0
    %v7232 = vadd.f32 %v7040, %v7231
    %v7233 = vpop.f32.mrb[0].mxu0
    %7234 = vdwg.mxu0
    %7235 = vst.msk [vmem:[#allocation10] sm:$0xff] %vm110, %v7157
    %7236 = vst.msk [vmem:[#allocation10 + $0x8] sm:$0xff] %vm110, %v7162
    %7237 = vst.msk [vmem:[#allocation10 + $0x10] sm:$0xff] %vm110, %v7167
    %7238 = vst.msk [vmem:[#allocation10 + $0x18] sm:$0xff] %vm110, %v7172
    %7239 = vst.msk [vmem:[#allocation10 + $0x20] sm:$0xff] %vm110, %v7177
    %7240 = vst.msk [vmem:[#allocation10 + $0x28] sm:$0xff] %vm110, %v7182
    %7241 = vst.msk [vmem:[#allocation10 + $0x30] sm:$0xff] %vm110, %v7187
    %7242 = vst.msk [vmem:[#allocation10 + $0x38] sm:$0xff] %vm110, %v7192
    %7243 = vst.msk [vmem:[#allocation10 + $0x40] sm:$0xff] %vm110, %v7197
    %7244 = vst.msk [vmem:[#allocation10 + $0x48] sm:$0xff] %vm110, %v7202
    %7245 = vst.msk [vmem:[#allocation10 + $0x50] sm:$0xff] %vm110, %v7207
    %7246 = vst.msk [vmem:[#allocation10 + $0x58] sm:$0xff] %vm110, %v7212
    %7247 = vst.msk [vmem:[#allocation10 + $0x60] sm:$0xff] %vm110, %v7217
    %7248 = vst.msk [vmem:[#allocation10 + $0x68] sm:$0xff] %vm110, %v7222
    %7249 = vst.msk [vmem:[#allocation10 + $0x70] sm:$0xff] %vm110, %v7227
    %7250 = vst.msk [vmem:[#allocation10 + $0x78] sm:$0xff] %vm110, %v7232
    // Predicated region
    $region42: #{tpu_custom_call.1} parent=1 // pred_check
      _
    $region43: #{tpu_custom_call.1} parent=1 // pred_check_branch
      %7252 = sbr.rel (0) target = $region45
    $region44: #{tpu_custom_call.1} parent=1 // pred_region
      %s7254 = ssub.s32 2048, 2048
      %7255 = vsyncadd [#allocation4], %s7254
      %s7256 = sshll.u32 [#allocation10], 4
      %s7257 = int_to_ptr.vmem [resolvable:$true] %s7256
      %7262 = dma.vmem_to_hbm [thread:$0]  %s7257, 2048, %s6, [#allocation4], 128, 128, 8
    $region45: #{tpu_custom_call.1} parent=1 // pred_fallthru
      _
    // Predicated region
    $region46: #{tpu_custom_call.1} parent=1 // pred_check
      _
    $region47: #{tpu_custom_call.1} parent=1 // pred_check_branch
      %7264 = sbr.rel (0) target = $region49
    $region48: #{tpu_custom_call.1} parent=1 // pred_region
      %7265 = dma.done [#allocation4], 2048
    $region49: #{tpu_custom_call.1} parent=1 // pred_fallthru
      _
    %7266 = vsyncpa [#allocation3], 1
    %7267 = vsyncpa [#allocation6], 1
    %7268 = vsyncpa [#allocation9], 1
    %7269 = vsyncpa [#allocation4], 1

</llo_original>
